<compile_context>
chip_gen: v6e
topology: v6e:2x2x1
jax: 0.10.0
libtpu: 0.0.40
codegen_flags: <defaults>
</compile_context>

<pallas_src>
import functools

import jax
import jax.numpy as jnp
from jax import lax
from jax.experimental import pallas as pl
from jax.experimental.pallas import tpu as pltpu


def _round_up(n, m):
    return ((n + m - 1) // m) * m


# ------------------------------ fused kernel -------------------------------

def _fused_cnn_kernel(x1_ref, w1_ref, b1_ref, w2_ref, b2_ref,
                      wf1_ref, bf1_ref, wf2_ref, bf2_ref, out_ref, *, tb):
    """One batch tile (tb images) of the whole SimpleCNN forward pass.

    x1_ref : (1, 2, 2, 7*tb, 128) bf16  conv1 Toeplitz rows, (parity, pool-tap,
                                        rows=(hp, n), K=(di, win) padded to 128)
    w1_ref : (2, 128, 512) bf16         conv1 weight variants (wi tap), lanes (win=16, oc=32)
    w2_ref : (2, 3, 512, 512) bf16      conv2 weight (wi tap, di), lanes (wo2=8, oc=64)
    wf1_ref: (7, 512, 128) bf16         fc1 weight split per pooled row ho2
    wf2_ref: (128, 128) bf16            fc2 weight, output padded 10 -> 128
    out_ref: (1, tb, 128) f32           padded logits
    """
    half = 7 * tb

    # ---- conv1 + ReLU + 2x2 max-pool (Toeplitz-over-width, per h-parity) ----
    # max-pool commutes with the monotone bias+ReLU epilogue, so we max the raw
    # MXU results of the 4 pooling taps and apply the epilogue once.
    planes = []
    for par in range(2):                       # conv1 pooled row h = 2*hp + par
        m1 = None
        for hi in range(2):                    # vertical pool tap (input rows)
            xm = x1_ref[0, par, hi]            # (7*tb, 128)
            for wi in range(2):                # horizontal pool tap (weight variant)
                d = jnp.dot(xm, w1_ref[wi], preferred_element_type=jnp.float32)
                m1 = d if m1 is None else jnp.maximum(m1, d)
        planes.append(jnp.maximum(m1 + b1_ref[...], 0.0).astype(jnp.bfloat16))
    a1e, a1o = planes                          # (7*tb, 512), lanes (win=16, c=32),
                                               # win 0/15 are zero (conv2 W padding)

    # Vertically shifted planes: rows are (hp, n), so shifting hp by 1 is a
    # shift by tb rows with zero fill (no cross-image leakage).
    zblk = jnp.zeros((tb, 512), jnp.bfloat16)
    a1o_m1 = jnp.concatenate([zblk, a1o[:half - tb]], axis=0)   # rows h = 2*hp - 1
    a1e_p1 = jnp.concatenate([a1e[tb:], zblk], axis=0)          # rows h = 2*hp + 2

    # ---- conv2 + ReLU + 2x2 max-pool (in-kernel im2col via parity planes) ---
    # output rows (ho2, n); lanes (wo2=8, oc=64) = 512 (wo2=7 is a zero column).
    taps = {(0, 0): a1o_m1, (0, 1): a1e, (0, 2): a1o,
            (1, 0): a1e,    (1, 1): a1o, (1, 2): a1e_p1}
    m2 = None
    for hi2 in range(2):                       # vertical pool tap
        for wi2 in range(2):                   # horizontal pool tap (weight variant)
            acc = None
            for di2 in range(3):               # conv2 kernel row offset
                d = jnp.dot(taps[(hi2, di2)], w2_ref[wi2, di2],
                            preferred_element_type=jnp.float32)
                acc = d if acc is None else acc + d
            m2 = acc if m2 is None else jnp.maximum(m2, acc)
    a2 = jnp.maximum(m2 + b2_ref[...], 0.0).astype(jnp.bfloat16)  # (7*tb, 512)

    # ---- fc1 + ReLU, accumulated over the 7 pooled rows (a2 rows = (ho2, n)) -
    h = None
    for ho2 in range(7):
        d = jnp.dot(a2[ho2 * tb:(ho2 + 1) * tb], wf1_ref[ho2],
                    preferred_element_type=jnp.float32)
        h = d if h is None else h + d
    h = jnp.maximum(h + bf1_ref[...], 0.0).astype(jnp.bfloat16)   # (tb, 128)

    # ---- fc2 (output channels padded 10 -> 128 for a lane-dense store) ------
    out_ref[0] = jnp.dot(h, wf2_ref[...],
                         preferred_element_type=jnp.float32) + bf2_ref[...]


# --------------------------- parameter handling -----------------------------

def init_params(key):
    """PyTorch-layout parameters with PyTorch-default uniform init."""
    ks = jax.random.split(key, 8)

    def u(k, shape, fan_in):
        bound = 1.0 / jnp.sqrt(fan_in)
        return jax.random.uniform(k, shape, jnp.float32, -bound, bound)

    return dict(
        w1=u(ks[0], (32, 1, 3, 3), 1 * 9),   b1=u(ks[1], (32,), 1 * 9),
        w2=u(ks[2], (64, 32, 3, 3), 32 * 9), b2=u(ks[3], (64,), 32 * 9),
        wf1=u(ks[4], (128, 64 * 7 * 7), 64 * 7 * 7), bf1=u(ks[5], (128,), 64 * 7 * 7),
        wf2=u(ks[6], (10, 128), 128),        bf2=u(ks[7], (10,), 128),
    )


def prepare_params(p):
    """One-time (outside-jit) repacking of PyTorch-layout params for the kernel."""
    w1, b1 = p["w1"], p["b1"]
    w2, b2 = p["w2"], p["b2"]
    wf1, bf1 = p["wf1"], p["bf1"]
    wf2, bf2 = p["wf2"], p["bf2"]

    # conv1: Toeplitz-over-width.  K = (di, win) = 90 padded to 128; output
    # lanes = (win_out in 0..15, oc in 0..31) = 512; win_out 0 and 15 are zero
    # columns (they double as conv2's width padding).  Two variants per wi tap.
    w1s = w1[:, 0, :, :]                                          # (oc, di, dj)
    di = jnp.arange(3)[:, None, None, None]
    win = jnp.arange(30)[None, :, None, None]
    wout = jnp.arange(16)[None, None, :, None]
    oc1 = jnp.arange(32)[None, None, None, :]

    def toep1(wi1):
        dj = win - (2 * (wout - 1) + wi1)
        ok = (dj >= 0) & (dj <= 2) & (wout >= 1) & (wout <= 14)
        vals = w1s[oc1, di, jnp.clip(dj, 0, 2)]                   # (3, 30, 16, 32)
        return jnp.where(ok, vals, 0.0).reshape(90, 512)

    w1t = jnp.stack([toep1(0), toep1(1)], axis=0)                 # (2, 90, 512)
    w1t = jnp.pad(w1t, ((0, 0), (0, 38), (0, 0))).astype(jnp.bfloat16)
    wo_ok = ((jnp.arange(16) >= 1) & (jnp.arange(16) <= 14)).astype(jnp.float32)
    b1t = (wo_ok[:, None] * b1[None, :]).reshape(1, 512).astype(jnp.float32)

    # conv2: Toeplitz-over-width per (wi tap, di).  K = (win=16, c=32) = 512
    # matches conv1's output lanes; output lanes = (wo2=8, oc=64) = 512 with
    # wo2 = 7 a zero column.
    win2 = jnp.arange(16)[:, None, None, None]
    c2 = jnp.arange(32)[None, :, None, None]
    wo2 = jnp.arange(8)[None, None, :, None]
    oc2 = jnp.arange(64)[None, None, None, :]

    def toep2(wi2, di2):
        dj = win2 - (2 * wo2 + wi2)
        ok = (dj >= 0) & (dj <= 2) & (wo2 <= 6)
        vals = w2[oc2, c2, di2, jnp.clip(dj, 0, 2)]               # (16, 32, 8, 64)
        return jnp.where(ok, vals, 0.0).reshape(512, 512)

    w2t = jnp.stack(
        [jnp.stack([toep2(wi2, di2) for di2 in range(3)], axis=0)
         for wi2 in range(2)], axis=0).astype(jnp.bfloat16)       # (2, 3, 512, 512)
    wo2_ok = (jnp.arange(8) <= 6).astype(jnp.float32)
    b2t = (wo2_ok[:, None] * b2[None, :]).reshape(1, 512).astype(jnp.float32)

    # fc1: split K per pooled row ho2, K-block ordered (wo2, oc) padded to 512
    # to match the kernel's a2 lane layout (PyTorch flatten is (oc, ho2, wo2)).
    wf1r = wf1.reshape(128, 64, 7, 7).transpose(2, 3, 1, 0)       # (ho2, wo2, oc, j)
    wf1t = jnp.pad(wf1r, ((0, 0), (0, 1), (0, 0), (0, 0)))        # wo2 7 -> 8
    wf1t = wf1t.reshape(7, 512, 128).astype(jnp.bfloat16)
    bf1t = bf1.reshape(1, 128).astype(jnp.float32)

    # fc2: pre-transpose, pad output dim 10 -> 128 for lane-dense stores.
    wf2t = jnp.pad(wf2.T, ((0, 0), (0, 118))).astype(jnp.bfloat16)   # (128, 128)
    bf2p = jnp.pad(bf2, (0, 118)).reshape(1, 128).astype(jnp.float32)

    return dict(w1t=w1t, b1t=b1t, w2t=w2t, b2t=b2t,
                wf1t=wf1t, bf1t=bf1t, wf2t=wf2t, bf2p=bf2p)


# ------------------------------- the model ---------------------------------

@jax.jit
def simple_cnn_forward(x, p):
    """x: (N, 1, 28, 28) float32 NCHW -> logits (N, 10) float32."""
    n = x.shape[0]
    # >= 2 grid steps whenever n >= 2 so v7x's two TensorCores both get work.
    tb = max(1, min(32, n // 2))
    n_pad = _round_up(n, tb)
    nt = n_pad // tb

    xin = x[:, 0, :, :].astype(jnp.float32)
    if n_pad != n:
        xin = jnp.pad(xin, ((0, n_pad - n), (0, 0), (0, 0)))
    xp = jnp.pad(xin, ((0, 0), (1, 1), (1, 1)))                        # (n_pad, 30, 30)

    # conv1 Toeplitz rows: row (n, ho_full) holds padded image rows
    # ho_full..ho_full+2 flattened over K = (di, win) = 90, zero-padded to 128.
    rows = jnp.stack([xp[:, d:d + 28, :] for d in range(3)], axis=2)   # (n_pad, 28, 3, 30)
    rows = jnp.pad(rows.reshape(n_pad, 28, 90), ((0, 0), (0, 0), (0, 38)))
    # ho_full = 4*hp + 2*par + hi1 -> split 28 into (hp, par, hi1) and order the
    # rows inside a batch tile as (par, hi1, hp, n) for the kernel.
    rows = rows.reshape(nt, tb, 7, 2, 2, 128)
    x1 = rows.transpose(0, 3, 4, 2, 1, 5).reshape(nt, 2, 2, 7 * tb, 128)
    x1 = x1.astype(jnp.bfloat16)

    out = pl.pallas_call(
        functools.partial(_fused_cnn_kernel, tb=tb),
        out_shape=jax.ShapeDtypeStruct((nt, tb, 128), jnp.float32),
        grid=(nt,),
        in_specs=[
            pl.BlockSpec((1, 2, 2, 7 * tb, 128), lambda i: (i, 0, 0, 0, 0)),
            pl.BlockSpec((2, 128, 512), lambda i: (0, 0, 0)),
            pl.BlockSpec((1, 512), lambda i: (0, 0)),
            pl.BlockSpec((2, 3, 512, 512), lambda i: (0, 0, 0, 0)),
            pl.BlockSpec((1, 512), lambda i: (0, 0)),
            pl.BlockSpec((7, 512, 128), lambda i: (0, 0, 0)),
            pl.BlockSpec((1, 128), lambda i: (0, 0)),
            pl.BlockSpec((128, 128), lambda i: (0, 0)),
            pl.BlockSpec((1, 128), lambda i: (0, 0)),
        ],
        out_specs=pl.BlockSpec((1, tb, 128), lambda i: (i, 0, 0)),
        compiler_params=pltpu.CompilerParams(
            dimension_semantics=("parallel",),
            vmem_limit_bytes=32 * 1024 * 1024,
        ),
    )(x1, p["w1t"], p["b1t"], p["w2t"], p["b2t"],
      p["wf1t"], p["bf1t"], p["wf2t"], p["bf2p"])

    return out.reshape(n_pad, 128)[:n, :10]


# --------------------------- plain-JAX reference ----------------------------

def reference_forward(x, p):
    """Pure-XLA reference matching PyTorch semantics (bf16-rounded operands)."""
    q = lambda a: a.astype(jnp.bfloat16).astype(jnp.float32)
    dn = ("NCHW", "OIHW", "NCHW")
    y = lax.conv_general_dilated(q(x), q(p["w1"]), (1, 1), ((1, 1), (1, 1)),
                                 dimension_numbers=dn)
    y = jnp.maximum(y + p["b1"][None, :, None, None], 0.0)
    y = lax.reduce_window(y, -jnp.inf, lax.max, (1, 1, 2, 2), (1, 1, 2, 2), "VALID")
    y = lax.conv_general_dilated(q(y), q(p["w2"]), (1, 1), ((1, 1), (1, 1)),
                                 dimension_numbers=dn)
    y = jnp.maximum(y + p["b2"][None, :, None, None], 0.0)
    y = lax.reduce_window(y, -jnp.inf, lax.max, (1, 1, 2, 2), (1, 1, 2, 2), "VALID")
    f = q(y).reshape(x.shape[0], 64 * 7 * 7)
    h = jnp.maximum(f @ q(p["wf1"]).T + p["bf1"], 0.0)
    return q(h) @ q(p["wf2"]).T + p["bf2"]


if __name__ == "__main__":
    key = jax.random.PRNGKey(0)
    pkey, xkey = jax.random.split(key)
    params = init_params(pkey)
    prepped = prepare_params(params)

    # Forward requires 28x28 spatial input (flatten to 64*7*7 after two pools).
    x = jax.random.normal(xkey, (2, 1, 28, 28), dtype=jnp.float32)

    out = simple_cnn_forward(x, prepped)
    jax.block_until_ready(out)
    assert out.shape == (2, 10) and out.dtype == jnp.float32

    ref = reference_forward(x, params)
    err = float(jnp.max(jnp.abs(out - ref)))
    assert err < 5e-2, f"mismatch vs reference: max abs err {err}"

    print("KERNEL_OK")
</pallas_src>

<mosaic_0001>
module attributes {stable_mosaic.version = 11 : i64} {
  func.func @_fused_cnn_kernel(%arg0: i32, %arg1: memref<1x2x2x7x128xbf16, #tpu.memory_space<vmem>>, %arg2: memref<2x128x512xbf16, #tpu.memory_space<vmem>>, %arg3: memref<1x512xf32, #tpu.memory_space<vmem>>, %arg4: memref<2x3x512x512xbf16, #tpu.memory_space<vmem>>, %arg5: memref<1x512xf32, #tpu.memory_space<vmem>>, %arg6: memref<7x512x128xbf16, #tpu.memory_space<vmem>>, %arg7: memref<1x128xf32, #tpu.memory_space<vmem>>, %arg8: memref<128x128xbf16, #tpu.memory_space<vmem>>, %arg9: memref<1x128xf32, #tpu.memory_space<vmem>>, %arg10: memref<1x1x128xf32, #tpu.memory_space<vmem>>) attributes {dimension_semantics = [#tpu.dimension_semantics<parallel>], iteration_bounds = array<i64: 2>, scalar_prefetch = 0 : i64, scratch_operands = 0 : i64, tpu.core_type = #tpu.core_type<tc>, window_params = [{transform_indices = @transform_0, window_bounds = array<i64: 1, 2, 2, 7, 128>}, {pipeline_mode = #tpu.pipeline_mode<synchronous>, transform_indices = @transform_1, window_bounds = array<i64: 2, 128, 512>}, {pipeline_mode = #tpu.pipeline_mode<synchronous>, transform_indices = @transform_2, window_bounds = array<i64: 1, 512>}, {pipeline_mode = #tpu.pipeline_mode<synchronous>, transform_indices = @transform_3, window_bounds = array<i64: 2, 3, 512, 512>}, {pipeline_mode = #tpu.pipeline_mode<synchronous>, transform_indices = @transform_4, window_bounds = array<i64: 1, 512>}, {pipeline_mode = #tpu.pipeline_mode<synchronous>, transform_indices = @transform_5, window_bounds = array<i64: 7, 512, 128>}, {pipeline_mode = #tpu.pipeline_mode<synchronous>, transform_indices = @transform_6, window_bounds = array<i64: 1, 128>}, {pipeline_mode = #tpu.pipeline_mode<synchronous>, transform_indices = @transform_7, window_bounds = array<i64: 128, 128>}, {pipeline_mode = #tpu.pipeline_mode<synchronous>, transform_indices = @transform_8, window_bounds = array<i64: 1, 128>}, {transform_indices = @transform_9, window_bounds = array<i64: 1, 1, 128>}]} {
    %c0 = arith.constant 0 : index
    %c0_0 = arith.constant 0 : index
    %c0_1 = arith.constant 0 : index
    %c0_2 = arith.constant 0 : index
    %c0_3 = arith.constant 0 : index
    %0 = vector.load %arg1[%c0, %c0_0, %c0_1, %c0_2, %c0_3] : memref<1x2x2x7x128xbf16, #tpu.memory_space<vmem>>, vector<1x1x1x7x128xbf16>
    %1 = vector.shape_cast %0 : vector<1x1x1x7x128xbf16> to vector<7x128xbf16>
    %c0_4 = arith.constant 0 : index
    %c0_5 = arith.constant 0 : index
    %c0_6 = arith.constant 0 : index
    %2 = vector.load %arg2[%c0_4, %c0_5, %c0_6] : memref<2x128x512xbf16, #tpu.memory_space<vmem>>, vector<1x128x512xbf16>
    %3 = vector.shape_cast %2 : vector<1x128x512xbf16> to vector<128x512xbf16>
    %cst = arith.constant dense<0.000000e+00> : vector<7x512xf32>
    %4 = tpu.matmul %1, %3, %cst {dimension_numbers = #tpu.dot_dimension_numbers<[1], [0], [0], [1], [0, 0, 1, 1], [], []>} : vector<7x128xbf16>, vector<128x512xbf16>, vector<7x512xf32> -> vector<7x512xf32>
    %c1 = arith.constant 1 : index
    %c0_7 = arith.constant 0 : index
    %c0_8 = arith.constant 0 : index
    %5 = vector.load %arg2[%c1, %c0_7, %c0_8] : memref<2x128x512xbf16, #tpu.memory_space<vmem>>, vector<1x128x512xbf16>
    %6 = vector.shape_cast %5 : vector<1x128x512xbf16> to vector<128x512xbf16>
    %cst_9 = arith.constant dense<0.000000e+00> : vector<7x512xf32>
    %7 = tpu.matmul %1, %6, %cst_9 {dimension_numbers = #tpu.dot_dimension_numbers<[1], [0], [0], [1], [0, 0, 1, 1], [], []>} : vector<7x128xbf16>, vector<128x512xbf16>, vector<7x512xf32> -> vector<7x512xf32>
    %8 = arith.maximumf %4, %7 : vector<7x512xf32>
    %c0_10 = arith.constant 0 : index
    %c0_11 = arith.constant 0 : index
    %c1_12 = arith.constant 1 : index
    %c0_13 = arith.constant 0 : index
    %c0_14 = arith.constant 0 : index
    %9 = vector.load %arg1[%c0_10, %c0_11, %c1_12, %c0_13, %c0_14] : memref<1x2x2x7x128xbf16, #tpu.memory_space<vmem>>, vector<1x1x1x7x128xbf16>
    %10 = vector.shape_cast %9 : vector<1x1x1x7x128xbf16> to vector<7x128xbf16>
    %c0_15 = arith.constant 0 : index
    %c0_16 = arith.constant 0 : index
    %c0_17 = arith.constant 0 : index
    %11 = vector.load %arg2[%c0_15, %c0_16, %c0_17] : memref<2x128x512xbf16, #tpu.memory_space<vmem>>, vector<1x128x512xbf16>
    %12 = vector.shape_cast %11 : vector<1x128x512xbf16> to vector<128x512xbf16>
    %cst_18 = arith.constant dense<0.000000e+00> : vector<7x512xf32>
    %13 = tpu.matmul %10, %12, %cst_18 {dimension_numbers = #tpu.dot_dimension_numbers<[1], [0], [0], [1], [0, 0, 1, 1], [], []>} : vector<7x128xbf16>, vector<128x512xbf16>, vector<7x512xf32> -> vector<7x512xf32>
    %14 = arith.maximumf %8, %13 : vector<7x512xf32>
    %c1_19 = arith.constant 1 : index
    %c0_20 = arith.constant 0 : index
    %c0_21 = arith.constant 0 : index
    %15 = vector.load %arg2[%c1_19, %c0_20, %c0_21] : memref<2x128x512xbf16, #tpu.memory_space<vmem>>, vector<1x128x512xbf16>
    %16 = vector.shape_cast %15 : vector<1x128x512xbf16> to vector<128x512xbf16>
    %cst_22 = arith.constant dense<0.000000e+00> : vector<7x512xf32>
    %17 = tpu.matmul %10, %16, %cst_22 {dimension_numbers = #tpu.dot_dimension_numbers<[1], [0], [0], [1], [0, 0, 1, 1], [], []>} : vector<7x128xbf16>, vector<128x512xbf16>, vector<7x512xf32> -> vector<7x512xf32>
    %18 = arith.maximumf %14, %17 : vector<7x512xf32>
    %c0_23 = arith.constant 0 : index
    %c0_24 = arith.constant 0 : index
    %19 = vector.load %arg3[%c0_23, %c0_24] : memref<1x512xf32, #tpu.memory_space<vmem>>, vector<1x512xf32>
    %20 = vector.broadcast %19 : vector<1x512xf32> to vector<7x512xf32>
    %21 = arith.addf %18, %20 : vector<7x512xf32>
    %cst_25 = arith.constant 0.000000e+00 : f32
    %22 = vector.broadcast %cst_25 : f32 to vector<7x512xf32>
    %23 = arith.maximumf %21, %22 : vector<7x512xf32>
    %24 = arith.truncf %23 : vector<7x512xf32> to vector<7x512xbf16>
    %c0_26 = arith.constant 0 : index
    %c1_27 = arith.constant 1 : index
    %c0_28 = arith.constant 0 : index
    %c0_29 = arith.constant 0 : index
    %c0_30 = arith.constant 0 : index
    %25 = vector.load %arg1[%c0_26, %c1_27, %c0_28, %c0_29, %c0_30] : memref<1x2x2x7x128xbf16, #tpu.memory_space<vmem>>, vector<1x1x1x7x128xbf16>
    %26 = vector.shape_cast %25 : vector<1x1x1x7x128xbf16> to vector<7x128xbf16>
    %c0_31 = arith.constant 0 : index
    %c0_32 = arith.constant 0 : index
    %c0_33 = arith.constant 0 : index
    %27 = vector.load %arg2[%c0_31, %c0_32, %c0_33] : memref<2x128x512xbf16, #tpu.memory_space<vmem>>, vector<1x128x512xbf16>
    %28 = vector.shape_cast %27 : vector<1x128x512xbf16> to vector<128x512xbf16>
    %cst_34 = arith.constant dense<0.000000e+00> : vector<7x512xf32>
    %29 = tpu.matmul %26, %28, %cst_34 {dimension_numbers = #tpu.dot_dimension_numbers<[1], [0], [0], [1], [0, 0, 1, 1], [], []>} : vector<7x128xbf16>, vector<128x512xbf16>, vector<7x512xf32> -> vector<7x512xf32>
    %c1_35 = arith.constant 1 : index
    %c0_36 = arith.constant 0 : index
    %c0_37 = arith.constant 0 : index
    %30 = vector.load %arg2[%c1_35, %c0_36, %c0_37] : memref<2x128x512xbf16, #tpu.memory_space<vmem>>, vector<1x128x512xbf16>
    %31 = vector.shape_cast %30 : vector<1x128x512xbf16> to vector<128x512xbf16>
    %cst_38 = arith.constant dense<0.000000e+00> : vector<7x512xf32>
    %32 = tpu.matmul %26, %31, %cst_38 {dimension_numbers = #tpu.dot_dimension_numbers<[1], [0], [0], [1], [0, 0, 1, 1], [], []>} : vector<7x128xbf16>, vector<128x512xbf16>, vector<7x512xf32> -> vector<7x512xf32>
    %33 = arith.maximumf %29, %32 : vector<7x512xf32>
    %c0_39 = arith.constant 0 : index
    %c1_40 = arith.constant 1 : index
    %c1_41 = arith.constant 1 : index
    %c0_42 = arith.constant 0 : index
    %c0_43 = arith.constant 0 : index
    %34 = vector.load %arg1[%c0_39, %c1_40, %c1_41, %c0_42, %c0_43] : memref<1x2x2x7x128xbf16, #tpu.memory_space<vmem>>, vector<1x1x1x7x128xbf16>
    %35 = vector.shape_cast %34 : vector<1x1x1x7x128xbf16> to vector<7x128xbf16>
    %c0_44 = arith.constant 0 : index
    %c0_45 = arith.constant 0 : index
    %c0_46 = arith.constant 0 : index
    %36 = vector.load %arg2[%c0_44, %c0_45, %c0_46] : memref<2x128x512xbf16, #tpu.memory_space<vmem>>, vector<1x128x512xbf16>
    %37 = vector.shape_cast %36 : vector<1x128x512xbf16> to vector<128x512xbf16>
    %cst_47 = arith.constant dense<0.000000e+00> : vector<7x512xf32>
    %38 = tpu.matmul %35, %37, %cst_47 {dimension_numbers = #tpu.dot_dimension_numbers<[1], [0], [0], [1], [0, 0, 1, 1], [], []>} : vector<7x128xbf16>, vector<128x512xbf16>, vector<7x512xf32> -> vector<7x512xf32>
    %39 = arith.maximumf %33, %38 : vector<7x512xf32>
    %c1_48 = arith.constant 1 : index
    %c0_49 = arith.constant 0 : index
    %c0_50 = arith.constant 0 : index
    %40 = vector.load %arg2[%c1_48, %c0_49, %c0_50] : memref<2x128x512xbf16, #tpu.memory_space<vmem>>, vector<1x128x512xbf16>
    %41 = vector.shape_cast %40 : vector<1x128x512xbf16> to vector<128x512xbf16>
    %cst_51 = arith.constant dense<0.000000e+00> : vector<7x512xf32>
    %42 = tpu.matmul %35, %41, %cst_51 {dimension_numbers = #tpu.dot_dimension_numbers<[1], [0], [0], [1], [0, 0, 1, 1], [], []>} : vector<7x128xbf16>, vector<128x512xbf16>, vector<7x512xf32> -> vector<7x512xf32>
    %43 = arith.maximumf %39, %42 : vector<7x512xf32>
    %c0_52 = arith.constant 0 : index
    %c0_53 = arith.constant 0 : index
    %44 = vector.load %arg3[%c0_52, %c0_53] : memref<1x512xf32, #tpu.memory_space<vmem>>, vector<1x512xf32>
    %45 = vector.broadcast %44 : vector<1x512xf32> to vector<7x512xf32>
    %46 = arith.addf %43, %45 : vector<7x512xf32>
    %cst_54 = arith.constant 0.000000e+00 : f32
    %47 = vector.broadcast %cst_54 : f32 to vector<7x512xf32>
    %48 = arith.maximumf %46, %47 : vector<7x512xf32>
    %49 = arith.truncf %48 : vector<7x512xf32> to vector<7x512xbf16>
    %cst_55 = arith.constant 0.000000e+00 : bf16
    %50 = vector.broadcast %cst_55 : bf16 to vector<1x512xbf16>
    %51 = vector.extract_strided_slice %49 {offsets = [0, 0], sizes = [6, 512], strides = [1, 1]} : vector<7x512xbf16> to vector<6x512xbf16>
    %52 = tpu.concatenate %50, %51 in 0 : vector<1x512xbf16>, vector<6x512xbf16> -> vector<7x512xbf16>
    %53 = vector.extract_strided_slice %24 {offsets = [1, 0], sizes = [6, 512], strides = [1, 1]} : vector<7x512xbf16> to vector<6x512xbf16>
    %54 = tpu.concatenate %53, %50 in 0 : vector<6x512xbf16>, vector<1x512xbf16> -> vector<7x512xbf16>
    %c0_56 = arith.constant 0 : index
    %c0_57 = arith.constant 0 : index
    %c0_58 = arith.constant 0 : index
    %c0_59 = arith.constant 0 : index
    %55 = vector.load %arg4[%c0_56, %c0_57, %c0_58, %c0_59] : memref<2x3x512x512xbf16, #tpu.memory_space<vmem>>, vector<1x1x512x512xbf16>
    %56 = vector.shape_cast %55 : vector<1x1x512x512xbf16> to vector<512x512xbf16>
    %cst_60 = arith.constant dense<0.000000e+00> : vector<7x512xf32>
    %57 = tpu.matmul %52, %56, %cst_60 {dimension_numbers = #tpu.dot_dimension_numbers<[1], [0], [0], [1], [0, 0, 1, 1], [], []>} : vector<7x512xbf16>, vector<512x512xbf16>, vector<7x512xf32> -> vector<7x512xf32>
    %c0_61 = arith.constant 0 : index
    %c1_62 = arith.constant 1 : index
    %c0_63 = arith.constant 0 : index
    %c0_64 = arith.constant 0 : index
    %58 = vector.load %arg4[%c0_61, %c1_62, %c0_63, %c0_64] : memref<2x3x512x512xbf16, #tpu.memory_space<vmem>>, vector<1x1x512x512xbf16>
    %59 = vector.shape_cast %58 : vector<1x1x512x512xbf16> to vector<512x512xbf16>
    %cst_65 = arith.constant dense<0.000000e+00> : vector<7x512xf32>
    %60 = tpu.matmul %24, %59, %cst_65 {dimension_numbers = #tpu.dot_dimension_numbers<[1], [0], [0], [1], [0, 0, 1, 1], [], []>} : vector<7x512xbf16>, vector<512x512xbf16>, vector<7x512xf32> -> vector<7x512xf32>
    %61 = arith.addf %57, %60 : vector<7x512xf32>
    %c0_66 = arith.constant 0 : index
    %c2 = arith.constant 2 : index
    %c0_67 = arith.constant 0 : index
    %c0_68 = arith.constant 0 : index
    %62 = vector.load %arg4[%c0_66, %c2, %c0_67, %c0_68] : memref<2x3x512x512xbf16, #tpu.memory_space<vmem>>, vector<1x1x512x512xbf16>
    %63 = vector.shape_cast %62 : vector<1x1x512x512xbf16> to vector<512x512xbf16>
    %cst_69 = arith.constant dense<0.000000e+00> : vector<7x512xf32>
    %64 = tpu.matmul %49, %63, %cst_69 {dimension_numbers = #tpu.dot_dimension_numbers<[1], [0], [0], [1], [0, 0, 1, 1], [], []>} : vector<7x512xbf16>, vector<512x512xbf16>, vector<7x512xf32> -> vector<7x512xf32>
    %65 = arith.addf %61, %64 : vector<7x512xf32>
    %c1_70 = arith.constant 1 : index
    %c0_71 = arith.constant 0 : index
    %c0_72 = arith.constant 0 : index
    %c0_73 = arith.constant 0 : index
    %66 = vector.load %arg4[%c1_70, %c0_71, %c0_72, %c0_73] : memref<2x3x512x512xbf16, #tpu.memory_space<vmem>>, vector<1x1x512x512xbf16>
    %67 = vector.shape_cast %66 : vector<1x1x512x512xbf16> to vector<512x512xbf16>
    %cst_74 = arith.constant dense<0.000000e+00> : vector<7x512xf32>
    %68 = tpu.matmul %52, %67, %cst_74 {dimension_numbers = #tpu.dot_dimension_numbers<[1], [0], [0], [1], [0, 0, 1, 1], [], []>} : vector<7x512xbf16>, vector<512x512xbf16>, vector<7x512xf32> -> vector<7x512xf32>
    %c1_75 = arith.constant 1 : index
    %c1_76 = arith.constant 1 : index
    %c0_77 = arith.constant 0 : index
    %c0_78 = arith.constant 0 : index
    %69 = vector.load %arg4[%c1_75, %c1_76, %c0_77, %c0_78] : memref<2x3x512x512xbf16, #tpu.memory_space<vmem>>, vector<1x1x512x512xbf16>
    %70 = vector.shape_cast %69 : vector<1x1x512x512xbf16> to vector<512x512xbf16>
    %cst_79 = arith.constant dense<0.000000e+00> : vector<7x512xf32>
    %71 = tpu.matmul %24, %70, %cst_79 {dimension_numbers = #tpu.dot_dimension_numbers<[1], [0], [0], [1], [0, 0, 1, 1], [], []>} : vector<7x512xbf16>, vector<512x512xbf16>, vector<7x512xf32> -> vector<7x512xf32>
    %72 = arith.addf %68, %71 : vector<7x512xf32>
    %c1_80 = arith.constant 1 : index
    %c2_81 = arith.constant 2 : index
    %c0_82 = arith.constant 0 : index
    %c0_83 = arith.constant 0 : index
    %73 = vector.load %arg4[%c1_80, %c2_81, %c0_82, %c0_83] : memref<2x3x512x512xbf16, #tpu.memory_space<vmem>>, vector<1x1x512x512xbf16>
    %74 = vector.shape_cast %73 : vector<1x1x512x512xbf16> to vector<512x512xbf16>
    %cst_84 = arith.constant dense<0.000000e+00> : vector<7x512xf32>
    %75 = tpu.matmul %49, %74, %cst_84 {dimension_numbers = #tpu.dot_dimension_numbers<[1], [0], [0], [1], [0, 0, 1, 1], [], []>} : vector<7x512xbf16>, vector<512x512xbf16>, vector<7x512xf32> -> vector<7x512xf32>
    %76 = arith.addf %72, %75 : vector<7x512xf32>
    %77 = arith.maximumf %65, %76 : vector<7x512xf32>
    %c0_85 = arith.constant 0 : index
    %c0_86 = arith.constant 0 : index
    %c0_87 = arith.constant 0 : index
    %c0_88 = arith.constant 0 : index
    %78 = vector.load %arg4[%c0_85, %c0_86, %c0_87, %c0_88] : memref<2x3x512x512xbf16, #tpu.memory_space<vmem>>, vector<1x1x512x512xbf16>
    %79 = vector.shape_cast %78 : vector<1x1x512x512xbf16> to vector<512x512xbf16>
    %cst_89 = arith.constant dense<0.000000e+00> : vector<7x512xf32>
    %80 = tpu.matmul %24, %79, %cst_89 {dimension_numbers = #tpu.dot_dimension_numbers<[1], [0], [0], [1], [0, 0, 1, 1], [], []>} : vector<7x512xbf16>, vector<512x512xbf16>, vector<7x512xf32> -> vector<7x512xf32>
    %c0_90 = arith.constant 0 : index
    %c1_91 = arith.constant 1 : index
    %c0_92 = arith.constant 0 : index
    %c0_93 = arith.constant 0 : index
    %81 = vector.load %arg4[%c0_90, %c1_91, %c0_92, %c0_93] : memref<2x3x512x512xbf16, #tpu.memory_space<vmem>>, vector<1x1x512x512xbf16>
    %82 = vector.shape_cast %81 : vector<1x1x512x512xbf16> to vector<512x512xbf16>
    %cst_94 = arith.constant dense<0.000000e+00> : vector<7x512xf32>
    %83 = tpu.matmul %49, %82, %cst_94 {dimension_numbers = #tpu.dot_dimension_numbers<[1], [0], [0], [1], [0, 0, 1, 1], [], []>} : vector<7x512xbf16>, vector<512x512xbf16>, vector<7x512xf32> -> vector<7x512xf32>
    %84 = arith.addf %80, %83 : vector<7x512xf32>
    %c0_95 = arith.constant 0 : index
    %c2_96 = arith.constant 2 : index
    %c0_97 = arith.constant 0 : index
    %c0_98 = arith.constant 0 : index
    %85 = vector.load %arg4[%c0_95, %c2_96, %c0_97, %c0_98] : memref<2x3x512x512xbf16, #tpu.memory_space<vmem>>, vector<1x1x512x512xbf16>
    %86 = vector.shape_cast %85 : vector<1x1x512x512xbf16> to vector<512x512xbf16>
    %cst_99 = arith.constant dense<0.000000e+00> : vector<7x512xf32>
    %87 = tpu.matmul %54, %86, %cst_99 {dimension_numbers = #tpu.dot_dimension_numbers<[1], [0], [0], [1], [0, 0, 1, 1], [], []>} : vector<7x512xbf16>, vector<512x512xbf16>, vector<7x512xf32> -> vector<7x512xf32>
    %88 = arith.addf %84, %87 : vector<7x512xf32>
    %89 = arith.maximumf %77, %88 : vector<7x512xf32>
    %c1_100 = arith.constant 1 : index
    %c0_101 = arith.constant 0 : index
    %c0_102 = arith.constant 0 : index
    %c0_103 = arith.constant 0 : index
    %90 = vector.load %arg4[%c1_100, %c0_101, %c0_102, %c0_103] : memref<2x3x512x512xbf16, #tpu.memory_space<vmem>>, vector<1x1x512x512xbf16>
    %91 = vector.shape_cast %90 : vector<1x1x512x512xbf16> to vector<512x512xbf16>
    %cst_104 = arith.constant dense<0.000000e+00> : vector<7x512xf32>
    %92 = tpu.matmul %24, %91, %cst_104 {dimension_numbers = #tpu.dot_dimension_numbers<[1], [0], [0], [1], [0, 0, 1, 1], [], []>} : vector<7x512xbf16>, vector<512x512xbf16>, vector<7x512xf32> -> vector<7x512xf32>
    %c1_105 = arith.constant 1 : index
    %c1_106 = arith.constant 1 : index
    %c0_107 = arith.constant 0 : index
    %c0_108 = arith.constant 0 : index
    %93 = vector.load %arg4[%c1_105, %c1_106, %c0_107, %c0_108] : memref<2x3x512x512xbf16, #tpu.memory_space<vmem>>, vector<1x1x512x512xbf16>
    %94 = vector.shape_cast %93 : vector<1x1x512x512xbf16> to vector<512x512xbf16>
    %cst_109 = arith.constant dense<0.000000e+00> : vector<7x512xf32>
    %95 = tpu.matmul %49, %94, %cst_109 {dimension_numbers = #tpu.dot_dimension_numbers<[1], [0], [0], [1], [0, 0, 1, 1], [], []>} : vector<7x512xbf16>, vector<512x512xbf16>, vector<7x512xf32> -> vector<7x512xf32>
    %96 = arith.addf %92, %95 : vector<7x512xf32>
    %c1_110 = arith.constant 1 : index
    %c2_111 = arith.constant 2 : index
    %c0_112 = arith.constant 0 : index
    %c0_113 = arith.constant 0 : index
    %97 = vector.load %arg4[%c1_110, %c2_111, %c0_112, %c0_113] : memref<2x3x512x512xbf16, #tpu.memory_space<vmem>>, vector<1x1x512x512xbf16>
    %98 = vector.shape_cast %97 : vector<1x1x512x512xbf16> to vector<512x512xbf16>
    %cst_114 = arith.constant dense<0.000000e+00> : vector<7x512xf32>
    %99 = tpu.matmul %54, %98, %cst_114 {dimension_numbers = #tpu.dot_dimension_numbers<[1], [0], [0], [1], [0, 0, 1, 1], [], []>} : vector<7x512xbf16>, vector<512x512xbf16>, vector<7x512xf32> -> vector<7x512xf32>
    %100 = arith.addf %96, %99 : vector<7x512xf32>
    %101 = arith.maximumf %89, %100 : vector<7x512xf32>
    %c0_115 = arith.constant 0 : index
    %c0_116 = arith.constant 0 : index
    %102 = vector.load %arg5[%c0_115, %c0_116] : memref<1x512xf32, #tpu.memory_space<vmem>>, vector<1x512xf32>
    %103 = vector.broadcast %102 : vector<1x512xf32> to vector<7x512xf32>
    %104 = arith.addf %101, %103 : vector<7x512xf32>
    %cst_117 = arith.constant 0.000000e+00 : f32
    %105 = vector.broadcast %cst_117 : f32 to vector<7x512xf32>
    %106 = arith.maximumf %104, %105 : vector<7x512xf32>
    %107 = arith.truncf %106 : vector<7x512xf32> to vector<7x512xbf16>
    %108 = vector.extract_strided_slice %107 {offsets = [0, 0], sizes = [1, 512], strides = [1, 1]} : vector<7x512xbf16> to vector<1x512xbf16>
    %c0_118 = arith.constant 0 : index
    %c0_119 = arith.constant 0 : index
    %c0_120 = arith.constant 0 : index
    %109 = vector.load %arg6[%c0_118, %c0_119, %c0_120] : memref<7x512x128xbf16, #tpu.memory_space<vmem>>, vector<1x512x128xbf16>
    %110 = vector.shape_cast %109 : vector<1x512x128xbf16> to vector<512x128xbf16>
    %cst_121 = arith.constant dense<0.000000e+00> : vector<1x128xf32>
    %111 = tpu.matmul %108, %110, %cst_121 {dimension_numbers = #tpu.dot_dimension_numbers<[1], [0], [0], [1], [0, 0, 1, 1], [], []>} : vector<1x512xbf16>, vector<512x128xbf16>, vector<1x128xf32> -> vector<1x128xf32>
    %112 = vector.extract_strided_slice %107 {offsets = [1, 0], sizes = [1, 512], strides = [1, 1]} : vector<7x512xbf16> to vector<1x512xbf16>
    %c1_122 = arith.constant 1 : index
    %c0_123 = arith.constant 0 : index
    %c0_124 = arith.constant 0 : index
    %113 = vector.load %arg6[%c1_122, %c0_123, %c0_124] : memref<7x512x128xbf16, #tpu.memory_space<vmem>>, vector<1x512x128xbf16>
    %114 = vector.shape_cast %113 : vector<1x512x128xbf16> to vector<512x128xbf16>
    %cst_125 = arith.constant dense<0.000000e+00> : vector<1x128xf32>
    %115 = tpu.matmul %112, %114, %cst_125 {dimension_numbers = #tpu.dot_dimension_numbers<[1], [0], [0], [1], [0, 0, 1, 1], [], []>} : vector<1x512xbf16>, vector<512x128xbf16>, vector<1x128xf32> -> vector<1x128xf32>
    %116 = arith.addf %111, %115 : vector<1x128xf32>
    %117 = vector.extract_strided_slice %107 {offsets = [2, 0], sizes = [1, 512], strides = [1, 1]} : vector<7x512xbf16> to vector<1x512xbf16>
    %c2_126 = arith.constant 2 : index
    %c0_127 = arith.constant 0 : index
    %c0_128 = arith.constant 0 : index
    %118 = vector.load %arg6[%c2_126, %c0_127, %c0_128] : memref<7x512x128xbf16, #tpu.memory_space<vmem>>, vector<1x512x128xbf16>
    %119 = vector.shape_cast %118 : vector<1x512x128xbf16> to vector<512x128xbf16>
    %cst_129 = arith.constant dense<0.000000e+00> : vector<1x128xf32>
    %120 = tpu.matmul %117, %119, %cst_129 {dimension_numbers = #tpu.dot_dimension_numbers<[1], [0], [0], [1], [0, 0, 1, 1], [], []>} : vector<1x512xbf16>, vector<512x128xbf16>, vector<1x128xf32> -> vector<1x128xf32>
    %121 = arith.addf %116, %120 : vector<1x128xf32>
    %122 = vector.extract_strided_slice %107 {offsets = [3, 0], sizes = [1, 512], strides = [1, 1]} : vector<7x512xbf16> to vector<1x512xbf16>
    %c3 = arith.constant 3 : index
    %c0_130 = arith.constant 0 : index
    %c0_131 = arith.constant 0 : index
    %123 = vector.load %arg6[%c3, %c0_130, %c0_131] : memref<7x512x128xbf16, #tpu.memory_space<vmem>>, vector<1x512x128xbf16>
    %124 = vector.shape_cast %123 : vector<1x512x128xbf16> to vector<512x128xbf16>
    %cst_132 = arith.constant dense<0.000000e+00> : vector<1x128xf32>
    %125 = tpu.matmul %122, %124, %cst_132 {dimension_numbers = #tpu.dot_dimension_numbers<[1], [0], [0], [1], [0, 0, 1, 1], [], []>} : vector<1x512xbf16>, vector<512x128xbf16>, vector<1x128xf32> -> vector<1x128xf32>
    %126 = arith.addf %121, %125 : vector<1x128xf32>
    %127 = vector.extract_strided_slice %107 {offsets = [4, 0], sizes = [1, 512], strides = [1, 1]} : vector<7x512xbf16> to vector<1x512xbf16>
    %c4 = arith.constant 4 : index
    %c0_133 = arith.constant 0 : index
    %c0_134 = arith.constant 0 : index
    %128 = vector.load %arg6[%c4, %c0_133, %c0_134] : memref<7x512x128xbf16, #tpu.memory_space<vmem>>, vector<1x512x128xbf16>
    %129 = vector.shape_cast %128 : vector<1x512x128xbf16> to vector<512x128xbf16>
    %cst_135 = arith.constant dense<0.000000e+00> : vector<1x128xf32>
    %130 = tpu.matmul %127, %129, %cst_135 {dimension_numbers = #tpu.dot_dimension_numbers<[1], [0], [0], [1], [0, 0, 1, 1], [], []>} : vector<1x512xbf16>, vector<512x128xbf16>, vector<1x128xf32> -> vector<1x128xf32>
    %131 = arith.addf %126, %130 : vector<1x128xf32>
    %132 = vector.extract_strided_slice %107 {offsets = [5, 0], sizes = [1, 512], strides = [1, 1]} : vector<7x512xbf16> to vector<1x512xbf16>
    %c5 = arith.constant 5 : index
    %c0_136 = arith.constant 0 : index
    %c0_137 = arith.constant 0 : index
    %133 = vector.load %arg6[%c5, %c0_136, %c0_137] : memref<7x512x128xbf16, #tpu.memory_space<vmem>>, vector<1x512x128xbf16>
    %134 = vector.shape_cast %133 : vector<1x512x128xbf16> to vector<512x128xbf16>
    %cst_138 = arith.constant dense<0.000000e+00> : vector<1x128xf32>
    %135 = tpu.matmul %132, %134, %cst_138 {dimension_numbers = #tpu.dot_dimension_numbers<[1], [0], [0], [1], [0, 0, 1, 1], [], []>} : vector<1x512xbf16>, vector<512x128xbf16>, vector<1x128xf32> -> vector<1x128xf32>
    %136 = arith.addf %131, %135 : vector<1x128xf32>
    %137 = vector.extract_strided_slice %107 {offsets = [6, 0], sizes = [1, 512], strides = [1, 1]} : vector<7x512xbf16> to vector<1x512xbf16>
    %c6 = arith.constant 6 : index
    %c0_139 = arith.constant 0 : index
    %c0_140 = arith.constant 0 : index
    %138 = vector.load %arg6[%c6, %c0_139, %c0_140] : memref<7x512x128xbf16, #tpu.memory_space<vmem>>, vector<1x512x128xbf16>
    %139 = vector.shape_cast %138 : vector<1x512x128xbf16> to vector<512x128xbf16>
    %cst_141 = arith.constant dense<0.000000e+00> : vector<1x128xf32>
    %140 = tpu.matmul %137, %139, %cst_141 {dimension_numbers = #tpu.dot_dimension_numbers<[1], [0], [0], [1], [0, 0, 1, 1], [], []>} : vector<1x512xbf16>, vector<512x128xbf16>, vector<1x128xf32> -> vector<1x128xf32>
    %141 = arith.addf %136, %140 : vector<1x128xf32>
    %c0_142 = arith.constant 0 : index
    %c0_143 = arith.constant 0 : index
    %142 = vector.load %arg7[%c0_142, %c0_143] : memref<1x128xf32, #tpu.memory_space<vmem>>, vector<1x128xf32>
    %143 = arith.addf %141, %142 : vector<1x128xf32>
    %cst_144 = arith.constant 0.000000e+00 : f32
    %144 = vector.broadcast %cst_144 : f32 to vector<1x128xf32>
    %145 = arith.maximumf %143, %144 : vector<1x128xf32>
    %146 = arith.truncf %145 : vector<1x128xf32> to vector<1x128xbf16>
    %c0_145 = arith.constant 0 : index
    %c0_146 = arith.constant 0 : index
    %147 = vector.load %arg8[%c0_145, %c0_146] : memref<128x128xbf16, #tpu.memory_space<vmem>>, vector<128x128xbf16>
    %cst_147 = arith.constant dense<0.000000e+00> : vector<1x128xf32>
    %148 = tpu.matmul %146, %147, %cst_147 {dimension_numbers = #tpu.dot_dimension_numbers<[1], [0], [0], [1], [0, 0, 1, 1], [], []>} : vector<1x128xbf16>, vector<128x128xbf16>, vector<1x128xf32> -> vector<1x128xf32>
    %c0_148 = arith.constant 0 : index
    %c0_149 = arith.constant 0 : index
    %149 = vector.load %arg9[%c0_148, %c0_149] : memref<1x128xf32, #tpu.memory_space<vmem>>, vector<1x128xf32>
    %150 = arith.addf %148, %149 : vector<1x128xf32>
    %c0_150 = arith.constant 0 : index
    %c0_151 = arith.constant 0 : index
    %c0_152 = arith.constant 0 : index
    %151 = vector.load %arg10[%c0_150, %c0_151, %c0_152] : memref<1x1x128xf32, #tpu.memory_space<vmem>>, vector<1x1x128xf32>
    %152 = vector.shape_cast %151 : vector<1x1x128xf32> to vector<1x128xf32>
    %153 = vector.shape_cast %150 : vector<1x128xf32> to vector<1x1x128xf32>
    tpu.vector_store %arg10[%c0_150, %c0_151, %c0_152], %153 {strides = array<i32>} : memref<1x1x128xf32, #tpu.memory_space<vmem>>, vector<1x1x128xf32>,
    return
  }
  func.func @transform_0(%arg0: i32) -> (i32, i32, i32, i32, i32) {
    %c0_i32 = arith.constant 0 : i32
    %c0_i32_0 = arith.constant 0 : i32
    %c0_i32_1 = arith.constant 0 : i32
    %c0_i32_2 = arith.constant 0 : i32
    %c0_i32_3 = arith.constant 0 : i32
    return %arg0, %c0_i32, %c0_i32_0, %c0_i32_1, %c0_i32_2 : i32, i32, i32, i32, i32
  }
  func.func @transform_1(%arg0: i32) -> (i32, i32, i32) {
    %c0_i32 = arith.constant 0 : i32
    %c0_i32_0 = arith.constant 0 : i32
    %c0_i32_1 = arith.constant 0 : i32
    %c0_i32_2 = arith.constant 0 : i32
    return %c0_i32, %c0_i32_0, %c0_i32_1 : i32, i32, i32
  }
  func.func @transform_2(%arg0: i32) -> (i32, i32) {
    %c0_i32 = arith.constant 0 : i32
    %c0_i32_0 = arith.constant 0 : i32
    %c0_i32_1 = arith.constant 0 : i32
    return %c0_i32, %c0_i32_0 : i32, i32
  }
  func.func @transform_3(%arg0: i32) -> (i32, i32, i32, i32) {
    %c0_i32 = arith.constant 0 : i32
    %c0_i32_0 = arith.constant 0 : i32
    %c0_i32_1 = arith.constant 0 : i32
    %c0_i32_2 = arith.constant 0 : i32
    %c0_i32_3 = arith.constant 0 : i32
    return %c0_i32, %c0_i32_0, %c0_i32_1, %c0_i32_2 : i32, i32, i32, i32
  }
  func.func @transform_4(%arg0: i32) -> (i32, i32) {
    %c0_i32 = arith.constant 0 : i32
    %c0_i32_0 = arith.constant 0 : i32
    %c0_i32_1 = arith.constant 0 : i32
    return %c0_i32, %c0_i32_0 : i32, i32
  }
  func.func @transform_5(%arg0: i32) -> (i32, i32, i32) {
    %c0_i32 = arith.constant 0 : i32
    %c0_i32_0 = arith.constant 0 : i32
    %c0_i32_1 = arith.constant 0 : i32
    %c0_i32_2 = arith.constant 0 : i32
    return %c0_i32, %c0_i32_0, %c0_i32_1 : i32, i32, i32
  }
  func.func @transform_6(%arg0: i32) -> (i32, i32) {
    %c0_i32 = arith.constant 0 : i32
    %c0_i32_0 = arith.constant 0 : i32
    %c0_i32_1 = arith.constant 0 : i32
    return %c0_i32, %c0_i32_0 : i32, i32
  }
  func.func @transform_7(%arg0: i32) -> (i32, i32) {
    %c0_i32 = arith.constant 0 : i32
    %c0_i32_0 = arith.constant 0 : i32
    %c0_i32_1 = arith.constant 0 : i32
    return %c0_i32, %c0_i32_0 : i32, i32
  }
  func.func @transform_8(%arg0: i32) -> (i32, i32) {
    %c0_i32 = arith.constant 0 : i32
    %c0_i32_0 = arith.constant 0 : i32
    %c0_i32_1 = arith.constant 0 : i32
    return %c0_i32, %c0_i32_0 : i32, i32
  }
  func.func @transform_9(%arg0: i32) -> (i32, i32, i32) {
    %c0_i32 = arith.constant 0 : i32
    %c0_i32_0 = arith.constant 0 : i32
    %c0_i32_1 = arith.constant 0 : i32
    return %arg0, %c0_i32, %c0_i32_0 : i32, i32, i32
  }
}

</mosaic_0001>

<llo_original>
// kernel: simple_cnn_forward.1
$region0: #{simple_cnn_forward.1}
  #allocation0 [shape = 'u32[]', space=smem, size = 0x4, offset = 0x4, fixed_abs, tag = 'smem constant byte address 0x4 - core index']
  #allocation1 [shape = 'u32[144,128]{1,0:T(1,128)}', space=vmem, size = 0x12000, scoped, tag = 'internal scratch']
  %s0 = inlined_call_operand.vmem [shape: bf16[2,2,2,7,128], index: 0, kind: input, shape index: {}]
  %s1 = inlined_call_operand.hbm [shape: bf16[2,128,512], index: 1, kind: input, shape index: {}]
  %s2 = inlined_call_operand.hbm [shape: f32[1,512], index: 2, kind: input, shape index: {}]
  %s3 = inlined_call_operand.hbm [shape: bf16[2,3,512,512], index: 3, kind: input, shape index: {}]
  %s4 = inlined_call_operand.hbm [shape: f32[1,512], index: 4, kind: input, shape index: {}]
  %s5 = inlined_call_operand.hbm [shape: bf16[7,512,128], index: 5, kind: input, shape index: {}]
  %s6 = inlined_call_operand.hbm [shape: f32[1,128], index: 6, kind: input, shape index: {}]
  %s7 = inlined_call_operand.hbm [shape: bf16[128,128], index: 7, kind: input, shape index: {}]
  %s8 = inlined_call_operand.hbm [shape: f32[1,128], index: 8, kind: input, shape index: {}]
  %s9 = inlined_call_operand.hbm [shape: f32[2,1,128], index: 9, kind: output, shape index: {}]
  %s10 = sld [smem:[#allocation0]]
  $region101: #{simple_cnn_forward.1} parent=0
    _
  %s12 = ssub.s32 1, %s10
  %s13 = scalar_select 0, %s12, %s10
  $region1: #{simple_cnn_forward.1} parent=0
    #allocation2 [shape = 'u8[262144]{0}', space=vmem, size = 0x40000, scoped, tag = 'input window, operand 1, single buffered']
    #allocation3 [shape = 's32[2]{0}', space=sflag, size = 0x8, scoped, tag = 'scoped memory for simple_cnn_forward.1']
    #allocation4 [shape = 's32[2]{0}', space=sflag, size = 0x8, scoped, tag = 'scoped memory for simple_cnn_forward.1']
    #allocation5 [shape = 'u8[2048]{0}', space=vmem, size = 0x800, scoped, tag = 'input window, operand 2, single buffered']
    #allocation6 [shape = 's32[1]{0}', space=sflag, size = 0x4, scoped, tag = 'scoped memory for simple_cnn_forward.1']
    #allocation7 [shape = 'u8[3145728]{0}', space=vmem, size = 0x300000, scoped, tag = 'input window, operand 3, single buffered']
    #allocation8 [shape = 'u8[2048]{0}', space=vmem, size = 0x800, scoped, tag = 'input window, operand 4, single buffered']
    #allocation9 [shape = 's32[1]{0}', space=sflag, size = 0x4, scoped, tag = 'scoped memory for simple_cnn_forward.1']
    #allocation10 [shape = 'u8[917504]{0}', space=vmem, size = 0xe0000, scoped, tag = 'input window, operand 5, single buffered']
    #allocation11 [shape = 'u8[512]{0}', space=vmem, size = 0x400, scoped, tag = 'input window, operand 6, single buffered']
    #allocation12 [shape = 's32[1]{0}', space=sflag, size = 0x4, scoped, tag = 'scoped memory for simple_cnn_forward.1']
    #allocation13 [shape = 'u8[32768]{0}', space=vmem, size = 0x8000, scoped, tag = 'input window, operand 7, single buffered']
    #allocation14 [shape = 'u8[512]{0}', space=vmem, size = 0x400, scoped, tag = 'input window, operand 8, single buffered']
    #allocation15 [shape = 's32[1]{0}', space=sflag, size = 0x4, scoped, tag = 'scoped memory for simple_cnn_forward.1']
    #allocation16 [shape = 'u8[1024]{0}', space=vmem, size = 0x400, scoped, tag = 'output window, operand 0']
    %14 = vsyncpa [#allocation3], 0
    %15 = vsyncpa [#allocation6], 0
    %16 = vsyncpa [#allocation9], 0
    %17 = vsyncpa [#allocation12], 0
    %18 = vsyncpa [#allocation15], 0
    %19 = vsyncpa [#allocation4], 0
    %s20 = scalar_lea.sflag [#allocation4], 1
    %21 = vsyncpa %s20, 0
    loop: start=0, step=1, limit=4
    $region2: #{simple_cnn_forward.1} parent=1 // loop_pre_header
      _
    $region3: #{simple_cnn_forward.1} parent=1 // loop_header
      %s23 = sphi 0, %s27
      %p24 = scmp.ge.s32.totalorder %s23, 4
      %s33 = sphi 0, %s35
      %s36 = sphi 0, %s33
      %s37 = sphi 0, %s36
      %s53 = sphi 0, %s37
      %s57 = sphi 0, %s57
      %s59 = sphi 0, %s57
      %s60 = sphi 0, %s59
      %s74 = sphi 0, %s60
      %s78 = sphi 0, %s78
      %s80 = sphi 0, %s78
      %s81 = sphi 0, %s80
      %s95 = sphi 0, %s81
      %s99 = sphi 0, %s99
      %s101 = sphi 0, %s99
      %s102 = sphi 0, %s101
      %s116 = sphi 0, %s102
      %s120 = sphi 0, %s120
      %s122 = sphi 0, %s120
      %s123 = sphi 0, %s122
      %s137 = sphi 0, %s123
      %s141 = sphi 0, %s141
      %s143 = sphi 0, %s141
      %s144 = sphi 0, %s143
      %s158 = sphi 0, %s144
      %s162 = sphi 0, %s162
      %s164 = sphi 0, %s162
      %s165 = sphi 0, %s164
      %s179 = sphi 0, %s165
      %s183 = sphi 0, %s183
      %s185 = sphi 0, %s183
      %s186 = sphi 0, %s185
      %s200 = sphi 0, %s186
      %s204 = sphi 0, %s204
      %s206 = sphi 0, %s204
      %s207 = sphi 0, %s206
      %s221 = sphi 0, %s207
      %s227 = sphi 0, %s229
      %s230 = sphi 0, %s227
      %s231 = sphi 0, %s230
      %s247 = sphi 0, %s231
    $region4: #{simple_cnn_forward.1} parent=1 // loop_header_branch
      %26 = sbr.rel (%p24) target = $region8
    $region5: #{simple_cnn_forward.1} parent=1 // loop_body
      %s28 = ssub.s32 %s23, 1
      %s29 = ssub.s32 %s23, 2
      %s30 = sadd.s32 %s23, 1
      %s31 = ssub.s32 %s23, %s30
      %p32 = scmp.eq.s32.totalorder %s31, 0
      %s34 = sadd.s32 %s33, 1
      %s35 = scalar_select %p32, %s33, %s34
      %p38 = pneg %p32
      %p39 = scmp.eq.s32.totalorder %s23, 1
      %p40 = por %p38, %p39
      %p41 = scmp.ne.s32.totalorder %s33, %s36
      %p42 = scmp.eq.s32.totalorder %s23, 0
      %p43 = por %p41, %p42
      %p44 = scmp.ne.s32.totalorder %s33, %s36
      %p45 = scmp.eq.s32.totalorder %s28, 1
      %p46 = por %p44, %p45
      %p47 = scmp.ne.s32.totalorder %s36, %s37
      %p48 = scmp.eq.s32.totalorder %s28, 0
      %p49 = por %p47, %p48
      %p50 = scmp.ne.s32.totalorder %s36, %s37
      %p51 = scmp.eq.s32.totalorder %s29, 1
      %p52 = por %p50, %p51
      %p54 = scmp.ne.s32.totalorder %s37, %s53
      %p55 = scmp.eq.s32.totalorder %s29, 0
      %p56 = por %p54, %p55
      %s58 = sadd.s32 %s57, 1
      %p61 = scmp.eq.s32.totalorder %s23, 1
      %p62 = scmp.ne.s32.totalorder %s57, %s59
      %p63 = scmp.eq.s32.totalorder %s23, 0
      %p64 = por %p62, %p63
      %p65 = scmp.ne.s32.totalorder %s57, %s59
      %p66 = scmp.eq.s32.totalorder %s28, 1
      %p67 = por %p65, %p66
      %p68 = scmp.ne.s32.totalorder %s59, %s60
      %p69 = scmp.eq.s32.totalorder %s28, 0
      %p70 = por %p68, %p69
      %p71 = scmp.ne.s32.totalorder %s59, %s60
      %p72 = scmp.eq.s32.totalorder %s29, 1
      %p73 = por %p71, %p72
      %p75 = scmp.ne.s32.totalorder %s60, %s74
      %p76 = scmp.eq.s32.totalorder %s29, 0
      %p77 = por %p75, %p76
      %s79 = sadd.s32 %s78, 1
      %p82 = scmp.eq.s32.totalorder %s23, 1
      %p83 = scmp.ne.s32.totalorder %s78, %s80
      %p84 = scmp.eq.s32.totalorder %s23, 0
      %p85 = por %p83, %p84
      %p86 = scmp.ne.s32.totalorder %s78, %s80
      %p87 = scmp.eq.s32.totalorder %s28, 1
      %p88 = por %p86, %p87
      %p89 = scmp.ne.s32.totalorder %s80, %s81
      %p90 = scmp.eq.s32.totalorder %s28, 0
      %p91 = por %p89, %p90
      %p92 = scmp.ne.s32.totalorder %s80, %s81
      %p93 = scmp.eq.s32.totalorder %s29, 1
      %p94 = por %p92, %p93
      %p96 = scmp.ne.s32.totalorder %s81, %s95
      %p97 = scmp.eq.s32.totalorder %s29, 0
      %p98 = por %p96, %p97
      %s100 = sadd.s32 %s99, 1
      %p103 = scmp.eq.s32.totalorder %s23, 1
      %p104 = scmp.ne.s32.totalorder %s99, %s101
      %p105 = scmp.eq.s32.totalorder %s23, 0
      %p106 = por %p104, %p105
      %p107 = scmp.ne.s32.totalorder %s99, %s101
      %p108 = scmp.eq.s32.totalorder %s28, 1
      %p109 = por %p107, %p108
      %p110 = scmp.ne.s32.totalorder %s101, %s102
      %p111 = scmp.eq.s32.totalorder %s28, 0
      %p112 = por %p110, %p111
      %p113 = scmp.ne.s32.totalorder %s101, %s102
      %p114 = scmp.eq.s32.totalorder %s29, 1
      %p115 = por %p113, %p114
      %p117 = scmp.ne.s32.totalorder %s102, %s116
      %p118 = scmp.eq.s32.totalorder %s29, 0
      %p119 = por %p117, %p118
      %s121 = sadd.s32 %s120, 1
      %p124 = scmp.eq.s32.totalorder %s23, 1
      %p125 = scmp.ne.s32.totalorder %s120, %s122
      %p126 = scmp.eq.s32.totalorder %s23, 0
      %p127 = por %p125, %p126
      %p128 = scmp.ne.s32.totalorder %s120, %s122
      %p129 = scmp.eq.s32.totalorder %s28, 1
      %p130 = por %p128, %p129
      %p131 = scmp.ne.s32.totalorder %s122, %s123
      %p132 = scmp.eq.s32.totalorder %s28, 0
      %p133 = por %p131, %p132
      %p134 = scmp.ne.s32.totalorder %s122, %s123
      %p135 = scmp.eq.s32.totalorder %s29, 1
      %p136 = por %p134, %p135
      %p138 = scmp.ne.s32.totalorder %s123, %s137
      %p139 = scmp.eq.s32.totalorder %s29, 0
      %p140 = por %p138, %p139
      %s142 = sadd.s32 %s141, 1
      %p145 = scmp.eq.s32.totalorder %s23, 1
      %p146 = scmp.ne.s32.totalorder %s141, %s143
      %p147 = scmp.eq.s32.totalorder %s23, 0
      %p148 = por %p146, %p147
      %p149 = scmp.ne.s32.totalorder %s141, %s143
      %p150 = scmp.eq.s32.totalorder %s28, 1
      %p151 = por %p149, %p150
      %p152 = scmp.ne.s32.totalorder %s143, %s144
      %p153 = scmp.eq.s32.totalorder %s28, 0
      %p154 = por %p152, %p153
      %p155 = scmp.ne.s32.totalorder %s143, %s144
      %p156 = scmp.eq.s32.totalorder %s29, 1
      %p157 = por %p155, %p156
      %p159 = scmp.ne.s32.totalorder %s144, %s158
      %p160 = scmp.eq.s32.totalorder %s29, 0
      %p161 = por %p159, %p160
      %s163 = sadd.s32 %s162, 1
      %p166 = scmp.eq.s32.totalorder %s23, 1
      %p167 = scmp.ne.s32.totalorder %s162, %s164
      %p168 = scmp.eq.s32.totalorder %s23, 0
      %p169 = por %p167, %p168
      %p170 = scmp.ne.s32.totalorder %s162, %s164
      %p171 = scmp.eq.s32.totalorder %s28, 1
      %p172 = por %p170, %p171
      %p173 = scmp.ne.s32.totalorder %s164, %s165
      %p174 = scmp.eq.s32.totalorder %s28, 0
      %p175 = por %p173, %p174
      %p176 = scmp.ne.s32.totalorder %s164, %s165
      %p177 = scmp.eq.s32.totalorder %s29, 1
      %p178 = por %p176, %p177
      %p180 = scmp.ne.s32.totalorder %s165, %s179
      %p181 = scmp.eq.s32.totalorder %s29, 0
      %p182 = por %p180, %p181
      %s184 = sadd.s32 %s183, 1
      %p187 = scmp.eq.s32.totalorder %s23, 1
      %p188 = scmp.ne.s32.totalorder %s183, %s185
      %p189 = scmp.eq.s32.totalorder %s23, 0
      %p190 = por %p188, %p189
      %p191 = scmp.ne.s32.totalorder %s183, %s185
      %p192 = scmp.eq.s32.totalorder %s28, 1
      %p193 = por %p191, %p192
      %p194 = scmp.ne.s32.totalorder %s185, %s186
      %p195 = scmp.eq.s32.totalorder %s28, 0
      %p196 = por %p194, %p195
      %p197 = scmp.ne.s32.totalorder %s185, %s186
      %p198 = scmp.eq.s32.totalorder %s29, 1
      %p199 = por %p197, %p198
      %p201 = scmp.ne.s32.totalorder %s186, %s200
      %p202 = scmp.eq.s32.totalorder %s29, 0
      %p203 = por %p201, %p202
      %s205 = sadd.s32 %s204, 1
      %p208 = scmp.eq.s32.totalorder %s23, 1
      %p209 = scmp.ne.s32.totalorder %s204, %s206
      %p210 = scmp.eq.s32.totalorder %s23, 0
      %p211 = por %p209, %p210
      %p212 = scmp.ne.s32.totalorder %s204, %s206
      %p213 = scmp.eq.s32.totalorder %s28, 1
      %p214 = por %p212, %p213
      %p215 = scmp.ne.s32.totalorder %s206, %s207
      %p216 = scmp.eq.s32.totalorder %s28, 0
      %p217 = por %p215, %p216
      %p218 = scmp.ne.s32.totalorder %s206, %s207
      %p219 = scmp.eq.s32.totalorder %s29, 1
      %p220 = por %p218, %p219
      %p222 = scmp.ne.s32.totalorder %s207, %s221
      %p223 = scmp.eq.s32.totalorder %s29, 0
      %p224 = por %p222, %p223
      %s225 = ssub.s32 %s23, %s30
      %p226 = scmp.eq.s32.totalorder %s225, 0
      %s228 = sadd.s32 %s227, 1
      %s229 = scalar_select %p226, %s227, %s228
      %p232 = pneg %p226
      %p233 = scmp.eq.s32.totalorder %s23, 1
      %p234 = por %p232, %p233
      %p235 = scmp.ne.s32.totalorder %s227, %s230
      %p236 = scmp.eq.s32.totalorder %s23, 0
      %p237 = por %p235, %p236
      %p238 = scmp.ne.s32.totalorder %s227, %s230
      %p239 = scmp.eq.s32.totalorder %s28, 1
      %p240 = por %p238, %p239
      %p241 = scmp.ne.s32.totalorder %s230, %s231
      %p242 = scmp.eq.s32.totalorder %s28, 0
      %p243 = por %p241, %p242
      %p244 = scmp.ne.s32.totalorder %s230, %s231
      %p245 = scmp.eq.s32.totalorder %s29, 1
      %p246 = por %p244, %p245
      %p248 = scmp.ne.s32.totalorder %s231, %s247
      %p249 = scmp.eq.s32.totalorder %s29, 0
      %p250 = por %p248, %p249
      %p251 = scmp.le.s32.totalorder 1, %s23
      %p252 = scmp.lt.s32.totalorder %s23, 3
      %p253 = pnand %p251, %p252
      %p254 = pneg %p253
      // Predicated region
      $region9: #{simple_cnn_forward.1} parent=5 // pred_check
        _
      $region10: #{simple_cnn_forward.1} parent=5 // pred_check_branch
        %256 = sbr.rel (%p253) target = $region12
      $region11: #{simple_cnn_forward.1} parent=5 // pred_region
        %s257 = ssub.s32 %s23, 1
        // Predicated region
        $region13: #{simple_cnn_forward.1} parent=11 // pred_check
          %p258 = pneg %p70
        $region14: #{simple_cnn_forward.1} parent=11 // pred_check_branch
          %260 = sbr.rel (%p258) target = $region16
        $region15: #{simple_cnn_forward.1} parent=11 // pred_region
          %s262 = ssub.s32 8192, 8192
          %263 = vsyncadd [#allocation3], %s262
          %s264 = sshll.u32 [#allocation2], 4
          %s265 = int_to_ptr.vmem [resolvable:$true] %s264
          %270 = dma.hbm_to_vmem [thread:$0]  %s1, 8192, %s265, [#allocation3], 256, 256, 16
        $region16: #{simple_cnn_forward.1} parent=11 // pred_fallthru
          _
        // Predicated region
        $region17: #{simple_cnn_forward.1} parent=11 // pred_check
          %p271 = pneg %p91
        $region18: #{simple_cnn_forward.1} parent=11 // pred_check_branch
          %273 = sbr.rel (%p271) target = $region20
        $region19: #{simple_cnn_forward.1} parent=11 // pred_region
          %s275 = ssub.s32 64, 64
          %276 = vsyncadd [#allocation6], %s275
          %s278 = sshll.u32 [#allocation5], 4
          %s279 = int_to_ptr.vmem [resolvable:$true] %s278
          %281 = dma.hbm_to_vmem [thread:$0]  %s2, 64, %s279, [#allocation6]
        $region20: #{simple_cnn_forward.1} parent=11 // pred_fallthru
          _
        // Predicated region
        $region21: #{simple_cnn_forward.1} parent=11 // pred_check
          %p282 = pneg %p112
        $region22: #{simple_cnn_forward.1} parent=11 // pred_check_branch
          %284 = sbr.rel (%p282) target = $region24
        $region23: #{simple_cnn_forward.1} parent=11 // pred_region
          %s286 = ssub.s32 98304, 98304
          %287 = vsyncadd [#allocation6], %s286
          %s288 = sshll.u32 [#allocation7], 4
          %s289 = int_to_ptr.vmem [resolvable:$true] %s288
          %294 = dma.hbm_to_vmem [thread:$0]  %s3, 98304, %s289, [#allocation6], 256, 256, 16
        $region24: #{simple_cnn_forward.1} parent=11 // pred_fallthru
          _
        // Predicated region
        $region25: #{simple_cnn_forward.1} parent=11 // pred_check
          %p295 = pneg %p133
        $region26: #{simple_cnn_forward.1} parent=11 // pred_check_branch
          %297 = sbr.rel (%p295) target = $region28
        $region27: #{simple_cnn_forward.1} parent=11 // pred_region
          %s299 = ssub.s32 64, 64
          %300 = vsyncadd [#allocation9], %s299
          %s302 = sshll.u32 [#allocation8], 4
          %s303 = int_to_ptr.vmem [resolvable:$true] %s302
          %305 = dma.hbm_to_vmem [thread:$0]  %s4, 64, %s303, [#allocation9]
        $region28: #{simple_cnn_forward.1} parent=11 // pred_fallthru
          _
        // Predicated region
        $region29: #{simple_cnn_forward.1} parent=11 // pred_check
          %p306 = pneg %p154
        $region30: #{simple_cnn_forward.1} parent=11 // pred_check_branch
          %308 = sbr.rel (%p306) target = $region32
        $region31: #{simple_cnn_forward.1} parent=11 // pred_region
          %s310 = ssub.s32 28672, 28672
          %311 = vsyncadd [#allocation9], %s310
          %s312 = sshll.u32 [#allocation10], 4
          %s313 = int_to_ptr.vmem [resolvable:$true] %s312
          %318 = dma.hbm_to_vmem [thread:$0]  %s5, 28672, %s313, [#allocation9], 64, 64, 4
        $region32: #{simple_cnn_forward.1} parent=11 // pred_fallthru
          _
        // Predicated region
        $region33: #{simple_cnn_forward.1} parent=11 // pred_check
          %p319 = pneg %p175
        $region34: #{simple_cnn_forward.1} parent=11 // pred_check_branch
          %321 = sbr.rel (%p319) target = $region36
        $region35: #{simple_cnn_forward.1} parent=11 // pred_region
          %s323 = ssub.s32 16, 16
          %324 = vsyncadd [#allocation12], %s323
          %s326 = sshll.u32 [#allocation11], 4
          %s327 = int_to_ptr.vmem [resolvable:$true] %s326
          %329 = dma.hbm_to_vmem [thread:$0]  %s6, 16, %s327, [#allocation12]
        $region36: #{simple_cnn_forward.1} parent=11 // pred_fallthru
          _
        // Predicated region
        $region37: #{simple_cnn_forward.1} parent=11 // pred_check
          %p330 = pneg %p196
        $region38: #{simple_cnn_forward.1} parent=11 // pred_check_branch
          %332 = sbr.rel (%p330) target = $region40
        $region39: #{simple_cnn_forward.1} parent=11 // pred_region
          %s334 = ssub.s32 1024, 1024
          %335 = vsyncadd [#allocation12], %s334
          %s336 = sshll.u32 [#allocation13], 4
          %s337 = int_to_ptr.vmem [resolvable:$true] %s336
          %342 = dma.hbm_to_vmem [thread:$0]  %s7, 1024, %s337, [#allocation12], 64, 64, 4
        $region40: #{simple_cnn_forward.1} parent=11 // pred_fallthru
          _
        // Predicated region
        $region41: #{simple_cnn_forward.1} parent=11 // pred_check
          %p343 = pneg %p217
        $region42: #{simple_cnn_forward.1} parent=11 // pred_check_branch
          %345 = sbr.rel (%p343) target = $region44
        $region43: #{simple_cnn_forward.1} parent=11 // pred_region
          %s347 = ssub.s32 16, 16
          %348 = vsyncadd [#allocation15], %s347
          %s350 = sshll.u32 [#allocation14], 4
          %s351 = int_to_ptr.vmem [resolvable:$true] %s350
          %353 = dma.hbm_to_vmem [thread:$0]  %s8, 16, %s351, [#allocation15]
        $region44: #{simple_cnn_forward.1} parent=11 // pred_fallthru
          _
      $region12: #{simple_cnn_forward.1} parent=5 // pred_fallthru
        _
      %p354 = scmp.lt.s32.totalorder %s23, 2
      // Predicated region
      $region45: #{simple_cnn_forward.1} parent=5 // pred_check
        %p355 = pneg %p354
      $region46: #{simple_cnn_forward.1} parent=5 // pred_check_branch
        %357 = sbr.rel (%p355) target = $region48
      $region47: #{simple_cnn_forward.1} parent=5 // pred_region
        // Predicated region
        $region49: #{simple_cnn_forward.1} parent=47 // pred_check
          %p358 = pneg %p43
        $region50: #{simple_cnn_forward.1} parent=47 // pred_check_branch
          %360 = sbr.rel (%p358) target = $region52
        $region51: #{simple_cnn_forward.1} parent=47 // pred_region
          %p361 = scmp.lt.s32.totalorder %s23, 1
          %s362 = scalar_select %p361, %s23, 1
          %s363 = smul.addr %s362, 4
          %s364 = smul.addr %s363, 4
          %s365 = scalar_lea.vmem %s0, %s364
        $region52: #{simple_cnn_forward.1} parent=47 // pred_fallthru
          _
      $region48: #{simple_cnn_forward.1} parent=5 // pred_fallthru
        _
      %p366 = scmp.le.s32.totalorder 1, %s23
      %p367 = scmp.lt.s32.totalorder %s23, 3
      %p368 = pnand %p366, %p367
      %p369 = pneg %p368
      // Predicated region
      $region53: #{simple_cnn_forward.1} parent=5 // pred_check
        _
      $region54: #{simple_cnn_forward.1} parent=5 // pred_check_branch
        %371 = sbr.rel (%p368) target = $region56
      $region55: #{simple_cnn_forward.1} parent=5 // pred_region
        %s372 = ssub.s32 %s23, 1
        // Predicated region
        $region57: #{simple_cnn_forward.1} parent=55 // pred_check
          %p373 = pneg %p70
        $region58: #{simple_cnn_forward.1} parent=55 // pred_check_branch
          %375 = sbr.rel (%p373) target = $region60
        $region59: #{simple_cnn_forward.1} parent=55 // pred_region
          %376 = dma.done [#allocation3], 8192
        $region60: #{simple_cnn_forward.1} parent=55 // pred_fallthru
          _
        // Predicated region
        $region61: #{simple_cnn_forward.1} parent=55 // pred_check
          %p377 = pneg %p91
        $region62: #{simple_cnn_forward.1} parent=55 // pred_check_branch
          %379 = sbr.rel (%p377) target = $region64
        $region63: #{simple_cnn_forward.1} parent=55 // pred_region
          %380 = dma.done [#allocation6], 64
        $region64: #{simple_cnn_forward.1} parent=55 // pred_fallthru
          _
        // Predicated region
        $region65: #{simple_cnn_forward.1} parent=55 // pred_check
          %p381 = pneg %p112
        $region66: #{simple_cnn_forward.1} parent=55 // pred_check_branch
          %383 = sbr.rel (%p381) target = $region68
        $region67: #{simple_cnn_forward.1} parent=55 // pred_region
          %384 = dma.done [#allocation6], 98304
        $region68: #{simple_cnn_forward.1} parent=55 // pred_fallthru
          _
        // Predicated region
        $region69: #{simple_cnn_forward.1} parent=55 // pred_check
          %p385 = pneg %p133
        $region70: #{simple_cnn_forward.1} parent=55 // pred_check_branch
          %387 = sbr.rel (%p385) target = $region72
        $region71: #{simple_cnn_forward.1} parent=55 // pred_region
          %388 = dma.done [#allocation9], 64
        $region72: #{simple_cnn_forward.1} parent=55 // pred_fallthru
          _
        // Predicated region
        $region73: #{simple_cnn_forward.1} parent=55 // pred_check
          %p389 = pneg %p154
        $region74: #{simple_cnn_forward.1} parent=55 // pred_check_branch
          %391 = sbr.rel (%p389) target = $region76
        $region75: #{simple_cnn_forward.1} parent=55 // pred_region
          %392 = dma.done [#allocation9], 28672
        $region76: #{simple_cnn_forward.1} parent=55 // pred_fallthru
          _
        // Predicated region
        $region77: #{simple_cnn_forward.1} parent=55 // pred_check
          %p393 = pneg %p175
        $region78: #{simple_cnn_forward.1} parent=55 // pred_check_branch
          %395 = sbr.rel (%p393) target = $region80
        $region79: #{simple_cnn_forward.1} parent=55 // pred_region
          %396 = dma.done [#allocation12], 16
        $region80: #{simple_cnn_forward.1} parent=55 // pred_fallthru
          _
        // Predicated region
        $region81: #{simple_cnn_forward.1} parent=55 // pred_check
          %p397 = pneg %p196
        $region82: #{simple_cnn_forward.1} parent=55 // pred_check_branch
          %399 = sbr.rel (%p397) target = $region84
        $region83: #{simple_cnn_forward.1} parent=55 // pred_region
          %400 = dma.done [#allocation12], 1024
        $region84: #{simple_cnn_forward.1} parent=55 // pred_fallthru
          _
        // Predicated region
        $region85: #{simple_cnn_forward.1} parent=55 // pred_check
          %p401 = pneg %p217
        $region86: #{simple_cnn_forward.1} parent=55 // pred_check_branch
          %403 = sbr.rel (%p401) target = $region88
        $region87: #{simple_cnn_forward.1} parent=55 // pred_region
          %404 = dma.done [#allocation15], 16
        $region88: #{simple_cnn_forward.1} parent=55 // pred_fallthru
          _
        %p405 = scmp.lt.s32.totalorder %s28, 1
        %s406 = scalar_select %p405, %s28, 1
        %s407 = smul.addr %s406, 4
        %s408 = smul.addr %s407, 4
        %s409 = scalar_lea.vmem %s0, %s408
        %p410 = pneg %p49
        %p411 = pneg %p46
        %p412 = pneg %p70
        %p413 = pneg %p67
        %p414 = pneg %p91
        %p415 = pneg %p88
        %p416 = pneg %p112
        %p417 = pneg %p109
        %p418 = pneg %p133
        %p419 = pneg %p130
        %p420 = pneg %p154
        %p421 = pneg %p151
        %p422 = pneg %p175
        %p423 = pneg %p172
        %p424 = pneg %p196
        %p425 = pneg %p193
        %p426 = pneg %p217
        %p427 = pneg %p214
        %p428 = pneg %p243
        %p429 = pneg %p240
        %s430 = sand.u32 %s230, 1
        %s431 = scalar_lea.sflag [#allocation4], %s430
        %s432 = sand.u32 %s230, 1
        %s433 = scalar_lea.vmem [#allocation16], %s432
        %p434 = scmp.lt.s32.totalorder %s28, 1
        %s435 = scalar_select %p434, %s28, 1
        %s436 = smul.addr %s435, 4
        %s437 = smul.addr %s436, 4
        %s438 = scalar_lea.vmem %s0, %s437
        %v440 = vld [vmem:[%s438] sm:$0xf]
        %v441 = vld [vmem:[#allocation2] sm:$0xff]
        %v442 = vld [vmem:[#allocation2 + $0x8] sm:$0xff]
        %v443 = vld [vmem:[#allocation2 + $0x10] sm:$0xff]
        %v444 = vld [vmem:[#allocation2 + $0x18] sm:$0xff]
        %v445 = vld [vmem:[#allocation2 + $0x20] sm:$0xff]
        %v446 = vld [vmem:[#allocation2 + $0x28] sm:$0xff]
        %v447 = vld [vmem:[#allocation2 + $0x30] sm:$0xff]
        %v448 = vld [vmem:[#allocation2 + $0x38] sm:$0xff]
        %v449 = vld [vmem:[#allocation2 + $0x40] sm:$0xff]
        %v450 = vld [vmem:[#allocation2 + $0x48] sm:$0xff]
        %v451 = vld [vmem:[#allocation2 + $0x50] sm:$0xff]
        %v452 = vld [vmem:[#allocation2 + $0x58] sm:$0xff]
        %v453 = vld [vmem:[#allocation2 + $0x60] sm:$0xff]
        %v454 = vld [vmem:[#allocation2 + $0x68] sm:$0xff]
        %v455 = vld [vmem:[#allocation2 + $0x70] sm:$0xff]
        %v456 = vld [vmem:[#allocation2 + $0x78] sm:$0xff]
        %v457 = vld [vmem:[#allocation2 + $0x80] sm:$0xff]
        %v458 = vld [vmem:[#allocation2 + $0x88] sm:$0xff]
        %v459 = vld [vmem:[#allocation2 + $0x90] sm:$0xff]
        %v460 = vld [vmem:[#allocation2 + $0x98] sm:$0xff]
        %v461 = vld [vmem:[#allocation2 + $0xa0] sm:$0xff]
        %v462 = vld [vmem:[#allocation2 + $0xa8] sm:$0xff]
        %v463 = vld [vmem:[#allocation2 + $0xb0] sm:$0xff]
        %v464 = vld [vmem:[#allocation2 + $0xb8] sm:$0xff]
        %v465 = vld [vmem:[#allocation2 + $0xc0] sm:$0xff]
        %v466 = vld [vmem:[#allocation2 + $0xc8] sm:$0xff]
        %v467 = vld [vmem:[#allocation2 + $0xd0] sm:$0xff]
        %v468 = vld [vmem:[#allocation2 + $0xd8] sm:$0xff]
        %v469 = vld [vmem:[#allocation2 + $0xe0] sm:$0xff]
        %v470 = vld [vmem:[#allocation2 + $0xe8] sm:$0xff]
        %v471 = vld [vmem:[#allocation2 + $0xf0] sm:$0xff]
        %v472 = vld [vmem:[#allocation2 + $0xf8] sm:$0xff]
        %v505 = vunpack.c.l.b16 %v441
        %v506 = vunpack.c.h.b16 %v441
        %v507 = vunpack.c.l.b16 %v442
        %v508 = vunpack.c.h.b16 %v442
        %v509 = vunpack.c.l.b16 %v443
        %v510 = vunpack.c.h.b16 %v443
        %v511 = vunpack.c.l.b16 %v444
        %v512 = vunpack.c.h.b16 %v444
        %v513 = vunpack.c.l.b16 %v445
        %v514 = vunpack.c.h.b16 %v445
        %v515 = vunpack.c.l.b16 %v446
        %v516 = vunpack.c.h.b16 %v446
        %v517 = vunpack.c.l.b16 %v447
        %v518 = vunpack.c.h.b16 %v447
        %v519 = vunpack.c.l.b16 %v448
        %v520 = vunpack.c.h.b16 %v448
        %v521 = vunpack.c.l.b16 %v449
        %v522 = vunpack.c.h.b16 %v449
        %v523 = vunpack.c.l.b16 %v450
        %v524 = vunpack.c.h.b16 %v450
        %v525 = vunpack.c.l.b16 %v451
        %v526 = vunpack.c.h.b16 %v451
        %v527 = vunpack.c.l.b16 %v452
        %v528 = vunpack.c.h.b16 %v452
        %v529 = vunpack.c.l.b16 %v453
        %v530 = vunpack.c.h.b16 %v453
        %v531 = vunpack.c.l.b16 %v454
        %v532 = vunpack.c.h.b16 %v454
        %v533 = vunpack.c.l.b16 %v455
        %v534 = vunpack.c.h.b16 %v455
        %v535 = vunpack.c.l.b16 %v456
        %v536 = vunpack.c.h.b16 %v456
        %v537 = vunpack.c.l.b16 %v457
        %v538 = vunpack.c.h.b16 %v457
        %v539 = vunpack.c.l.b16 %v458
        %v540 = vunpack.c.h.b16 %v458
        %v541 = vunpack.c.l.b16 %v459
        %v542 = vunpack.c.h.b16 %v459
        %v543 = vunpack.c.l.b16 %v460
        %v544 = vunpack.c.h.b16 %v460
        %v545 = vunpack.c.l.b16 %v461
        %v546 = vunpack.c.h.b16 %v461
        %v547 = vunpack.c.l.b16 %v462
        %v548 = vunpack.c.h.b16 %v462
        %v549 = vunpack.c.l.b16 %v463
        %v550 = vunpack.c.h.b16 %v463
        %v551 = vunpack.c.l.b16 %v464
        %v552 = vunpack.c.h.b16 %v464
        %v553 = vunpack.c.l.b16 %v465
        %v554 = vunpack.c.h.b16 %v465
        %v555 = vunpack.c.l.b16 %v466
        %v556 = vunpack.c.h.b16 %v466
        %v557 = vunpack.c.l.b16 %v467
        %v558 = vunpack.c.h.b16 %v467
        %v559 = vunpack.c.l.b16 %v468
        %v560 = vunpack.c.h.b16 %v468
        %v561 = vunpack.c.l.b16 %v469
        %v562 = vunpack.c.h.b16 %v469
        %v563 = vunpack.c.l.b16 %v470
        %v564 = vunpack.c.h.b16 %v470
        %v565 = vunpack.c.l.b16 %v471
        %v566 = vunpack.c.h.b16 %v471
        %v567 = vunpack.c.l.b16 %v472
        %v568 = vunpack.c.h.b16 %v472
        %v569 = vpack.c.b16 %v509, %v505
        %v570 = vpack.c.b16 %v510, %v506
        %v571 = vpack.c.b16 %v511, %v507
        %v572 = vpack.c.b16 %v512, %v508
        %v573 = vpack.c.b16 %v517, %v513
        %v574 = vpack.c.b16 %v518, %v514
        %v575 = vpack.c.b16 %v519, %v515
        %v576 = vpack.c.b16 %v520, %v516
        %v577 = vpack.c.b16 %v525, %v521
        %v578 = vpack.c.b16 %v526, %v522
        %v579 = vpack.c.b16 %v527, %v523
        %v580 = vpack.c.b16 %v528, %v524
        %v581 = vpack.c.b16 %v533, %v529
        %v582 = vpack.c.b16 %v534, %v530
        %v583 = vpack.c.b16 %v535, %v531
        %v584 = vpack.c.b16 %v536, %v532
        %v585 = vpack.c.b16 %v541, %v537
        %v586 = vpack.c.b16 %v542, %v538
        %v587 = vpack.c.b16 %v543, %v539
        %v588 = vpack.c.b16 %v544, %v540
        %v589 = vpack.c.b16 %v549, %v545
        %v590 = vpack.c.b16 %v550, %v546
        %v591 = vpack.c.b16 %v551, %v547
        %v592 = vpack.c.b16 %v552, %v548
        %v593 = vpack.c.b16 %v557, %v553
        %v594 = vpack.c.b16 %v558, %v554
        %v595 = vpack.c.b16 %v559, %v555
        %v596 = vpack.c.b16 %v560, %v556
        %v597 = vpack.c.b16 %v565, %v561
        %v598 = vpack.c.b16 %v566, %v562
        %v599 = vpack.c.b16 %v567, %v563
        %v600 = vpack.c.b16 %v568, %v564
        %633 = vmatprep.subr.bf16.mxu0 %v598
        %634 = vmatpush1.bf16.msra.mxu0 %v597
        %635 = vmatprep.subr.bf16.mxu0 %v594
        %636 = vmatpush1.bf16.msra.mxu0 %v593
        %637 = vmatprep.subr.bf16.mxu0 %v590
        %638 = vmatpush1.bf16.msra.mxu0 %v589
        %639 = vmatprep.subr.bf16.mxu0 %v586
        %640 = vmatpush1.bf16.msra.mxu0 %v585
        %641 = vmatprep.subr.bf16.mxu0 %v582
        %642 = vmatpush1.bf16.msra.mxu0 %v581
        %643 = vmatprep.subr.bf16.mxu0 %v578
        %644 = vmatpush1.bf16.msra.mxu0 %v577
        %645 = vmatprep.subr.bf16.mxu0 %v574
        %646 = vmatpush1.bf16.msra.mxu0 %v573
        %647 = vmatprep.subr.bf16.mxu0 %v570
        %648 = vmatpush1.bf16.msra.mxu0 %v569
        %649 = vmatprep.subr.bf16.mxu0 0
        %650 = vmatpush2.bf16.msra.mxu0 0
        %651 = vmatprep.subr.bf16.mxu0 0
        %652 = vmatpush2.bf16.msra.mxu0 0
        %653 = vmatprep.subr.bf16.mxu0 0
        %654 = vmatpush2.bf16.msra.mxu0 0
        %655 = vmatprep.subr.bf16.mxu0 0
        %656 = vmatpush2.bf16.msra.mxu0 0
        %657 = vmatprep.subr.bf16.mxu0 0
        %658 = vmatpush2.bf16.msra.mxu0 0
        %659 = vmatprep.subr.bf16.mxu0 0
        %660 = vmatpush2.bf16.msra.mxu0 0
        %661 = vmatprep.subr.bf16.mxu0 0
        %662 = vmatpush2.bf16.msra.mxu0 0
        %663 = vmatprep.subr.bf16.mxu0 0
        %664 = vmatpush2.bf16.msra.mxu0 0
        %665 = vmatprep.mubr.bf16.mxu0 0
        %666 = vmatmul.mubr.bf16.gmra.mxu0 %v440
        %v667 = vpop.f32.mrf.mxu0
        %v668 = vadd.f32 0.0, %v667
        %v669 = vpop.f32.mrf.mxu0
        %v670 = vadd.f32 0.0, %v669
        %v671 = vpop.f32.mrf.mxu0
        %v672 = vpop.f32.mrf.mxu0
        %673 = vdwg.mxu0
        %674 = vmatprep.subr.bf16.mxu0 %v600
        %675 = vmatpush1.bf16.msra.mxu0 %v599
        %676 = vmatprep.subr.bf16.mxu0 %v596
        %677 = vmatpush1.bf16.msra.mxu0 %v595
        %678 = vmatprep.subr.bf16.mxu0 %v592
        %679 = vmatpush1.bf16.msra.mxu0 %v591
        %680 = vmatprep.subr.bf16.mxu0 %v588
        %681 = vmatpush1.bf16.msra.mxu0 %v587
        %682 = vmatprep.subr.bf16.mxu0 %v584
        %683 = vmatpush1.bf16.msra.mxu0 %v583
        %684 = vmatprep.subr.bf16.mxu0 %v580
        %685 = vmatpush1.bf16.msra.mxu0 %v579
        %686 = vmatprep.subr.bf16.mxu0 %v576
        %687 = vmatpush1.bf16.msra.mxu0 %v575
        %688 = vmatprep.subr.bf16.mxu0 %v572
        %689 = vmatpush1.bf16.msra.mxu0 %v571
        %690 = vmatprep.subr.bf16.mxu0 0
        %691 = vmatpush2.bf16.msra.mxu0 0
        %692 = vmatprep.subr.bf16.mxu0 0
        %693 = vmatpush2.bf16.msra.mxu0 0
        %694 = vmatprep.subr.bf16.mxu0 0
        %695 = vmatpush2.bf16.msra.mxu0 0
        %696 = vmatprep.subr.bf16.mxu0 0
        %697 = vmatpush2.bf16.msra.mxu0 0
        %698 = vmatprep.subr.bf16.mxu0 0
        %699 = vmatpush2.bf16.msra.mxu0 0
        %700 = vmatprep.subr.bf16.mxu0 0
        %701 = vmatpush2.bf16.msra.mxu0 0
        %702 = vmatprep.subr.bf16.mxu0 0
        %703 = vmatpush2.bf16.msra.mxu0 0
        %704 = vmatprep.subr.bf16.mxu0 0
        %705 = vmatpush2.bf16.msra.mxu0 0
        %706 = vmatprep.mubr.bf16.mxu0 0
        %707 = vmatmul.mubr.bf16.gmra.mxu0 %v440
        %v708 = vpop.f32.mrf.mxu0
        %v709 = vadd.f32 0.0, %v708
        %v710 = vpop.f32.mrf.mxu0
        %v711 = vadd.f32 0.0, %v710
        %v712 = vpop.f32.mrf.mxu0
        %v713 = vpop.f32.mrf.mxu0
        %714 = vdwg.mxu0
        %s715 = scalar_lea.vmem [#allocation2], 256
        %v716 = vld [vmem:[%s715] sm:$0xff]
        %v717 = vld [vmem:[%s715 + $0x8] sm:$0xff]
        %v718 = vld [vmem:[%s715 + $0x10] sm:$0xff]
        %v719 = vld [vmem:[%s715 + $0x18] sm:$0xff]
        %v720 = vld [vmem:[%s715 + $0x20] sm:$0xff]
        %v721 = vld [vmem:[%s715 + $0x28] sm:$0xff]
        %v722 = vld [vmem:[%s715 + $0x30] sm:$0xff]
        %v723 = vld [vmem:[%s715 + $0x38] sm:$0xff]
        %v724 = vld [vmem:[%s715 + $0x40] sm:$0xff]
        %v725 = vld [vmem:[%s715 + $0x48] sm:$0xff]
        %v726 = vld [vmem:[%s715 + $0x50] sm:$0xff]
        %v727 = vld [vmem:[%s715 + $0x58] sm:$0xff]
        %v728 = vld [vmem:[%s715 + $0x60] sm:$0xff]
        %v729 = vld [vmem:[%s715 + $0x68] sm:$0xff]
        %v730 = vld [vmem:[%s715 + $0x70] sm:$0xff]
        %v731 = vld [vmem:[%s715 + $0x78] sm:$0xff]
        %v732 = vld [vmem:[%s715 + $0x80] sm:$0xff]
        %v733 = vld [vmem:[%s715 + $0x88] sm:$0xff]
        %v734 = vld [vmem:[%s715 + $0x90] sm:$0xff]
        %v735 = vld [vmem:[%s715 + $0x98] sm:$0xff]
        %v736 = vld [vmem:[%s715 + $0xa0] sm:$0xff]
        %v737 = vld [vmem:[%s715 + $0xa8] sm:$0xff]
        %v738 = vld [vmem:[%s715 + $0xb0] sm:$0xff]
        %v739 = vld [vmem:[%s715 + $0xb8] sm:$0xff]
        %v740 = vld [vmem:[%s715 + $0xc0] sm:$0xff]
        %v741 = vld [vmem:[%s715 + $0xc8] sm:$0xff]
        %v742 = vld [vmem:[%s715 + $0xd0] sm:$0xff]
        %v743 = vld [vmem:[%s715 + $0xd8] sm:$0xff]
        %v744 = vld [vmem:[%s715 + $0xe0] sm:$0xff]
        %v745 = vld [vmem:[%s715 + $0xe8] sm:$0xff]
        %v746 = vld [vmem:[%s715 + $0xf0] sm:$0xff]
        %v747 = vld [vmem:[%s715 + $0xf8] sm:$0xff]
        %v780 = vunpack.c.l.b16 %v716
        %v781 = vunpack.c.h.b16 %v716
        %v782 = vunpack.c.l.b16 %v717
        %v783 = vunpack.c.h.b16 %v717
        %v784 = vunpack.c.l.b16 %v718
        %v785 = vunpack.c.h.b16 %v718
        %v786 = vunpack.c.l.b16 %v719
        %v787 = vunpack.c.h.b16 %v719
        %v788 = vunpack.c.l.b16 %v720
        %v789 = vunpack.c.h.b16 %v720
        %v790 = vunpack.c.l.b16 %v721
        %v791 = vunpack.c.h.b16 %v721
        %v792 = vunpack.c.l.b16 %v722
        %v793 = vunpack.c.h.b16 %v722
        %v794 = vunpack.c.l.b16 %v723
        %v795 = vunpack.c.h.b16 %v723
        %v796 = vunpack.c.l.b16 %v724
        %v797 = vunpack.c.h.b16 %v724
        %v798 = vunpack.c.l.b16 %v725
        %v799 = vunpack.c.h.b16 %v725
        %v800 = vunpack.c.l.b16 %v726
        %v801 = vunpack.c.h.b16 %v726
        %v802 = vunpack.c.l.b16 %v727
        %v803 = vunpack.c.h.b16 %v727
        %v804 = vunpack.c.l.b16 %v728
        %v805 = vunpack.c.h.b16 %v728
        %v806 = vunpack.c.l.b16 %v729
        %v807 = vunpack.c.h.b16 %v729
        %v808 = vunpack.c.l.b16 %v730
        %v809 = vunpack.c.h.b16 %v730
        %v810 = vunpack.c.l.b16 %v731
        %v811 = vunpack.c.h.b16 %v731
        %v812 = vunpack.c.l.b16 %v732
        %v813 = vunpack.c.h.b16 %v732
        %v814 = vunpack.c.l.b16 %v733
        %v815 = vunpack.c.h.b16 %v733
        %v816 = vunpack.c.l.b16 %v734
        %v817 = vunpack.c.h.b16 %v734
        %v818 = vunpack.c.l.b16 %v735
        %v819 = vunpack.c.h.b16 %v735
        %v820 = vunpack.c.l.b16 %v736
        %v821 = vunpack.c.h.b16 %v736
        %v822 = vunpack.c.l.b16 %v737
        %v823 = vunpack.c.h.b16 %v737
        %v824 = vunpack.c.l.b16 %v738
        %v825 = vunpack.c.h.b16 %v738
        %v826 = vunpack.c.l.b16 %v739
        %v827 = vunpack.c.h.b16 %v739
        %v828 = vunpack.c.l.b16 %v740
        %v829 = vunpack.c.h.b16 %v740
        %v830 = vunpack.c.l.b16 %v741
        %v831 = vunpack.c.h.b16 %v741
        %v832 = vunpack.c.l.b16 %v742
        %v833 = vunpack.c.h.b16 %v742
        %v834 = vunpack.c.l.b16 %v743
        %v835 = vunpack.c.h.b16 %v743
        %v836 = vunpack.c.l.b16 %v744
        %v837 = vunpack.c.h.b16 %v744
        %v838 = vunpack.c.l.b16 %v745
        %v839 = vunpack.c.h.b16 %v745
        %v840 = vunpack.c.l.b16 %v746
        %v841 = vunpack.c.h.b16 %v746
        %v842 = vunpack.c.l.b16 %v747
        %v843 = vunpack.c.h.b16 %v747
        %v844 = vpack.c.b16 %v784, %v780
        %v845 = vpack.c.b16 %v785, %v781
        %v846 = vpack.c.b16 %v786, %v782
        %v847 = vpack.c.b16 %v787, %v783
        %v848 = vpack.c.b16 %v792, %v788
        %v849 = vpack.c.b16 %v793, %v789
        %v850 = vpack.c.b16 %v794, %v790
        %v851 = vpack.c.b16 %v795, %v791
        %v852 = vpack.c.b16 %v800, %v796
        %v853 = vpack.c.b16 %v801, %v797
        %v854 = vpack.c.b16 %v802, %v798
        %v855 = vpack.c.b16 %v803, %v799
        %v856 = vpack.c.b16 %v808, %v804
        %v857 = vpack.c.b16 %v809, %v805
        %v858 = vpack.c.b16 %v810, %v806
        %v859 = vpack.c.b16 %v811, %v807
        %v860 = vpack.c.b16 %v816, %v812
        %v861 = vpack.c.b16 %v817, %v813
        %v862 = vpack.c.b16 %v818, %v814
        %v863 = vpack.c.b16 %v819, %v815
        %v864 = vpack.c.b16 %v824, %v820
        %v865 = vpack.c.b16 %v825, %v821
        %v866 = vpack.c.b16 %v826, %v822
        %v867 = vpack.c.b16 %v827, %v823
        %v868 = vpack.c.b16 %v832, %v828
        %v869 = vpack.c.b16 %v833, %v829
        %v870 = vpack.c.b16 %v834, %v830
        %v871 = vpack.c.b16 %v835, %v831
        %v872 = vpack.c.b16 %v840, %v836
        %v873 = vpack.c.b16 %v841, %v837
        %v874 = vpack.c.b16 %v842, %v838
        %v875 = vpack.c.b16 %v843, %v839
        %908 = vmatprep.subr.bf16.mxu0 %v873
        %909 = vmatpush1.bf16.msra.mxu0 %v872
        %910 = vmatprep.subr.bf16.mxu0 %v869
        %911 = vmatpush1.bf16.msra.mxu0 %v868
        %912 = vmatprep.subr.bf16.mxu0 %v865
        %913 = vmatpush1.bf16.msra.mxu0 %v864
        %914 = vmatprep.subr.bf16.mxu0 %v861
        %915 = vmatpush1.bf16.msra.mxu0 %v860
        %916 = vmatprep.subr.bf16.mxu0 %v857
        %917 = vmatpush1.bf16.msra.mxu0 %v856
        %918 = vmatprep.subr.bf16.mxu0 %v853
        %919 = vmatpush1.bf16.msra.mxu0 %v852
        %920 = vmatprep.subr.bf16.mxu0 %v849
        %921 = vmatpush1.bf16.msra.mxu0 %v848
        %922 = vmatprep.subr.bf16.mxu0 %v845
        %923 = vmatpush1.bf16.msra.mxu0 %v844
        %924 = vmatprep.subr.bf16.mxu0 0
        %925 = vmatpush2.bf16.msra.mxu0 0
        %926 = vmatprep.subr.bf16.mxu0 0
        %927 = vmatpush2.bf16.msra.mxu0 0
        %928 = vmatprep.subr.bf16.mxu0 0
        %929 = vmatpush2.bf16.msra.mxu0 0
        %930 = vmatprep.subr.bf16.mxu0 0
        %931 = vmatpush2.bf16.msra.mxu0 0
        %932 = vmatprep.subr.bf16.mxu0 0
        %933 = vmatpush2.bf16.msra.mxu0 0
        %934 = vmatprep.subr.bf16.mxu0 0
        %935 = vmatpush2.bf16.msra.mxu0 0
        %936 = vmatprep.subr.bf16.mxu0 0
        %937 = vmatpush2.bf16.msra.mxu0 0
        %938 = vmatprep.subr.bf16.mxu0 0
        %939 = vmatpush2.bf16.msra.mxu0 0
        %940 = vmatprep.mubr.bf16.mxu0 0
        %941 = vmatmul.mubr.bf16.gmra.mxu0 %v440
        %v942 = vpop.f32.mrf.mxu0
        %v943 = vadd.f32 0.0, %v942
        %v944 = vpop.f32.mrf.mxu0
        %v945 = vadd.f32 0.0, %v944
        %v946 = vpop.f32.mrf.mxu0
        %v947 = vpop.f32.mrf.mxu0
        %948 = vdwg.mxu0
        %949 = vmatprep.subr.bf16.mxu0 %v875
        %950 = vmatpush1.bf16.msra.mxu0 %v874
        %951 = vmatprep.subr.bf16.mxu0 %v871
        %952 = vmatpush1.bf16.msra.mxu0 %v870
        %953 = vmatprep.subr.bf16.mxu0 %v867
        %954 = vmatpush1.bf16.msra.mxu0 %v866
        %955 = vmatprep.subr.bf16.mxu0 %v863
        %956 = vmatpush1.bf16.msra.mxu0 %v862
        %957 = vmatprep.subr.bf16.mxu0 %v859
        %958 = vmatpush1.bf16.msra.mxu0 %v858
        %959 = vmatprep.subr.bf16.mxu0 %v855
        %960 = vmatpush1.bf16.msra.mxu0 %v854
        %961 = vmatprep.subr.bf16.mxu0 %v851
        %962 = vmatpush1.bf16.msra.mxu0 %v850
        %963 = vmatprep.subr.bf16.mxu0 %v847
        %964 = vmatpush1.bf16.msra.mxu0 %v846
        %965 = vmatprep.subr.bf16.mxu0 0
        %966 = vmatpush2.bf16.msra.mxu0 0
        %967 = vmatprep.subr.bf16.mxu0 0
        %968 = vmatpush2.bf16.msra.mxu0 0
        %969 = vmatprep.subr.bf16.mxu0 0
        %970 = vmatpush2.bf16.msra.mxu0 0
        %971 = vmatprep.subr.bf16.mxu0 0
        %972 = vmatpush2.bf16.msra.mxu0 0
        %973 = vmatprep.subr.bf16.mxu0 0
        %974 = vmatpush2.bf16.msra.mxu0 0
        %975 = vmatprep.subr.bf16.mxu0 0
        %976 = vmatpush2.bf16.msra.mxu0 0
        %977 = vmatprep.subr.bf16.mxu0 0
        %978 = vmatpush2.bf16.msra.mxu0 0
        %979 = vmatprep.subr.bf16.mxu0 0
        %980 = vmatpush2.bf16.msra.mxu0 0
        %981 = vmatprep.mubr.bf16.mxu0 0
        %982 = vmatmul.mubr.bf16.gmra.mxu0 %v440
        %v983 = vpop.f32.mrf.mxu0
        %v984 = vadd.f32 0.0, %v983
        %v985 = vpop.f32.mrf.mxu0
        %v986 = vadd.f32 0.0, %v985
        %v987 = vpop.f32.mrf.mxu0
        %v988 = vpop.f32.mrf.mxu0
        %989 = vdwg.mxu0
        %v990 = vmax.f32 %v668, %v943
        %v991 = vmax.f32 %v670, %v945
        %v992 = vmax.f32 %v709, %v984
        %v993 = vmax.f32 %v711, %v986
        %s994 = scalar_lea.vmem %s438, 4
        %v995 = vld [vmem:[%s994] sm:$0xf]
        %996 = vmatprep.subr.bf16.mxu0 %v598
        %997 = vmatpush1.bf16.msra.mxu0 %v597
        %998 = vmatprep.subr.bf16.mxu0 %v594
        %999 = vmatpush1.bf16.msra.mxu0 %v593
        %1000 = vmatprep.subr.bf16.mxu0 %v590
        %1001 = vmatpush1.bf16.msra.mxu0 %v589
        %1002 = vmatprep.subr.bf16.mxu0 %v586
        %1003 = vmatpush1.bf16.msra.mxu0 %v585
        %1004 = vmatprep.subr.bf16.mxu0 %v582
        %1005 = vmatpush1.bf16.msra.mxu0 %v581
        %1006 = vmatprep.subr.bf16.mxu0 %v578
        %1007 = vmatpush1.bf16.msra.mxu0 %v577
        %1008 = vmatprep.subr.bf16.mxu0 %v574
        %1009 = vmatpush1.bf16.msra.mxu0 %v573
        %1010 = vmatprep.subr.bf16.mxu0 %v570
        %1011 = vmatpush1.bf16.msra.mxu0 %v569
        %1012 = vmatprep.subr.bf16.mxu0 0
        %1013 = vmatpush2.bf16.msra.mxu0 0
        %1014 = vmatprep.subr.bf16.mxu0 0
        %1015 = vmatpush2.bf16.msra.mxu0 0
        %1016 = vmatprep.subr.bf16.mxu0 0
        %1017 = vmatpush2.bf16.msra.mxu0 0
        %1018 = vmatprep.subr.bf16.mxu0 0
        %1019 = vmatpush2.bf16.msra.mxu0 0
        %1020 = vmatprep.subr.bf16.mxu0 0
        %1021 = vmatpush2.bf16.msra.mxu0 0
        %1022 = vmatprep.subr.bf16.mxu0 0
        %1023 = vmatpush2.bf16.msra.mxu0 0
        %1024 = vmatprep.subr.bf16.mxu0 0
        %1025 = vmatpush2.bf16.msra.mxu0 0
        %1026 = vmatprep.subr.bf16.mxu0 0
        %1027 = vmatpush2.bf16.msra.mxu0 0
        %1028 = vmatprep.mubr.bf16.mxu0 0
        %1029 = vmatmul.mubr.bf16.gmra.mxu0 %v995
        %v1030 = vpop.f32.mrf.mxu0
        %v1031 = vadd.f32 0.0, %v1030
        %v1032 = vpop.f32.mrf.mxu0
        %v1033 = vadd.f32 0.0, %v1032
        %v1034 = vpop.f32.mrf.mxu0
        %v1035 = vpop.f32.mrf.mxu0
        %1036 = vdwg.mxu0
        %1037 = vmatprep.subr.bf16.mxu0 %v600
        %1038 = vmatpush1.bf16.msra.mxu0 %v599
        %1039 = vmatprep.subr.bf16.mxu0 %v596
        %1040 = vmatpush1.bf16.msra.mxu0 %v595
        %1041 = vmatprep.subr.bf16.mxu0 %v592
        %1042 = vmatpush1.bf16.msra.mxu0 %v591
        %1043 = vmatprep.subr.bf16.mxu0 %v588
        %1044 = vmatpush1.bf16.msra.mxu0 %v587
        %1045 = vmatprep.subr.bf16.mxu0 %v584
        %1046 = vmatpush1.bf16.msra.mxu0 %v583
        %1047 = vmatprep.subr.bf16.mxu0 %v580
        %1048 = vmatpush1.bf16.msra.mxu0 %v579
        %1049 = vmatprep.subr.bf16.mxu0 %v576
        %1050 = vmatpush1.bf16.msra.mxu0 %v575
        %1051 = vmatprep.subr.bf16.mxu0 %v572
        %1052 = vmatpush1.bf16.msra.mxu0 %v571
        %1053 = vmatprep.subr.bf16.mxu0 0
        %1054 = vmatpush2.bf16.msra.mxu0 0
        %1055 = vmatprep.subr.bf16.mxu0 0
        %1056 = vmatpush2.bf16.msra.mxu0 0
        %1057 = vmatprep.subr.bf16.mxu0 0
        %1058 = vmatpush2.bf16.msra.mxu0 0
        %1059 = vmatprep.subr.bf16.mxu0 0
        %1060 = vmatpush2.bf16.msra.mxu0 0
        %1061 = vmatprep.subr.bf16.mxu0 0
        %1062 = vmatpush2.bf16.msra.mxu0 0
        %1063 = vmatprep.subr.bf16.mxu0 0
        %1064 = vmatpush2.bf16.msra.mxu0 0
        %1065 = vmatprep.subr.bf16.mxu0 0
        %1066 = vmatpush2.bf16.msra.mxu0 0
        %1067 = vmatprep.subr.bf16.mxu0 0
        %1068 = vmatpush2.bf16.msra.mxu0 0
        %1069 = vmatprep.mubr.bf16.mxu0 0
        %1070 = vmatmul.mubr.bf16.gmra.mxu0 %v995
        %v1071 = vpop.f32.mrf.mxu0
        %v1072 = vadd.f32 0.0, %v1071
        %v1073 = vpop.f32.mrf.mxu0
        %v1074 = vadd.f32 0.0, %v1073
        %v1075 = vpop.f32.mrf.mxu0
        %v1076 = vpop.f32.mrf.mxu0
        %1077 = vdwg.mxu0
        %v1078 = vmax.f32 %v990, %v1031
        %v1079 = vmax.f32 %v991, %v1033
        %v1080 = vmax.f32 %v992, %v1072
        %v1081 = vmax.f32 %v993, %v1074
        %1082 = vmatprep.subr.bf16.mxu0 %v873
        %1083 = vmatpush1.bf16.msra.mxu0 %v872
        %1084 = vmatprep.subr.bf16.mxu0 %v869
        %1085 = vmatpush1.bf16.msra.mxu0 %v868
        %1086 = vmatprep.subr.bf16.mxu0 %v865
        %1087 = vmatpush1.bf16.msra.mxu0 %v864
        %1088 = vmatprep.subr.bf16.mxu0 %v861
        %1089 = vmatpush1.bf16.msra.mxu0 %v860
        %1090 = vmatprep.subr.bf16.mxu0 %v857
        %1091 = vmatpush1.bf16.msra.mxu0 %v856
        %1092 = vmatprep.subr.bf16.mxu0 %v853
        %1093 = vmatpush1.bf16.msra.mxu0 %v852
        %1094 = vmatprep.subr.bf16.mxu0 %v849
        %1095 = vmatpush1.bf16.msra.mxu0 %v848
        %1096 = vmatprep.subr.bf16.mxu0 %v845
        %1097 = vmatpush1.bf16.msra.mxu0 %v844
        %1098 = vmatprep.subr.bf16.mxu0 0
        %1099 = vmatpush2.bf16.msra.mxu0 0
        %1100 = vmatprep.subr.bf16.mxu0 0
        %1101 = vmatpush2.bf16.msra.mxu0 0
        %1102 = vmatprep.subr.bf16.mxu0 0
        %1103 = vmatpush2.bf16.msra.mxu0 0
        %1104 = vmatprep.subr.bf16.mxu0 0
        %1105 = vmatpush2.bf16.msra.mxu0 0
        %1106 = vmatprep.subr.bf16.mxu0 0
        %1107 = vmatpush2.bf16.msra.mxu0 0
        %1108 = vmatprep.subr.bf16.mxu0 0
        %1109 = vmatpush2.bf16.msra.mxu0 0
        %1110 = vmatprep.subr.bf16.mxu0 0
        %1111 = vmatpush2.bf16.msra.mxu0 0
        %1112 = vmatprep.subr.bf16.mxu0 0
        %1113 = vmatpush2.bf16.msra.mxu0 0
        %1114 = vmatprep.mubr.bf16.mxu0 0
        %1115 = vmatmul.mubr.bf16.gmra.mxu0 %v995
        %v1116 = vpop.f32.mrf.mxu0
        %v1117 = vadd.f32 0.0, %v1116
        %v1118 = vpop.f32.mrf.mxu0
        %v1119 = vadd.f32 0.0, %v1118
        %v1120 = vpop.f32.mrf.mxu0
        %v1121 = vpop.f32.mrf.mxu0
        %1122 = vdwg.mxu0
        %1123 = vmatprep.subr.bf16.mxu0 %v875
        %1124 = vmatpush1.bf16.msra.mxu0 %v874
        %1125 = vmatprep.subr.bf16.mxu0 %v871
        %1126 = vmatpush1.bf16.msra.mxu0 %v870
        %1127 = vmatprep.subr.bf16.mxu0 %v867
        %1128 = vmatpush1.bf16.msra.mxu0 %v866
        %1129 = vmatprep.subr.bf16.mxu0 %v863
        %1130 = vmatpush1.bf16.msra.mxu0 %v862
        %1131 = vmatprep.subr.bf16.mxu0 %v859
        %1132 = vmatpush1.bf16.msra.mxu0 %v858
        %1133 = vmatprep.subr.bf16.mxu0 %v855
        %1134 = vmatpush1.bf16.msra.mxu0 %v854
        %1135 = vmatprep.subr.bf16.mxu0 %v851
        %1136 = vmatpush1.bf16.msra.mxu0 %v850
        %1137 = vmatprep.subr.bf16.mxu0 %v847
        %1138 = vmatpush1.bf16.msra.mxu0 %v846
        %1139 = vmatprep.subr.bf16.mxu0 0
        %1140 = vmatpush2.bf16.msra.mxu0 0
        %1141 = vmatprep.subr.bf16.mxu0 0
        %1142 = vmatpush2.bf16.msra.mxu0 0
        %1143 = vmatprep.subr.bf16.mxu0 0
        %1144 = vmatpush2.bf16.msra.mxu0 0
        %1145 = vmatprep.subr.bf16.mxu0 0
        %1146 = vmatpush2.bf16.msra.mxu0 0
        %1147 = vmatprep.subr.bf16.mxu0 0
        %1148 = vmatpush2.bf16.msra.mxu0 0
        %1149 = vmatprep.subr.bf16.mxu0 0
        %1150 = vmatpush2.bf16.msra.mxu0 0
        %1151 = vmatprep.subr.bf16.mxu0 0
        %1152 = vmatpush2.bf16.msra.mxu0 0
        %1153 = vmatprep.subr.bf16.mxu0 0
        %1154 = vmatpush2.bf16.msra.mxu0 0
        %1155 = vmatprep.mubr.bf16.mxu0 0
        %1156 = vmatmul.mubr.bf16.gmra.mxu0 %v995
        %v1157 = vpop.f32.mrf.mxu0
        %v1158 = vadd.f32 0.0, %v1157
        %v1159 = vpop.f32.mrf.mxu0
        %v1160 = vadd.f32 0.0, %v1159
        %v1161 = vpop.f32.mrf.mxu0
        %v1162 = vpop.f32.mrf.mxu0
        %1163 = vdwg.mxu0
        %v1164 = vmax.f32 %v1078, %v1117
        %v1165 = vmax.f32 %v1079, %v1119
        %v1166 = vmax.f32 %v1080, %v1158
        %v1167 = vmax.f32 %v1081, %v1160
        %v1168 = vld [vmem:[#allocation5] sm:$0xf]
        %v1170 = vlaneseq
        %v1171 = vshrl.u32 %v1170, 7
        %v1172 = vsub.s32 0, %v1171
        %v1173 = vrot.slane %v1168, %v1172
        %v1174 = vlaneseq
        %v1175 = vshrl.u32 %v1174, 7
        %v1176 = vsub.s32 1, %v1175
        %v1177 = vrot.slane %v1168, %v1176
        %v1178 = vlaneseq
        %v1179 = vshrl.u32 %v1178, 7
        %v1180 = vsub.s32 2, %v1179
        %v1181 = vrot.slane %v1168, %v1180
        %v1182 = vlaneseq
        %v1183 = vshrl.u32 %v1182, 7
        %v1184 = vsub.s32 3, %v1183
        %v1185 = vrot.slane %v1168, %v1184
        %v1190 = vadd.f32 %v1164, %v1173
        %v1191 = vadd.f32 %v1165, %v1177
        %v1192 = vadd.f32 %v1166, %v1181
        %v1193 = vadd.f32 %v1167, %v1185
        %v1194 = vmax.f32 %v1190, 0.0
        %v1195 = vmax.f32 %v1191, 0.0
        %v1196 = vmax.f32 %v1192, 0.0
        %v1197 = vmax.f32 %v1193, 0.0
        %v1198 = vpack.c.bf16 %v1194, %v1194
        %v1199 = vpack.c.bf16 %v1195, %v1195
        %v1200 = vpack.c.bf16 %v1196, %v1196
        %v1201 = vpack.c.bf16 %v1197, %v1197
        %s1202 = scalar_lea.vmem %s438, 8
        %v1203 = vld [vmem:[%s1202] sm:$0xf]
        %1204 = vmatprep.subr.bf16.mxu0 %v598
        %1205 = vmatpush1.bf16.msra.mxu0 %v597
        %1206 = vmatprep.subr.bf16.mxu0 %v594
        %1207 = vmatpush1.bf16.msra.mxu0 %v593
        %1208 = vmatprep.subr.bf16.mxu0 %v590
        %1209 = vmatpush1.bf16.msra.mxu0 %v589
        %1210 = vmatprep.subr.bf16.mxu0 %v586
        %1211 = vmatpush1.bf16.msra.mxu0 %v585
        %1212 = vmatprep.subr.bf16.mxu0 %v582
        %1213 = vmatpush1.bf16.msra.mxu0 %v581
        %1214 = vmatprep.subr.bf16.mxu0 %v578
        %1215 = vmatpush1.bf16.msra.mxu0 %v577
        %1216 = vmatprep.subr.bf16.mxu0 %v574
        %1217 = vmatpush1.bf16.msra.mxu0 %v573
        %1218 = vmatprep.subr.bf16.mxu0 %v570
        %1219 = vmatpush1.bf16.msra.mxu0 %v569
        %1220 = vmatprep.subr.bf16.mxu0 0
        %1221 = vmatpush2.bf16.msra.mxu0 0
        %1222 = vmatprep.subr.bf16.mxu0 0
        %1223 = vmatpush2.bf16.msra.mxu0 0
        %1224 = vmatprep.subr.bf16.mxu0 0
        %1225 = vmatpush2.bf16.msra.mxu0 0
        %1226 = vmatprep.subr.bf16.mxu0 0
        %1227 = vmatpush2.bf16.msra.mxu0 0
        %1228 = vmatprep.subr.bf16.mxu0 0
        %1229 = vmatpush2.bf16.msra.mxu0 0
        %1230 = vmatprep.subr.bf16.mxu0 0
        %1231 = vmatpush2.bf16.msra.mxu0 0
        %1232 = vmatprep.subr.bf16.mxu0 0
        %1233 = vmatpush2.bf16.msra.mxu0 0
        %1234 = vmatprep.subr.bf16.mxu0 0
        %1235 = vmatpush2.bf16.msra.mxu0 0
        %1236 = vmatprep.mubr.bf16.mxu0 0
        %1237 = vmatmul.mubr.bf16.gmra.mxu0 %v1203
        %v1238 = vpop.f32.mrf.mxu0
        %v1239 = vadd.f32 0.0, %v1238
        %v1240 = vpop.f32.mrf.mxu0
        %v1241 = vadd.f32 0.0, %v1240
        %v1242 = vpop.f32.mrf.mxu0
        %v1243 = vpop.f32.mrf.mxu0
        %1244 = vdwg.mxu0
        %1245 = vmatprep.subr.bf16.mxu0 %v600
        %1246 = vmatpush1.bf16.msra.mxu0 %v599
        %1247 = vmatprep.subr.bf16.mxu0 %v596
        %1248 = vmatpush1.bf16.msra.mxu0 %v595
        %1249 = vmatprep.subr.bf16.mxu0 %v592
        %1250 = vmatpush1.bf16.msra.mxu0 %v591
        %1251 = vmatprep.subr.bf16.mxu0 %v588
        %1252 = vmatpush1.bf16.msra.mxu0 %v587
        %1253 = vmatprep.subr.bf16.mxu0 %v584
        %1254 = vmatpush1.bf16.msra.mxu0 %v583
        %1255 = vmatprep.subr.bf16.mxu0 %v580
        %1256 = vmatpush1.bf16.msra.mxu0 %v579
        %1257 = vmatprep.subr.bf16.mxu0 %v576
        %1258 = vmatpush1.bf16.msra.mxu0 %v575
        %1259 = vmatprep.subr.bf16.mxu0 %v572
        %1260 = vmatpush1.bf16.msra.mxu0 %v571
        %1261 = vmatprep.subr.bf16.mxu0 0
        %1262 = vmatpush2.bf16.msra.mxu0 0
        %1263 = vmatprep.subr.bf16.mxu0 0
        %1264 = vmatpush2.bf16.msra.mxu0 0
        %1265 = vmatprep.subr.bf16.mxu0 0
        %1266 = vmatpush2.bf16.msra.mxu0 0
        %1267 = vmatprep.subr.bf16.mxu0 0
        %1268 = vmatpush2.bf16.msra.mxu0 0
        %1269 = vmatprep.subr.bf16.mxu0 0
        %1270 = vmatpush2.bf16.msra.mxu0 0
        %1271 = vmatprep.subr.bf16.mxu0 0
        %1272 = vmatpush2.bf16.msra.mxu0 0
        %1273 = vmatprep.subr.bf16.mxu0 0
        %1274 = vmatpush2.bf16.msra.mxu0 0
        %1275 = vmatprep.subr.bf16.mxu0 0
        %1276 = vmatpush2.bf16.msra.mxu0 0
        %1277 = vmatprep.mubr.bf16.mxu0 0
        %1278 = vmatmul.mubr.bf16.gmra.mxu0 %v1203
        %v1279 = vpop.f32.mrf.mxu0
        %v1280 = vadd.f32 0.0, %v1279
        %v1281 = vpop.f32.mrf.mxu0
        %v1282 = vadd.f32 0.0, %v1281
        %v1283 = vpop.f32.mrf.mxu0
        %v1284 = vpop.f32.mrf.mxu0
        %1285 = vdwg.mxu0
        %1286 = vmatprep.subr.bf16.mxu0 %v873
        %1287 = vmatpush1.bf16.msra.mxu0 %v872
        %1288 = vmatprep.subr.bf16.mxu0 %v869
        %1289 = vmatpush1.bf16.msra.mxu0 %v868
        %1290 = vmatprep.subr.bf16.mxu0 %v865
        %1291 = vmatpush1.bf16.msra.mxu0 %v864
        %1292 = vmatprep.subr.bf16.mxu0 %v861
        %1293 = vmatpush1.bf16.msra.mxu0 %v860
        %1294 = vmatprep.subr.bf16.mxu0 %v857
        %1295 = vmatpush1.bf16.msra.mxu0 %v856
        %1296 = vmatprep.subr.bf16.mxu0 %v853
        %1297 = vmatpush1.bf16.msra.mxu0 %v852
        %1298 = vmatprep.subr.bf16.mxu0 %v849
        %1299 = vmatpush1.bf16.msra.mxu0 %v848
        %1300 = vmatprep.subr.bf16.mxu0 %v845
        %1301 = vmatpush1.bf16.msra.mxu0 %v844
        %1302 = vmatprep.subr.bf16.mxu0 0
        %1303 = vmatpush2.bf16.msra.mxu0 0
        %1304 = vmatprep.subr.bf16.mxu0 0
        %1305 = vmatpush2.bf16.msra.mxu0 0
        %1306 = vmatprep.subr.bf16.mxu0 0
        %1307 = vmatpush2.bf16.msra.mxu0 0
        %1308 = vmatprep.subr.bf16.mxu0 0
        %1309 = vmatpush2.bf16.msra.mxu0 0
        %1310 = vmatprep.subr.bf16.mxu0 0
        %1311 = vmatpush2.bf16.msra.mxu0 0
        %1312 = vmatprep.subr.bf16.mxu0 0
        %1313 = vmatpush2.bf16.msra.mxu0 0
        %1314 = vmatprep.subr.bf16.mxu0 0
        %1315 = vmatpush2.bf16.msra.mxu0 0
        %1316 = vmatprep.subr.bf16.mxu0 0
        %1317 = vmatpush2.bf16.msra.mxu0 0
        %1318 = vmatprep.mubr.bf16.mxu0 0
        %1319 = vmatmul.mubr.bf16.gmra.mxu0 %v1203
        %v1320 = vpop.f32.mrf.mxu0
        %v1321 = vadd.f32 0.0, %v1320
        %v1322 = vpop.f32.mrf.mxu0
        %v1323 = vadd.f32 0.0, %v1322
        %v1324 = vpop.f32.mrf.mxu0
        %v1325 = vpop.f32.mrf.mxu0
        %1326 = vdwg.mxu0
        %1327 = vmatprep.subr.bf16.mxu0 %v875
        %1328 = vmatpush1.bf16.msra.mxu0 %v874
        %1329 = vmatprep.subr.bf16.mxu0 %v871
        %1330 = vmatpush1.bf16.msra.mxu0 %v870
        %1331 = vmatprep.subr.bf16.mxu0 %v867
        %1332 = vmatpush1.bf16.msra.mxu0 %v866
        %1333 = vmatprep.subr.bf16.mxu0 %v863
        %1334 = vmatpush1.bf16.msra.mxu0 %v862
        %1335 = vmatprep.subr.bf16.mxu0 %v859
        %1336 = vmatpush1.bf16.msra.mxu0 %v858
        %1337 = vmatprep.subr.bf16.mxu0 %v855
        %1338 = vmatpush1.bf16.msra.mxu0 %v854
        %1339 = vmatprep.subr.bf16.mxu0 %v851
        %1340 = vmatpush1.bf16.msra.mxu0 %v850
        %1341 = vmatprep.subr.bf16.mxu0 %v847
        %1342 = vmatpush1.bf16.msra.mxu0 %v846
        %1343 = vmatprep.subr.bf16.mxu0 0
        %1344 = vmatpush2.bf16.msra.mxu0 0
        %1345 = vmatprep.subr.bf16.mxu0 0
        %1346 = vmatpush2.bf16.msra.mxu0 0
        %1347 = vmatprep.subr.bf16.mxu0 0
        %1348 = vmatpush2.bf16.msra.mxu0 0
        %1349 = vmatprep.subr.bf16.mxu0 0
        %1350 = vmatpush2.bf16.msra.mxu0 0
        %1351 = vmatprep.subr.bf16.mxu0 0
        %1352 = vmatpush2.bf16.msra.mxu0 0
        %1353 = vmatprep.subr.bf16.mxu0 0
        %1354 = vmatpush2.bf16.msra.mxu0 0
        %1355 = vmatprep.subr.bf16.mxu0 0
        %1356 = vmatpush2.bf16.msra.mxu0 0
        %1357 = vmatprep.subr.bf16.mxu0 0
        %1358 = vmatpush2.bf16.msra.mxu0 0
        %1359 = vmatprep.mubr.bf16.mxu0 0
        %1360 = vmatmul.mubr.bf16.gmra.mxu0 %v1203
        %v1361 = vpop.f32.mrf.mxu0
        %v1362 = vadd.f32 0.0, %v1361
        %v1363 = vpop.f32.mrf.mxu0
        %v1364 = vadd.f32 0.0, %v1363
        %v1365 = vpop.f32.mrf.mxu0
        %v1366 = vpop.f32.mrf.mxu0
        %1367 = vdwg.mxu0
        %v1368 = vmax.f32 %v1239, %v1321
        %v1369 = vmax.f32 %v1241, %v1323
        %v1370 = vmax.f32 %v1280, %v1362
        %v1371 = vmax.f32 %v1282, %v1364
        %s1372 = scalar_lea.vmem %s438, 12
        %v1373 = vld [vmem:[%s1372] sm:$0xf]
        %1374 = vmatprep.subr.bf16.mxu0 %v598
        %1375 = vmatpush1.bf16.msra.mxu0 %v597
        %1376 = vmatprep.subr.bf16.mxu0 %v594
        %1377 = vmatpush1.bf16.msra.mxu0 %v593
        %1378 = vmatprep.subr.bf16.mxu0 %v590
        %1379 = vmatpush1.bf16.msra.mxu0 %v589
        %1380 = vmatprep.subr.bf16.mxu0 %v586
        %1381 = vmatpush1.bf16.msra.mxu0 %v585
        %1382 = vmatprep.subr.bf16.mxu0 %v582
        %1383 = vmatpush1.bf16.msra.mxu0 %v581
        %1384 = vmatprep.subr.bf16.mxu0 %v578
        %1385 = vmatpush1.bf16.msra.mxu0 %v577
        %1386 = vmatprep.subr.bf16.mxu0 %v574
        %1387 = vmatpush1.bf16.msra.mxu0 %v573
        %1388 = vmatprep.subr.bf16.mxu0 %v570
        %1389 = vmatpush1.bf16.msra.mxu0 %v569
        %1390 = vmatprep.subr.bf16.mxu0 0
        %1391 = vmatpush2.bf16.msra.mxu0 0
        %1392 = vmatprep.subr.bf16.mxu0 0
        %1393 = vmatpush2.bf16.msra.mxu0 0
        %1394 = vmatprep.subr.bf16.mxu0 0
        %1395 = vmatpush2.bf16.msra.mxu0 0
        %1396 = vmatprep.subr.bf16.mxu0 0
        %1397 = vmatpush2.bf16.msra.mxu0 0
        %1398 = vmatprep.subr.bf16.mxu0 0
        %1399 = vmatpush2.bf16.msra.mxu0 0
        %1400 = vmatprep.subr.bf16.mxu0 0
        %1401 = vmatpush2.bf16.msra.mxu0 0
        %1402 = vmatprep.subr.bf16.mxu0 0
        %1403 = vmatpush2.bf16.msra.mxu0 0
        %1404 = vmatprep.subr.bf16.mxu0 0
        %1405 = vmatpush2.bf16.msra.mxu0 0
        %1406 = vmatprep.mubr.bf16.mxu0 0
        %1407 = vmatmul.mubr.bf16.gmra.mxu0 %v1373
        %v1408 = vpop.f32.mrf.mxu0
        %v1409 = vadd.f32 0.0, %v1408
        %v1410 = vpop.f32.mrf.mxu0
        %v1411 = vadd.f32 0.0, %v1410
        %v1412 = vpop.f32.mrf.mxu0
        %v1413 = vpop.f32.mrf.mxu0
        %1414 = vdwg.mxu0
        %1415 = vmatprep.subr.bf16.mxu0 %v600
        %1416 = vmatpush1.bf16.msra.mxu0 %v599
        %1417 = vmatprep.subr.bf16.mxu0 %v596
        %1418 = vmatpush1.bf16.msra.mxu0 %v595
        %1419 = vmatprep.subr.bf16.mxu0 %v592
        %1420 = vmatpush1.bf16.msra.mxu0 %v591
        %1421 = vmatprep.subr.bf16.mxu0 %v588
        %1422 = vmatpush1.bf16.msra.mxu0 %v587
        %1423 = vmatprep.subr.bf16.mxu0 %v584
        %1424 = vmatpush1.bf16.msra.mxu0 %v583
        %1425 = vmatprep.subr.bf16.mxu0 %v580
        %1426 = vmatpush1.bf16.msra.mxu0 %v579
        %1427 = vmatprep.subr.bf16.mxu0 %v576
        %1428 = vmatpush1.bf16.msra.mxu0 %v575
        %1429 = vmatprep.subr.bf16.mxu0 %v572
        %1430 = vmatpush1.bf16.msra.mxu0 %v571
        %1431 = vmatprep.subr.bf16.mxu0 0
        %1432 = vmatpush2.bf16.msra.mxu0 0
        %1433 = vmatprep.subr.bf16.mxu0 0
        %1434 = vmatpush2.bf16.msra.mxu0 0
        %1435 = vmatprep.subr.bf16.mxu0 0
        %1436 = vmatpush2.bf16.msra.mxu0 0
        %1437 = vmatprep.subr.bf16.mxu0 0
        %1438 = vmatpush2.bf16.msra.mxu0 0
        %1439 = vmatprep.subr.bf16.mxu0 0
        %1440 = vmatpush2.bf16.msra.mxu0 0
        %1441 = vmatprep.subr.bf16.mxu0 0
        %1442 = vmatpush2.bf16.msra.mxu0 0
        %1443 = vmatprep.subr.bf16.mxu0 0
        %1444 = vmatpush2.bf16.msra.mxu0 0
        %1445 = vmatprep.subr.bf16.mxu0 0
        %1446 = vmatpush2.bf16.msra.mxu0 0
        %1447 = vmatprep.mubr.bf16.mxu0 0
        %1448 = vmatmul.mubr.bf16.gmra.mxu0 %v1373
        %v1449 = vpop.f32.mrf.mxu0
        %v1450 = vadd.f32 0.0, %v1449
        %v1451 = vpop.f32.mrf.mxu0
        %v1452 = vadd.f32 0.0, %v1451
        %v1453 = vpop.f32.mrf.mxu0
        %v1454 = vpop.f32.mrf.mxu0
        %1455 = vdwg.mxu0
        %v1456 = vmax.f32 %v1368, %v1409
        %v1457 = vmax.f32 %v1369, %v1411
        %v1458 = vmax.f32 %v1370, %v1450
        %v1459 = vmax.f32 %v1371, %v1452
        %1460 = vmatprep.subr.bf16.mxu0 %v873
        %1461 = vmatpush1.bf16.msra.mxu0 %v872
        %1462 = vmatprep.subr.bf16.mxu0 %v869
        %1463 = vmatpush1.bf16.msra.mxu0 %v868
        %1464 = vmatprep.subr.bf16.mxu0 %v865
        %1465 = vmatpush1.bf16.msra.mxu0 %v864
        %1466 = vmatprep.subr.bf16.mxu0 %v861
        %1467 = vmatpush1.bf16.msra.mxu0 %v860
        %1468 = vmatprep.subr.bf16.mxu0 %v857
        %1469 = vmatpush1.bf16.msra.mxu0 %v856
        %1470 = vmatprep.subr.bf16.mxu0 %v853
        %1471 = vmatpush1.bf16.msra.mxu0 %v852
        %1472 = vmatprep.subr.bf16.mxu0 %v849
        %1473 = vmatpush1.bf16.msra.mxu0 %v848
        %1474 = vmatprep.subr.bf16.mxu0 %v845
        %1475 = vmatpush1.bf16.msra.mxu0 %v844
        %1476 = vmatprep.subr.bf16.mxu0 0
        %1477 = vmatpush2.bf16.msra.mxu0 0
        %1478 = vmatprep.subr.bf16.mxu0 0
        %1479 = vmatpush2.bf16.msra.mxu0 0
        %1480 = vmatprep.subr.bf16.mxu0 0
        %1481 = vmatpush2.bf16.msra.mxu0 0
        %1482 = vmatprep.subr.bf16.mxu0 0
        %1483 = vmatpush2.bf16.msra.mxu0 0
        %1484 = vmatprep.subr.bf16.mxu0 0
        %1485 = vmatpush2.bf16.msra.mxu0 0
        %1486 = vmatprep.subr.bf16.mxu0 0
        %1487 = vmatpush2.bf16.msra.mxu0 0
        %1488 = vmatprep.subr.bf16.mxu0 0
        %1489 = vmatpush2.bf16.msra.mxu0 0
        %1490 = vmatprep.subr.bf16.mxu0 0
        %1491 = vmatpush2.bf16.msra.mxu0 0
        %1492 = vmatprep.mubr.bf16.mxu0 0
        %1493 = vmatmul.mubr.bf16.gmra.mxu0 %v1373
        %v1494 = vpop.f32.mrf.mxu0
        %v1495 = vadd.f32 0.0, %v1494
        %v1496 = vpop.f32.mrf.mxu0
        %v1497 = vadd.f32 0.0, %v1496
        %v1498 = vpop.f32.mrf.mxu0
        %v1499 = vpop.f32.mrf.mxu0
        %1500 = vdwg.mxu0
        %1501 = vmatprep.subr.bf16.mxu0 %v875
        %1502 = vmatpush1.bf16.msra.mxu0 %v874
        %1503 = vmatprep.subr.bf16.mxu0 %v871
        %1504 = vmatpush1.bf16.msra.mxu0 %v870
        %1505 = vmatprep.subr.bf16.mxu0 %v867
        %1506 = vmatpush1.bf16.msra.mxu0 %v866
        %1507 = vmatprep.subr.bf16.mxu0 %v863
        %1508 = vmatpush1.bf16.msra.mxu0 %v862
        %1509 = vmatprep.subr.bf16.mxu0 %v859
        %1510 = vmatpush1.bf16.msra.mxu0 %v858
        %1511 = vmatprep.subr.bf16.mxu0 %v855
        %1512 = vmatpush1.bf16.msra.mxu0 %v854
        %1513 = vmatprep.subr.bf16.mxu0 %v851
        %1514 = vmatpush1.bf16.msra.mxu0 %v850
        %1515 = vmatprep.subr.bf16.mxu0 %v847
        %1516 = vmatpush1.bf16.msra.mxu0 %v846
        %1517 = vmatprep.subr.bf16.mxu0 0
        %1518 = vmatpush2.bf16.msra.mxu0 0
        %1519 = vmatprep.subr.bf16.mxu0 0
        %1520 = vmatpush2.bf16.msra.mxu0 0
        %1521 = vmatprep.subr.bf16.mxu0 0
        %1522 = vmatpush2.bf16.msra.mxu0 0
        %1523 = vmatprep.subr.bf16.mxu0 0
        %1524 = vmatpush2.bf16.msra.mxu0 0
        %1525 = vmatprep.subr.bf16.mxu0 0
        %1526 = vmatpush2.bf16.msra.mxu0 0
        %1527 = vmatprep.subr.bf16.mxu0 0
        %1528 = vmatpush2.bf16.msra.mxu0 0
        %1529 = vmatprep.subr.bf16.mxu0 0
        %1530 = vmatpush2.bf16.msra.mxu0 0
        %1531 = vmatprep.subr.bf16.mxu0 0
        %1532 = vmatpush2.bf16.msra.mxu0 0
        %1533 = vmatprep.mubr.bf16.mxu0 0
        %1534 = vmatmul.mubr.bf16.gmra.mxu0 %v1373
        %v1535 = vpop.f32.mrf.mxu0
        %v1536 = vadd.f32 0.0, %v1535
        %v1537 = vpop.f32.mrf.mxu0
        %v1538 = vadd.f32 0.0, %v1537
        %v1539 = vpop.f32.mrf.mxu0
        %v1540 = vpop.f32.mrf.mxu0
        %1541 = vdwg.mxu0
        %v1542 = vmax.f32 %v1456, %v1495
        %v1543 = vmax.f32 %v1457, %v1497
        %v1544 = vmax.f32 %v1458, %v1536
        %v1545 = vmax.f32 %v1459, %v1538
        %v1546 = vadd.f32 %v1542, %v1173
        %v1547 = vadd.f32 %v1543, %v1177
        %v1548 = vadd.f32 %v1544, %v1181
        %v1549 = vadd.f32 %v1545, %v1185
        %v1550 = vmax.f32 %v1546, 0.0
        %v1551 = vmax.f32 %v1547, 0.0
        %v1552 = vmax.f32 %v1548, 0.0
        %v1553 = vmax.f32 %v1549, 0.0
        %v1554 = vpack.c.bf16 %v1550, %v1550
        %v1555 = vpack.c.bf16 %v1551, %v1551
        %v1556 = vpack.c.bf16 %v1552, %v1552
        %v1557 = vpack.c.bf16 %v1553, %v1553
        %v1559 = vshrl.u32 %v1554, 16
        %v1561 = vrot.slane %v1559, 7
        %v1562 = vshll.u32 %v1554, 16
        %v1564 = vor.u32 %v1561, %v1562
        %v1566 = vshrl.u32 %v1555, 16
        %v1568 = vrot.slane %v1566, 7
        %v1569 = vshll.u32 %v1555, 16
        %v1571 = vor.u32 %v1568, %v1569
        %v1573 = vshrl.u32 %v1556, 16
        %v1575 = vrot.slane %v1573, 7
        %v1576 = vshll.u32 %v1556, 16
        %v1578 = vor.u32 %v1575, %v1576
        %v1580 = vshrl.u32 %v1557, 16
        %v1582 = vrot.slane %v1580, 7
        %v1583 = vshll.u32 %v1557, 16
        %v1585 = vor.u32 %v1582, %v1583
        %vm1590 = vcmask 1040384
        %vm1591 = vsmask.f32 256
        %vm1592 = vmand %vm1590, %vm1591
        %v1593 = vsel %vm1592, 0, %v1564
        %v1594 = vsel %vm1592, 0, %v1571
        %v1595 = vsel %vm1592, 0, %v1578
        %v1596 = vsel %vm1592, 0, %v1585
        %v1598 = vshrl.u32 %v1198, 16
        %v1600 = vshll.u32 %v1198, 16
        %v1602 = vrot.slane %v1600, 1
        %v1603 = vor.u32 %v1598, %v1602
        %v1605 = vshrl.u32 %v1199, 16
        %v1607 = vshll.u32 %v1199, 16
        %v1609 = vrot.slane %v1607, 1
        %v1610 = vor.u32 %v1605, %v1609
        %v1612 = vshrl.u32 %v1200, 16
        %v1614 = vshll.u32 %v1200, 16
        %v1616 = vrot.slane %v1614, 1
        %v1617 = vor.u32 %v1612, %v1616
        %v1619 = vshrl.u32 %v1201, 16
        %v1621 = vshll.u32 %v1201, 16
        %v1623 = vrot.slane %v1621, 1
        %v1624 = vor.u32 %v1619, %v1623
        %vm1625 = vcmask 1042432
        %v1628 = vsel %vm1625, %v1603, 0
        %v1631 = vsel %vm1625, %v1610, 0
        %v1634 = vsel %vm1625, %v1617, 0
        %v1637 = vsel %vm1625, %v1624, 0
        %v1639 = vld [vmem:[#allocation7] sm:$0xff]
        %v1640 = vld [vmem:[#allocation7 + $0x8] sm:$0xff]
        %v1641 = vld [vmem:[#allocation7 + $0x10] sm:$0xff]
        %v1642 = vld [vmem:[#allocation7 + $0x18] sm:$0xff]
        %v1643 = vld [vmem:[#allocation7 + $0x20] sm:$0xff]
        %v1644 = vld [vmem:[#allocation7 + $0x28] sm:$0xff]
        %v1645 = vld [vmem:[#allocation7 + $0x30] sm:$0xff]
        %v1646 = vld [vmem:[#allocation7 + $0x38] sm:$0xff]
        %v1647 = vld [vmem:[#allocation7 + $0x40] sm:$0xff]
        %v1648 = vld [vmem:[#allocation7 + $0x48] sm:$0xff]
        %v1649 = vld [vmem:[#allocation7 + $0x50] sm:$0xff]
        %v1650 = vld [vmem:[#allocation7 + $0x58] sm:$0xff]
        %v1651 = vld [vmem:[#allocation7 + $0x60] sm:$0xff]
        %v1652 = vld [vmem:[#allocation7 + $0x68] sm:$0xff]
        %v1653 = vld [vmem:[#allocation7 + $0x70] sm:$0xff]
        %v1654 = vld [vmem:[#allocation7 + $0x78] sm:$0xff]
        %v1655 = vld [vmem:[#allocation7 + $0x80] sm:$0xff]
        %v1656 = vld [vmem:[#allocation7 + $0x88] sm:$0xff]
        %v1657 = vld [vmem:[#allocation7 + $0x90] sm:$0xff]
        %v1658 = vld [vmem:[#allocation7 + $0x98] sm:$0xff]
        %v1659 = vld [vmem:[#allocation7 + $0xa0] sm:$0xff]
        %v1660 = vld [vmem:[#allocation7 + $0xa8] sm:$0xff]
        %v1661 = vld [vmem:[#allocation7 + $0xb0] sm:$0xff]
        %v1662 = vld [vmem:[#allocation7 + $0xb8] sm:$0xff]
        %v1663 = vld [vmem:[#allocation7 + $0xc0] sm:$0xff]
        %v1664 = vld [vmem:[#allocation7 + $0xc8] sm:$0xff]
        %v1665 = vld [vmem:[#allocation7 + $0xd0] sm:$0xff]
        %v1666 = vld [vmem:[#allocation7 + $0xd8] sm:$0xff]
        %v1667 = vld [vmem:[#allocation7 + $0xe0] sm:$0xff]
        %v1668 = vld [vmem:[#allocation7 + $0xe8] sm:$0xff]
        %v1669 = vld [vmem:[#allocation7 + $0xf0] sm:$0xff]
        %v1670 = vld [vmem:[#allocation7 + $0xf8] sm:$0xff]
        %v1671 = vld [vmem:[#allocation7 + $0x100] sm:$0xff]
        %v1672 = vld [vmem:[#allocation7 + $0x108] sm:$0xff]
        %v1673 = vld [vmem:[#allocation7 + $0x110] sm:$0xff]
        %v1674 = vld [vmem:[#allocation7 + $0x118] sm:$0xff]
        %v1675 = vld [vmem:[#allocation7 + $0x120] sm:$0xff]
        %v1676 = vld [vmem:[#allocation7 + $0x128] sm:$0xff]
        %v1677 = vld [vmem:[#allocation7 + $0x130] sm:$0xff]
        %v1678 = vld [vmem:[#allocation7 + $0x138] sm:$0xff]
        %v1679 = vld [vmem:[#allocation7 + $0x140] sm:$0xff]
        %v1680 = vld [vmem:[#allocation7 + $0x148] sm:$0xff]
        %v1681 = vld [vmem:[#allocation7 + $0x150] sm:$0xff]
        %v1682 = vld [vmem:[#allocation7 + $0x158] sm:$0xff]
        %v1683 = vld [vmem:[#allocation7 + $0x160] sm:$0xff]
        %v1684 = vld [vmem:[#allocation7 + $0x168] sm:$0xff]
        %v1685 = vld [vmem:[#allocation7 + $0x170] sm:$0xff]
        %v1686 = vld [vmem:[#allocation7 + $0x178] sm:$0xff]
        %v1687 = vld [vmem:[#allocation7 + $0x180] sm:$0xff]
        %v1688 = vld [vmem:[#allocation7 + $0x188] sm:$0xff]
        %v1689 = vld [vmem:[#allocation7 + $0x190] sm:$0xff]
        %v1690 = vld [vmem:[#allocation7 + $0x198] sm:$0xff]
        %v1691 = vld [vmem:[#allocation7 + $0x1a0] sm:$0xff]
        %v1692 = vld [vmem:[#allocation7 + $0x1a8] sm:$0xff]
        %v1693 = vld [vmem:[#allocation7 + $0x1b0] sm:$0xff]
        %v1694 = vld [vmem:[#allocation7 + $0x1b8] sm:$0xff]
        %v1695 = vld [vmem:[#allocation7 + $0x1c0] sm:$0xff]
        %v1696 = vld [vmem:[#allocation7 + $0x1c8] sm:$0xff]
        %v1697 = vld [vmem:[#allocation7 + $0x1d0] sm:$0xff]
        %v1698 = vld [vmem:[#allocation7 + $0x1d8] sm:$0xff]
        %v1699 = vld [vmem:[#allocation7 + $0x1e0] sm:$0xff]
        %v1700 = vld [vmem:[#allocation7 + $0x1e8] sm:$0xff]
        %v1701 = vld [vmem:[#allocation7 + $0x1f0] sm:$0xff]
        %v1702 = vld [vmem:[#allocation7 + $0x1f8] sm:$0xff]
        %v1703 = vld [vmem:[#allocation7 + $0x200] sm:$0xff]
        %v1704 = vld [vmem:[#allocation7 + $0x208] sm:$0xff]
        %v1705 = vld [vmem:[#allocation7 + $0x210] sm:$0xff]
        %v1706 = vld [vmem:[#allocation7 + $0x218] sm:$0xff]
        %v1707 = vld [vmem:[#allocation7 + $0x220] sm:$0xff]
        %v1708 = vld [vmem:[#allocation7 + $0x228] sm:$0xff]
        %v1709 = vld [vmem:[#allocation7 + $0x230] sm:$0xff]
        %v1710 = vld [vmem:[#allocation7 + $0x238] sm:$0xff]
        %v1711 = vld [vmem:[#allocation7 + $0x240] sm:$0xff]
        %v1712 = vld [vmem:[#allocation7 + $0x248] sm:$0xff]
        %v1713 = vld [vmem:[#allocation7 + $0x250] sm:$0xff]
        %v1714 = vld [vmem:[#allocation7 + $0x258] sm:$0xff]
        %v1715 = vld [vmem:[#allocation7 + $0x260] sm:$0xff]
        %v1716 = vld [vmem:[#allocation7 + $0x268] sm:$0xff]
        %v1717 = vld [vmem:[#allocation7 + $0x270] sm:$0xff]
        %v1718 = vld [vmem:[#allocation7 + $0x278] sm:$0xff]
        %v1719 = vld [vmem:[#allocation7 + $0x280] sm:$0xff]
        %v1720 = vld [vmem:[#allocation7 + $0x288] sm:$0xff]
        %v1721 = vld [vmem:[#allocation7 + $0x290] sm:$0xff]
        %v1722 = vld [vmem:[#allocation7 + $0x298] sm:$0xff]
        %v1723 = vld [vmem:[#allocation7 + $0x2a0] sm:$0xff]
        %v1724 = vld [vmem:[#allocation7 + $0x2a8] sm:$0xff]
        %v1725 = vld [vmem:[#allocation7 + $0x2b0] sm:$0xff]
        %v1726 = vld [vmem:[#allocation7 + $0x2b8] sm:$0xff]
        %v1727 = vld [vmem:[#allocation7 + $0x2c0] sm:$0xff]
        %v1728 = vld [vmem:[#allocation7 + $0x2c8] sm:$0xff]
        %v1729 = vld [vmem:[#allocation7 + $0x2d0] sm:$0xff]
        %v1730 = vld [vmem:[#allocation7 + $0x2d8] sm:$0xff]
        %v1731 = vld [vmem:[#allocation7 + $0x2e0] sm:$0xff]
        %v1732 = vld [vmem:[#allocation7 + $0x2e8] sm:$0xff]
        %v1733 = vld [vmem:[#allocation7 + $0x2f0] sm:$0xff]
        %v1734 = vld [vmem:[#allocation7 + $0x2f8] sm:$0xff]
        %v1735 = vld [vmem:[#allocation7 + $0x300] sm:$0xff]
        %v1736 = vld [vmem:[#allocation7 + $0x308] sm:$0xff]
        %v1737 = vld [vmem:[#allocation7 + $0x310] sm:$0xff]
        %v1738 = vld [vmem:[#allocation7 + $0x318] sm:$0xff]
        %v1739 = vld [vmem:[#allocation7 + $0x320] sm:$0xff]
        %v1740 = vld [vmem:[#allocation7 + $0x328] sm:$0xff]
        %v1741 = vld [vmem:[#allocation7 + $0x330] sm:$0xff]
        %v1742 = vld [vmem:[#allocation7 + $0x338] sm:$0xff]
        %v1743 = vld [vmem:[#allocation7 + $0x340] sm:$0xff]
        %v1744 = vld [vmem:[#allocation7 + $0x348] sm:$0xff]
        %v1745 = vld [vmem:[#allocation7 + $0x350] sm:$0xff]
        %v1746 = vld [vmem:[#allocation7 + $0x358] sm:$0xff]
        %v1747 = vld [vmem:[#allocation7 + $0x360] sm:$0xff]
        %v1748 = vld [vmem:[#allocation7 + $0x368] sm:$0xff]
        %v1749 = vld [vmem:[#allocation7 + $0x370] sm:$0xff]
        %v1750 = vld [vmem:[#allocation7 + $0x378] sm:$0xff]
        %v1751 = vld [vmem:[#allocation7 + $0x380] sm:$0xff]
        %v1752 = vld [vmem:[#allocation7 + $0x388] sm:$0xff]
        %v1753 = vld [vmem:[#allocation7 + $0x390] sm:$0xff]
        %v1754 = vld [vmem:[#allocation7 + $0x398] sm:$0xff]
        %v1755 = vld [vmem:[#allocation7 + $0x3a0] sm:$0xff]
        %v1756 = vld [vmem:[#allocation7 + $0x3a8] sm:$0xff]
        %v1757 = vld [vmem:[#allocation7 + $0x3b0] sm:$0xff]
        %v1758 = vld [vmem:[#allocation7 + $0x3b8] sm:$0xff]
        %v1759 = vld [vmem:[#allocation7 + $0x3c0] sm:$0xff]
        %v1760 = vld [vmem:[#allocation7 + $0x3c8] sm:$0xff]
        %v1761 = vld [vmem:[#allocation7 + $0x3d0] sm:$0xff]
        %v1762 = vld [vmem:[#allocation7 + $0x3d8] sm:$0xff]
        %v1763 = vld [vmem:[#allocation7 + $0x3e0] sm:$0xff]
        %v1764 = vld [vmem:[#allocation7 + $0x3e8] sm:$0xff]
        %v1765 = vld [vmem:[#allocation7 + $0x3f0] sm:$0xff]
        %v1766 = vld [vmem:[#allocation7 + $0x3f8] sm:$0xff]
        %s1767 = scalar_lea.vmem [#allocation7], 1024
        %v1768 = vld [vmem:[%s1767] sm:$0xff]
        %v1769 = vld [vmem:[%s1767 + $0x8] sm:$0xff]
        %v1770 = vld [vmem:[%s1767 + $0x10] sm:$0xff]
        %v1771 = vld [vmem:[%s1767 + $0x18] sm:$0xff]
        %v1772 = vld [vmem:[%s1767 + $0x20] sm:$0xff]
        %v1773 = vld [vmem:[%s1767 + $0x28] sm:$0xff]
        %v1774 = vld [vmem:[%s1767 + $0x30] sm:$0xff]
        %v1775 = vld [vmem:[%s1767 + $0x38] sm:$0xff]
        %v1776 = vld [vmem:[%s1767 + $0x40] sm:$0xff]
        %v1777 = vld [vmem:[%s1767 + $0x48] sm:$0xff]
        %v1778 = vld [vmem:[%s1767 + $0x50] sm:$0xff]
        %v1779 = vld [vmem:[%s1767 + $0x58] sm:$0xff]
        %v1780 = vld [vmem:[%s1767 + $0x60] sm:$0xff]
        %v1781 = vld [vmem:[%s1767 + $0x68] sm:$0xff]
        %v1782 = vld [vmem:[%s1767 + $0x70] sm:$0xff]
        %v1783 = vld [vmem:[%s1767 + $0x78] sm:$0xff]
        %v1784 = vld [vmem:[%s1767 + $0x80] sm:$0xff]
        %v1785 = vld [vmem:[%s1767 + $0x88] sm:$0xff]
        %v1786 = vld [vmem:[%s1767 + $0x90] sm:$0xff]
        %v1787 = vld [vmem:[%s1767 + $0x98] sm:$0xff]
        %v1788 = vld [vmem:[%s1767 + $0xa0] sm:$0xff]
        %v1789 = vld [vmem:[%s1767 + $0xa8] sm:$0xff]
        %v1790 = vld [vmem:[%s1767 + $0xb0] sm:$0xff]
        %v1791 = vld [vmem:[%s1767 + $0xb8] sm:$0xff]
        %v1792 = vld [vmem:[%s1767 + $0xc0] sm:$0xff]
        %v1793 = vld [vmem:[%s1767 + $0xc8] sm:$0xff]
        %v1794 = vld [vmem:[%s1767 + $0xd0] sm:$0xff]
        %v1795 = vld [vmem:[%s1767 + $0xd8] sm:$0xff]
        %v1796 = vld [vmem:[%s1767 + $0xe0] sm:$0xff]
        %v1797 = vld [vmem:[%s1767 + $0xe8] sm:$0xff]
        %v1798 = vld [vmem:[%s1767 + $0xf0] sm:$0xff]
        %v1799 = vld [vmem:[%s1767 + $0xf8] sm:$0xff]
        %v1800 = vld [vmem:[%s1767 + $0x100] sm:$0xff]
        %v1801 = vld [vmem:[%s1767 + $0x108] sm:$0xff]
        %v1802 = vld [vmem:[%s1767 + $0x110] sm:$0xff]
        %v1803 = vld [vmem:[%s1767 + $0x118] sm:$0xff]
        %v1804 = vld [vmem:[%s1767 + $0x120] sm:$0xff]
        %v1805 = vld [vmem:[%s1767 + $0x128] sm:$0xff]
        %v1806 = vld [vmem:[%s1767 + $0x130] sm:$0xff]
        %v1807 = vld [vmem:[%s1767 + $0x138] sm:$0xff]
        %v1808 = vld [vmem:[%s1767 + $0x140] sm:$0xff]
        %v1809 = vld [vmem:[%s1767 + $0x148] sm:$0xff]
        %v1810 = vld [vmem:[%s1767 + $0x150] sm:$0xff]
        %v1811 = vld [vmem:[%s1767 + $0x158] sm:$0xff]
        %v1812 = vld [vmem:[%s1767 + $0x160] sm:$0xff]
        %v1813 = vld [vmem:[%s1767 + $0x168] sm:$0xff]
        %v1814 = vld [vmem:[%s1767 + $0x170] sm:$0xff]
        %v1815 = vld [vmem:[%s1767 + $0x178] sm:$0xff]
        %v1816 = vld [vmem:[%s1767 + $0x180] sm:$0xff]
        %v1817 = vld [vmem:[%s1767 + $0x188] sm:$0xff]
        %v1818 = vld [vmem:[%s1767 + $0x190] sm:$0xff]
        %v1819 = vld [vmem:[%s1767 + $0x198] sm:$0xff]
        %v1820 = vld [vmem:[%s1767 + $0x1a0] sm:$0xff]
        %v1821 = vld [vmem:[%s1767 + $0x1a8] sm:$0xff]
        %v1822 = vld [vmem:[%s1767 + $0x1b0] sm:$0xff]
        %v1823 = vld [vmem:[%s1767 + $0x1b8] sm:$0xff]
        %v1824 = vld [vmem:[%s1767 + $0x1c0] sm:$0xff]
        %v1825 = vld [vmem:[%s1767 + $0x1c8] sm:$0xff]
        %v1826 = vld [vmem:[%s1767 + $0x1d0] sm:$0xff]
        %v1827 = vld [vmem:[%s1767 + $0x1d8] sm:$0xff]
        %v1828 = vld [vmem:[%s1767 + $0x1e0] sm:$0xff]
        %v1829 = vld [vmem:[%s1767 + $0x1e8] sm:$0xff]
        %v1830 = vld [vmem:[%s1767 + $0x1f0] sm:$0xff]
        %v1831 = vld [vmem:[%s1767 + $0x1f8] sm:$0xff]
        %v1832 = vld [vmem:[%s1767 + $0x200] sm:$0xff]
        %v1833 = vld [vmem:[%s1767 + $0x208] sm:$0xff]
        %v1834 = vld [vmem:[%s1767 + $0x210] sm:$0xff]
        %v1835 = vld [vmem:[%s1767 + $0x218] sm:$0xff]
        %v1836 = vld [vmem:[%s1767 + $0x220] sm:$0xff]
        %v1837 = vld [vmem:[%s1767 + $0x228] sm:$0xff]
        %v1838 = vld [vmem:[%s1767 + $0x230] sm:$0xff]
        %v1839 = vld [vmem:[%s1767 + $0x238] sm:$0xff]
        %v1840 = vld [vmem:[%s1767 + $0x240] sm:$0xff]
        %v1841 = vld [vmem:[%s1767 + $0x248] sm:$0xff]
        %v1842 = vld [vmem:[%s1767 + $0x250] sm:$0xff]
        %v1843 = vld [vmem:[%s1767 + $0x258] sm:$0xff]
        %v1844 = vld [vmem:[%s1767 + $0x260] sm:$0xff]
        %v1845 = vld [vmem:[%s1767 + $0x268] sm:$0xff]
        %v1846 = vld [vmem:[%s1767 + $0x270] sm:$0xff]
        %v1847 = vld [vmem:[%s1767 + $0x278] sm:$0xff]
        %v1848 = vld [vmem:[%s1767 + $0x280] sm:$0xff]
        %v1849 = vld [vmem:[%s1767 + $0x288] sm:$0xff]
        %v1850 = vld [vmem:[%s1767 + $0x290] sm:$0xff]
        %v1851 = vld [vmem:[%s1767 + $0x298] sm:$0xff]
        %v1852 = vld [vmem:[%s1767 + $0x2a0] sm:$0xff]
        %v1853 = vld [vmem:[%s1767 + $0x2a8] sm:$0xff]
        %v1854 = vld [vmem:[%s1767 + $0x2b0] sm:$0xff]
        %v1855 = vld [vmem:[%s1767 + $0x2b8] sm:$0xff]
        %v1856 = vld [vmem:[%s1767 + $0x2c0] sm:$0xff]
        %v1857 = vld [vmem:[%s1767 + $0x2c8] sm:$0xff]
        %v1858 = vld [vmem:[%s1767 + $0x2d0] sm:$0xff]
        %v1859 = vld [vmem:[%s1767 + $0x2d8] sm:$0xff]
        %v1860 = vld [vmem:[%s1767 + $0x2e0] sm:$0xff]
        %v1861 = vld [vmem:[%s1767 + $0x2e8] sm:$0xff]
        %v1862 = vld [vmem:[%s1767 + $0x2f0] sm:$0xff]
        %v1863 = vld [vmem:[%s1767 + $0x2f8] sm:$0xff]
        %v1864 = vld [vmem:[%s1767 + $0x300] sm:$0xff]
        %v1865 = vld [vmem:[%s1767 + $0x308] sm:$0xff]
        %v1866 = vld [vmem:[%s1767 + $0x310] sm:$0xff]
        %v1867 = vld [vmem:[%s1767 + $0x318] sm:$0xff]
        %v1868 = vld [vmem:[%s1767 + $0x320] sm:$0xff]
        %v1869 = vld [vmem:[%s1767 + $0x328] sm:$0xff]
        %v1870 = vld [vmem:[%s1767 + $0x330] sm:$0xff]
        %v1871 = vld [vmem:[%s1767 + $0x338] sm:$0xff]
        %v1872 = vld [vmem:[%s1767 + $0x340] sm:$0xff]
        %v1873 = vld [vmem:[%s1767 + $0x348] sm:$0xff]
        %v1874 = vld [vmem:[%s1767 + $0x350] sm:$0xff]
        %v1875 = vld [vmem:[%s1767 + $0x358] sm:$0xff]
        %v1876 = vld [vmem:[%s1767 + $0x360] sm:$0xff]
        %v1877 = vld [vmem:[%s1767 + $0x368] sm:$0xff]
        %v1878 = vld [vmem:[%s1767 + $0x370] sm:$0xff]
        %v1879 = vld [vmem:[%s1767 + $0x378] sm:$0xff]
        %v1880 = vld [vmem:[%s1767 + $0x380] sm:$0xff]
        %v1881 = vld [vmem:[%s1767 + $0x388] sm:$0xff]
        %v1882 = vld [vmem:[%s1767 + $0x390] sm:$0xff]
        %v1883 = vld [vmem:[%s1767 + $0x398] sm:$0xff]
        %v1884 = vld [vmem:[%s1767 + $0x3a0] sm:$0xff]
        %v1885 = vld [vmem:[%s1767 + $0x3a8] sm:$0xff]
        %v1886 = vld [vmem:[%s1767 + $0x3b0] sm:$0xff]
        %v1887 = vld [vmem:[%s1767 + $0x3b8] sm:$0xff]
        %v1888 = vld [vmem:[%s1767 + $0x3c0] sm:$0xff]
        %v1889 = vld [vmem:[%s1767 + $0x3c8] sm:$0xff]
        %v1890 = vld [vmem:[%s1767 + $0x3d0] sm:$0xff]
        %v1891 = vld [vmem:[%s1767 + $0x3d8] sm:$0xff]
        %v1892 = vld [vmem:[%s1767 + $0x3e0] sm:$0xff]
        %v1893 = vld [vmem:[%s1767 + $0x3e8] sm:$0xff]
        %v1894 = vld [vmem:[%s1767 + $0x3f0] sm:$0xff]
        %v1895 = vld [vmem:[%s1767 + $0x3f8] sm:$0xff]
        %v2024 = vunpack.c.l.b16 %v1768
        %v2025 = vunpack.c.h.b16 %v1768
        %v2026 = vunpack.c.l.b16 %v1769
        %v2027 = vunpack.c.h.b16 %v1769
        %v2028 = vunpack.c.l.b16 %v1770
        %v2029 = vunpack.c.h.b16 %v1770
        %v2030 = vunpack.c.l.b16 %v1771
        %v2031 = vunpack.c.h.b16 %v1771
        %v2032 = vunpack.c.l.b16 %v1772
        %v2033 = vunpack.c.h.b16 %v1772
        %v2034 = vunpack.c.l.b16 %v1773
        %v2035 = vunpack.c.h.b16 %v1773
        %v2036 = vunpack.c.l.b16 %v1774
        %v2037 = vunpack.c.h.b16 %v1774
        %v2038 = vunpack.c.l.b16 %v1775
        %v2039 = vunpack.c.h.b16 %v1775
        %v2040 = vunpack.c.l.b16 %v1776
        %v2041 = vunpack.c.h.b16 %v1776
        %v2042 = vunpack.c.l.b16 %v1777
        %v2043 = vunpack.c.h.b16 %v1777
        %v2044 = vunpack.c.l.b16 %v1778
        %v2045 = vunpack.c.h.b16 %v1778
        %v2046 = vunpack.c.l.b16 %v1779
        %v2047 = vunpack.c.h.b16 %v1779
        %v2048 = vunpack.c.l.b16 %v1780
        %v2049 = vunpack.c.h.b16 %v1780
        %v2050 = vunpack.c.l.b16 %v1781
        %v2051 = vunpack.c.h.b16 %v1781
        %v2052 = vunpack.c.l.b16 %v1782
        %v2053 = vunpack.c.h.b16 %v1782
        %v2054 = vunpack.c.l.b16 %v1783
        %v2055 = vunpack.c.h.b16 %v1783
        %v2056 = vunpack.c.l.b16 %v1784
        %v2057 = vunpack.c.h.b16 %v1784
        %v2058 = vunpack.c.l.b16 %v1785
        %v2059 = vunpack.c.h.b16 %v1785
        %v2060 = vunpack.c.l.b16 %v1786
        %v2061 = vunpack.c.h.b16 %v1786
        %v2062 = vunpack.c.l.b16 %v1787
        %v2063 = vunpack.c.h.b16 %v1787
        %v2064 = vunpack.c.l.b16 %v1788
        %v2065 = vunpack.c.h.b16 %v1788
        %v2066 = vunpack.c.l.b16 %v1789
        %v2067 = vunpack.c.h.b16 %v1789
        %v2068 = vunpack.c.l.b16 %v1790
        %v2069 = vunpack.c.h.b16 %v1790
        %v2070 = vunpack.c.l.b16 %v1791
        %v2071 = vunpack.c.h.b16 %v1791
        %v2072 = vunpack.c.l.b16 %v1792
        %v2073 = vunpack.c.h.b16 %v1792
        %v2074 = vunpack.c.l.b16 %v1793
        %v2075 = vunpack.c.h.b16 %v1793
        %v2076 = vunpack.c.l.b16 %v1794
        %v2077 = vunpack.c.h.b16 %v1794
        %v2078 = vunpack.c.l.b16 %v1795
        %v2079 = vunpack.c.h.b16 %v1795
        %v2080 = vunpack.c.l.b16 %v1796
        %v2081 = vunpack.c.h.b16 %v1796
        %v2082 = vunpack.c.l.b16 %v1797
        %v2083 = vunpack.c.h.b16 %v1797
        %v2084 = vunpack.c.l.b16 %v1798
        %v2085 = vunpack.c.h.b16 %v1798
        %v2086 = vunpack.c.l.b16 %v1799
        %v2087 = vunpack.c.h.b16 %v1799
        %v2088 = vunpack.c.l.b16 %v1800
        %v2089 = vunpack.c.h.b16 %v1800
        %v2090 = vunpack.c.l.b16 %v1801
        %v2091 = vunpack.c.h.b16 %v1801
        %v2092 = vunpack.c.l.b16 %v1802
        %v2093 = vunpack.c.h.b16 %v1802
        %v2094 = vunpack.c.l.b16 %v1803
        %v2095 = vunpack.c.h.b16 %v1803
        %v2096 = vunpack.c.l.b16 %v1804
        %v2097 = vunpack.c.h.b16 %v1804
        %v2098 = vunpack.c.l.b16 %v1805
        %v2099 = vunpack.c.h.b16 %v1805
        %v2100 = vunpack.c.l.b16 %v1806
        %v2101 = vunpack.c.h.b16 %v1806
        %v2102 = vunpack.c.l.b16 %v1807
        %v2103 = vunpack.c.h.b16 %v1807
        %v2104 = vunpack.c.l.b16 %v1808
        %v2105 = vunpack.c.h.b16 %v1808
        %v2106 = vunpack.c.l.b16 %v1809
        %v2107 = vunpack.c.h.b16 %v1809
        %v2108 = vunpack.c.l.b16 %v1810
        %v2109 = vunpack.c.h.b16 %v1810
        %v2110 = vunpack.c.l.b16 %v1811
        %v2111 = vunpack.c.h.b16 %v1811
        %v2112 = vunpack.c.l.b16 %v1812
        %v2113 = vunpack.c.h.b16 %v1812
        %v2114 = vunpack.c.l.b16 %v1813
        %v2115 = vunpack.c.h.b16 %v1813
        %v2116 = vunpack.c.l.b16 %v1814
        %v2117 = vunpack.c.h.b16 %v1814
        %v2118 = vunpack.c.l.b16 %v1815
        %v2119 = vunpack.c.h.b16 %v1815
        %v2120 = vunpack.c.l.b16 %v1816
        %v2121 = vunpack.c.h.b16 %v1816
        %v2122 = vunpack.c.l.b16 %v1817
        %v2123 = vunpack.c.h.b16 %v1817
        %v2124 = vunpack.c.l.b16 %v1818
        %v2125 = vunpack.c.h.b16 %v1818
        %v2126 = vunpack.c.l.b16 %v1819
        %v2127 = vunpack.c.h.b16 %v1819
        %v2128 = vunpack.c.l.b16 %v1820
        %v2129 = vunpack.c.h.b16 %v1820
        %v2130 = vunpack.c.l.b16 %v1821
        %v2131 = vunpack.c.h.b16 %v1821
        %v2132 = vunpack.c.l.b16 %v1822
        %v2133 = vunpack.c.h.b16 %v1822
        %v2134 = vunpack.c.l.b16 %v1823
        %v2135 = vunpack.c.h.b16 %v1823
        %v2136 = vunpack.c.l.b16 %v1824
        %v2137 = vunpack.c.h.b16 %v1824
        %v2138 = vunpack.c.l.b16 %v1825
        %v2139 = vunpack.c.h.b16 %v1825
        %v2140 = vunpack.c.l.b16 %v1826
        %v2141 = vunpack.c.h.b16 %v1826
        %v2142 = vunpack.c.l.b16 %v1827
        %v2143 = vunpack.c.h.b16 %v1827
        %v2144 = vunpack.c.l.b16 %v1828
        %v2145 = vunpack.c.h.b16 %v1828
        %v2146 = vunpack.c.l.b16 %v1829
        %v2147 = vunpack.c.h.b16 %v1829
        %v2148 = vunpack.c.l.b16 %v1830
        %v2149 = vunpack.c.h.b16 %v1830
        %v2150 = vunpack.c.l.b16 %v1831
        %v2151 = vunpack.c.h.b16 %v1831
        %v2152 = vunpack.c.l.b16 %v1832
        %v2153 = vunpack.c.h.b16 %v1832
        %v2154 = vunpack.c.l.b16 %v1833
        %v2155 = vunpack.c.h.b16 %v1833
        %v2156 = vunpack.c.l.b16 %v1834
        %v2157 = vunpack.c.h.b16 %v1834
        %v2158 = vunpack.c.l.b16 %v1835
        %v2159 = vunpack.c.h.b16 %v1835
        %v2160 = vunpack.c.l.b16 %v1836
        %v2161 = vunpack.c.h.b16 %v1836
        %v2162 = vunpack.c.l.b16 %v1837
        %v2163 = vunpack.c.h.b16 %v1837
        %v2164 = vunpack.c.l.b16 %v1838
        %v2165 = vunpack.c.h.b16 %v1838
        %v2166 = vunpack.c.l.b16 %v1839
        %v2167 = vunpack.c.h.b16 %v1839
        %v2168 = vunpack.c.l.b16 %v1840
        %v2169 = vunpack.c.h.b16 %v1840
        %v2170 = vunpack.c.l.b16 %v1841
        %v2171 = vunpack.c.h.b16 %v1841
        %v2172 = vunpack.c.l.b16 %v1842
        %v2173 = vunpack.c.h.b16 %v1842
        %v2174 = vunpack.c.l.b16 %v1843
        %v2175 = vunpack.c.h.b16 %v1843
        %v2176 = vunpack.c.l.b16 %v1844
        %v2177 = vunpack.c.h.b16 %v1844
        %v2178 = vunpack.c.l.b16 %v1845
        %v2179 = vunpack.c.h.b16 %v1845
        %v2180 = vunpack.c.l.b16 %v1846
        %v2181 = vunpack.c.h.b16 %v1846
        %v2182 = vunpack.c.l.b16 %v1847
        %v2183 = vunpack.c.h.b16 %v1847
        %v2184 = vunpack.c.l.b16 %v1848
        %v2185 = vunpack.c.h.b16 %v1848
        %v2186 = vunpack.c.l.b16 %v1849
        %v2187 = vunpack.c.h.b16 %v1849
        %v2188 = vunpack.c.l.b16 %v1850
        %v2189 = vunpack.c.h.b16 %v1850
        %v2190 = vunpack.c.l.b16 %v1851
        %v2191 = vunpack.c.h.b16 %v1851
        %v2192 = vunpack.c.l.b16 %v1852
        %v2193 = vunpack.c.h.b16 %v1852
        %v2194 = vunpack.c.l.b16 %v1853
        %v2195 = vunpack.c.h.b16 %v1853
        %v2196 = vunpack.c.l.b16 %v1854
        %v2197 = vunpack.c.h.b16 %v1854
        %v2198 = vunpack.c.l.b16 %v1855
        %v2199 = vunpack.c.h.b16 %v1855
        %v2200 = vunpack.c.l.b16 %v1856
        %v2201 = vunpack.c.h.b16 %v1856
        %v2202 = vunpack.c.l.b16 %v1857
        %v2203 = vunpack.c.h.b16 %v1857
        %v2204 = vunpack.c.l.b16 %v1858
        %v2205 = vunpack.c.h.b16 %v1858
        %v2206 = vunpack.c.l.b16 %v1859
        %v2207 = vunpack.c.h.b16 %v1859
        %v2208 = vunpack.c.l.b16 %v1860
        %v2209 = vunpack.c.h.b16 %v1860
        %v2210 = vunpack.c.l.b16 %v1861
        %v2211 = vunpack.c.h.b16 %v1861
        %v2212 = vunpack.c.l.b16 %v1862
        %v2213 = vunpack.c.h.b16 %v1862
        %v2214 = vunpack.c.l.b16 %v1863
        %v2215 = vunpack.c.h.b16 %v1863
        %v2216 = vunpack.c.l.b16 %v1864
        %v2217 = vunpack.c.h.b16 %v1864
        %v2218 = vunpack.c.l.b16 %v1865
        %v2219 = vunpack.c.h.b16 %v1865
        %v2220 = vunpack.c.l.b16 %v1866
        %v2221 = vunpack.c.h.b16 %v1866
        %v2222 = vunpack.c.l.b16 %v1867
        %v2223 = vunpack.c.h.b16 %v1867
        %v2224 = vunpack.c.l.b16 %v1868
        %v2225 = vunpack.c.h.b16 %v1868
        %v2226 = vunpack.c.l.b16 %v1869
        %v2227 = vunpack.c.h.b16 %v1869
        %v2228 = vunpack.c.l.b16 %v1870
        %v2229 = vunpack.c.h.b16 %v1870
        %v2230 = vunpack.c.l.b16 %v1871
        %v2231 = vunpack.c.h.b16 %v1871
        %v2232 = vunpack.c.l.b16 %v1872
        %v2233 = vunpack.c.h.b16 %v1872
        %v2234 = vunpack.c.l.b16 %v1873
        %v2235 = vunpack.c.h.b16 %v1873
        %v2236 = vunpack.c.l.b16 %v1874
        %v2237 = vunpack.c.h.b16 %v1874
        %v2238 = vunpack.c.l.b16 %v1875
        %v2239 = vunpack.c.h.b16 %v1875
        %v2240 = vunpack.c.l.b16 %v1876
        %v2241 = vunpack.c.h.b16 %v1876
        %v2242 = vunpack.c.l.b16 %v1877
        %v2243 = vunpack.c.h.b16 %v1877
        %v2244 = vunpack.c.l.b16 %v1878
        %v2245 = vunpack.c.h.b16 %v1878
        %v2246 = vunpack.c.l.b16 %v1879
        %v2247 = vunpack.c.h.b16 %v1879
        %v2248 = vunpack.c.l.b16 %v1880
        %v2249 = vunpack.c.h.b16 %v1880
        %v2250 = vunpack.c.l.b16 %v1881
        %v2251 = vunpack.c.h.b16 %v1881
        %v2252 = vunpack.c.l.b16 %v1882
        %v2253 = vunpack.c.h.b16 %v1882
        %v2254 = vunpack.c.l.b16 %v1883
        %v2255 = vunpack.c.h.b16 %v1883
        %v2256 = vunpack.c.l.b16 %v1884
        %v2257 = vunpack.c.h.b16 %v1884
        %v2258 = vunpack.c.l.b16 %v1885
        %v2259 = vunpack.c.h.b16 %v1885
        %v2260 = vunpack.c.l.b16 %v1886
        %v2261 = vunpack.c.h.b16 %v1886
        %v2262 = vunpack.c.l.b16 %v1887
        %v2263 = vunpack.c.h.b16 %v1887
        %v2264 = vunpack.c.l.b16 %v1888
        %v2265 = vunpack.c.h.b16 %v1888
        %v2266 = vunpack.c.l.b16 %v1889
        %v2267 = vunpack.c.h.b16 %v1889
        %v2268 = vunpack.c.l.b16 %v1890
        %v2269 = vunpack.c.h.b16 %v1890
        %v2270 = vunpack.c.l.b16 %v1891
        %v2271 = vunpack.c.h.b16 %v1891
        %v2272 = vunpack.c.l.b16 %v1892
        %v2273 = vunpack.c.h.b16 %v1892
        %v2274 = vunpack.c.l.b16 %v1893
        %v2275 = vunpack.c.h.b16 %v1893
        %v2276 = vunpack.c.l.b16 %v1894
        %v2277 = vunpack.c.h.b16 %v1894
        %v2278 = vunpack.c.l.b16 %v1895
        %v2279 = vunpack.c.h.b16 %v1895
        %v2280 = vpack.c.b16 %v2028, %v2024
        %v2281 = vpack.c.b16 %v2029, %v2025
        %v2282 = vpack.c.b16 %v2030, %v2026
        %v2283 = vpack.c.b16 %v2031, %v2027
        %v2284 = vpack.c.b16 %v2036, %v2032
        %v2285 = vpack.c.b16 %v2037, %v2033
        %v2286 = vpack.c.b16 %v2038, %v2034
        %v2287 = vpack.c.b16 %v2039, %v2035
        %v2288 = vpack.c.b16 %v2044, %v2040
        %v2289 = vpack.c.b16 %v2045, %v2041
        %v2290 = vpack.c.b16 %v2046, %v2042
        %v2291 = vpack.c.b16 %v2047, %v2043
        %v2292 = vpack.c.b16 %v2052, %v2048
        %v2293 = vpack.c.b16 %v2053, %v2049
        %v2294 = vpack.c.b16 %v2054, %v2050
        %v2295 = vpack.c.b16 %v2055, %v2051
        %v2296 = vpack.c.b16 %v2060, %v2056
        %v2297 = vpack.c.b16 %v2061, %v2057
        %v2298 = vpack.c.b16 %v2062, %v2058
        %v2299 = vpack.c.b16 %v2063, %v2059
        %v2300 = vpack.c.b16 %v2068, %v2064
        %v2301 = vpack.c.b16 %v2069, %v2065
        %v2302 = vpack.c.b16 %v2070, %v2066
        %v2303 = vpack.c.b16 %v2071, %v2067
        %v2304 = vpack.c.b16 %v2076, %v2072
        %v2305 = vpack.c.b16 %v2077, %v2073
        %v2306 = vpack.c.b16 %v2078, %v2074
        %v2307 = vpack.c.b16 %v2079, %v2075
        %v2308 = vpack.c.b16 %v2084, %v2080
        %v2309 = vpack.c.b16 %v2085, %v2081
        %v2310 = vpack.c.b16 %v2086, %v2082
        %v2311 = vpack.c.b16 %v2087, %v2083
        %v2312 = vpack.c.b16 %v2092, %v2088
        %v2313 = vpack.c.b16 %v2093, %v2089
        %v2314 = vpack.c.b16 %v2094, %v2090
        %v2315 = vpack.c.b16 %v2095, %v2091
        %v2316 = vpack.c.b16 %v2100, %v2096
        %v2317 = vpack.c.b16 %v2101, %v2097
        %v2318 = vpack.c.b16 %v2102, %v2098
        %v2319 = vpack.c.b16 %v2103, %v2099
        %v2320 = vpack.c.b16 %v2108, %v2104
        %v2321 = vpack.c.b16 %v2109, %v2105
        %v2322 = vpack.c.b16 %v2110, %v2106
        %v2323 = vpack.c.b16 %v2111, %v2107
        %v2324 = vpack.c.b16 %v2116, %v2112
        %v2325 = vpack.c.b16 %v2117, %v2113
        %v2326 = vpack.c.b16 %v2118, %v2114
        %v2327 = vpack.c.b16 %v2119, %v2115
        %v2328 = vpack.c.b16 %v2124, %v2120
        %v2329 = vpack.c.b16 %v2125, %v2121
        %v2330 = vpack.c.b16 %v2126, %v2122
        %v2331 = vpack.c.b16 %v2127, %v2123
        %v2332 = vpack.c.b16 %v2132, %v2128
        %v2333 = vpack.c.b16 %v2133, %v2129
        %v2334 = vpack.c.b16 %v2134, %v2130
        %v2335 = vpack.c.b16 %v2135, %v2131
        %v2336 = vpack.c.b16 %v2140, %v2136
        %v2337 = vpack.c.b16 %v2141, %v2137
        %v2338 = vpack.c.b16 %v2142, %v2138
        %v2339 = vpack.c.b16 %v2143, %v2139
        %v2340 = vpack.c.b16 %v2148, %v2144
        %v2341 = vpack.c.b16 %v2149, %v2145
        %v2342 = vpack.c.b16 %v2150, %v2146
        %v2343 = vpack.c.b16 %v2151, %v2147
        %v2344 = vpack.c.b16 %v2156, %v2152
        %v2345 = vpack.c.b16 %v2157, %v2153
        %v2346 = vpack.c.b16 %v2158, %v2154
        %v2347 = vpack.c.b16 %v2159, %v2155
        %v2348 = vpack.c.b16 %v2164, %v2160
        %v2349 = vpack.c.b16 %v2165, %v2161
        %v2350 = vpack.c.b16 %v2166, %v2162
        %v2351 = vpack.c.b16 %v2167, %v2163
        %v2352 = vpack.c.b16 %v2172, %v2168
        %v2353 = vpack.c.b16 %v2173, %v2169
        %v2354 = vpack.c.b16 %v2174, %v2170
        %v2355 = vpack.c.b16 %v2175, %v2171
        %v2356 = vpack.c.b16 %v2180, %v2176
        %v2357 = vpack.c.b16 %v2181, %v2177
        %v2358 = vpack.c.b16 %v2182, %v2178
        %v2359 = vpack.c.b16 %v2183, %v2179
        %v2360 = vpack.c.b16 %v2188, %v2184
        %v2361 = vpack.c.b16 %v2189, %v2185
        %v2362 = vpack.c.b16 %v2190, %v2186
        %v2363 = vpack.c.b16 %v2191, %v2187
        %v2364 = vpack.c.b16 %v2196, %v2192
        %v2365 = vpack.c.b16 %v2197, %v2193
        %v2366 = vpack.c.b16 %v2198, %v2194
        %v2367 = vpack.c.b16 %v2199, %v2195
        %v2368 = vpack.c.b16 %v2204, %v2200
        %v2369 = vpack.c.b16 %v2205, %v2201
        %v2370 = vpack.c.b16 %v2206, %v2202
        %v2371 = vpack.c.b16 %v2207, %v2203
        %v2372 = vpack.c.b16 %v2212, %v2208
        %v2373 = vpack.c.b16 %v2213, %v2209
        %v2374 = vpack.c.b16 %v2214, %v2210
        %v2375 = vpack.c.b16 %v2215, %v2211
        %v2376 = vpack.c.b16 %v2220, %v2216
        %v2377 = vpack.c.b16 %v2221, %v2217
        %v2378 = vpack.c.b16 %v2222, %v2218
        %v2379 = vpack.c.b16 %v2223, %v2219
        %v2380 = vpack.c.b16 %v2228, %v2224
        %v2381 = vpack.c.b16 %v2229, %v2225
        %v2382 = vpack.c.b16 %v2230, %v2226
        %v2383 = vpack.c.b16 %v2231, %v2227
        %v2384 = vpack.c.b16 %v2236, %v2232
        %v2385 = vpack.c.b16 %v2237, %v2233
        %v2386 = vpack.c.b16 %v2238, %v2234
        %v2387 = vpack.c.b16 %v2239, %v2235
        %v2388 = vpack.c.b16 %v2244, %v2240
        %v2389 = vpack.c.b16 %v2245, %v2241
        %v2390 = vpack.c.b16 %v2246, %v2242
        %v2391 = vpack.c.b16 %v2247, %v2243
        %v2392 = vpack.c.b16 %v2252, %v2248
        %v2393 = vpack.c.b16 %v2253, %v2249
        %v2394 = vpack.c.b16 %v2254, %v2250
        %v2395 = vpack.c.b16 %v2255, %v2251
        %v2396 = vpack.c.b16 %v2260, %v2256
        %v2397 = vpack.c.b16 %v2261, %v2257
        %v2398 = vpack.c.b16 %v2262, %v2258
        %v2399 = vpack.c.b16 %v2263, %v2259
        %v2400 = vpack.c.b16 %v2268, %v2264
        %v2401 = vpack.c.b16 %v2269, %v2265
        %v2402 = vpack.c.b16 %v2270, %v2266
        %v2403 = vpack.c.b16 %v2271, %v2267
        %v2404 = vpack.c.b16 %v2276, %v2272
        %v2405 = vpack.c.b16 %v2277, %v2273
        %v2406 = vpack.c.b16 %v2278, %v2274
        %v2407 = vpack.c.b16 %v2279, %v2275
        %2536 = vmatprep.subr.bf16.mxu0 %v2309
        %2537 = vmatpush1.bf16.msra.mxu0 %v2308
        %2538 = vmatprep.subr.bf16.mxu0 %v2305
        %2539 = vmatpush1.bf16.msra.mxu0 %v2304
        %2540 = vmatprep.subr.bf16.mxu0 %v2301
        %2541 = vmatpush1.bf16.msra.mxu0 %v2300
        %2542 = vmatprep.subr.bf16.mxu0 %v2297
        %2543 = vmatpush1.bf16.msra.mxu0 %v2296
        %2544 = vmatprep.subr.bf16.mxu0 %v2293
        %2545 = vmatpush1.bf16.msra.mxu0 %v2292
        %2546 = vmatprep.subr.bf16.mxu0 %v2289
        %2547 = vmatpush1.bf16.msra.mxu0 %v2288
        %2548 = vmatprep.subr.bf16.mxu0 %v2285
        %2549 = vmatpush1.bf16.msra.mxu0 %v2284
        %2550 = vmatprep.subr.bf16.mxu0 %v2281
        %2551 = vmatpush1.bf16.msra.mxu0 %v2280
        %2552 = vmatprep.subr.bf16.mxu0 %v2341
        %2553 = vmatpush2.bf16.msra.mxu0 %v2340
        %2554 = vmatprep.subr.bf16.mxu0 %v2337
        %2555 = vmatpush2.bf16.msra.mxu0 %v2336
        %2556 = vmatprep.subr.bf16.mxu0 %v2333
        %2557 = vmatpush2.bf16.msra.mxu0 %v2332
        %2558 = vmatprep.subr.bf16.mxu0 %v2329
        %2559 = vmatpush2.bf16.msra.mxu0 %v2328
        %2560 = vmatprep.subr.bf16.mxu0 %v2325
        %2561 = vmatpush2.bf16.msra.mxu0 %v2324
        %2562 = vmatprep.subr.bf16.mxu0 %v2321
        %2563 = vmatpush2.bf16.msra.mxu0 %v2320
        %2564 = vmatprep.subr.bf16.mxu0 %v2317
        %2565 = vmatpush2.bf16.msra.mxu0 %v2316
        %2566 = vmatprep.subr.bf16.mxu0 %v2313
        %2567 = vmatpush2.bf16.msra.mxu0 %v2312
        %2568 = vmatprep.mubr.bf16.mxu0 %v1199
        %2569 = vmatmul.mubr.bf16.gmra.mxu0 %v1198
        %v2570 = vpop.f32.mrf.mxu0
        %v2571 = vadd.f32 0.0, %v2570
        %v2572 = vpop.f32.mrf.mxu0
        %v2573 = vadd.f32 0.0, %v2572
        %v2574 = vpop.f32.mrf.mxu0
        %v2575 = vpop.f32.mrf.mxu0
        %2576 = vdwg.mxu0
        %2577 = vmatprep.subr.bf16.mxu0 %v2373
        %2578 = vmatpush1.bf16.msra.mxu0 %v2372
        %2579 = vmatprep.subr.bf16.mxu0 %v2369
        %2580 = vmatpush1.bf16.msra.mxu0 %v2368
        %2581 = vmatprep.subr.bf16.mxu0 %v2365
        %2582 = vmatpush1.bf16.msra.mxu0 %v2364
        %2583 = vmatprep.subr.bf16.mxu0 %v2361
        %2584 = vmatpush1.bf16.msra.mxu0 %v2360
        %2585 = vmatprep.subr.bf16.mxu0 %v2357
        %2586 = vmatpush1.bf16.msra.mxu0 %v2356
        %2587 = vmatprep.subr.bf16.mxu0 %v2353
        %2588 = vmatpush1.bf16.msra.mxu0 %v2352
        %2589 = vmatprep.subr.bf16.mxu0 %v2349
        %2590 = vmatpush1.bf16.msra.mxu0 %v2348
        %2591 = vmatprep.subr.bf16.mxu0 %v2345
        %2592 = vmatpush1.bf16.msra.mxu0 %v2344
        %2593 = vmatprep.subr.bf16.mxu0 %v2405
        %2594 = vmatpush2.bf16.msra.mxu0 %v2404
        %2595 = vmatprep.subr.bf16.mxu0 %v2401
        %2596 = vmatpush2.bf16.msra.mxu0 %v2400
        %2597 = vmatprep.subr.bf16.mxu0 %v2397
        %2598 = vmatpush2.bf16.msra.mxu0 %v2396
        %2599 = vmatprep.subr.bf16.mxu0 %v2393
        %2600 = vmatpush2.bf16.msra.mxu0 %v2392
        %2601 = vmatprep.subr.bf16.mxu0 %v2389
        %2602 = vmatpush2.bf16.msra.mxu0 %v2388
        %2603 = vmatprep.subr.bf16.mxu0 %v2385
        %2604 = vmatpush2.bf16.msra.mxu0 %v2384
        %2605 = vmatprep.subr.bf16.mxu0 %v2381
        %2606 = vmatpush2.bf16.msra.mxu0 %v2380
        %2607 = vmatprep.subr.bf16.mxu0 %v2377
        %2608 = vmatpush2.bf16.msra.mxu0 %v2376
        %2609 = vmatprep.mubr.bf16.mxu0 %v1201
        %2610 = vmatmul.mubr.bf16.gmra.mxu0 %v1200
        %v2611 = vpop.f32.mrf.mxu0
        %v2612 = vadd.f32 %v2571, %v2611
        %v2613 = vpop.f32.mrf.mxu0
        %v2614 = vadd.f32 %v2573, %v2613
        %v2615 = vpop.f32.mrf.mxu0
        %v2616 = vpop.f32.mrf.mxu0
        %2617 = vdwg.mxu0
        %2618 = vmatprep.subr.bf16.mxu0 %v2311
        %2619 = vmatpush1.bf16.msra.mxu0 %v2310
        %2620 = vmatprep.subr.bf16.mxu0 %v2307
        %2621 = vmatpush1.bf16.msra.mxu0 %v2306
        %2622 = vmatprep.subr.bf16.mxu0 %v2303
        %2623 = vmatpush1.bf16.msra.mxu0 %v2302
        %2624 = vmatprep.subr.bf16.mxu0 %v2299
        %2625 = vmatpush1.bf16.msra.mxu0 %v2298
        %2626 = vmatprep.subr.bf16.mxu0 %v2295
        %2627 = vmatpush1.bf16.msra.mxu0 %v2294
        %2628 = vmatprep.subr.bf16.mxu0 %v2291
        %2629 = vmatpush1.bf16.msra.mxu0 %v2290
        %2630 = vmatprep.subr.bf16.mxu0 %v2287
        %2631 = vmatpush1.bf16.msra.mxu0 %v2286
        %2632 = vmatprep.subr.bf16.mxu0 %v2283
        %2633 = vmatpush1.bf16.msra.mxu0 %v2282
        %2634 = vmatprep.subr.bf16.mxu0 %v2343
        %2635 = vmatpush2.bf16.msra.mxu0 %v2342
        %2636 = vmatprep.subr.bf16.mxu0 %v2339
        %2637 = vmatpush2.bf16.msra.mxu0 %v2338
        %2638 = vmatprep.subr.bf16.mxu0 %v2335
        %2639 = vmatpush2.bf16.msra.mxu0 %v2334
        %2640 = vmatprep.subr.bf16.mxu0 %v2331
        %2641 = vmatpush2.bf16.msra.mxu0 %v2330
        %2642 = vmatprep.subr.bf16.mxu0 %v2327
        %2643 = vmatpush2.bf16.msra.mxu0 %v2326
        %2644 = vmatprep.subr.bf16.mxu0 %v2323
        %2645 = vmatpush2.bf16.msra.mxu0 %v2322
        %2646 = vmatprep.subr.bf16.mxu0 %v2319
        %2647 = vmatpush2.bf16.msra.mxu0 %v2318
        %2648 = vmatprep.subr.bf16.mxu0 %v2315
        %2649 = vmatpush2.bf16.msra.mxu0 %v2314
        %2650 = vmatprep.mubr.bf16.mxu0 %v1199
        %2651 = vmatmul.mubr.bf16.gmra.mxu0 %v1198
        %v2652 = vpop.f32.mrf.mxu0
        %v2653 = vadd.f32 0.0, %v2652
        %v2654 = vpop.f32.mrf.mxu0
        %v2655 = vadd.f32 0.0, %v2654
        %v2656 = vpop.f32.mrf.mxu0
        %v2657 = vpop.f32.mrf.mxu0
        %2658 = vdwg.mxu0
        %2659 = vmatprep.subr.bf16.mxu0 %v2375
        %2660 = vmatpush1.bf16.msra.mxu0 %v2374
        %2661 = vmatprep.subr.bf16.mxu0 %v2371
        %2662 = vmatpush1.bf16.msra.mxu0 %v2370
        %2663 = vmatprep.subr.bf16.mxu0 %v2367
        %2664 = vmatpush1.bf16.msra.mxu0 %v2366
        %2665 = vmatprep.subr.bf16.mxu0 %v2363
        %2666 = vmatpush1.bf16.msra.mxu0 %v2362
        %2667 = vmatprep.subr.bf16.mxu0 %v2359
        %2668 = vmatpush1.bf16.msra.mxu0 %v2358
        %2669 = vmatprep.subr.bf16.mxu0 %v2355
        %2670 = vmatpush1.bf16.msra.mxu0 %v2354
        %2671 = vmatprep.subr.bf16.mxu0 %v2351
        %2672 = vmatpush1.bf16.msra.mxu0 %v2350
        %2673 = vmatprep.subr.bf16.mxu0 %v2347
        %2674 = vmatpush1.bf16.msra.mxu0 %v2346
        %2675 = vmatprep.subr.bf16.mxu0 %v2407
        %2676 = vmatpush2.bf16.msra.mxu0 %v2406
        %2677 = vmatprep.subr.bf16.mxu0 %v2403
        %2678 = vmatpush2.bf16.msra.mxu0 %v2402
        %2679 = vmatprep.subr.bf16.mxu0 %v2399
        %2680 = vmatpush2.bf16.msra.mxu0 %v2398
        %2681 = vmatprep.subr.bf16.mxu0 %v2395
        %2682 = vmatpush2.bf16.msra.mxu0 %v2394
        %2683 = vmatprep.subr.bf16.mxu0 %v2391
        %2684 = vmatpush2.bf16.msra.mxu0 %v2390
        %2685 = vmatprep.subr.bf16.mxu0 %v2387
        %2686 = vmatpush2.bf16.msra.mxu0 %v2386
        %2687 = vmatprep.subr.bf16.mxu0 %v2383
        %2688 = vmatpush2.bf16.msra.mxu0 %v2382
        %2689 = vmatprep.subr.bf16.mxu0 %v2379
        %2690 = vmatpush2.bf16.msra.mxu0 %v2378
        %2691 = vmatprep.mubr.bf16.mxu0 %v1201
        %2692 = vmatmul.mubr.bf16.gmra.mxu0 %v1200
        %v2693 = vpop.f32.mrf.mxu0
        %v2694 = vadd.f32 %v2653, %v2693
        %v2695 = vpop.f32.mrf.mxu0
        %v2696 = vadd.f32 %v2655, %v2695
        %v2697 = vpop.f32.mrf.mxu0
        %v2698 = vpop.f32.mrf.mxu0
        %2699 = vdwg.mxu0
        %v2828 = vunpack.c.l.b16 %v1639
        %v2829 = vunpack.c.h.b16 %v1639
        %v2830 = vunpack.c.l.b16 %v1640
        %v2831 = vunpack.c.h.b16 %v1640
        %v2832 = vunpack.c.l.b16 %v1641
        %v2833 = vunpack.c.h.b16 %v1641
        %v2834 = vunpack.c.l.b16 %v1642
        %v2835 = vunpack.c.h.b16 %v1642
        %v2836 = vunpack.c.l.b16 %v1643
        %v2837 = vunpack.c.h.b16 %v1643
        %v2838 = vunpack.c.l.b16 %v1644
        %v2839 = vunpack.c.h.b16 %v1644
        %v2840 = vunpack.c.l.b16 %v1645
        %v2841 = vunpack.c.h.b16 %v1645
        %v2842 = vunpack.c.l.b16 %v1646
        %v2843 = vunpack.c.h.b16 %v1646
        %v2844 = vunpack.c.l.b16 %v1647
        %v2845 = vunpack.c.h.b16 %v1647
        %v2846 = vunpack.c.l.b16 %v1648
        %v2847 = vunpack.c.h.b16 %v1648
        %v2848 = vunpack.c.l.b16 %v1649
        %v2849 = vunpack.c.h.b16 %v1649
        %v2850 = vunpack.c.l.b16 %v1650
        %v2851 = vunpack.c.h.b16 %v1650
        %v2852 = vunpack.c.l.b16 %v1651
        %v2853 = vunpack.c.h.b16 %v1651
        %v2854 = vunpack.c.l.b16 %v1652
        %v2855 = vunpack.c.h.b16 %v1652
        %v2856 = vunpack.c.l.b16 %v1653
        %v2857 = vunpack.c.h.b16 %v1653
        %v2858 = vunpack.c.l.b16 %v1654
        %v2859 = vunpack.c.h.b16 %v1654
        %v2860 = vunpack.c.l.b16 %v1655
        %v2861 = vunpack.c.h.b16 %v1655
        %v2862 = vunpack.c.l.b16 %v1656
        %v2863 = vunpack.c.h.b16 %v1656
        %v2864 = vunpack.c.l.b16 %v1657
        %v2865 = vunpack.c.h.b16 %v1657
        %v2866 = vunpack.c.l.b16 %v1658
        %v2867 = vunpack.c.h.b16 %v1658
        %v2868 = vunpack.c.l.b16 %v1659
        %v2869 = vunpack.c.h.b16 %v1659
        %v2870 = vunpack.c.l.b16 %v1660
        %v2871 = vunpack.c.h.b16 %v1660
        %v2872 = vunpack.c.l.b16 %v1661
        %v2873 = vunpack.c.h.b16 %v1661
        %v2874 = vunpack.c.l.b16 %v1662
        %v2875 = vunpack.c.h.b16 %v1662
        %v2876 = vunpack.c.l.b16 %v1663
        %v2877 = vunpack.c.h.b16 %v1663
        %v2878 = vunpack.c.l.b16 %v1664
        %v2879 = vunpack.c.h.b16 %v1664
        %v2880 = vunpack.c.l.b16 %v1665
        %v2881 = vunpack.c.h.b16 %v1665
        %v2882 = vunpack.c.l.b16 %v1666
        %v2883 = vunpack.c.h.b16 %v1666
        %v2884 = vunpack.c.l.b16 %v1667
        %v2885 = vunpack.c.h.b16 %v1667
        %v2886 = vunpack.c.l.b16 %v1668
        %v2887 = vunpack.c.h.b16 %v1668
        %v2888 = vunpack.c.l.b16 %v1669
        %v2889 = vunpack.c.h.b16 %v1669
        %v2890 = vunpack.c.l.b16 %v1670
        %v2891 = vunpack.c.h.b16 %v1670
        %v2892 = vunpack.c.l.b16 %v1671
        %v2893 = vunpack.c.h.b16 %v1671
        %v2894 = vunpack.c.l.b16 %v1672
        %v2895 = vunpack.c.h.b16 %v1672
        %v2896 = vunpack.c.l.b16 %v1673
        %v2897 = vunpack.c.h.b16 %v1673
        %v2898 = vunpack.c.l.b16 %v1674
        %v2899 = vunpack.c.h.b16 %v1674
        %v2900 = vunpack.c.l.b16 %v1675
        %v2901 = vunpack.c.h.b16 %v1675
        %v2902 = vunpack.c.l.b16 %v1676
        %v2903 = vunpack.c.h.b16 %v1676
        %v2904 = vunpack.c.l.b16 %v1677
        %v2905 = vunpack.c.h.b16 %v1677
        %v2906 = vunpack.c.l.b16 %v1678
        %v2907 = vunpack.c.h.b16 %v1678
        %v2908 = vunpack.c.l.b16 %v1679
        %v2909 = vunpack.c.h.b16 %v1679
        %v2910 = vunpack.c.l.b16 %v1680
        %v2911 = vunpack.c.h.b16 %v1680
        %v2912 = vunpack.c.l.b16 %v1681
        %v2913 = vunpack.c.h.b16 %v1681
        %v2914 = vunpack.c.l.b16 %v1682
        %v2915 = vunpack.c.h.b16 %v1682
        %v2916 = vunpack.c.l.b16 %v1683
        %v2917 = vunpack.c.h.b16 %v1683
        %v2918 = vunpack.c.l.b16 %v1684
        %v2919 = vunpack.c.h.b16 %v1684
        %v2920 = vunpack.c.l.b16 %v1685
        %v2921 = vunpack.c.h.b16 %v1685
        %v2922 = vunpack.c.l.b16 %v1686
        %v2923 = vunpack.c.h.b16 %v1686
        %v2924 = vunpack.c.l.b16 %v1687
        %v2925 = vunpack.c.h.b16 %v1687
        %v2926 = vunpack.c.l.b16 %v1688
        %v2927 = vunpack.c.h.b16 %v1688
        %v2928 = vunpack.c.l.b16 %v1689
        %v2929 = vunpack.c.h.b16 %v1689
        %v2930 = vunpack.c.l.b16 %v1690
        %v2931 = vunpack.c.h.b16 %v1690
        %v2932 = vunpack.c.l.b16 %v1691
        %v2933 = vunpack.c.h.b16 %v1691
        %v2934 = vunpack.c.l.b16 %v1692
        %v2935 = vunpack.c.h.b16 %v1692
        %v2936 = vunpack.c.l.b16 %v1693
        %v2937 = vunpack.c.h.b16 %v1693
        %v2938 = vunpack.c.l.b16 %v1694
        %v2939 = vunpack.c.h.b16 %v1694
        %v2940 = vunpack.c.l.b16 %v1695
        %v2941 = vunpack.c.h.b16 %v1695
        %v2942 = vunpack.c.l.b16 %v1696
        %v2943 = vunpack.c.h.b16 %v1696
        %v2944 = vunpack.c.l.b16 %v1697
        %v2945 = vunpack.c.h.b16 %v1697
        %v2946 = vunpack.c.l.b16 %v1698
        %v2947 = vunpack.c.h.b16 %v1698
        %v2948 = vunpack.c.l.b16 %v1699
        %v2949 = vunpack.c.h.b16 %v1699
        %v2950 = vunpack.c.l.b16 %v1700
        %v2951 = vunpack.c.h.b16 %v1700
        %v2952 = vunpack.c.l.b16 %v1701
        %v2953 = vunpack.c.h.b16 %v1701
        %v2954 = vunpack.c.l.b16 %v1702
        %v2955 = vunpack.c.h.b16 %v1702
        %v2956 = vunpack.c.l.b16 %v1703
        %v2957 = vunpack.c.h.b16 %v1703
        %v2958 = vunpack.c.l.b16 %v1704
        %v2959 = vunpack.c.h.b16 %v1704
        %v2960 = vunpack.c.l.b16 %v1705
        %v2961 = vunpack.c.h.b16 %v1705
        %v2962 = vunpack.c.l.b16 %v1706
        %v2963 = vunpack.c.h.b16 %v1706
        %v2964 = vunpack.c.l.b16 %v1707
        %v2965 = vunpack.c.h.b16 %v1707
        %v2966 = vunpack.c.l.b16 %v1708
        %v2967 = vunpack.c.h.b16 %v1708
        %v2968 = vunpack.c.l.b16 %v1709
        %v2969 = vunpack.c.h.b16 %v1709
        %v2970 = vunpack.c.l.b16 %v1710
        %v2971 = vunpack.c.h.b16 %v1710
        %v2972 = vunpack.c.l.b16 %v1711
        %v2973 = vunpack.c.h.b16 %v1711
        %v2974 = vunpack.c.l.b16 %v1712
        %v2975 = vunpack.c.h.b16 %v1712
        %v2976 = vunpack.c.l.b16 %v1713
        %v2977 = vunpack.c.h.b16 %v1713
        %v2978 = vunpack.c.l.b16 %v1714
        %v2979 = vunpack.c.h.b16 %v1714
        %v2980 = vunpack.c.l.b16 %v1715
        %v2981 = vunpack.c.h.b16 %v1715
        %v2982 = vunpack.c.l.b16 %v1716
        %v2983 = vunpack.c.h.b16 %v1716
        %v2984 = vunpack.c.l.b16 %v1717
        %v2985 = vunpack.c.h.b16 %v1717
        %v2986 = vunpack.c.l.b16 %v1718
        %v2987 = vunpack.c.h.b16 %v1718
        %v2988 = vunpack.c.l.b16 %v1719
        %v2989 = vunpack.c.h.b16 %v1719
        %v2990 = vunpack.c.l.b16 %v1720
        %v2991 = vunpack.c.h.b16 %v1720
        %v2992 = vunpack.c.l.b16 %v1721
        %v2993 = vunpack.c.h.b16 %v1721
        %v2994 = vunpack.c.l.b16 %v1722
        %v2995 = vunpack.c.h.b16 %v1722
        %v2996 = vunpack.c.l.b16 %v1723
        %v2997 = vunpack.c.h.b16 %v1723
        %v2998 = vunpack.c.l.b16 %v1724
        %v2999 = vunpack.c.h.b16 %v1724
        %v3000 = vunpack.c.l.b16 %v1725
        %v3001 = vunpack.c.h.b16 %v1725
        %v3002 = vunpack.c.l.b16 %v1726
        %v3003 = vunpack.c.h.b16 %v1726
        %v3004 = vunpack.c.l.b16 %v1727
        %v3005 = vunpack.c.h.b16 %v1727
        %v3006 = vunpack.c.l.b16 %v1728
        %v3007 = vunpack.c.h.b16 %v1728
        %v3008 = vunpack.c.l.b16 %v1729
        %v3009 = vunpack.c.h.b16 %v1729
        %v3010 = vunpack.c.l.b16 %v1730
        %v3011 = vunpack.c.h.b16 %v1730
        %v3012 = vunpack.c.l.b16 %v1731
        %v3013 = vunpack.c.h.b16 %v1731
        %v3014 = vunpack.c.l.b16 %v1732
        %v3015 = vunpack.c.h.b16 %v1732
        %v3016 = vunpack.c.l.b16 %v1733
        %v3017 = vunpack.c.h.b16 %v1733
        %v3018 = vunpack.c.l.b16 %v1734
        %v3019 = vunpack.c.h.b16 %v1734
        %v3020 = vunpack.c.l.b16 %v1735
        %v3021 = vunpack.c.h.b16 %v1735
        %v3022 = vunpack.c.l.b16 %v1736
        %v3023 = vunpack.c.h.b16 %v1736
        %v3024 = vunpack.c.l.b16 %v1737
        %v3025 = vunpack.c.h.b16 %v1737
        %v3026 = vunpack.c.l.b16 %v1738
        %v3027 = vunpack.c.h.b16 %v1738
        %v3028 = vunpack.c.l.b16 %v1739
        %v3029 = vunpack.c.h.b16 %v1739
        %v3030 = vunpack.c.l.b16 %v1740
        %v3031 = vunpack.c.h.b16 %v1740
        %v3032 = vunpack.c.l.b16 %v1741
        %v3033 = vunpack.c.h.b16 %v1741
        %v3034 = vunpack.c.l.b16 %v1742
        %v3035 = vunpack.c.h.b16 %v1742
        %v3036 = vunpack.c.l.b16 %v1743
        %v3037 = vunpack.c.h.b16 %v1743
        %v3038 = vunpack.c.l.b16 %v1744
        %v3039 = vunpack.c.h.b16 %v1744
        %v3040 = vunpack.c.l.b16 %v1745
        %v3041 = vunpack.c.h.b16 %v1745
        %v3042 = vunpack.c.l.b16 %v1746
        %v3043 = vunpack.c.h.b16 %v1746
        %v3044 = vunpack.c.l.b16 %v1747
        %v3045 = vunpack.c.h.b16 %v1747
        %v3046 = vunpack.c.l.b16 %v1748
        %v3047 = vunpack.c.h.b16 %v1748
        %v3048 = vunpack.c.l.b16 %v1749
        %v3049 = vunpack.c.h.b16 %v1749
        %v3050 = vunpack.c.l.b16 %v1750
        %v3051 = vunpack.c.h.b16 %v1750
        %v3052 = vunpack.c.l.b16 %v1751
        %v3053 = vunpack.c.h.b16 %v1751
        %v3054 = vunpack.c.l.b16 %v1752
        %v3055 = vunpack.c.h.b16 %v1752
        %v3056 = vunpack.c.l.b16 %v1753
        %v3057 = vunpack.c.h.b16 %v1753
        %v3058 = vunpack.c.l.b16 %v1754
        %v3059 = vunpack.c.h.b16 %v1754
        %v3060 = vunpack.c.l.b16 %v1755
        %v3061 = vunpack.c.h.b16 %v1755
        %v3062 = vunpack.c.l.b16 %v1756
        %v3063 = vunpack.c.h.b16 %v1756
        %v3064 = vunpack.c.l.b16 %v1757
        %v3065 = vunpack.c.h.b16 %v1757
        %v3066 = vunpack.c.l.b16 %v1758
        %v3067 = vunpack.c.h.b16 %v1758
        %v3068 = vunpack.c.l.b16 %v1759
        %v3069 = vunpack.c.h.b16 %v1759
        %v3070 = vunpack.c.l.b16 %v1760
        %v3071 = vunpack.c.h.b16 %v1760
        %v3072 = vunpack.c.l.b16 %v1761
        %v3073 = vunpack.c.h.b16 %v1761
        %v3074 = vunpack.c.l.b16 %v1762
        %v3075 = vunpack.c.h.b16 %v1762
        %v3076 = vunpack.c.l.b16 %v1763
        %v3077 = vunpack.c.h.b16 %v1763
        %v3078 = vunpack.c.l.b16 %v1764
        %v3079 = vunpack.c.h.b16 %v1764
        %v3080 = vunpack.c.l.b16 %v1765
        %v3081 = vunpack.c.h.b16 %v1765
        %v3082 = vunpack.c.l.b16 %v1766
        %v3083 = vunpack.c.h.b16 %v1766
        %v3084 = vpack.c.b16 %v2832, %v2828
        %v3085 = vpack.c.b16 %v2833, %v2829
        %v3086 = vpack.c.b16 %v2834, %v2830
        %v3087 = vpack.c.b16 %v2835, %v2831
        %v3088 = vpack.c.b16 %v2840, %v2836
        %v3089 = vpack.c.b16 %v2841, %v2837
        %v3090 = vpack.c.b16 %v2842, %v2838
        %v3091 = vpack.c.b16 %v2843, %v2839
        %v3092 = vpack.c.b16 %v2848, %v2844
        %v3093 = vpack.c.b16 %v2849, %v2845
        %v3094 = vpack.c.b16 %v2850, %v2846
        %v3095 = vpack.c.b16 %v2851, %v2847
        %v3096 = vpack.c.b16 %v2856, %v2852
        %v3097 = vpack.c.b16 %v2857, %v2853
        %v3098 = vpack.c.b16 %v2858, %v2854
        %v3099 = vpack.c.b16 %v2859, %v2855
        %v3100 = vpack.c.b16 %v2864, %v2860
        %v3101 = vpack.c.b16 %v2865, %v2861
        %v3102 = vpack.c.b16 %v2866, %v2862
        %v3103 = vpack.c.b16 %v2867, %v2863
        %v3104 = vpack.c.b16 %v2872, %v2868
        %v3105 = vpack.c.b16 %v2873, %v2869
        %v3106 = vpack.c.b16 %v2874, %v2870
        %v3107 = vpack.c.b16 %v2875, %v2871
        %v3108 = vpack.c.b16 %v2880, %v2876
        %v3109 = vpack.c.b16 %v2881, %v2877
        %v3110 = vpack.c.b16 %v2882, %v2878
        %v3111 = vpack.c.b16 %v2883, %v2879
        %v3112 = vpack.c.b16 %v2888, %v2884
        %v3113 = vpack.c.b16 %v2889, %v2885
        %v3114 = vpack.c.b16 %v2890, %v2886
        %v3115 = vpack.c.b16 %v2891, %v2887
        %v3116 = vpack.c.b16 %v2896, %v2892
        %v3117 = vpack.c.b16 %v2897, %v2893
        %v3118 = vpack.c.b16 %v2898, %v2894
        %v3119 = vpack.c.b16 %v2899, %v2895
        %v3120 = vpack.c.b16 %v2904, %v2900
        %v3121 = vpack.c.b16 %v2905, %v2901
        %v3122 = vpack.c.b16 %v2906, %v2902
        %v3123 = vpack.c.b16 %v2907, %v2903
        %v3124 = vpack.c.b16 %v2912, %v2908
        %v3125 = vpack.c.b16 %v2913, %v2909
        %v3126 = vpack.c.b16 %v2914, %v2910
        %v3127 = vpack.c.b16 %v2915, %v2911
        %v3128 = vpack.c.b16 %v2920, %v2916
        %v3129 = vpack.c.b16 %v2921, %v2917
        %v3130 = vpack.c.b16 %v2922, %v2918
        %v3131 = vpack.c.b16 %v2923, %v2919
        %v3132 = vpack.c.b16 %v2928, %v2924
        %v3133 = vpack.c.b16 %v2929, %v2925
        %v3134 = vpack.c.b16 %v2930, %v2926
        %v3135 = vpack.c.b16 %v2931, %v2927
        %v3136 = vpack.c.b16 %v2936, %v2932
        %v3137 = vpack.c.b16 %v2937, %v2933
        %v3138 = vpack.c.b16 %v2938, %v2934
        %v3139 = vpack.c.b16 %v2939, %v2935
        %v3140 = vpack.c.b16 %v2944, %v2940
        %v3141 = vpack.c.b16 %v2945, %v2941
        %v3142 = vpack.c.b16 %v2946, %v2942
        %v3143 = vpack.c.b16 %v2947, %v2943
        %v3144 = vpack.c.b16 %v2952, %v2948
        %v3145 = vpack.c.b16 %v2953, %v2949
        %v3146 = vpack.c.b16 %v2954, %v2950
        %v3147 = vpack.c.b16 %v2955, %v2951
        %v3148 = vpack.c.b16 %v2960, %v2956
        %v3149 = vpack.c.b16 %v2961, %v2957
        %v3150 = vpack.c.b16 %v2962, %v2958
        %v3151 = vpack.c.b16 %v2963, %v2959
        %v3152 = vpack.c.b16 %v2968, %v2964
        %v3153 = vpack.c.b16 %v2969, %v2965
        %v3154 = vpack.c.b16 %v2970, %v2966
        %v3155 = vpack.c.b16 %v2971, %v2967
        %v3156 = vpack.c.b16 %v2976, %v2972
        %v3157 = vpack.c.b16 %v2977, %v2973
        %v3158 = vpack.c.b16 %v2978, %v2974
        %v3159 = vpack.c.b16 %v2979, %v2975
        %v3160 = vpack.c.b16 %v2984, %v2980
        %v3161 = vpack.c.b16 %v2985, %v2981
        %v3162 = vpack.c.b16 %v2986, %v2982
        %v3163 = vpack.c.b16 %v2987, %v2983
        %v3164 = vpack.c.b16 %v2992, %v2988
        %v3165 = vpack.c.b16 %v2993, %v2989
        %v3166 = vpack.c.b16 %v2994, %v2990
        %v3167 = vpack.c.b16 %v2995, %v2991
        %v3168 = vpack.c.b16 %v3000, %v2996
        %v3169 = vpack.c.b16 %v3001, %v2997
        %v3170 = vpack.c.b16 %v3002, %v2998
        %v3171 = vpack.c.b16 %v3003, %v2999
        %v3172 = vpack.c.b16 %v3008, %v3004
        %v3173 = vpack.c.b16 %v3009, %v3005
        %v3174 = vpack.c.b16 %v3010, %v3006
        %v3175 = vpack.c.b16 %v3011, %v3007
        %v3176 = vpack.c.b16 %v3016, %v3012
        %v3177 = vpack.c.b16 %v3017, %v3013
        %v3178 = vpack.c.b16 %v3018, %v3014
        %v3179 = vpack.c.b16 %v3019, %v3015
        %v3180 = vpack.c.b16 %v3024, %v3020
        %v3181 = vpack.c.b16 %v3025, %v3021
        %v3182 = vpack.c.b16 %v3026, %v3022
        %v3183 = vpack.c.b16 %v3027, %v3023
        %v3184 = vpack.c.b16 %v3032, %v3028
        %v3185 = vpack.c.b16 %v3033, %v3029
        %v3186 = vpack.c.b16 %v3034, %v3030
        %v3187 = vpack.c.b16 %v3035, %v3031
        %v3188 = vpack.c.b16 %v3040, %v3036
        %v3189 = vpack.c.b16 %v3041, %v3037
        %v3190 = vpack.c.b16 %v3042, %v3038
        %v3191 = vpack.c.b16 %v3043, %v3039
        %v3192 = vpack.c.b16 %v3048, %v3044
        %v3193 = vpack.c.b16 %v3049, %v3045
        %v3194 = vpack.c.b16 %v3050, %v3046
        %v3195 = vpack.c.b16 %v3051, %v3047
        %v3196 = vpack.c.b16 %v3056, %v3052
        %v3197 = vpack.c.b16 %v3057, %v3053
        %v3198 = vpack.c.b16 %v3058, %v3054
        %v3199 = vpack.c.b16 %v3059, %v3055
        %v3200 = vpack.c.b16 %v3064, %v3060
        %v3201 = vpack.c.b16 %v3065, %v3061
        %v3202 = vpack.c.b16 %v3066, %v3062
        %v3203 = vpack.c.b16 %v3067, %v3063
        %v3204 = vpack.c.b16 %v3072, %v3068
        %v3205 = vpack.c.b16 %v3073, %v3069
        %v3206 = vpack.c.b16 %v3074, %v3070
        %v3207 = vpack.c.b16 %v3075, %v3071
        %v3208 = vpack.c.b16 %v3080, %v3076
        %v3209 = vpack.c.b16 %v3081, %v3077
        %v3210 = vpack.c.b16 %v3082, %v3078
        %v3211 = vpack.c.b16 %v3083, %v3079
        %3340 = vmatprep.subr.bf16.mxu0 %v3113
        %3341 = vmatpush1.bf16.msra.mxu0 %v3112
        %3342 = vmatprep.subr.bf16.mxu0 %v3109
        %3343 = vmatpush1.bf16.msra.mxu0 %v3108
        %3344 = vmatprep.subr.bf16.mxu0 %v3105
        %3345 = vmatpush1.bf16.msra.mxu0 %v3104
        %3346 = vmatprep.subr.bf16.mxu0 %v3101
        %3347 = vmatpush1.bf16.msra.mxu0 %v3100
        %3348 = vmatprep.subr.bf16.mxu0 %v3097
        %3349 = vmatpush1.bf16.msra.mxu0 %v3096
        %3350 = vmatprep.subr.bf16.mxu0 %v3093
        %3351 = vmatpush1.bf16.msra.mxu0 %v3092
        %3352 = vmatprep.subr.bf16.mxu0 %v3089
        %3353 = vmatpush1.bf16.msra.mxu0 %v3088
        %3354 = vmatprep.subr.bf16.mxu0 %v3085
        %3355 = vmatpush1.bf16.msra.mxu0 %v3084
        %3356 = vmatprep.subr.bf16.mxu0 %v3145
        %3357 = vmatpush2.bf16.msra.mxu0 %v3144
        %3358 = vmatprep.subr.bf16.mxu0 %v3141
        %3359 = vmatpush2.bf16.msra.mxu0 %v3140
        %3360 = vmatprep.subr.bf16.mxu0 %v3137
        %3361 = vmatpush2.bf16.msra.mxu0 %v3136
        %3362 = vmatprep.subr.bf16.mxu0 %v3133
        %3363 = vmatpush2.bf16.msra.mxu0 %v3132
        %3364 = vmatprep.subr.bf16.mxu0 %v3129
        %3365 = vmatpush2.bf16.msra.mxu0 %v3128
        %3366 = vmatprep.subr.bf16.mxu0 %v3125
        %3367 = vmatpush2.bf16.msra.mxu0 %v3124
        %3368 = vmatprep.subr.bf16.mxu0 %v3121
        %3369 = vmatpush2.bf16.msra.mxu0 %v3120
        %3370 = vmatprep.subr.bf16.mxu0 %v3117
        %3371 = vmatpush2.bf16.msra.mxu0 %v3116
        %3372 = vmatprep.mubr.bf16.mxu0 %v1594
        %3373 = vmatmul.mubr.bf16.gmra.mxu0 %v1593
        %v3374 = vpop.f32.mrf.mxu0
        %v3375 = vadd.f32 %v2612, %v3374
        %v3376 = vpop.f32.mrf.mxu0
        %v3377 = vadd.f32 %v2614, %v3376
        %v3378 = vpop.f32.mrf.mxu0
        %v3379 = vpop.f32.mrf.mxu0
        %3380 = vdwg.mxu0
        %3381 = vmatprep.subr.bf16.mxu0 %v3177
        %3382 = vmatpush1.bf16.msra.mxu0 %v3176
        %3383 = vmatprep.subr.bf16.mxu0 %v3173
        %3384 = vmatpush1.bf16.msra.mxu0 %v3172
        %3385 = vmatprep.subr.bf16.mxu0 %v3169
        %3386 = vmatpush1.bf16.msra.mxu0 %v3168
        %3387 = vmatprep.subr.bf16.mxu0 %v3165
        %3388 = vmatpush1.bf16.msra.mxu0 %v3164
        %3389 = vmatprep.subr.bf16.mxu0 %v3161
        %3390 = vmatpush1.bf16.msra.mxu0 %v3160
        %3391 = vmatprep.subr.bf16.mxu0 %v3157
        %3392 = vmatpush1.bf16.msra.mxu0 %v3156
        %3393 = vmatprep.subr.bf16.mxu0 %v3153
        %3394 = vmatpush1.bf16.msra.mxu0 %v3152
        %3395 = vmatprep.subr.bf16.mxu0 %v3149
        %3396 = vmatpush1.bf16.msra.mxu0 %v3148
        %3397 = vmatprep.subr.bf16.mxu0 %v3209
        %3398 = vmatpush2.bf16.msra.mxu0 %v3208
        %3399 = vmatprep.subr.bf16.mxu0 %v3205
        %3400 = vmatpush2.bf16.msra.mxu0 %v3204
        %3401 = vmatprep.subr.bf16.mxu0 %v3201
        %3402 = vmatpush2.bf16.msra.mxu0 %v3200
        %3403 = vmatprep.subr.bf16.mxu0 %v3197
        %3404 = vmatpush2.bf16.msra.mxu0 %v3196
        %3405 = vmatprep.subr.bf16.mxu0 %v3193
        %3406 = vmatpush2.bf16.msra.mxu0 %v3192
        %3407 = vmatprep.subr.bf16.mxu0 %v3189
        %3408 = vmatpush2.bf16.msra.mxu0 %v3188
        %3409 = vmatprep.subr.bf16.mxu0 %v3185
        %3410 = vmatpush2.bf16.msra.mxu0 %v3184
        %3411 = vmatprep.subr.bf16.mxu0 %v3181
        %3412 = vmatpush2.bf16.msra.mxu0 %v3180
        %3413 = vmatprep.mubr.bf16.mxu0 %v1596
        %3414 = vmatmul.mubr.bf16.gmra.mxu0 %v1595
        %v3415 = vpop.f32.mrf.mxu0
        %v3416 = vadd.f32 %v3375, %v3415
        %v3417 = vpop.f32.mrf.mxu0
        %v3418 = vadd.f32 %v3377, %v3417
        %v3419 = vpop.f32.mrf.mxu0
        %v3420 = vpop.f32.mrf.mxu0
        %3421 = vdwg.mxu0
        %3422 = vmatprep.subr.bf16.mxu0 %v3115
        %3423 = vmatpush1.bf16.msra.mxu0 %v3114
        %3424 = vmatprep.subr.bf16.mxu0 %v3111
        %3425 = vmatpush1.bf16.msra.mxu0 %v3110
        %3426 = vmatprep.subr.bf16.mxu0 %v3107
        %3427 = vmatpush1.bf16.msra.mxu0 %v3106
        %3428 = vmatprep.subr.bf16.mxu0 %v3103
        %3429 = vmatpush1.bf16.msra.mxu0 %v3102
        %3430 = vmatprep.subr.bf16.mxu0 %v3099
        %3431 = vmatpush1.bf16.msra.mxu0 %v3098
        %3432 = vmatprep.subr.bf16.mxu0 %v3095
        %3433 = vmatpush1.bf16.msra.mxu0 %v3094
        %3434 = vmatprep.subr.bf16.mxu0 %v3091
        %3435 = vmatpush1.bf16.msra.mxu0 %v3090
        %3436 = vmatprep.subr.bf16.mxu0 %v3087
        %3437 = vmatpush1.bf16.msra.mxu0 %v3086
        %3438 = vmatprep.subr.bf16.mxu0 %v3147
        %3439 = vmatpush2.bf16.msra.mxu0 %v3146
        %3440 = vmatprep.subr.bf16.mxu0 %v3143
        %3441 = vmatpush2.bf16.msra.mxu0 %v3142
        %3442 = vmatprep.subr.bf16.mxu0 %v3139
        %3443 = vmatpush2.bf16.msra.mxu0 %v3138
        %3444 = vmatprep.subr.bf16.mxu0 %v3135
        %3445 = vmatpush2.bf16.msra.mxu0 %v3134
        %3446 = vmatprep.subr.bf16.mxu0 %v3131
        %3447 = vmatpush2.bf16.msra.mxu0 %v3130
        %3448 = vmatprep.subr.bf16.mxu0 %v3127
        %3449 = vmatpush2.bf16.msra.mxu0 %v3126
        %3450 = vmatprep.subr.bf16.mxu0 %v3123
        %3451 = vmatpush2.bf16.msra.mxu0 %v3122
        %3452 = vmatprep.subr.bf16.mxu0 %v3119
        %3453 = vmatpush2.bf16.msra.mxu0 %v3118
        %3454 = vmatprep.mubr.bf16.mxu0 %v1594
        %3455 = vmatmul.mubr.bf16.gmra.mxu0 %v1593
        %v3456 = vpop.f32.mrf.mxu0
        %v3457 = vadd.f32 %v2694, %v3456
        %v3458 = vpop.f32.mrf.mxu0
        %v3459 = vadd.f32 %v2696, %v3458
        %v3460 = vpop.f32.mrf.mxu0
        %v3461 = vpop.f32.mrf.mxu0
        %3462 = vdwg.mxu0
        %3463 = vmatprep.subr.bf16.mxu0 %v3179
        %3464 = vmatpush1.bf16.msra.mxu0 %v3178
        %3465 = vmatprep.subr.bf16.mxu0 %v3175
        %3466 = vmatpush1.bf16.msra.mxu0 %v3174
        %3467 = vmatprep.subr.bf16.mxu0 %v3171
        %3468 = vmatpush1.bf16.msra.mxu0 %v3170
        %3469 = vmatprep.subr.bf16.mxu0 %v3167
        %3470 = vmatpush1.bf16.msra.mxu0 %v3166
        %3471 = vmatprep.subr.bf16.mxu0 %v3163
        %3472 = vmatpush1.bf16.msra.mxu0 %v3162
        %3473 = vmatprep.subr.bf16.mxu0 %v3159
        %3474 = vmatpush1.bf16.msra.mxu0 %v3158
        %3475 = vmatprep.subr.bf16.mxu0 %v3155
        %3476 = vmatpush1.bf16.msra.mxu0 %v3154
        %3477 = vmatprep.subr.bf16.mxu0 %v3151
        %3478 = vmatpush1.bf16.msra.mxu0 %v3150
        %3479 = vmatprep.subr.bf16.mxu0 %v3211
        %3480 = vmatpush2.bf16.msra.mxu0 %v3210
        %3481 = vmatprep.subr.bf16.mxu0 %v3207
        %3482 = vmatpush2.bf16.msra.mxu0 %v3206
        %3483 = vmatprep.subr.bf16.mxu0 %v3203
        %3484 = vmatpush2.bf16.msra.mxu0 %v3202
        %3485 = vmatprep.subr.bf16.mxu0 %v3199
        %3486 = vmatpush2.bf16.msra.mxu0 %v3198
        %3487 = vmatprep.subr.bf16.mxu0 %v3195
        %3488 = vmatpush2.bf16.msra.mxu0 %v3194
        %3489 = vmatprep.subr.bf16.mxu0 %v3191
        %3490 = vmatpush2.bf16.msra.mxu0 %v3190
        %3491 = vmatprep.subr.bf16.mxu0 %v3187
        %3492 = vmatpush2.bf16.msra.mxu0 %v3186
        %3493 = vmatprep.subr.bf16.mxu0 %v3183
        %3494 = vmatpush2.bf16.msra.mxu0 %v3182
        %3495 = vmatprep.mubr.bf16.mxu0 %v1596
        %3496 = vmatmul.mubr.bf16.gmra.mxu0 %v1595
        %v3497 = vpop.f32.mrf.mxu0
        %v3498 = vadd.f32 %v3457, %v3497
        %v3499 = vpop.f32.mrf.mxu0
        %v3500 = vadd.f32 %v3459, %v3499
        %v3501 = vpop.f32.mrf.mxu0
        %v3502 = vpop.f32.mrf.mxu0
        %3503 = vdwg.mxu0
        %s3504 = scalar_lea.vmem [#allocation7], 2048
        %v3505 = vld [vmem:[%s3504] sm:$0xff]
        %v3506 = vld [vmem:[%s3504 + $0x8] sm:$0xff]
        %v3507 = vld [vmem:[%s3504 + $0x10] sm:$0xff]
        %v3508 = vld [vmem:[%s3504 + $0x18] sm:$0xff]
        %v3509 = vld [vmem:[%s3504 + $0x20] sm:$0xff]
        %v3510 = vld [vmem:[%s3504 + $0x28] sm:$0xff]
        %v3511 = vld [vmem:[%s3504 + $0x30] sm:$0xff]
        %v3512 = vld [vmem:[%s3504 + $0x38] sm:$0xff]
        %v3513 = vld [vmem:[%s3504 + $0x40] sm:$0xff]
        %v3514 = vld [vmem:[%s3504 + $0x48] sm:$0xff]
        %v3515 = vld [vmem:[%s3504 + $0x50] sm:$0xff]
        %v3516 = vld [vmem:[%s3504 + $0x58] sm:$0xff]
        %v3517 = vld [vmem:[%s3504 + $0x60] sm:$0xff]
        %v3518 = vld [vmem:[%s3504 + $0x68] sm:$0xff]
        %v3519 = vld [vmem:[%s3504 + $0x70] sm:$0xff]
        %v3520 = vld [vmem:[%s3504 + $0x78] sm:$0xff]
        %v3521 = vld [vmem:[%s3504 + $0x80] sm:$0xff]
        %v3522 = vld [vmem:[%s3504 + $0x88] sm:$0xff]
        %v3523 = vld [vmem:[%s3504 + $0x90] sm:$0xff]
        %v3524 = vld [vmem:[%s3504 + $0x98] sm:$0xff]
        %v3525 = vld [vmem:[%s3504 + $0xa0] sm:$0xff]
        %v3526 = vld [vmem:[%s3504 + $0xa8] sm:$0xff]
        %v3527 = vld [vmem:[%s3504 + $0xb0] sm:$0xff]
        %v3528 = vld [vmem:[%s3504 + $0xb8] sm:$0xff]
        %v3529 = vld [vmem:[%s3504 + $0xc0] sm:$0xff]
        %v3530 = vld [vmem:[%s3504 + $0xc8] sm:$0xff]
        %v3531 = vld [vmem:[%s3504 + $0xd0] sm:$0xff]
        %v3532 = vld [vmem:[%s3504 + $0xd8] sm:$0xff]
        %v3533 = vld [vmem:[%s3504 + $0xe0] sm:$0xff]
        %v3534 = vld [vmem:[%s3504 + $0xe8] sm:$0xff]
        %v3535 = vld [vmem:[%s3504 + $0xf0] sm:$0xff]
        %v3536 = vld [vmem:[%s3504 + $0xf8] sm:$0xff]
        %v3537 = vld [vmem:[%s3504 + $0x100] sm:$0xff]
        %v3538 = vld [vmem:[%s3504 + $0x108] sm:$0xff]
        %v3539 = vld [vmem:[%s3504 + $0x110] sm:$0xff]
        %v3540 = vld [vmem:[%s3504 + $0x118] sm:$0xff]
        %v3541 = vld [vmem:[%s3504 + $0x120] sm:$0xff]
        %v3542 = vld [vmem:[%s3504 + $0x128] sm:$0xff]
        %v3543 = vld [vmem:[%s3504 + $0x130] sm:$0xff]
        %v3544 = vld [vmem:[%s3504 + $0x138] sm:$0xff]
        %v3545 = vld [vmem:[%s3504 + $0x140] sm:$0xff]
        %v3546 = vld [vmem:[%s3504 + $0x148] sm:$0xff]
        %v3547 = vld [vmem:[%s3504 + $0x150] sm:$0xff]
        %v3548 = vld [vmem:[%s3504 + $0x158] sm:$0xff]
        %v3549 = vld [vmem:[%s3504 + $0x160] sm:$0xff]
        %v3550 = vld [vmem:[%s3504 + $0x168] sm:$0xff]
        %v3551 = vld [vmem:[%s3504 + $0x170] sm:$0xff]
        %v3552 = vld [vmem:[%s3504 + $0x178] sm:$0xff]
        %v3553 = vld [vmem:[%s3504 + $0x180] sm:$0xff]
        %v3554 = vld [vmem:[%s3504 + $0x188] sm:$0xff]
        %v3555 = vld [vmem:[%s3504 + $0x190] sm:$0xff]
        %v3556 = vld [vmem:[%s3504 + $0x198] sm:$0xff]
        %v3557 = vld [vmem:[%s3504 + $0x1a0] sm:$0xff]
        %v3558 = vld [vmem:[%s3504 + $0x1a8] sm:$0xff]
        %v3559 = vld [vmem:[%s3504 + $0x1b0] sm:$0xff]
        %v3560 = vld [vmem:[%s3504 + $0x1b8] sm:$0xff]
        %v3561 = vld [vmem:[%s3504 + $0x1c0] sm:$0xff]
        %v3562 = vld [vmem:[%s3504 + $0x1c8] sm:$0xff]
        %v3563 = vld [vmem:[%s3504 + $0x1d0] sm:$0xff]
        %v3564 = vld [vmem:[%s3504 + $0x1d8] sm:$0xff]
        %v3565 = vld [vmem:[%s3504 + $0x1e0] sm:$0xff]
        %v3566 = vld [vmem:[%s3504 + $0x1e8] sm:$0xff]
        %v3567 = vld [vmem:[%s3504 + $0x1f0] sm:$0xff]
        %v3568 = vld [vmem:[%s3504 + $0x1f8] sm:$0xff]
        %v3569 = vld [vmem:[%s3504 + $0x200] sm:$0xff]
        %v3570 = vld [vmem:[%s3504 + $0x208] sm:$0xff]
        %v3571 = vld [vmem:[%s3504 + $0x210] sm:$0xff]
        %v3572 = vld [vmem:[%s3504 + $0x218] sm:$0xff]
        %v3573 = vld [vmem:[%s3504 + $0x220] sm:$0xff]
        %v3574 = vld [vmem:[%s3504 + $0x228] sm:$0xff]
        %v3575 = vld [vmem:[%s3504 + $0x230] sm:$0xff]
        %v3576 = vld [vmem:[%s3504 + $0x238] sm:$0xff]
        %v3577 = vld [vmem:[%s3504 + $0x240] sm:$0xff]
        %v3578 = vld [vmem:[%s3504 + $0x248] sm:$0xff]
        %v3579 = vld [vmem:[%s3504 + $0x250] sm:$0xff]
        %v3580 = vld [vmem:[%s3504 + $0x258] sm:$0xff]
        %v3581 = vld [vmem:[%s3504 + $0x260] sm:$0xff]
        %v3582 = vld [vmem:[%s3504 + $0x268] sm:$0xff]
        %v3583 = vld [vmem:[%s3504 + $0x270] sm:$0xff]
        %v3584 = vld [vmem:[%s3504 + $0x278] sm:$0xff]
        %v3585 = vld [vmem:[%s3504 + $0x280] sm:$0xff]
        %v3586 = vld [vmem:[%s3504 + $0x288] sm:$0xff]
        %v3587 = vld [vmem:[%s3504 + $0x290] sm:$0xff]
        %v3588 = vld [vmem:[%s3504 + $0x298] sm:$0xff]
        %v3589 = vld [vmem:[%s3504 + $0x2a0] sm:$0xff]
        %v3590 = vld [vmem:[%s3504 + $0x2a8] sm:$0xff]
        %v3591 = vld [vmem:[%s3504 + $0x2b0] sm:$0xff]
        %v3592 = vld [vmem:[%s3504 + $0x2b8] sm:$0xff]
        %v3593 = vld [vmem:[%s3504 + $0x2c0] sm:$0xff]
        %v3594 = vld [vmem:[%s3504 + $0x2c8] sm:$0xff]
        %v3595 = vld [vmem:[%s3504 + $0x2d0] sm:$0xff]
        %v3596 = vld [vmem:[%s3504 + $0x2d8] sm:$0xff]
        %v3597 = vld [vmem:[%s3504 + $0x2e0] sm:$0xff]
        %v3598 = vld [vmem:[%s3504 + $0x2e8] sm:$0xff]
        %v3599 = vld [vmem:[%s3504 + $0x2f0] sm:$0xff]
        %v3600 = vld [vmem:[%s3504 + $0x2f8] sm:$0xff]
        %v3601 = vld [vmem:[%s3504 + $0x300] sm:$0xff]
        %v3602 = vld [vmem:[%s3504 + $0x308] sm:$0xff]
        %v3603 = vld [vmem:[%s3504 + $0x310] sm:$0xff]
        %v3604 = vld [vmem:[%s3504 + $0x318] sm:$0xff]
        %v3605 = vld [vmem:[%s3504 + $0x320] sm:$0xff]
        %v3606 = vld [vmem:[%s3504 + $0x328] sm:$0xff]
        %v3607 = vld [vmem:[%s3504 + $0x330] sm:$0xff]
        %v3608 = vld [vmem:[%s3504 + $0x338] sm:$0xff]
        %v3609 = vld [vmem:[%s3504 + $0x340] sm:$0xff]
        %v3610 = vld [vmem:[%s3504 + $0x348] sm:$0xff]
        %v3611 = vld [vmem:[%s3504 + $0x350] sm:$0xff]
        %v3612 = vld [vmem:[%s3504 + $0x358] sm:$0xff]
        %v3613 = vld [vmem:[%s3504 + $0x360] sm:$0xff]
        %v3614 = vld [vmem:[%s3504 + $0x368] sm:$0xff]
        %v3615 = vld [vmem:[%s3504 + $0x370] sm:$0xff]
        %v3616 = vld [vmem:[%s3504 + $0x378] sm:$0xff]
        %v3617 = vld [vmem:[%s3504 + $0x380] sm:$0xff]
        %v3618 = vld [vmem:[%s3504 + $0x388] sm:$0xff]
        %v3619 = vld [vmem:[%s3504 + $0x390] sm:$0xff]
        %v3620 = vld [vmem:[%s3504 + $0x398] sm:$0xff]
        %v3621 = vld [vmem:[%s3504 + $0x3a0] sm:$0xff]
        %v3622 = vld [vmem:[%s3504 + $0x3a8] sm:$0xff]
        %v3623 = vld [vmem:[%s3504 + $0x3b0] sm:$0xff]
        %v3624 = vld [vmem:[%s3504 + $0x3b8] sm:$0xff]
        %v3625 = vld [vmem:[%s3504 + $0x3c0] sm:$0xff]
        %v3626 = vld [vmem:[%s3504 + $0x3c8] sm:$0xff]
        %v3627 = vld [vmem:[%s3504 + $0x3d0] sm:$0xff]
        %v3628 = vld [vmem:[%s3504 + $0x3d8] sm:$0xff]
        %v3629 = vld [vmem:[%s3504 + $0x3e0] sm:$0xff]
        %v3630 = vld [vmem:[%s3504 + $0x3e8] sm:$0xff]
        %v3631 = vld [vmem:[%s3504 + $0x3f0] sm:$0xff]
        %v3632 = vld [vmem:[%s3504 + $0x3f8] sm:$0xff]
        %v3761 = vunpack.c.l.b16 %v3505
        %v3762 = vunpack.c.h.b16 %v3505
        %v3763 = vunpack.c.l.b16 %v3506
        %v3764 = vunpack.c.h.b16 %v3506
        %v3765 = vunpack.c.l.b16 %v3507
        %v3766 = vunpack.c.h.b16 %v3507
        %v3767 = vunpack.c.l.b16 %v3508
        %v3768 = vunpack.c.h.b16 %v3508
        %v3769 = vunpack.c.l.b16 %v3509
        %v3770 = vunpack.c.h.b16 %v3509
        %v3771 = vunpack.c.l.b16 %v3510
        %v3772 = vunpack.c.h.b16 %v3510
        %v3773 = vunpack.c.l.b16 %v3511
        %v3774 = vunpack.c.h.b16 %v3511
        %v3775 = vunpack.c.l.b16 %v3512
        %v3776 = vunpack.c.h.b16 %v3512
        %v3777 = vunpack.c.l.b16 %v3513
        %v3778 = vunpack.c.h.b16 %v3513
        %v3779 = vunpack.c.l.b16 %v3514
        %v3780 = vunpack.c.h.b16 %v3514
        %v3781 = vunpack.c.l.b16 %v3515
        %v3782 = vunpack.c.h.b16 %v3515
        %v3783 = vunpack.c.l.b16 %v3516
        %v3784 = vunpack.c.h.b16 %v3516
        %v3785 = vunpack.c.l.b16 %v3517
        %v3786 = vunpack.c.h.b16 %v3517
        %v3787 = vunpack.c.l.b16 %v3518
        %v3788 = vunpack.c.h.b16 %v3518
        %v3789 = vunpack.c.l.b16 %v3519
        %v3790 = vunpack.c.h.b16 %v3519
        %v3791 = vunpack.c.l.b16 %v3520
        %v3792 = vunpack.c.h.b16 %v3520
        %v3793 = vunpack.c.l.b16 %v3521
        %v3794 = vunpack.c.h.b16 %v3521
        %v3795 = vunpack.c.l.b16 %v3522
        %v3796 = vunpack.c.h.b16 %v3522
        %v3797 = vunpack.c.l.b16 %v3523
        %v3798 = vunpack.c.h.b16 %v3523
        %v3799 = vunpack.c.l.b16 %v3524
        %v3800 = vunpack.c.h.b16 %v3524
        %v3801 = vunpack.c.l.b16 %v3525
        %v3802 = vunpack.c.h.b16 %v3525
        %v3803 = vunpack.c.l.b16 %v3526
        %v3804 = vunpack.c.h.b16 %v3526
        %v3805 = vunpack.c.l.b16 %v3527
        %v3806 = vunpack.c.h.b16 %v3527
        %v3807 = vunpack.c.l.b16 %v3528
        %v3808 = vunpack.c.h.b16 %v3528
        %v3809 = vunpack.c.l.b16 %v3529
        %v3810 = vunpack.c.h.b16 %v3529
        %v3811 = vunpack.c.l.b16 %v3530
        %v3812 = vunpack.c.h.b16 %v3530
        %v3813 = vunpack.c.l.b16 %v3531
        %v3814 = vunpack.c.h.b16 %v3531
        %v3815 = vunpack.c.l.b16 %v3532
        %v3816 = vunpack.c.h.b16 %v3532
        %v3817 = vunpack.c.l.b16 %v3533
        %v3818 = vunpack.c.h.b16 %v3533
        %v3819 = vunpack.c.l.b16 %v3534
        %v3820 = vunpack.c.h.b16 %v3534
        %v3821 = vunpack.c.l.b16 %v3535
        %v3822 = vunpack.c.h.b16 %v3535
        %v3823 = vunpack.c.l.b16 %v3536
        %v3824 = vunpack.c.h.b16 %v3536
        %v3825 = vunpack.c.l.b16 %v3537
        %v3826 = vunpack.c.h.b16 %v3537
        %v3827 = vunpack.c.l.b16 %v3538
        %v3828 = vunpack.c.h.b16 %v3538
        %v3829 = vunpack.c.l.b16 %v3539
        %v3830 = vunpack.c.h.b16 %v3539
        %v3831 = vunpack.c.l.b16 %v3540
        %v3832 = vunpack.c.h.b16 %v3540
        %v3833 = vunpack.c.l.b16 %v3541
        %v3834 = vunpack.c.h.b16 %v3541
        %v3835 = vunpack.c.l.b16 %v3542
        %v3836 = vunpack.c.h.b16 %v3542
        %v3837 = vunpack.c.l.b16 %v3543
        %v3838 = vunpack.c.h.b16 %v3543
        %v3839 = vunpack.c.l.b16 %v3544
        %v3840 = vunpack.c.h.b16 %v3544
        %v3841 = vunpack.c.l.b16 %v3545
        %v3842 = vunpack.c.h.b16 %v3545
        %v3843 = vunpack.c.l.b16 %v3546
        %v3844 = vunpack.c.h.b16 %v3546
        %v3845 = vunpack.c.l.b16 %v3547
        %v3846 = vunpack.c.h.b16 %v3547
        %v3847 = vunpack.c.l.b16 %v3548
        %v3848 = vunpack.c.h.b16 %v3548
        %v3849 = vunpack.c.l.b16 %v3549
        %v3850 = vunpack.c.h.b16 %v3549
        %v3851 = vunpack.c.l.b16 %v3550
        %v3852 = vunpack.c.h.b16 %v3550
        %v3853 = vunpack.c.l.b16 %v3551
        %v3854 = vunpack.c.h.b16 %v3551
        %v3855 = vunpack.c.l.b16 %v3552
        %v3856 = vunpack.c.h.b16 %v3552
        %v3857 = vunpack.c.l.b16 %v3553
        %v3858 = vunpack.c.h.b16 %v3553
        %v3859 = vunpack.c.l.b16 %v3554
        %v3860 = vunpack.c.h.b16 %v3554
        %v3861 = vunpack.c.l.b16 %v3555
        %v3862 = vunpack.c.h.b16 %v3555
        %v3863 = vunpack.c.l.b16 %v3556
        %v3864 = vunpack.c.h.b16 %v3556
        %v3865 = vunpack.c.l.b16 %v3557
        %v3866 = vunpack.c.h.b16 %v3557
        %v3867 = vunpack.c.l.b16 %v3558
        %v3868 = vunpack.c.h.b16 %v3558
        %v3869 = vunpack.c.l.b16 %v3559
        %v3870 = vunpack.c.h.b16 %v3559
        %v3871 = vunpack.c.l.b16 %v3560
        %v3872 = vunpack.c.h.b16 %v3560
        %v3873 = vunpack.c.l.b16 %v3561
        %v3874 = vunpack.c.h.b16 %v3561
        %v3875 = vunpack.c.l.b16 %v3562
        %v3876 = vunpack.c.h.b16 %v3562
        %v3877 = vunpack.c.l.b16 %v3563
        %v3878 = vunpack.c.h.b16 %v3563
        %v3879 = vunpack.c.l.b16 %v3564
        %v3880 = vunpack.c.h.b16 %v3564
        %v3881 = vunpack.c.l.b16 %v3565
        %v3882 = vunpack.c.h.b16 %v3565
        %v3883 = vunpack.c.l.b16 %v3566
        %v3884 = vunpack.c.h.b16 %v3566
        %v3885 = vunpack.c.l.b16 %v3567
        %v3886 = vunpack.c.h.b16 %v3567
        %v3887 = vunpack.c.l.b16 %v3568
        %v3888 = vunpack.c.h.b16 %v3568
        %v3889 = vunpack.c.l.b16 %v3569
        %v3890 = vunpack.c.h.b16 %v3569
        %v3891 = vunpack.c.l.b16 %v3570
        %v3892 = vunpack.c.h.b16 %v3570
        %v3893 = vunpack.c.l.b16 %v3571
        %v3894 = vunpack.c.h.b16 %v3571
        %v3895 = vunpack.c.l.b16 %v3572
        %v3896 = vunpack.c.h.b16 %v3572
        %v3897 = vunpack.c.l.b16 %v3573
        %v3898 = vunpack.c.h.b16 %v3573
        %v3899 = vunpack.c.l.b16 %v3574
        %v3900 = vunpack.c.h.b16 %v3574
        %v3901 = vunpack.c.l.b16 %v3575
        %v3902 = vunpack.c.h.b16 %v3575
        %v3903 = vunpack.c.l.b16 %v3576
        %v3904 = vunpack.c.h.b16 %v3576
        %v3905 = vunpack.c.l.b16 %v3577
        %v3906 = vunpack.c.h.b16 %v3577
        %v3907 = vunpack.c.l.b16 %v3578
        %v3908 = vunpack.c.h.b16 %v3578
        %v3909 = vunpack.c.l.b16 %v3579
        %v3910 = vunpack.c.h.b16 %v3579
        %v3911 = vunpack.c.l.b16 %v3580
        %v3912 = vunpack.c.h.b16 %v3580
        %v3913 = vunpack.c.l.b16 %v3581
        %v3914 = vunpack.c.h.b16 %v3581
        %v3915 = vunpack.c.l.b16 %v3582
        %v3916 = vunpack.c.h.b16 %v3582
        %v3917 = vunpack.c.l.b16 %v3583
        %v3918 = vunpack.c.h.b16 %v3583
        %v3919 = vunpack.c.l.b16 %v3584
        %v3920 = vunpack.c.h.b16 %v3584
        %v3921 = vunpack.c.l.b16 %v3585
        %v3922 = vunpack.c.h.b16 %v3585
        %v3923 = vunpack.c.l.b16 %v3586
        %v3924 = vunpack.c.h.b16 %v3586
        %v3925 = vunpack.c.l.b16 %v3587
        %v3926 = vunpack.c.h.b16 %v3587
        %v3927 = vunpack.c.l.b16 %v3588
        %v3928 = vunpack.c.h.b16 %v3588
        %v3929 = vunpack.c.l.b16 %v3589
        %v3930 = vunpack.c.h.b16 %v3589
        %v3931 = vunpack.c.l.b16 %v3590
        %v3932 = vunpack.c.h.b16 %v3590
        %v3933 = vunpack.c.l.b16 %v3591
        %v3934 = vunpack.c.h.b16 %v3591
        %v3935 = vunpack.c.l.b16 %v3592
        %v3936 = vunpack.c.h.b16 %v3592
        %v3937 = vunpack.c.l.b16 %v3593
        %v3938 = vunpack.c.h.b16 %v3593
        %v3939 = vunpack.c.l.b16 %v3594
        %v3940 = vunpack.c.h.b16 %v3594
        %v3941 = vunpack.c.l.b16 %v3595
        %v3942 = vunpack.c.h.b16 %v3595
        %v3943 = vunpack.c.l.b16 %v3596
        %v3944 = vunpack.c.h.b16 %v3596
        %v3945 = vunpack.c.l.b16 %v3597
        %v3946 = vunpack.c.h.b16 %v3597
        %v3947 = vunpack.c.l.b16 %v3598
        %v3948 = vunpack.c.h.b16 %v3598
        %v3949 = vunpack.c.l.b16 %v3599
        %v3950 = vunpack.c.h.b16 %v3599
        %v3951 = vunpack.c.l.b16 %v3600
        %v3952 = vunpack.c.h.b16 %v3600
        %v3953 = vunpack.c.l.b16 %v3601
        %v3954 = vunpack.c.h.b16 %v3601
        %v3955 = vunpack.c.l.b16 %v3602
        %v3956 = vunpack.c.h.b16 %v3602
        %v3957 = vunpack.c.l.b16 %v3603
        %v3958 = vunpack.c.h.b16 %v3603
        %v3959 = vunpack.c.l.b16 %v3604
        %v3960 = vunpack.c.h.b16 %v3604
        %v3961 = vunpack.c.l.b16 %v3605
        %v3962 = vunpack.c.h.b16 %v3605
        %v3963 = vunpack.c.l.b16 %v3606
        %v3964 = vunpack.c.h.b16 %v3606
        %v3965 = vunpack.c.l.b16 %v3607
        %v3966 = vunpack.c.h.b16 %v3607
        %v3967 = vunpack.c.l.b16 %v3608
        %v3968 = vunpack.c.h.b16 %v3608
        %v3969 = vunpack.c.l.b16 %v3609
        %v3970 = vunpack.c.h.b16 %v3609
        %v3971 = vunpack.c.l.b16 %v3610
        %v3972 = vunpack.c.h.b16 %v3610
        %v3973 = vunpack.c.l.b16 %v3611
        %v3974 = vunpack.c.h.b16 %v3611
        %v3975 = vunpack.c.l.b16 %v3612
        %v3976 = vunpack.c.h.b16 %v3612
        %v3977 = vunpack.c.l.b16 %v3613
        %v3978 = vunpack.c.h.b16 %v3613
        %v3979 = vunpack.c.l.b16 %v3614
        %v3980 = vunpack.c.h.b16 %v3614
        %v3981 = vunpack.c.l.b16 %v3615
        %v3982 = vunpack.c.h.b16 %v3615
        %v3983 = vunpack.c.l.b16 %v3616
        %v3984 = vunpack.c.h.b16 %v3616
        %v3985 = vunpack.c.l.b16 %v3617
        %v3986 = vunpack.c.h.b16 %v3617
        %v3987 = vunpack.c.l.b16 %v3618
        %v3988 = vunpack.c.h.b16 %v3618
        %v3989 = vunpack.c.l.b16 %v3619
        %v3990 = vunpack.c.h.b16 %v3619
        %v3991 = vunpack.c.l.b16 %v3620
        %v3992 = vunpack.c.h.b16 %v3620
        %v3993 = vunpack.c.l.b16 %v3621
        %v3994 = vunpack.c.h.b16 %v3621
        %v3995 = vunpack.c.l.b16 %v3622
        %v3996 = vunpack.c.h.b16 %v3622
        %v3997 = vunpack.c.l.b16 %v3623
        %v3998 = vunpack.c.h.b16 %v3623
        %v3999 = vunpack.c.l.b16 %v3624
        %v4000 = vunpack.c.h.b16 %v3624
        %v4001 = vunpack.c.l.b16 %v3625
        %v4002 = vunpack.c.h.b16 %v3625
        %v4003 = vunpack.c.l.b16 %v3626
        %v4004 = vunpack.c.h.b16 %v3626
        %v4005 = vunpack.c.l.b16 %v3627
        %v4006 = vunpack.c.h.b16 %v3627
        %v4007 = vunpack.c.l.b16 %v3628
        %v4008 = vunpack.c.h.b16 %v3628
        %v4009 = vunpack.c.l.b16 %v3629
        %v4010 = vunpack.c.h.b16 %v3629
        %v4011 = vunpack.c.l.b16 %v3630
        %v4012 = vunpack.c.h.b16 %v3630
        %v4013 = vunpack.c.l.b16 %v3631
        %v4014 = vunpack.c.h.b16 %v3631
        %v4015 = vunpack.c.l.b16 %v3632
        %v4016 = vunpack.c.h.b16 %v3632
        %v4017 = vpack.c.b16 %v3765, %v3761
        %v4018 = vpack.c.b16 %v3766, %v3762
        %v4019 = vpack.c.b16 %v3767, %v3763
        %v4020 = vpack.c.b16 %v3768, %v3764
        %v4021 = vpack.c.b16 %v3773, %v3769
        %v4022 = vpack.c.b16 %v3774, %v3770
        %v4023 = vpack.c.b16 %v3775, %v3771
        %v4024 = vpack.c.b16 %v3776, %v3772
        %v4025 = vpack.c.b16 %v3781, %v3777
        %v4026 = vpack.c.b16 %v3782, %v3778
        %v4027 = vpack.c.b16 %v3783, %v3779
        %v4028 = vpack.c.b16 %v3784, %v3780
        %v4029 = vpack.c.b16 %v3789, %v3785
        %v4030 = vpack.c.b16 %v3790, %v3786
        %v4031 = vpack.c.b16 %v3791, %v3787
        %v4032 = vpack.c.b16 %v3792, %v3788
        %v4033 = vpack.c.b16 %v3797, %v3793
        %v4034 = vpack.c.b16 %v3798, %v3794
        %v4035 = vpack.c.b16 %v3799, %v3795
        %v4036 = vpack.c.b16 %v3800, %v3796
        %v4037 = vpack.c.b16 %v3805, %v3801
        %v4038 = vpack.c.b16 %v3806, %v3802
        %v4039 = vpack.c.b16 %v3807, %v3803
        %v4040 = vpack.c.b16 %v3808, %v3804
        %v4041 = vpack.c.b16 %v3813, %v3809
        %v4042 = vpack.c.b16 %v3814, %v3810
        %v4043 = vpack.c.b16 %v3815, %v3811
        %v4044 = vpack.c.b16 %v3816, %v3812
        %v4045 = vpack.c.b16 %v3821, %v3817
        %v4046 = vpack.c.b16 %v3822, %v3818
        %v4047 = vpack.c.b16 %v3823, %v3819
        %v4048 = vpack.c.b16 %v3824, %v3820
        %v4049 = vpack.c.b16 %v3829, %v3825
        %v4050 = vpack.c.b16 %v3830, %v3826
        %v4051 = vpack.c.b16 %v3831, %v3827
        %v4052 = vpack.c.b16 %v3832, %v3828
        %v4053 = vpack.c.b16 %v3837, %v3833
        %v4054 = vpack.c.b16 %v3838, %v3834
        %v4055 = vpack.c.b16 %v3839, %v3835
        %v4056 = vpack.c.b16 %v3840, %v3836
        %v4057 = vpack.c.b16 %v3845, %v3841
        %v4058 = vpack.c.b16 %v3846, %v3842
        %v4059 = vpack.c.b16 %v3847, %v3843
        %v4060 = vpack.c.b16 %v3848, %v3844
        %v4061 = vpack.c.b16 %v3853, %v3849
        %v4062 = vpack.c.b16 %v3854, %v3850
        %v4063 = vpack.c.b16 %v3855, %v3851
        %v4064 = vpack.c.b16 %v3856, %v3852
        %v4065 = vpack.c.b16 %v3861, %v3857
        %v4066 = vpack.c.b16 %v3862, %v3858
        %v4067 = vpack.c.b16 %v3863, %v3859
        %v4068 = vpack.c.b16 %v3864, %v3860
        %v4069 = vpack.c.b16 %v3869, %v3865
        %v4070 = vpack.c.b16 %v3870, %v3866
        %v4071 = vpack.c.b16 %v3871, %v3867
        %v4072 = vpack.c.b16 %v3872, %v3868
        %v4073 = vpack.c.b16 %v3877, %v3873
        %v4074 = vpack.c.b16 %v3878, %v3874
        %v4075 = vpack.c.b16 %v3879, %v3875
        %v4076 = vpack.c.b16 %v3880, %v3876
        %v4077 = vpack.c.b16 %v3885, %v3881
        %v4078 = vpack.c.b16 %v3886, %v3882
        %v4079 = vpack.c.b16 %v3887, %v3883
        %v4080 = vpack.c.b16 %v3888, %v3884
        %v4081 = vpack.c.b16 %v3893, %v3889
        %v4082 = vpack.c.b16 %v3894, %v3890
        %v4083 = vpack.c.b16 %v3895, %v3891
        %v4084 = vpack.c.b16 %v3896, %v3892
        %v4085 = vpack.c.b16 %v3901, %v3897
        %v4086 = vpack.c.b16 %v3902, %v3898
        %v4087 = vpack.c.b16 %v3903, %v3899
        %v4088 = vpack.c.b16 %v3904, %v3900
        %v4089 = vpack.c.b16 %v3909, %v3905
        %v4090 = vpack.c.b16 %v3910, %v3906
        %v4091 = vpack.c.b16 %v3911, %v3907
        %v4092 = vpack.c.b16 %v3912, %v3908
        %v4093 = vpack.c.b16 %v3917, %v3913
        %v4094 = vpack.c.b16 %v3918, %v3914
        %v4095 = vpack.c.b16 %v3919, %v3915
        %v4096 = vpack.c.b16 %v3920, %v3916
        %v4097 = vpack.c.b16 %v3925, %v3921
        %v4098 = vpack.c.b16 %v3926, %v3922
        %v4099 = vpack.c.b16 %v3927, %v3923
        %v4100 = vpack.c.b16 %v3928, %v3924
        %v4101 = vpack.c.b16 %v3933, %v3929
        %v4102 = vpack.c.b16 %v3934, %v3930
        %v4103 = vpack.c.b16 %v3935, %v3931
        %v4104 = vpack.c.b16 %v3936, %v3932
        %v4105 = vpack.c.b16 %v3941, %v3937
        %v4106 = vpack.c.b16 %v3942, %v3938
        %v4107 = vpack.c.b16 %v3943, %v3939
        %v4108 = vpack.c.b16 %v3944, %v3940
        %v4109 = vpack.c.b16 %v3949, %v3945
        %v4110 = vpack.c.b16 %v3950, %v3946
        %v4111 = vpack.c.b16 %v3951, %v3947
        %v4112 = vpack.c.b16 %v3952, %v3948
        %v4113 = vpack.c.b16 %v3957, %v3953
        %v4114 = vpack.c.b16 %v3958, %v3954
        %v4115 = vpack.c.b16 %v3959, %v3955
        %v4116 = vpack.c.b16 %v3960, %v3956
        %v4117 = vpack.c.b16 %v3965, %v3961
        %v4118 = vpack.c.b16 %v3966, %v3962
        %v4119 = vpack.c.b16 %v3967, %v3963
        %v4120 = vpack.c.b16 %v3968, %v3964
        %v4121 = vpack.c.b16 %v3973, %v3969
        %v4122 = vpack.c.b16 %v3974, %v3970
        %v4123 = vpack.c.b16 %v3975, %v3971
        %v4124 = vpack.c.b16 %v3976, %v3972
        %v4125 = vpack.c.b16 %v3981, %v3977
        %v4126 = vpack.c.b16 %v3982, %v3978
        %v4127 = vpack.c.b16 %v3983, %v3979
        %v4128 = vpack.c.b16 %v3984, %v3980
        %v4129 = vpack.c.b16 %v3989, %v3985
        %v4130 = vpack.c.b16 %v3990, %v3986
        %v4131 = vpack.c.b16 %v3991, %v3987
        %v4132 = vpack.c.b16 %v3992, %v3988
        %v4133 = vpack.c.b16 %v3997, %v3993
        %v4134 = vpack.c.b16 %v3998, %v3994
        %v4135 = vpack.c.b16 %v3999, %v3995
        %v4136 = vpack.c.b16 %v4000, %v3996
        %v4137 = vpack.c.b16 %v4005, %v4001
        %v4138 = vpack.c.b16 %v4006, %v4002
        %v4139 = vpack.c.b16 %v4007, %v4003
        %v4140 = vpack.c.b16 %v4008, %v4004
        %v4141 = vpack.c.b16 %v4013, %v4009
        %v4142 = vpack.c.b16 %v4014, %v4010
        %v4143 = vpack.c.b16 %v4015, %v4011
        %v4144 = vpack.c.b16 %v4016, %v4012
        %4273 = vmatprep.subr.bf16.mxu0 %v4046
        %4274 = vmatpush1.bf16.msra.mxu0 %v4045
        %4275 = vmatprep.subr.bf16.mxu0 %v4042
        %4276 = vmatpush1.bf16.msra.mxu0 %v4041
        %4277 = vmatprep.subr.bf16.mxu0 %v4038
        %4278 = vmatpush1.bf16.msra.mxu0 %v4037
        %4279 = vmatprep.subr.bf16.mxu0 %v4034
        %4280 = vmatpush1.bf16.msra.mxu0 %v4033
        %4281 = vmatprep.subr.bf16.mxu0 %v4030
        %4282 = vmatpush1.bf16.msra.mxu0 %v4029
        %4283 = vmatprep.subr.bf16.mxu0 %v4026
        %4284 = vmatpush1.bf16.msra.mxu0 %v4025
        %4285 = vmatprep.subr.bf16.mxu0 %v4022
        %4286 = vmatpush1.bf16.msra.mxu0 %v4021
        %4287 = vmatprep.subr.bf16.mxu0 %v4018
        %4288 = vmatpush1.bf16.msra.mxu0 %v4017
        %4289 = vmatprep.subr.bf16.mxu0 %v4078
        %4290 = vmatpush2.bf16.msra.mxu0 %v4077
        %4291 = vmatprep.subr.bf16.mxu0 %v4074
        %4292 = vmatpush2.bf16.msra.mxu0 %v4073
        %4293 = vmatprep.subr.bf16.mxu0 %v4070
        %4294 = vmatpush2.bf16.msra.mxu0 %v4069
        %4295 = vmatprep.subr.bf16.mxu0 %v4066
        %4296 = vmatpush2.bf16.msra.mxu0 %v4065
        %4297 = vmatprep.subr.bf16.mxu0 %v4062
        %4298 = vmatpush2.bf16.msra.mxu0 %v4061
        %4299 = vmatprep.subr.bf16.mxu0 %v4058
        %4300 = vmatpush2.bf16.msra.mxu0 %v4057
        %4301 = vmatprep.subr.bf16.mxu0 %v4054
        %4302 = vmatpush2.bf16.msra.mxu0 %v4053
        %4303 = vmatprep.subr.bf16.mxu0 %v4050
        %4304 = vmatpush2.bf16.msra.mxu0 %v4049
        %4305 = vmatprep.mubr.bf16.mxu0 %v1555
        %4306 = vmatmul.mubr.bf16.gmra.mxu0 %v1554
        %v4307 = vpop.f32.mrf.mxu0
        %v4308 = vadd.f32 0.0, %v4307
        %v4309 = vpop.f32.mrf.mxu0
        %v4310 = vadd.f32 0.0, %v4309
        %v4311 = vpop.f32.mrf.mxu0
        %v4312 = vpop.f32.mrf.mxu0
        %4313 = vdwg.mxu0
        %4314 = vmatprep.subr.bf16.mxu0 %v4110
        %4315 = vmatpush1.bf16.msra.mxu0 %v4109
        %4316 = vmatprep.subr.bf16.mxu0 %v4106
        %4317 = vmatpush1.bf16.msra.mxu0 %v4105
        %4318 = vmatprep.subr.bf16.mxu0 %v4102
        %4319 = vmatpush1.bf16.msra.mxu0 %v4101
        %4320 = vmatprep.subr.bf16.mxu0 %v4098
        %4321 = vmatpush1.bf16.msra.mxu0 %v4097
        %4322 = vmatprep.subr.bf16.mxu0 %v4094
        %4323 = vmatpush1.bf16.msra.mxu0 %v4093
        %4324 = vmatprep.subr.bf16.mxu0 %v4090
        %4325 = vmatpush1.bf16.msra.mxu0 %v4089
        %4326 = vmatprep.subr.bf16.mxu0 %v4086
        %4327 = vmatpush1.bf16.msra.mxu0 %v4085
        %4328 = vmatprep.subr.bf16.mxu0 %v4082
        %4329 = vmatpush1.bf16.msra.mxu0 %v4081
        %4330 = vmatprep.subr.bf16.mxu0 %v4142
        %4331 = vmatpush2.bf16.msra.mxu0 %v4141
        %4332 = vmatprep.subr.bf16.mxu0 %v4138
        %4333 = vmatpush2.bf16.msra.mxu0 %v4137
        %4334 = vmatprep.subr.bf16.mxu0 %v4134
        %4335 = vmatpush2.bf16.msra.mxu0 %v4133
        %4336 = vmatprep.subr.bf16.mxu0 %v4130
        %4337 = vmatpush2.bf16.msra.mxu0 %v4129
        %4338 = vmatprep.subr.bf16.mxu0 %v4126
        %4339 = vmatpush2.bf16.msra.mxu0 %v4125
        %4340 = vmatprep.subr.bf16.mxu0 %v4122
        %4341 = vmatpush2.bf16.msra.mxu0 %v4121
        %4342 = vmatprep.subr.bf16.mxu0 %v4118
        %4343 = vmatpush2.bf16.msra.mxu0 %v4117
        %4344 = vmatprep.subr.bf16.mxu0 %v4114
        %4345 = vmatpush2.bf16.msra.mxu0 %v4113
        %4346 = vmatprep.mubr.bf16.mxu0 %v1557
        %4347 = vmatmul.mubr.bf16.gmra.mxu0 %v1556
        %v4348 = vpop.f32.mrf.mxu0
        %v4349 = vadd.f32 %v4308, %v4348
        %v4350 = vpop.f32.mrf.mxu0
        %v4351 = vadd.f32 %v4310, %v4350
        %v4352 = vpop.f32.mrf.mxu0
        %v4353 = vpop.f32.mrf.mxu0
        %4354 = vdwg.mxu0
        %4355 = vmatprep.subr.bf16.mxu0 %v4048
        %4356 = vmatpush1.bf16.msra.mxu0 %v4047
        %4357 = vmatprep.subr.bf16.mxu0 %v4044
        %4358 = vmatpush1.bf16.msra.mxu0 %v4043
        %4359 = vmatprep.subr.bf16.mxu0 %v4040
        %4360 = vmatpush1.bf16.msra.mxu0 %v4039
        %4361 = vmatprep.subr.bf16.mxu0 %v4036
        %4362 = vmatpush1.bf16.msra.mxu0 %v4035
        %4363 = vmatprep.subr.bf16.mxu0 %v4032
        %4364 = vmatpush1.bf16.msra.mxu0 %v4031
        %4365 = vmatprep.subr.bf16.mxu0 %v4028
        %4366 = vmatpush1.bf16.msra.mxu0 %v4027
        %4367 = vmatprep.subr.bf16.mxu0 %v4024
        %4368 = vmatpush1.bf16.msra.mxu0 %v4023
        %4369 = vmatprep.subr.bf16.mxu0 %v4020
        %4370 = vmatpush1.bf16.msra.mxu0 %v4019
        %4371 = vmatprep.subr.bf16.mxu0 %v4080
        %4372 = vmatpush2.bf16.msra.mxu0 %v4079
        %4373 = vmatprep.subr.bf16.mxu0 %v4076
        %4374 = vmatpush2.bf16.msra.mxu0 %v4075
        %4375 = vmatprep.subr.bf16.mxu0 %v4072
        %4376 = vmatpush2.bf16.msra.mxu0 %v4071
        %4377 = vmatprep.subr.bf16.mxu0 %v4068
        %4378 = vmatpush2.bf16.msra.mxu0 %v4067
        %4379 = vmatprep.subr.bf16.mxu0 %v4064
        %4380 = vmatpush2.bf16.msra.mxu0 %v4063
        %4381 = vmatprep.subr.bf16.mxu0 %v4060
        %4382 = vmatpush2.bf16.msra.mxu0 %v4059
        %4383 = vmatprep.subr.bf16.mxu0 %v4056
        %4384 = vmatpush2.bf16.msra.mxu0 %v4055
        %4385 = vmatprep.subr.bf16.mxu0 %v4052
        %4386 = vmatpush2.bf16.msra.mxu0 %v4051
        %4387 = vmatprep.mubr.bf16.mxu0 %v1555
        %4388 = vmatmul.mubr.bf16.gmra.mxu0 %v1554
        %v4389 = vpop.f32.mrf.mxu0
        %v4390 = vadd.f32 0.0, %v4389
        %v4391 = vpop.f32.mrf.mxu0
        %v4392 = vadd.f32 0.0, %v4391
        %v4393 = vpop.f32.mrf.mxu0
        %v4394 = vpop.f32.mrf.mxu0
        %4395 = vdwg.mxu0
        %4396 = vmatprep.subr.bf16.mxu0 %v4112
        %4397 = vmatpush1.bf16.msra.mxu0 %v4111
        %4398 = vmatprep.subr.bf16.mxu0 %v4108
        %4399 = vmatpush1.bf16.msra.mxu0 %v4107
        %4400 = vmatprep.subr.bf16.mxu0 %v4104
        %4401 = vmatpush1.bf16.msra.mxu0 %v4103
        %4402 = vmatprep.subr.bf16.mxu0 %v4100
        %4403 = vmatpush1.bf16.msra.mxu0 %v4099
        %4404 = vmatprep.subr.bf16.mxu0 %v4096
        %4405 = vmatpush1.bf16.msra.mxu0 %v4095
        %4406 = vmatprep.subr.bf16.mxu0 %v4092
        %4407 = vmatpush1.bf16.msra.mxu0 %v4091
        %4408 = vmatprep.subr.bf16.mxu0 %v4088
        %4409 = vmatpush1.bf16.msra.mxu0 %v4087
        %4410 = vmatprep.subr.bf16.mxu0 %v4084
        %4411 = vmatpush1.bf16.msra.mxu0 %v4083
        %4412 = vmatprep.subr.bf16.mxu0 %v4144
        %4413 = vmatpush2.bf16.msra.mxu0 %v4143
        %4414 = vmatprep.subr.bf16.mxu0 %v4140
        %4415 = vmatpush2.bf16.msra.mxu0 %v4139
        %4416 = vmatprep.subr.bf16.mxu0 %v4136
        %4417 = vmatpush2.bf16.msra.mxu0 %v4135
        %4418 = vmatprep.subr.bf16.mxu0 %v4132
        %4419 = vmatpush2.bf16.msra.mxu0 %v4131
        %4420 = vmatprep.subr.bf16.mxu0 %v4128
        %4421 = vmatpush2.bf16.msra.mxu0 %v4127
        %4422 = vmatprep.subr.bf16.mxu0 %v4124
        %4423 = vmatpush2.bf16.msra.mxu0 %v4123
        %4424 = vmatprep.subr.bf16.mxu0 %v4120
        %4425 = vmatpush2.bf16.msra.mxu0 %v4119
        %4426 = vmatprep.subr.bf16.mxu0 %v4116
        %4427 = vmatpush2.bf16.msra.mxu0 %v4115
        %4428 = vmatprep.mubr.bf16.mxu0 %v1557
        %4429 = vmatmul.mubr.bf16.gmra.mxu0 %v1556
        %v4430 = vpop.f32.mrf.mxu0
        %v4431 = vadd.f32 %v4390, %v4430
        %v4432 = vpop.f32.mrf.mxu0
        %v4433 = vadd.f32 %v4392, %v4432
        %v4434 = vpop.f32.mrf.mxu0
        %v4435 = vpop.f32.mrf.mxu0
        %4436 = vdwg.mxu0
        %v4437 = vadd.f32 %v3416, %v4349
        %v4438 = vadd.f32 %v3418, %v4351
        %v4439 = vadd.f32 %v3498, %v4431
        %v4440 = vadd.f32 %v3500, %v4433
        %s4441 = scalar_lea.vmem [#allocation7], 3072
        %v4442 = vld [vmem:[%s4441] sm:$0xff]
        %v4443 = vld [vmem:[%s4441 + $0x8] sm:$0xff]
        %v4444 = vld [vmem:[%s4441 + $0x10] sm:$0xff]
        %v4445 = vld [vmem:[%s4441 + $0x18] sm:$0xff]
        %v4446 = vld [vmem:[%s4441 + $0x20] sm:$0xff]
        %v4447 = vld [vmem:[%s4441 + $0x28] sm:$0xff]
        %v4448 = vld [vmem:[%s4441 + $0x30] sm:$0xff]
        %v4449 = vld [vmem:[%s4441 + $0x38] sm:$0xff]
        %v4450 = vld [vmem:[%s4441 + $0x40] sm:$0xff]
        %v4451 = vld [vmem:[%s4441 + $0x48] sm:$0xff]
        %v4452 = vld [vmem:[%s4441 + $0x50] sm:$0xff]
        %v4453 = vld [vmem:[%s4441 + $0x58] sm:$0xff]
        %v4454 = vld [vmem:[%s4441 + $0x60] sm:$0xff]
        %v4455 = vld [vmem:[%s4441 + $0x68] sm:$0xff]
        %v4456 = vld [vmem:[%s4441 + $0x70] sm:$0xff]
        %v4457 = vld [vmem:[%s4441 + $0x78] sm:$0xff]
        %v4458 = vld [vmem:[%s4441 + $0x80] sm:$0xff]
        %v4459 = vld [vmem:[%s4441 + $0x88] sm:$0xff]
        %v4460 = vld [vmem:[%s4441 + $0x90] sm:$0xff]
        %v4461 = vld [vmem:[%s4441 + $0x98] sm:$0xff]
        %v4462 = vld [vmem:[%s4441 + $0xa0] sm:$0xff]
        %v4463 = vld [vmem:[%s4441 + $0xa8] sm:$0xff]
        %v4464 = vld [vmem:[%s4441 + $0xb0] sm:$0xff]
        %v4465 = vld [vmem:[%s4441 + $0xb8] sm:$0xff]
        %v4466 = vld [vmem:[%s4441 + $0xc0] sm:$0xff]
        %v4467 = vld [vmem:[%s4441 + $0xc8] sm:$0xff]
        %v4468 = vld [vmem:[%s4441 + $0xd0] sm:$0xff]
        %v4469 = vld [vmem:[%s4441 + $0xd8] sm:$0xff]
        %v4470 = vld [vmem:[%s4441 + $0xe0] sm:$0xff]
        %v4471 = vld [vmem:[%s4441 + $0xe8] sm:$0xff]
        %v4472 = vld [vmem:[%s4441 + $0xf0] sm:$0xff]
        %v4473 = vld [vmem:[%s4441 + $0xf8] sm:$0xff]
        %v4474 = vld [vmem:[%s4441 + $0x100] sm:$0xff]
        %v4475 = vld [vmem:[%s4441 + $0x108] sm:$0xff]
        %v4476 = vld [vmem:[%s4441 + $0x110] sm:$0xff]
        %v4477 = vld [vmem:[%s4441 + $0x118] sm:$0xff]
        %v4478 = vld [vmem:[%s4441 + $0x120] sm:$0xff]
        %v4479 = vld [vmem:[%s4441 + $0x128] sm:$0xff]
        %v4480 = vld [vmem:[%s4441 + $0x130] sm:$0xff]
        %v4481 = vld [vmem:[%s4441 + $0x138] sm:$0xff]
        %v4482 = vld [vmem:[%s4441 + $0x140] sm:$0xff]
        %v4483 = vld [vmem:[%s4441 + $0x148] sm:$0xff]
        %v4484 = vld [vmem:[%s4441 + $0x150] sm:$0xff]
        %v4485 = vld [vmem:[%s4441 + $0x158] sm:$0xff]
        %v4486 = vld [vmem:[%s4441 + $0x160] sm:$0xff]
        %v4487 = vld [vmem:[%s4441 + $0x168] sm:$0xff]
        %v4488 = vld [vmem:[%s4441 + $0x170] sm:$0xff]
        %v4489 = vld [vmem:[%s4441 + $0x178] sm:$0xff]
        %v4490 = vld [vmem:[%s4441 + $0x180] sm:$0xff]
        %v4491 = vld [vmem:[%s4441 + $0x188] sm:$0xff]
        %v4492 = vld [vmem:[%s4441 + $0x190] sm:$0xff]
        %v4493 = vld [vmem:[%s4441 + $0x198] sm:$0xff]
        %v4494 = vld [vmem:[%s4441 + $0x1a0] sm:$0xff]
        %v4495 = vld [vmem:[%s4441 + $0x1a8] sm:$0xff]
        %v4496 = vld [vmem:[%s4441 + $0x1b0] sm:$0xff]
        %v4497 = vld [vmem:[%s4441 + $0x1b8] sm:$0xff]
        %v4498 = vld [vmem:[%s4441 + $0x1c0] sm:$0xff]
        %v4499 = vld [vmem:[%s4441 + $0x1c8] sm:$0xff]
        %v4500 = vld [vmem:[%s4441 + $0x1d0] sm:$0xff]
        %v4501 = vld [vmem:[%s4441 + $0x1d8] sm:$0xff]
        %v4502 = vld [vmem:[%s4441 + $0x1e0] sm:$0xff]
        %v4503 = vld [vmem:[%s4441 + $0x1e8] sm:$0xff]
        %v4504 = vld [vmem:[%s4441 + $0x1f0] sm:$0xff]
        %v4505 = vld [vmem:[%s4441 + $0x1f8] sm:$0xff]
        %v4506 = vld [vmem:[%s4441 + $0x200] sm:$0xff]
        %v4507 = vld [vmem:[%s4441 + $0x208] sm:$0xff]
        %v4508 = vld [vmem:[%s4441 + $0x210] sm:$0xff]
        %v4509 = vld [vmem:[%s4441 + $0x218] sm:$0xff]
        %v4510 = vld [vmem:[%s4441 + $0x220] sm:$0xff]
        %v4511 = vld [vmem:[%s4441 + $0x228] sm:$0xff]
        %v4512 = vld [vmem:[%s4441 + $0x230] sm:$0xff]
        %v4513 = vld [vmem:[%s4441 + $0x238] sm:$0xff]
        %v4514 = vld [vmem:[%s4441 + $0x240] sm:$0xff]
        %v4515 = vld [vmem:[%s4441 + $0x248] sm:$0xff]
        %v4516 = vld [vmem:[%s4441 + $0x250] sm:$0xff]
        %v4517 = vld [vmem:[%s4441 + $0x258] sm:$0xff]
        %v4518 = vld [vmem:[%s4441 + $0x260] sm:$0xff]
        %v4519 = vld [vmem:[%s4441 + $0x268] sm:$0xff]
        %v4520 = vld [vmem:[%s4441 + $0x270] sm:$0xff]
        %v4521 = vld [vmem:[%s4441 + $0x278] sm:$0xff]
        %v4522 = vld [vmem:[%s4441 + $0x280] sm:$0xff]
        %v4523 = vld [vmem:[%s4441 + $0x288] sm:$0xff]
        %v4524 = vld [vmem:[%s4441 + $0x290] sm:$0xff]
        %v4525 = vld [vmem:[%s4441 + $0x298] sm:$0xff]
        %v4526 = vld [vmem:[%s4441 + $0x2a0] sm:$0xff]
        %v4527 = vld [vmem:[%s4441 + $0x2a8] sm:$0xff]
        %v4528 = vld [vmem:[%s4441 + $0x2b0] sm:$0xff]
        %v4529 = vld [vmem:[%s4441 + $0x2b8] sm:$0xff]
        %v4530 = vld [vmem:[%s4441 + $0x2c0] sm:$0xff]
        %v4531 = vld [vmem:[%s4441 + $0x2c8] sm:$0xff]
        %v4532 = vld [vmem:[%s4441 + $0x2d0] sm:$0xff]
        %v4533 = vld [vmem:[%s4441 + $0x2d8] sm:$0xff]
        %v4534 = vld [vmem:[%s4441 + $0x2e0] sm:$0xff]
        %v4535 = vld [vmem:[%s4441 + $0x2e8] sm:$0xff]
        %v4536 = vld [vmem:[%s4441 + $0x2f0] sm:$0xff]
        %v4537 = vld [vmem:[%s4441 + $0x2f8] sm:$0xff]
        %v4538 = vld [vmem:[%s4441 + $0x300] sm:$0xff]
        %v4539 = vld [vmem:[%s4441 + $0x308] sm:$0xff]
        %v4540 = vld [vmem:[%s4441 + $0x310] sm:$0xff]
        %v4541 = vld [vmem:[%s4441 + $0x318] sm:$0xff]
        %v4542 = vld [vmem:[%s4441 + $0x320] sm:$0xff]
        %v4543 = vld [vmem:[%s4441 + $0x328] sm:$0xff]
        %v4544 = vld [vmem:[%s4441 + $0x330] sm:$0xff]
        %v4545 = vld [vmem:[%s4441 + $0x338] sm:$0xff]
        %v4546 = vld [vmem:[%s4441 + $0x340] sm:$0xff]
        %v4547 = vld [vmem:[%s4441 + $0x348] sm:$0xff]
        %v4548 = vld [vmem:[%s4441 + $0x350] sm:$0xff]
        %v4549 = vld [vmem:[%s4441 + $0x358] sm:$0xff]
        %v4550 = vld [vmem:[%s4441 + $0x360] sm:$0xff]
        %v4551 = vld [vmem:[%s4441 + $0x368] sm:$0xff]
        %v4552 = vld [vmem:[%s4441 + $0x370] sm:$0xff]
        %v4553 = vld [vmem:[%s4441 + $0x378] sm:$0xff]
        %v4554 = vld [vmem:[%s4441 + $0x380] sm:$0xff]
        %v4555 = vld [vmem:[%s4441 + $0x388] sm:$0xff]
        %v4556 = vld [vmem:[%s4441 + $0x390] sm:$0xff]
        %v4557 = vld [vmem:[%s4441 + $0x398] sm:$0xff]
        %v4558 = vld [vmem:[%s4441 + $0x3a0] sm:$0xff]
        %v4559 = vld [vmem:[%s4441 + $0x3a8] sm:$0xff]
        %v4560 = vld [vmem:[%s4441 + $0x3b0] sm:$0xff]
        %v4561 = vld [vmem:[%s4441 + $0x3b8] sm:$0xff]
        %v4562 = vld [vmem:[%s4441 + $0x3c0] sm:$0xff]
        %v4563 = vld [vmem:[%s4441 + $0x3c8] sm:$0xff]
        %v4564 = vld [vmem:[%s4441 + $0x3d0] sm:$0xff]
        %v4565 = vld [vmem:[%s4441 + $0x3d8] sm:$0xff]
        %v4566 = vld [vmem:[%s4441 + $0x3e0] sm:$0xff]
        %v4567 = vld [vmem:[%s4441 + $0x3e8] sm:$0xff]
        %v4568 = vld [vmem:[%s4441 + $0x3f0] sm:$0xff]
        %v4569 = vld [vmem:[%s4441 + $0x3f8] sm:$0xff]
        %s4570 = scalar_lea.vmem [#allocation7], 4096
        %v4571 = vld [vmem:[%s4570] sm:$0xff]
        %v4572 = vld [vmem:[%s4570 + $0x8] sm:$0xff]
        %v4573 = vld [vmem:[%s4570 + $0x10] sm:$0xff]
        %v4574 = vld [vmem:[%s4570 + $0x18] sm:$0xff]
        %v4575 = vld [vmem:[%s4570 + $0x20] sm:$0xff]
        %v4576 = vld [vmem:[%s4570 + $0x28] sm:$0xff]
        %v4577 = vld [vmem:[%s4570 + $0x30] sm:$0xff]
        %v4578 = vld [vmem:[%s4570 + $0x38] sm:$0xff]
        %v4579 = vld [vmem:[%s4570 + $0x40] sm:$0xff]
        %v4580 = vld [vmem:[%s4570 + $0x48] sm:$0xff]
        %v4581 = vld [vmem:[%s4570 + $0x50] sm:$0xff]
        %v4582 = vld [vmem:[%s4570 + $0x58] sm:$0xff]
        %v4583 = vld [vmem:[%s4570 + $0x60] sm:$0xff]
        %v4584 = vld [vmem:[%s4570 + $0x68] sm:$0xff]
        %v4585 = vld [vmem:[%s4570 + $0x70] sm:$0xff]
        %v4586 = vld [vmem:[%s4570 + $0x78] sm:$0xff]
        %v4587 = vld [vmem:[%s4570 + $0x80] sm:$0xff]
        %v4588 = vld [vmem:[%s4570 + $0x88] sm:$0xff]
        %v4589 = vld [vmem:[%s4570 + $0x90] sm:$0xff]
        %v4590 = vld [vmem:[%s4570 + $0x98] sm:$0xff]
        %v4591 = vld [vmem:[%s4570 + $0xa0] sm:$0xff]
        %v4592 = vld [vmem:[%s4570 + $0xa8] sm:$0xff]
        %v4593 = vld [vmem:[%s4570 + $0xb0] sm:$0xff]
        %v4594 = vld [vmem:[%s4570 + $0xb8] sm:$0xff]
        %v4595 = vld [vmem:[%s4570 + $0xc0] sm:$0xff]
        %v4596 = vld [vmem:[%s4570 + $0xc8] sm:$0xff]
        %v4597 = vld [vmem:[%s4570 + $0xd0] sm:$0xff]
        %v4598 = vld [vmem:[%s4570 + $0xd8] sm:$0xff]
        %v4599 = vld [vmem:[%s4570 + $0xe0] sm:$0xff]
        %v4600 = vld [vmem:[%s4570 + $0xe8] sm:$0xff]
        %v4601 = vld [vmem:[%s4570 + $0xf0] sm:$0xff]
        %v4602 = vld [vmem:[%s4570 + $0xf8] sm:$0xff]
        %v4603 = vld [vmem:[%s4570 + $0x100] sm:$0xff]
        %v4604 = vld [vmem:[%s4570 + $0x108] sm:$0xff]
        %v4605 = vld [vmem:[%s4570 + $0x110] sm:$0xff]
        %v4606 = vld [vmem:[%s4570 + $0x118] sm:$0xff]
        %v4607 = vld [vmem:[%s4570 + $0x120] sm:$0xff]
        %v4608 = vld [vmem:[%s4570 + $0x128] sm:$0xff]
        %v4609 = vld [vmem:[%s4570 + $0x130] sm:$0xff]
        %v4610 = vld [vmem:[%s4570 + $0x138] sm:$0xff]
        %v4611 = vld [vmem:[%s4570 + $0x140] sm:$0xff]
        %v4612 = vld [vmem:[%s4570 + $0x148] sm:$0xff]
        %v4613 = vld [vmem:[%s4570 + $0x150] sm:$0xff]
        %v4614 = vld [vmem:[%s4570 + $0x158] sm:$0xff]
        %v4615 = vld [vmem:[%s4570 + $0x160] sm:$0xff]
        %v4616 = vld [vmem:[%s4570 + $0x168] sm:$0xff]
        %v4617 = vld [vmem:[%s4570 + $0x170] sm:$0xff]
        %v4618 = vld [vmem:[%s4570 + $0x178] sm:$0xff]
        %v4619 = vld [vmem:[%s4570 + $0x180] sm:$0xff]
        %v4620 = vld [vmem:[%s4570 + $0x188] sm:$0xff]
        %v4621 = vld [vmem:[%s4570 + $0x190] sm:$0xff]
        %v4622 = vld [vmem:[%s4570 + $0x198] sm:$0xff]
        %v4623 = vld [vmem:[%s4570 + $0x1a0] sm:$0xff]
        %v4624 = vld [vmem:[%s4570 + $0x1a8] sm:$0xff]
        %v4625 = vld [vmem:[%s4570 + $0x1b0] sm:$0xff]
        %v4626 = vld [vmem:[%s4570 + $0x1b8] sm:$0xff]
        %v4627 = vld [vmem:[%s4570 + $0x1c0] sm:$0xff]
        %v4628 = vld [vmem:[%s4570 + $0x1c8] sm:$0xff]
        %v4629 = vld [vmem:[%s4570 + $0x1d0] sm:$0xff]
        %v4630 = vld [vmem:[%s4570 + $0x1d8] sm:$0xff]
        %v4631 = vld [vmem:[%s4570 + $0x1e0] sm:$0xff]
        %v4632 = vld [vmem:[%s4570 + $0x1e8] sm:$0xff]
        %v4633 = vld [vmem:[%s4570 + $0x1f0] sm:$0xff]
        %v4634 = vld [vmem:[%s4570 + $0x1f8] sm:$0xff]
        %v4635 = vld [vmem:[%s4570 + $0x200] sm:$0xff]
        %v4636 = vld [vmem:[%s4570 + $0x208] sm:$0xff]
        %v4637 = vld [vmem:[%s4570 + $0x210] sm:$0xff]
        %v4638 = vld [vmem:[%s4570 + $0x218] sm:$0xff]
        %v4639 = vld [vmem:[%s4570 + $0x220] sm:$0xff]
        %v4640 = vld [vmem:[%s4570 + $0x228] sm:$0xff]
        %v4641 = vld [vmem:[%s4570 + $0x230] sm:$0xff]
        %v4642 = vld [vmem:[%s4570 + $0x238] sm:$0xff]
        %v4643 = vld [vmem:[%s4570 + $0x240] sm:$0xff]
        %v4644 = vld [vmem:[%s4570 + $0x248] sm:$0xff]
        %v4645 = vld [vmem:[%s4570 + $0x250] sm:$0xff]
        %v4646 = vld [vmem:[%s4570 + $0x258] sm:$0xff]
        %v4647 = vld [vmem:[%s4570 + $0x260] sm:$0xff]
        %v4648 = vld [vmem:[%s4570 + $0x268] sm:$0xff]
        %v4649 = vld [vmem:[%s4570 + $0x270] sm:$0xff]
        %v4650 = vld [vmem:[%s4570 + $0x278] sm:$0xff]
        %v4651 = vld [vmem:[%s4570 + $0x280] sm:$0xff]
        %v4652 = vld [vmem:[%s4570 + $0x288] sm:$0xff]
        %v4653 = vld [vmem:[%s4570 + $0x290] sm:$0xff]
        %v4654 = vld [vmem:[%s4570 + $0x298] sm:$0xff]
        %v4655 = vld [vmem:[%s4570 + $0x2a0] sm:$0xff]
        %v4656 = vld [vmem:[%s4570 + $0x2a8] sm:$0xff]
        %v4657 = vld [vmem:[%s4570 + $0x2b0] sm:$0xff]
        %v4658 = vld [vmem:[%s4570 + $0x2b8] sm:$0xff]
        %v4659 = vld [vmem:[%s4570 + $0x2c0] sm:$0xff]
        %v4660 = vld [vmem:[%s4570 + $0x2c8] sm:$0xff]
        %v4661 = vld [vmem:[%s4570 + $0x2d0] sm:$0xff]
        %v4662 = vld [vmem:[%s4570 + $0x2d8] sm:$0xff]
        %v4663 = vld [vmem:[%s4570 + $0x2e0] sm:$0xff]
        %v4664 = vld [vmem:[%s4570 + $0x2e8] sm:$0xff]
        %v4665 = vld [vmem:[%s4570 + $0x2f0] sm:$0xff]
        %v4666 = vld [vmem:[%s4570 + $0x2f8] sm:$0xff]
        %v4667 = vld [vmem:[%s4570 + $0x300] sm:$0xff]
        %v4668 = vld [vmem:[%s4570 + $0x308] sm:$0xff]
        %v4669 = vld [vmem:[%s4570 + $0x310] sm:$0xff]
        %v4670 = vld [vmem:[%s4570 + $0x318] sm:$0xff]
        %v4671 = vld [vmem:[%s4570 + $0x320] sm:$0xff]
        %v4672 = vld [vmem:[%s4570 + $0x328] sm:$0xff]
        %v4673 = vld [vmem:[%s4570 + $0x330] sm:$0xff]
        %v4674 = vld [vmem:[%s4570 + $0x338] sm:$0xff]
        %v4675 = vld [vmem:[%s4570 + $0x340] sm:$0xff]
        %v4676 = vld [vmem:[%s4570 + $0x348] sm:$0xff]
        %v4677 = vld [vmem:[%s4570 + $0x350] sm:$0xff]
        %v4678 = vld [vmem:[%s4570 + $0x358] sm:$0xff]
        %v4679 = vld [vmem:[%s4570 + $0x360] sm:$0xff]
        %v4680 = vld [vmem:[%s4570 + $0x368] sm:$0xff]
        %v4681 = vld [vmem:[%s4570 + $0x370] sm:$0xff]
        %v4682 = vld [vmem:[%s4570 + $0x378] sm:$0xff]
        %v4683 = vld [vmem:[%s4570 + $0x380] sm:$0xff]
        %v4684 = vld [vmem:[%s4570 + $0x388] sm:$0xff]
        %v4685 = vld [vmem:[%s4570 + $0x390] sm:$0xff]
        %v4686 = vld [vmem:[%s4570 + $0x398] sm:$0xff]
        %v4687 = vld [vmem:[%s4570 + $0x3a0] sm:$0xff]
        %v4688 = vld [vmem:[%s4570 + $0x3a8] sm:$0xff]
        %v4689 = vld [vmem:[%s4570 + $0x3b0] sm:$0xff]
        %v4690 = vld [vmem:[%s4570 + $0x3b8] sm:$0xff]
        %v4691 = vld [vmem:[%s4570 + $0x3c0] sm:$0xff]
        %v4692 = vld [vmem:[%s4570 + $0x3c8] sm:$0xff]
        %v4693 = vld [vmem:[%s4570 + $0x3d0] sm:$0xff]
        %v4694 = vld [vmem:[%s4570 + $0x3d8] sm:$0xff]
        %v4695 = vld [vmem:[%s4570 + $0x3e0] sm:$0xff]
        %v4696 = vld [vmem:[%s4570 + $0x3e8] sm:$0xff]
        %v4697 = vld [vmem:[%s4570 + $0x3f0] sm:$0xff]
        %v4698 = vld [vmem:[%s4570 + $0x3f8] sm:$0xff]
        %v4827 = vunpack.c.l.b16 %v4571
        %v4828 = vunpack.c.h.b16 %v4571
        %v4829 = vunpack.c.l.b16 %v4572
        %v4830 = vunpack.c.h.b16 %v4572
        %v4831 = vunpack.c.l.b16 %v4573
        %v4832 = vunpack.c.h.b16 %v4573
        %v4833 = vunpack.c.l.b16 %v4574
        %v4834 = vunpack.c.h.b16 %v4574
        %v4835 = vunpack.c.l.b16 %v4575
        %v4836 = vunpack.c.h.b16 %v4575
        %v4837 = vunpack.c.l.b16 %v4576
        %v4838 = vunpack.c.h.b16 %v4576
        %v4839 = vunpack.c.l.b16 %v4577
        %v4840 = vunpack.c.h.b16 %v4577
        %v4841 = vunpack.c.l.b16 %v4578
        %v4842 = vunpack.c.h.b16 %v4578
        %v4843 = vunpack.c.l.b16 %v4579
        %v4844 = vunpack.c.h.b16 %v4579
        %v4845 = vunpack.c.l.b16 %v4580
        %v4846 = vunpack.c.h.b16 %v4580
        %v4847 = vunpack.c.l.b16 %v4581
        %v4848 = vunpack.c.h.b16 %v4581
        %v4849 = vunpack.c.l.b16 %v4582
        %v4850 = vunpack.c.h.b16 %v4582
        %v4851 = vunpack.c.l.b16 %v4583
        %v4852 = vunpack.c.h.b16 %v4583
        %v4853 = vunpack.c.l.b16 %v4584
        %v4854 = vunpack.c.h.b16 %v4584
        %v4855 = vunpack.c.l.b16 %v4585
        %v4856 = vunpack.c.h.b16 %v4585
        %v4857 = vunpack.c.l.b16 %v4586
        %v4858 = vunpack.c.h.b16 %v4586
        %v4859 = vunpack.c.l.b16 %v4587
        %v4860 = vunpack.c.h.b16 %v4587
        %v4861 = vunpack.c.l.b16 %v4588
        %v4862 = vunpack.c.h.b16 %v4588
        %v4863 = vunpack.c.l.b16 %v4589
        %v4864 = vunpack.c.h.b16 %v4589
        %v4865 = vunpack.c.l.b16 %v4590
        %v4866 = vunpack.c.h.b16 %v4590
        %v4867 = vunpack.c.l.b16 %v4591
        %v4868 = vunpack.c.h.b16 %v4591
        %v4869 = vunpack.c.l.b16 %v4592
        %v4870 = vunpack.c.h.b16 %v4592
        %v4871 = vunpack.c.l.b16 %v4593
        %v4872 = vunpack.c.h.b16 %v4593
        %v4873 = vunpack.c.l.b16 %v4594
        %v4874 = vunpack.c.h.b16 %v4594
        %v4875 = vunpack.c.l.b16 %v4595
        %v4876 = vunpack.c.h.b16 %v4595
        %v4877 = vunpack.c.l.b16 %v4596
        %v4878 = vunpack.c.h.b16 %v4596
        %v4879 = vunpack.c.l.b16 %v4597
        %v4880 = vunpack.c.h.b16 %v4597
        %v4881 = vunpack.c.l.b16 %v4598
        %v4882 = vunpack.c.h.b16 %v4598
        %v4883 = vunpack.c.l.b16 %v4599
        %v4884 = vunpack.c.h.b16 %v4599
        %v4885 = vunpack.c.l.b16 %v4600
        %v4886 = vunpack.c.h.b16 %v4600
        %v4887 = vunpack.c.l.b16 %v4601
        %v4888 = vunpack.c.h.b16 %v4601
        %v4889 = vunpack.c.l.b16 %v4602
        %v4890 = vunpack.c.h.b16 %v4602
        %v4891 = vunpack.c.l.b16 %v4603
        %v4892 = vunpack.c.h.b16 %v4603
        %v4893 = vunpack.c.l.b16 %v4604
        %v4894 = vunpack.c.h.b16 %v4604
        %v4895 = vunpack.c.l.b16 %v4605
        %v4896 = vunpack.c.h.b16 %v4605
        %v4897 = vunpack.c.l.b16 %v4606
        %v4898 = vunpack.c.h.b16 %v4606
        %v4899 = vunpack.c.l.b16 %v4607
        %v4900 = vunpack.c.h.b16 %v4607
        %v4901 = vunpack.c.l.b16 %v4608
        %v4902 = vunpack.c.h.b16 %v4608
        %v4903 = vunpack.c.l.b16 %v4609
        %v4904 = vunpack.c.h.b16 %v4609
        %v4905 = vunpack.c.l.b16 %v4610
        %v4906 = vunpack.c.h.b16 %v4610
        %v4907 = vunpack.c.l.b16 %v4611
        %v4908 = vunpack.c.h.b16 %v4611
        %v4909 = vunpack.c.l.b16 %v4612
        %v4910 = vunpack.c.h.b16 %v4612
        %v4911 = vunpack.c.l.b16 %v4613
        %v4912 = vunpack.c.h.b16 %v4613
        %v4913 = vunpack.c.l.b16 %v4614
        %v4914 = vunpack.c.h.b16 %v4614
        %v4915 = vunpack.c.l.b16 %v4615
        %v4916 = vunpack.c.h.b16 %v4615
        %v4917 = vunpack.c.l.b16 %v4616
        %v4918 = vunpack.c.h.b16 %v4616
        %v4919 = vunpack.c.l.b16 %v4617
        %v4920 = vunpack.c.h.b16 %v4617
        %v4921 = vunpack.c.l.b16 %v4618
        %v4922 = vunpack.c.h.b16 %v4618
        %v4923 = vunpack.c.l.b16 %v4619
        %v4924 = vunpack.c.h.b16 %v4619
        %v4925 = vunpack.c.l.b16 %v4620
        %v4926 = vunpack.c.h.b16 %v4620
        %v4927 = vunpack.c.l.b16 %v4621
        %v4928 = vunpack.c.h.b16 %v4621
        %v4929 = vunpack.c.l.b16 %v4622
        %v4930 = vunpack.c.h.b16 %v4622
        %v4931 = vunpack.c.l.b16 %v4623
        %v4932 = vunpack.c.h.b16 %v4623
        %v4933 = vunpack.c.l.b16 %v4624
        %v4934 = vunpack.c.h.b16 %v4624
        %v4935 = vunpack.c.l.b16 %v4625
        %v4936 = vunpack.c.h.b16 %v4625
        %v4937 = vunpack.c.l.b16 %v4626
        %v4938 = vunpack.c.h.b16 %v4626
        %v4939 = vunpack.c.l.b16 %v4627
        %v4940 = vunpack.c.h.b16 %v4627
        %v4941 = vunpack.c.l.b16 %v4628
        %v4942 = vunpack.c.h.b16 %v4628
        %v4943 = vunpack.c.l.b16 %v4629
        %v4944 = vunpack.c.h.b16 %v4629
        %v4945 = vunpack.c.l.b16 %v4630
        %v4946 = vunpack.c.h.b16 %v4630
        %v4947 = vunpack.c.l.b16 %v4631
        %v4948 = vunpack.c.h.b16 %v4631
        %v4949 = vunpack.c.l.b16 %v4632
        %v4950 = vunpack.c.h.b16 %v4632
        %v4951 = vunpack.c.l.b16 %v4633
        %v4952 = vunpack.c.h.b16 %v4633
        %v4953 = vunpack.c.l.b16 %v4634
        %v4954 = vunpack.c.h.b16 %v4634
        %v4955 = vunpack.c.l.b16 %v4635
        %v4956 = vunpack.c.h.b16 %v4635
        %v4957 = vunpack.c.l.b16 %v4636
        %v4958 = vunpack.c.h.b16 %v4636
        %v4959 = vunpack.c.l.b16 %v4637
        %v4960 = vunpack.c.h.b16 %v4637
        %v4961 = vunpack.c.l.b16 %v4638
        %v4962 = vunpack.c.h.b16 %v4638
        %v4963 = vunpack.c.l.b16 %v4639
        %v4964 = vunpack.c.h.b16 %v4639
        %v4965 = vunpack.c.l.b16 %v4640
        %v4966 = vunpack.c.h.b16 %v4640
        %v4967 = vunpack.c.l.b16 %v4641
        %v4968 = vunpack.c.h.b16 %v4641
        %v4969 = vunpack.c.l.b16 %v4642
        %v4970 = vunpack.c.h.b16 %v4642
        %v4971 = vunpack.c.l.b16 %v4643
        %v4972 = vunpack.c.h.b16 %v4643
        %v4973 = vunpack.c.l.b16 %v4644
        %v4974 = vunpack.c.h.b16 %v4644
        %v4975 = vunpack.c.l.b16 %v4645
        %v4976 = vunpack.c.h.b16 %v4645
        %v4977 = vunpack.c.l.b16 %v4646
        %v4978 = vunpack.c.h.b16 %v4646
        %v4979 = vunpack.c.l.b16 %v4647
        %v4980 = vunpack.c.h.b16 %v4647
        %v4981 = vunpack.c.l.b16 %v4648
        %v4982 = vunpack.c.h.b16 %v4648
        %v4983 = vunpack.c.l.b16 %v4649
        %v4984 = vunpack.c.h.b16 %v4649
        %v4985 = vunpack.c.l.b16 %v4650
        %v4986 = vunpack.c.h.b16 %v4650
        %v4987 = vunpack.c.l.b16 %v4651
        %v4988 = vunpack.c.h.b16 %v4651
        %v4989 = vunpack.c.l.b16 %v4652
        %v4990 = vunpack.c.h.b16 %v4652
        %v4991 = vunpack.c.l.b16 %v4653
        %v4992 = vunpack.c.h.b16 %v4653
        %v4993 = vunpack.c.l.b16 %v4654
        %v4994 = vunpack.c.h.b16 %v4654
        %v4995 = vunpack.c.l.b16 %v4655
        %v4996 = vunpack.c.h.b16 %v4655
        %v4997 = vunpack.c.l.b16 %v4656
        %v4998 = vunpack.c.h.b16 %v4656
        %v4999 = vunpack.c.l.b16 %v4657
        %v5000 = vunpack.c.h.b16 %v4657
        %v5001 = vunpack.c.l.b16 %v4658
        %v5002 = vunpack.c.h.b16 %v4658
        %v5003 = vunpack.c.l.b16 %v4659
        %v5004 = vunpack.c.h.b16 %v4659
        %v5005 = vunpack.c.l.b16 %v4660
        %v5006 = vunpack.c.h.b16 %v4660
        %v5007 = vunpack.c.l.b16 %v4661
        %v5008 = vunpack.c.h.b16 %v4661
        %v5009 = vunpack.c.l.b16 %v4662
        %v5010 = vunpack.c.h.b16 %v4662
        %v5011 = vunpack.c.l.b16 %v4663
        %v5012 = vunpack.c.h.b16 %v4663
        %v5013 = vunpack.c.l.b16 %v4664
        %v5014 = vunpack.c.h.b16 %v4664
        %v5015 = vunpack.c.l.b16 %v4665
        %v5016 = vunpack.c.h.b16 %v4665
        %v5017 = vunpack.c.l.b16 %v4666
        %v5018 = vunpack.c.h.b16 %v4666
        %v5019 = vunpack.c.l.b16 %v4667
        %v5020 = vunpack.c.h.b16 %v4667
        %v5021 = vunpack.c.l.b16 %v4668
        %v5022 = vunpack.c.h.b16 %v4668
        %v5023 = vunpack.c.l.b16 %v4669
        %v5024 = vunpack.c.h.b16 %v4669
        %v5025 = vunpack.c.l.b16 %v4670
        %v5026 = vunpack.c.h.b16 %v4670
        %v5027 = vunpack.c.l.b16 %v4671
        %v5028 = vunpack.c.h.b16 %v4671
        %v5029 = vunpack.c.l.b16 %v4672
        %v5030 = vunpack.c.h.b16 %v4672
        %v5031 = vunpack.c.l.b16 %v4673
        %v5032 = vunpack.c.h.b16 %v4673
        %v5033 = vunpack.c.l.b16 %v4674
        %v5034 = vunpack.c.h.b16 %v4674
        %v5035 = vunpack.c.l.b16 %v4675
        %v5036 = vunpack.c.h.b16 %v4675
        %v5037 = vunpack.c.l.b16 %v4676
        %v5038 = vunpack.c.h.b16 %v4676
        %v5039 = vunpack.c.l.b16 %v4677
        %v5040 = vunpack.c.h.b16 %v4677
        %v5041 = vunpack.c.l.b16 %v4678
        %v5042 = vunpack.c.h.b16 %v4678
        %v5043 = vunpack.c.l.b16 %v4679
        %v5044 = vunpack.c.h.b16 %v4679
        %v5045 = vunpack.c.l.b16 %v4680
        %v5046 = vunpack.c.h.b16 %v4680
        %v5047 = vunpack.c.l.b16 %v4681
        %v5048 = vunpack.c.h.b16 %v4681
        %v5049 = vunpack.c.l.b16 %v4682
        %v5050 = vunpack.c.h.b16 %v4682
        %v5051 = vunpack.c.l.b16 %v4683
        %v5052 = vunpack.c.h.b16 %v4683
        %v5053 = vunpack.c.l.b16 %v4684
        %v5054 = vunpack.c.h.b16 %v4684
        %v5055 = vunpack.c.l.b16 %v4685
        %v5056 = vunpack.c.h.b16 %v4685
        %v5057 = vunpack.c.l.b16 %v4686
        %v5058 = vunpack.c.h.b16 %v4686
        %v5059 = vunpack.c.l.b16 %v4687
        %v5060 = vunpack.c.h.b16 %v4687
        %v5061 = vunpack.c.l.b16 %v4688
        %v5062 = vunpack.c.h.b16 %v4688
        %v5063 = vunpack.c.l.b16 %v4689
        %v5064 = vunpack.c.h.b16 %v4689
        %v5065 = vunpack.c.l.b16 %v4690
        %v5066 = vunpack.c.h.b16 %v4690
        %v5067 = vunpack.c.l.b16 %v4691
        %v5068 = vunpack.c.h.b16 %v4691
        %v5069 = vunpack.c.l.b16 %v4692
        %v5070 = vunpack.c.h.b16 %v4692
        %v5071 = vunpack.c.l.b16 %v4693
        %v5072 = vunpack.c.h.b16 %v4693
        %v5073 = vunpack.c.l.b16 %v4694
        %v5074 = vunpack.c.h.b16 %v4694
        %v5075 = vunpack.c.l.b16 %v4695
        %v5076 = vunpack.c.h.b16 %v4695
        %v5077 = vunpack.c.l.b16 %v4696
        %v5078 = vunpack.c.h.b16 %v4696
        %v5079 = vunpack.c.l.b16 %v4697
        %v5080 = vunpack.c.h.b16 %v4697
        %v5081 = vunpack.c.l.b16 %v4698
        %v5082 = vunpack.c.h.b16 %v4698
        %v5083 = vpack.c.b16 %v4831, %v4827
        %v5084 = vpack.c.b16 %v4832, %v4828
        %v5085 = vpack.c.b16 %v4833, %v4829
        %v5086 = vpack.c.b16 %v4834, %v4830
        %v5087 = vpack.c.b16 %v4839, %v4835
        %v5088 = vpack.c.b16 %v4840, %v4836
        %v5089 = vpack.c.b16 %v4841, %v4837
        %v5090 = vpack.c.b16 %v4842, %v4838
        %v5091 = vpack.c.b16 %v4847, %v4843
        %v5092 = vpack.c.b16 %v4848, %v4844
        %v5093 = vpack.c.b16 %v4849, %v4845
        %v5094 = vpack.c.b16 %v4850, %v4846
        %v5095 = vpack.c.b16 %v4855, %v4851
        %v5096 = vpack.c.b16 %v4856, %v4852
        %v5097 = vpack.c.b16 %v4857, %v4853
        %v5098 = vpack.c.b16 %v4858, %v4854
        %v5099 = vpack.c.b16 %v4863, %v4859
        %v5100 = vpack.c.b16 %v4864, %v4860
        %v5101 = vpack.c.b16 %v4865, %v4861
        %v5102 = vpack.c.b16 %v4866, %v4862
        %v5103 = vpack.c.b16 %v4871, %v4867
        %v5104 = vpack.c.b16 %v4872, %v4868
        %v5105 = vpack.c.b16 %v4873, %v4869
        %v5106 = vpack.c.b16 %v4874, %v4870
        %v5107 = vpack.c.b16 %v4879, %v4875
        %v5108 = vpack.c.b16 %v4880, %v4876
        %v5109 = vpack.c.b16 %v4881, %v4877
        %v5110 = vpack.c.b16 %v4882, %v4878
        %v5111 = vpack.c.b16 %v4887, %v4883
        %v5112 = vpack.c.b16 %v4888, %v4884
        %v5113 = vpack.c.b16 %v4889, %v4885
        %v5114 = vpack.c.b16 %v4890, %v4886
        %v5115 = vpack.c.b16 %v4895, %v4891
        %v5116 = vpack.c.b16 %v4896, %v4892
        %v5117 = vpack.c.b16 %v4897, %v4893
        %v5118 = vpack.c.b16 %v4898, %v4894
        %v5119 = vpack.c.b16 %v4903, %v4899
        %v5120 = vpack.c.b16 %v4904, %v4900
        %v5121 = vpack.c.b16 %v4905, %v4901
        %v5122 = vpack.c.b16 %v4906, %v4902
        %v5123 = vpack.c.b16 %v4911, %v4907
        %v5124 = vpack.c.b16 %v4912, %v4908
        %v5125 = vpack.c.b16 %v4913, %v4909
        %v5126 = vpack.c.b16 %v4914, %v4910
        %v5127 = vpack.c.b16 %v4919, %v4915
        %v5128 = vpack.c.b16 %v4920, %v4916
        %v5129 = vpack.c.b16 %v4921, %v4917
        %v5130 = vpack.c.b16 %v4922, %v4918
        %v5131 = vpack.c.b16 %v4927, %v4923
        %v5132 = vpack.c.b16 %v4928, %v4924
        %v5133 = vpack.c.b16 %v4929, %v4925
        %v5134 = vpack.c.b16 %v4930, %v4926
        %v5135 = vpack.c.b16 %v4935, %v4931
        %v5136 = vpack.c.b16 %v4936, %v4932
        %v5137 = vpack.c.b16 %v4937, %v4933
        %v5138 = vpack.c.b16 %v4938, %v4934
        %v5139 = vpack.c.b16 %v4943, %v4939
        %v5140 = vpack.c.b16 %v4944, %v4940
        %v5141 = vpack.c.b16 %v4945, %v4941
        %v5142 = vpack.c.b16 %v4946, %v4942
        %v5143 = vpack.c.b16 %v4951, %v4947
        %v5144 = vpack.c.b16 %v4952, %v4948
        %v5145 = vpack.c.b16 %v4953, %v4949
        %v5146 = vpack.c.b16 %v4954, %v4950
        %v5147 = vpack.c.b16 %v4959, %v4955
        %v5148 = vpack.c.b16 %v4960, %v4956
        %v5149 = vpack.c.b16 %v4961, %v4957
        %v5150 = vpack.c.b16 %v4962, %v4958
        %v5151 = vpack.c.b16 %v4967, %v4963
        %v5152 = vpack.c.b16 %v4968, %v4964
        %v5153 = vpack.c.b16 %v4969, %v4965
        %v5154 = vpack.c.b16 %v4970, %v4966
        %v5155 = vpack.c.b16 %v4975, %v4971
        %v5156 = vpack.c.b16 %v4976, %v4972
        %v5157 = vpack.c.b16 %v4977, %v4973
        %v5158 = vpack.c.b16 %v4978, %v4974
        %v5159 = vpack.c.b16 %v4983, %v4979
        %v5160 = vpack.c.b16 %v4984, %v4980
        %v5161 = vpack.c.b16 %v4985, %v4981
        %v5162 = vpack.c.b16 %v4986, %v4982
        %v5163 = vpack.c.b16 %v4991, %v4987
        %v5164 = vpack.c.b16 %v4992, %v4988
        %v5165 = vpack.c.b16 %v4993, %v4989
        %v5166 = vpack.c.b16 %v4994, %v4990
        %v5167 = vpack.c.b16 %v4999, %v4995
        %v5168 = vpack.c.b16 %v5000, %v4996
        %v5169 = vpack.c.b16 %v5001, %v4997
        %v5170 = vpack.c.b16 %v5002, %v4998
        %v5171 = vpack.c.b16 %v5007, %v5003
        %v5172 = vpack.c.b16 %v5008, %v5004
        %v5173 = vpack.c.b16 %v5009, %v5005
        %v5174 = vpack.c.b16 %v5010, %v5006
        %v5175 = vpack.c.b16 %v5015, %v5011
        %v5176 = vpack.c.b16 %v5016, %v5012
        %v5177 = vpack.c.b16 %v5017, %v5013
        %v5178 = vpack.c.b16 %v5018, %v5014
        %v5179 = vpack.c.b16 %v5023, %v5019
        %v5180 = vpack.c.b16 %v5024, %v5020
        %v5181 = vpack.c.b16 %v5025, %v5021
        %v5182 = vpack.c.b16 %v5026, %v5022
        %v5183 = vpack.c.b16 %v5031, %v5027
        %v5184 = vpack.c.b16 %v5032, %v5028
        %v5185 = vpack.c.b16 %v5033, %v5029
        %v5186 = vpack.c.b16 %v5034, %v5030
        %v5187 = vpack.c.b16 %v5039, %v5035
        %v5188 = vpack.c.b16 %v5040, %v5036
        %v5189 = vpack.c.b16 %v5041, %v5037
        %v5190 = vpack.c.b16 %v5042, %v5038
        %v5191 = vpack.c.b16 %v5047, %v5043
        %v5192 = vpack.c.b16 %v5048, %v5044
        %v5193 = vpack.c.b16 %v5049, %v5045
        %v5194 = vpack.c.b16 %v5050, %v5046
        %v5195 = vpack.c.b16 %v5055, %v5051
        %v5196 = vpack.c.b16 %v5056, %v5052
        %v5197 = vpack.c.b16 %v5057, %v5053
        %v5198 = vpack.c.b16 %v5058, %v5054
        %v5199 = vpack.c.b16 %v5063, %v5059
        %v5200 = vpack.c.b16 %v5064, %v5060
        %v5201 = vpack.c.b16 %v5065, %v5061
        %v5202 = vpack.c.b16 %v5066, %v5062
        %v5203 = vpack.c.b16 %v5071, %v5067
        %v5204 = vpack.c.b16 %v5072, %v5068
        %v5205 = vpack.c.b16 %v5073, %v5069
        %v5206 = vpack.c.b16 %v5074, %v5070
        %v5207 = vpack.c.b16 %v5079, %v5075
        %v5208 = vpack.c.b16 %v5080, %v5076
        %v5209 = vpack.c.b16 %v5081, %v5077
        %v5210 = vpack.c.b16 %v5082, %v5078
        %5339 = vmatprep.subr.bf16.mxu0 %v5112
        %5340 = vmatpush1.bf16.msra.mxu0 %v5111
        %5341 = vmatprep.subr.bf16.mxu0 %v5108
        %5342 = vmatpush1.bf16.msra.mxu0 %v5107
        %5343 = vmatprep.subr.bf16.mxu0 %v5104
        %5344 = vmatpush1.bf16.msra.mxu0 %v5103
        %5345 = vmatprep.subr.bf16.mxu0 %v5100
        %5346 = vmatpush1.bf16.msra.mxu0 %v5099
        %5347 = vmatprep.subr.bf16.mxu0 %v5096
        %5348 = vmatpush1.bf16.msra.mxu0 %v5095
        %5349 = vmatprep.subr.bf16.mxu0 %v5092
        %5350 = vmatpush1.bf16.msra.mxu0 %v5091
        %5351 = vmatprep.subr.bf16.mxu0 %v5088
        %5352 = vmatpush1.bf16.msra.mxu0 %v5087
        %5353 = vmatprep.subr.bf16.mxu0 %v5084
        %5354 = vmatpush1.bf16.msra.mxu0 %v5083
        %5355 = vmatprep.subr.bf16.mxu0 %v5144
        %5356 = vmatpush2.bf16.msra.mxu0 %v5143
        %5357 = vmatprep.subr.bf16.mxu0 %v5140
        %5358 = vmatpush2.bf16.msra.mxu0 %v5139
        %5359 = vmatprep.subr.bf16.mxu0 %v5136
        %5360 = vmatpush2.bf16.msra.mxu0 %v5135
        %5361 = vmatprep.subr.bf16.mxu0 %v5132
        %5362 = vmatpush2.bf16.msra.mxu0 %v5131
        %5363 = vmatprep.subr.bf16.mxu0 %v5128
        %5364 = vmatpush2.bf16.msra.mxu0 %v5127
        %5365 = vmatprep.subr.bf16.mxu0 %v5124
        %5366 = vmatpush2.bf16.msra.mxu0 %v5123
        %5367 = vmatprep.subr.bf16.mxu0 %v5120
        %5368 = vmatpush2.bf16.msra.mxu0 %v5119
        %5369 = vmatprep.subr.bf16.mxu0 %v5116
        %5370 = vmatpush2.bf16.msra.mxu0 %v5115
        %5371 = vmatprep.mubr.bf16.mxu0 %v1199
        %5372 = vmatmul.mubr.bf16.gmra.mxu0 %v1198
        %v5373 = vpop.f32.mrf.mxu0
        %v5374 = vadd.f32 0.0, %v5373
        %v5375 = vpop.f32.mrf.mxu0
        %v5376 = vadd.f32 0.0, %v5375
        %v5377 = vpop.f32.mrf.mxu0
        %v5378 = vpop.f32.mrf.mxu0
        %5379 = vdwg.mxu0
        %5380 = vmatprep.subr.bf16.mxu0 %v5176
        %5381 = vmatpush1.bf16.msra.mxu0 %v5175
        %5382 = vmatprep.subr.bf16.mxu0 %v5172
        %5383 = vmatpush1.bf16.msra.mxu0 %v5171
        %5384 = vmatprep.subr.bf16.mxu0 %v5168
        %5385 = vmatpush1.bf16.msra.mxu0 %v5167
        %5386 = vmatprep.subr.bf16.mxu0 %v5164
        %5387 = vmatpush1.bf16.msra.mxu0 %v5163
        %5388 = vmatprep.subr.bf16.mxu0 %v5160
        %5389 = vmatpush1.bf16.msra.mxu0 %v5159
        %5390 = vmatprep.subr.bf16.mxu0 %v5156
        %5391 = vmatpush1.bf16.msra.mxu0 %v5155
        %5392 = vmatprep.subr.bf16.mxu0 %v5152
        %5393 = vmatpush1.bf16.msra.mxu0 %v5151
        %5394 = vmatprep.subr.bf16.mxu0 %v5148
        %5395 = vmatpush1.bf16.msra.mxu0 %v5147
        %5396 = vmatprep.subr.bf16.mxu0 %v5208
        %5397 = vmatpush2.bf16.msra.mxu0 %v5207
        %5398 = vmatprep.subr.bf16.mxu0 %v5204
        %5399 = vmatpush2.bf16.msra.mxu0 %v5203
        %5400 = vmatprep.subr.bf16.mxu0 %v5200
        %5401 = vmatpush2.bf16.msra.mxu0 %v5199
        %5402 = vmatprep.subr.bf16.mxu0 %v5196
        %5403 = vmatpush2.bf16.msra.mxu0 %v5195
        %5404 = vmatprep.subr.bf16.mxu0 %v5192
        %5405 = vmatpush2.bf16.msra.mxu0 %v5191
        %5406 = vmatprep.subr.bf16.mxu0 %v5188
        %5407 = vmatpush2.bf16.msra.mxu0 %v5187
        %5408 = vmatprep.subr.bf16.mxu0 %v5184
        %5409 = vmatpush2.bf16.msra.mxu0 %v5183
        %5410 = vmatprep.subr.bf16.mxu0 %v5180
        %5411 = vmatpush2.bf16.msra.mxu0 %v5179
        %5412 = vmatprep.mubr.bf16.mxu0 %v1201
        %5413 = vmatmul.mubr.bf16.gmra.mxu0 %v1200
        %v5414 = vpop.f32.mrf.mxu0
        %v5415 = vadd.f32 %v5374, %v5414
        %v5416 = vpop.f32.mrf.mxu0
        %v5417 = vadd.f32 %v5376, %v5416
        %v5418 = vpop.f32.mrf.mxu0
        %v5419 = vpop.f32.mrf.mxu0
        %5420 = vdwg.mxu0
        %5421 = vmatprep.subr.bf16.mxu0 %v5114
        %5422 = vmatpush1.bf16.msra.mxu0 %v5113
        %5423 = vmatprep.subr.bf16.mxu0 %v5110
        %5424 = vmatpush1.bf16.msra.mxu0 %v5109
        %5425 = vmatprep.subr.bf16.mxu0 %v5106
        %5426 = vmatpush1.bf16.msra.mxu0 %v5105
        %5427 = vmatprep.subr.bf16.mxu0 %v5102
        %5428 = vmatpush1.bf16.msra.mxu0 %v5101
        %5429 = vmatprep.subr.bf16.mxu0 %v5098
        %5430 = vmatpush1.bf16.msra.mxu0 %v5097
        %5431 = vmatprep.subr.bf16.mxu0 %v5094
        %5432 = vmatpush1.bf16.msra.mxu0 %v5093
        %5433 = vmatprep.subr.bf16.mxu0 %v5090
        %5434 = vmatpush1.bf16.msra.mxu0 %v5089
        %5435 = vmatprep.subr.bf16.mxu0 %v5086
        %5436 = vmatpush1.bf16.msra.mxu0 %v5085
        %5437 = vmatprep.subr.bf16.mxu0 %v5146
        %5438 = vmatpush2.bf16.msra.mxu0 %v5145
        %5439 = vmatprep.subr.bf16.mxu0 %v5142
        %5440 = vmatpush2.bf16.msra.mxu0 %v5141
        %5441 = vmatprep.subr.bf16.mxu0 %v5138
        %5442 = vmatpush2.bf16.msra.mxu0 %v5137
        %5443 = vmatprep.subr.bf16.mxu0 %v5134
        %5444 = vmatpush2.bf16.msra.mxu0 %v5133
        %5445 = vmatprep.subr.bf16.mxu0 %v5130
        %5446 = vmatpush2.bf16.msra.mxu0 %v5129
        %5447 = vmatprep.subr.bf16.mxu0 %v5126
        %5448 = vmatpush2.bf16.msra.mxu0 %v5125
        %5449 = vmatprep.subr.bf16.mxu0 %v5122
        %5450 = vmatpush2.bf16.msra.mxu0 %v5121
        %5451 = vmatprep.subr.bf16.mxu0 %v5118
        %5452 = vmatpush2.bf16.msra.mxu0 %v5117
        %5453 = vmatprep.mubr.bf16.mxu0 %v1199
        %5454 = vmatmul.mubr.bf16.gmra.mxu0 %v1198
        %v5455 = vpop.f32.mrf.mxu0
        %v5456 = vadd.f32 0.0, %v5455
        %v5457 = vpop.f32.mrf.mxu0
        %v5458 = vadd.f32 0.0, %v5457
        %v5459 = vpop.f32.mrf.mxu0
        %v5460 = vpop.f32.mrf.mxu0
        %5461 = vdwg.mxu0
        %5462 = vmatprep.subr.bf16.mxu0 %v5178
        %5463 = vmatpush1.bf16.msra.mxu0 %v5177
        %5464 = vmatprep.subr.bf16.mxu0 %v5174
        %5465 = vmatpush1.bf16.msra.mxu0 %v5173
        %5466 = vmatprep.subr.bf16.mxu0 %v5170
        %5467 = vmatpush1.bf16.msra.mxu0 %v5169
        %5468 = vmatprep.subr.bf16.mxu0 %v5166
        %5469 = vmatpush1.bf16.msra.mxu0 %v5165
        %5470 = vmatprep.subr.bf16.mxu0 %v5162
        %5471 = vmatpush1.bf16.msra.mxu0 %v5161
        %5472 = vmatprep.subr.bf16.mxu0 %v5158
        %5473 = vmatpush1.bf16.msra.mxu0 %v5157
        %5474 = vmatprep.subr.bf16.mxu0 %v5154
        %5475 = vmatpush1.bf16.msra.mxu0 %v5153
        %5476 = vmatprep.subr.bf16.mxu0 %v5150
        %5477 = vmatpush1.bf16.msra.mxu0 %v5149
        %5478 = vmatprep.subr.bf16.mxu0 %v5210
        %5479 = vmatpush2.bf16.msra.mxu0 %v5209
        %5480 = vmatprep.subr.bf16.mxu0 %v5206
        %5481 = vmatpush2.bf16.msra.mxu0 %v5205
        %5482 = vmatprep.subr.bf16.mxu0 %v5202
        %5483 = vmatpush2.bf16.msra.mxu0 %v5201
        %5484 = vmatprep.subr.bf16.mxu0 %v5198
        %5485 = vmatpush2.bf16.msra.mxu0 %v5197
        %5486 = vmatprep.subr.bf16.mxu0 %v5194
        %5487 = vmatpush2.bf16.msra.mxu0 %v5193
        %5488 = vmatprep.subr.bf16.mxu0 %v5190
        %5489 = vmatpush2.bf16.msra.mxu0 %v5189
        %5490 = vmatprep.subr.bf16.mxu0 %v5186
        %5491 = vmatpush2.bf16.msra.mxu0 %v5185
        %5492 = vmatprep.subr.bf16.mxu0 %v5182
        %5493 = vmatpush2.bf16.msra.mxu0 %v5181
        %5494 = vmatprep.mubr.bf16.mxu0 %v1201
        %5495 = vmatmul.mubr.bf16.gmra.mxu0 %v1200
        %v5496 = vpop.f32.mrf.mxu0
        %v5497 = vadd.f32 %v5456, %v5496
        %v5498 = vpop.f32.mrf.mxu0
        %v5499 = vadd.f32 %v5458, %v5498
        %v5500 = vpop.f32.mrf.mxu0
        %v5501 = vpop.f32.mrf.mxu0
        %5502 = vdwg.mxu0
        %v5631 = vunpack.c.l.b16 %v4442
        %v5632 = vunpack.c.h.b16 %v4442
        %v5633 = vunpack.c.l.b16 %v4443
        %v5634 = vunpack.c.h.b16 %v4443
        %v5635 = vunpack.c.l.b16 %v4444
        %v5636 = vunpack.c.h.b16 %v4444
        %v5637 = vunpack.c.l.b16 %v4445
        %v5638 = vunpack.c.h.b16 %v4445
        %v5639 = vunpack.c.l.b16 %v4446
        %v5640 = vunpack.c.h.b16 %v4446
        %v5641 = vunpack.c.l.b16 %v4447
        %v5642 = vunpack.c.h.b16 %v4447
        %v5643 = vunpack.c.l.b16 %v4448
        %v5644 = vunpack.c.h.b16 %v4448
        %v5645 = vunpack.c.l.b16 %v4449
        %v5646 = vunpack.c.h.b16 %v4449
        %v5647 = vunpack.c.l.b16 %v4450
        %v5648 = vunpack.c.h.b16 %v4450
        %v5649 = vunpack.c.l.b16 %v4451
        %v5650 = vunpack.c.h.b16 %v4451
        %v5651 = vunpack.c.l.b16 %v4452
        %v5652 = vunpack.c.h.b16 %v4452
        %v5653 = vunpack.c.l.b16 %v4453
        %v5654 = vunpack.c.h.b16 %v4453
        %v5655 = vunpack.c.l.b16 %v4454
        %v5656 = vunpack.c.h.b16 %v4454
        %v5657 = vunpack.c.l.b16 %v4455
        %v5658 = vunpack.c.h.b16 %v4455
        %v5659 = vunpack.c.l.b16 %v4456
        %v5660 = vunpack.c.h.b16 %v4456
        %v5661 = vunpack.c.l.b16 %v4457
        %v5662 = vunpack.c.h.b16 %v4457
        %v5663 = vunpack.c.l.b16 %v4458
        %v5664 = vunpack.c.h.b16 %v4458
        %v5665 = vunpack.c.l.b16 %v4459
        %v5666 = vunpack.c.h.b16 %v4459
        %v5667 = vunpack.c.l.b16 %v4460
        %v5668 = vunpack.c.h.b16 %v4460
        %v5669 = vunpack.c.l.b16 %v4461
        %v5670 = vunpack.c.h.b16 %v4461
        %v5671 = vunpack.c.l.b16 %v4462
        %v5672 = vunpack.c.h.b16 %v4462
        %v5673 = vunpack.c.l.b16 %v4463
        %v5674 = vunpack.c.h.b16 %v4463
        %v5675 = vunpack.c.l.b16 %v4464
        %v5676 = vunpack.c.h.b16 %v4464
        %v5677 = vunpack.c.l.b16 %v4465
        %v5678 = vunpack.c.h.b16 %v4465
        %v5679 = vunpack.c.l.b16 %v4466
        %v5680 = vunpack.c.h.b16 %v4466
        %v5681 = vunpack.c.l.b16 %v4467
        %v5682 = vunpack.c.h.b16 %v4467
        %v5683 = vunpack.c.l.b16 %v4468
        %v5684 = vunpack.c.h.b16 %v4468
        %v5685 = vunpack.c.l.b16 %v4469
        %v5686 = vunpack.c.h.b16 %v4469
        %v5687 = vunpack.c.l.b16 %v4470
        %v5688 = vunpack.c.h.b16 %v4470
        %v5689 = vunpack.c.l.b16 %v4471
        %v5690 = vunpack.c.h.b16 %v4471
        %v5691 = vunpack.c.l.b16 %v4472
        %v5692 = vunpack.c.h.b16 %v4472
        %v5693 = vunpack.c.l.b16 %v4473
        %v5694 = vunpack.c.h.b16 %v4473
        %v5695 = vunpack.c.l.b16 %v4474
        %v5696 = vunpack.c.h.b16 %v4474
        %v5697 = vunpack.c.l.b16 %v4475
        %v5698 = vunpack.c.h.b16 %v4475
        %v5699 = vunpack.c.l.b16 %v4476
        %v5700 = vunpack.c.h.b16 %v4476
        %v5701 = vunpack.c.l.b16 %v4477
        %v5702 = vunpack.c.h.b16 %v4477
        %v5703 = vunpack.c.l.b16 %v4478
        %v5704 = vunpack.c.h.b16 %v4478
        %v5705 = vunpack.c.l.b16 %v4479
        %v5706 = vunpack.c.h.b16 %v4479
        %v5707 = vunpack.c.l.b16 %v4480
        %v5708 = vunpack.c.h.b16 %v4480
        %v5709 = vunpack.c.l.b16 %v4481
        %v5710 = vunpack.c.h.b16 %v4481
        %v5711 = vunpack.c.l.b16 %v4482
        %v5712 = vunpack.c.h.b16 %v4482
        %v5713 = vunpack.c.l.b16 %v4483
        %v5714 = vunpack.c.h.b16 %v4483
        %v5715 = vunpack.c.l.b16 %v4484
        %v5716 = vunpack.c.h.b16 %v4484
        %v5717 = vunpack.c.l.b16 %v4485
        %v5718 = vunpack.c.h.b16 %v4485
        %v5719 = vunpack.c.l.b16 %v4486
        %v5720 = vunpack.c.h.b16 %v4486
        %v5721 = vunpack.c.l.b16 %v4487
        %v5722 = vunpack.c.h.b16 %v4487
        %v5723 = vunpack.c.l.b16 %v4488
        %v5724 = vunpack.c.h.b16 %v4488
        %v5725 = vunpack.c.l.b16 %v4489
        %v5726 = vunpack.c.h.b16 %v4489
        %v5727 = vunpack.c.l.b16 %v4490
        %v5728 = vunpack.c.h.b16 %v4490
        %v5729 = vunpack.c.l.b16 %v4491
        %v5730 = vunpack.c.h.b16 %v4491
        %v5731 = vunpack.c.l.b16 %v4492
        %v5732 = vunpack.c.h.b16 %v4492
        %v5733 = vunpack.c.l.b16 %v4493
        %v5734 = vunpack.c.h.b16 %v4493
        %v5735 = vunpack.c.l.b16 %v4494
        %v5736 = vunpack.c.h.b16 %v4494
        %v5737 = vunpack.c.l.b16 %v4495
        %v5738 = vunpack.c.h.b16 %v4495
        %v5739 = vunpack.c.l.b16 %v4496
        %v5740 = vunpack.c.h.b16 %v4496
        %v5741 = vunpack.c.l.b16 %v4497
        %v5742 = vunpack.c.h.b16 %v4497
        %v5743 = vunpack.c.l.b16 %v4498
        %v5744 = vunpack.c.h.b16 %v4498
        %v5745 = vunpack.c.l.b16 %v4499
        %v5746 = vunpack.c.h.b16 %v4499
        %v5747 = vunpack.c.l.b16 %v4500
        %v5748 = vunpack.c.h.b16 %v4500
        %v5749 = vunpack.c.l.b16 %v4501
        %v5750 = vunpack.c.h.b16 %v4501
        %v5751 = vunpack.c.l.b16 %v4502
        %v5752 = vunpack.c.h.b16 %v4502
        %v5753 = vunpack.c.l.b16 %v4503
        %v5754 = vunpack.c.h.b16 %v4503
        %v5755 = vunpack.c.l.b16 %v4504
        %v5756 = vunpack.c.h.b16 %v4504
        %v5757 = vunpack.c.l.b16 %v4505
        %v5758 = vunpack.c.h.b16 %v4505
        %v5759 = vunpack.c.l.b16 %v4506
        %v5760 = vunpack.c.h.b16 %v4506
        %v5761 = vunpack.c.l.b16 %v4507
        %v5762 = vunpack.c.h.b16 %v4507
        %v5763 = vunpack.c.l.b16 %v4508
        %v5764 = vunpack.c.h.b16 %v4508
        %v5765 = vunpack.c.l.b16 %v4509
        %v5766 = vunpack.c.h.b16 %v4509
        %v5767 = vunpack.c.l.b16 %v4510
        %v5768 = vunpack.c.h.b16 %v4510
        %v5769 = vunpack.c.l.b16 %v4511
        %v5770 = vunpack.c.h.b16 %v4511
        %v5771 = vunpack.c.l.b16 %v4512
        %v5772 = vunpack.c.h.b16 %v4512
        %v5773 = vunpack.c.l.b16 %v4513
        %v5774 = vunpack.c.h.b16 %v4513
        %v5775 = vunpack.c.l.b16 %v4514
        %v5776 = vunpack.c.h.b16 %v4514
        %v5777 = vunpack.c.l.b16 %v4515
        %v5778 = vunpack.c.h.b16 %v4515
        %v5779 = vunpack.c.l.b16 %v4516
        %v5780 = vunpack.c.h.b16 %v4516
        %v5781 = vunpack.c.l.b16 %v4517
        %v5782 = vunpack.c.h.b16 %v4517
        %v5783 = vunpack.c.l.b16 %v4518
        %v5784 = vunpack.c.h.b16 %v4518
        %v5785 = vunpack.c.l.b16 %v4519
        %v5786 = vunpack.c.h.b16 %v4519
        %v5787 = vunpack.c.l.b16 %v4520
        %v5788 = vunpack.c.h.b16 %v4520
        %v5789 = vunpack.c.l.b16 %v4521
        %v5790 = vunpack.c.h.b16 %v4521
        %v5791 = vunpack.c.l.b16 %v4522
        %v5792 = vunpack.c.h.b16 %v4522
        %v5793 = vunpack.c.l.b16 %v4523
        %v5794 = vunpack.c.h.b16 %v4523
        %v5795 = vunpack.c.l.b16 %v4524
        %v5796 = vunpack.c.h.b16 %v4524
        %v5797 = vunpack.c.l.b16 %v4525
        %v5798 = vunpack.c.h.b16 %v4525
        %v5799 = vunpack.c.l.b16 %v4526
        %v5800 = vunpack.c.h.b16 %v4526
        %v5801 = vunpack.c.l.b16 %v4527
        %v5802 = vunpack.c.h.b16 %v4527
        %v5803 = vunpack.c.l.b16 %v4528
        %v5804 = vunpack.c.h.b16 %v4528
        %v5805 = vunpack.c.l.b16 %v4529
        %v5806 = vunpack.c.h.b16 %v4529
        %v5807 = vunpack.c.l.b16 %v4530
        %v5808 = vunpack.c.h.b16 %v4530
        %v5809 = vunpack.c.l.b16 %v4531
        %v5810 = vunpack.c.h.b16 %v4531
        %v5811 = vunpack.c.l.b16 %v4532
        %v5812 = vunpack.c.h.b16 %v4532
        %v5813 = vunpack.c.l.b16 %v4533
        %v5814 = vunpack.c.h.b16 %v4533
        %v5815 = vunpack.c.l.b16 %v4534
        %v5816 = vunpack.c.h.b16 %v4534
        %v5817 = vunpack.c.l.b16 %v4535
        %v5818 = vunpack.c.h.b16 %v4535
        %v5819 = vunpack.c.l.b16 %v4536
        %v5820 = vunpack.c.h.b16 %v4536
        %v5821 = vunpack.c.l.b16 %v4537
        %v5822 = vunpack.c.h.b16 %v4537
        %v5823 = vunpack.c.l.b16 %v4538
        %v5824 = vunpack.c.h.b16 %v4538
        %v5825 = vunpack.c.l.b16 %v4539
        %v5826 = vunpack.c.h.b16 %v4539
        %v5827 = vunpack.c.l.b16 %v4540
        %v5828 = vunpack.c.h.b16 %v4540
        %v5829 = vunpack.c.l.b16 %v4541
        %v5830 = vunpack.c.h.b16 %v4541
        %v5831 = vunpack.c.l.b16 %v4542
        %v5832 = vunpack.c.h.b16 %v4542
        %v5833 = vunpack.c.l.b16 %v4543
        %v5834 = vunpack.c.h.b16 %v4543
        %v5835 = vunpack.c.l.b16 %v4544
        %v5836 = vunpack.c.h.b16 %v4544
        %v5837 = vunpack.c.l.b16 %v4545
        %v5838 = vunpack.c.h.b16 %v4545
        %v5839 = vunpack.c.l.b16 %v4546
        %v5840 = vunpack.c.h.b16 %v4546
        %v5841 = vunpack.c.l.b16 %v4547
        %v5842 = vunpack.c.h.b16 %v4547
        %v5843 = vunpack.c.l.b16 %v4548
        %v5844 = vunpack.c.h.b16 %v4548
        %v5845 = vunpack.c.l.b16 %v4549
        %v5846 = vunpack.c.h.b16 %v4549
        %v5847 = vunpack.c.l.b16 %v4550
        %v5848 = vunpack.c.h.b16 %v4550
        %v5849 = vunpack.c.l.b16 %v4551
        %v5850 = vunpack.c.h.b16 %v4551
        %v5851 = vunpack.c.l.b16 %v4552
        %v5852 = vunpack.c.h.b16 %v4552
        %v5853 = vunpack.c.l.b16 %v4553
        %v5854 = vunpack.c.h.b16 %v4553
        %v5855 = vunpack.c.l.b16 %v4554
        %v5856 = vunpack.c.h.b16 %v4554
        %v5857 = vunpack.c.l.b16 %v4555
        %v5858 = vunpack.c.h.b16 %v4555
        %v5859 = vunpack.c.l.b16 %v4556
        %v5860 = vunpack.c.h.b16 %v4556
        %v5861 = vunpack.c.l.b16 %v4557
        %v5862 = vunpack.c.h.b16 %v4557
        %v5863 = vunpack.c.l.b16 %v4558
        %v5864 = vunpack.c.h.b16 %v4558
        %v5865 = vunpack.c.l.b16 %v4559
        %v5866 = vunpack.c.h.b16 %v4559
        %v5867 = vunpack.c.l.b16 %v4560
        %v5868 = vunpack.c.h.b16 %v4560
        %v5869 = vunpack.c.l.b16 %v4561
        %v5870 = vunpack.c.h.b16 %v4561
        %v5871 = vunpack.c.l.b16 %v4562
        %v5872 = vunpack.c.h.b16 %v4562
        %v5873 = vunpack.c.l.b16 %v4563
        %v5874 = vunpack.c.h.b16 %v4563
        %v5875 = vunpack.c.l.b16 %v4564
        %v5876 = vunpack.c.h.b16 %v4564
        %v5877 = vunpack.c.l.b16 %v4565
        %v5878 = vunpack.c.h.b16 %v4565
        %v5879 = vunpack.c.l.b16 %v4566
        %v5880 = vunpack.c.h.b16 %v4566
        %v5881 = vunpack.c.l.b16 %v4567
        %v5882 = vunpack.c.h.b16 %v4567
        %v5883 = vunpack.c.l.b16 %v4568
        %v5884 = vunpack.c.h.b16 %v4568
        %v5885 = vunpack.c.l.b16 %v4569
        %v5886 = vunpack.c.h.b16 %v4569
        %v5887 = vpack.c.b16 %v5635, %v5631
        %v5888 = vpack.c.b16 %v5636, %v5632
        %v5889 = vpack.c.b16 %v5637, %v5633
        %v5890 = vpack.c.b16 %v5638, %v5634
        %v5891 = vpack.c.b16 %v5643, %v5639
        %v5892 = vpack.c.b16 %v5644, %v5640
        %v5893 = vpack.c.b16 %v5645, %v5641
        %v5894 = vpack.c.b16 %v5646, %v5642
        %v5895 = vpack.c.b16 %v5651, %v5647
        %v5896 = vpack.c.b16 %v5652, %v5648
        %v5897 = vpack.c.b16 %v5653, %v5649
        %v5898 = vpack.c.b16 %v5654, %v5650
        %v5899 = vpack.c.b16 %v5659, %v5655
        %v5900 = vpack.c.b16 %v5660, %v5656
        %v5901 = vpack.c.b16 %v5661, %v5657
        %v5902 = vpack.c.b16 %v5662, %v5658
        %v5903 = vpack.c.b16 %v5667, %v5663
        %v5904 = vpack.c.b16 %v5668, %v5664
        %v5905 = vpack.c.b16 %v5669, %v5665
        %v5906 = vpack.c.b16 %v5670, %v5666
        %v5907 = vpack.c.b16 %v5675, %v5671
        %v5908 = vpack.c.b16 %v5676, %v5672
        %v5909 = vpack.c.b16 %v5677, %v5673
        %v5910 = vpack.c.b16 %v5678, %v5674
        %v5911 = vpack.c.b16 %v5683, %v5679
        %v5912 = vpack.c.b16 %v5684, %v5680
        %v5913 = vpack.c.b16 %v5685, %v5681
        %v5914 = vpack.c.b16 %v5686, %v5682
        %v5915 = vpack.c.b16 %v5691, %v5687
        %v5916 = vpack.c.b16 %v5692, %v5688
        %v5917 = vpack.c.b16 %v5693, %v5689
        %v5918 = vpack.c.b16 %v5694, %v5690
        %v5919 = vpack.c.b16 %v5699, %v5695
        %v5920 = vpack.c.b16 %v5700, %v5696
        %v5921 = vpack.c.b16 %v5701, %v5697
        %v5922 = vpack.c.b16 %v5702, %v5698
        %v5923 = vpack.c.b16 %v5707, %v5703
        %v5924 = vpack.c.b16 %v5708, %v5704
        %v5925 = vpack.c.b16 %v5709, %v5705
        %v5926 = vpack.c.b16 %v5710, %v5706
        %v5927 = vpack.c.b16 %v5715, %v5711
        %v5928 = vpack.c.b16 %v5716, %v5712
        %v5929 = vpack.c.b16 %v5717, %v5713
        %v5930 = vpack.c.b16 %v5718, %v5714
        %v5931 = vpack.c.b16 %v5723, %v5719
        %v5932 = vpack.c.b16 %v5724, %v5720
        %v5933 = vpack.c.b16 %v5725, %v5721
        %v5934 = vpack.c.b16 %v5726, %v5722
        %v5935 = vpack.c.b16 %v5731, %v5727
        %v5936 = vpack.c.b16 %v5732, %v5728
        %v5937 = vpack.c.b16 %v5733, %v5729
        %v5938 = vpack.c.b16 %v5734, %v5730
        %v5939 = vpack.c.b16 %v5739, %v5735
        %v5940 = vpack.c.b16 %v5740, %v5736
        %v5941 = vpack.c.b16 %v5741, %v5737
        %v5942 = vpack.c.b16 %v5742, %v5738
        %v5943 = vpack.c.b16 %v5747, %v5743
        %v5944 = vpack.c.b16 %v5748, %v5744
        %v5945 = vpack.c.b16 %v5749, %v5745
        %v5946 = vpack.c.b16 %v5750, %v5746
        %v5947 = vpack.c.b16 %v5755, %v5751
        %v5948 = vpack.c.b16 %v5756, %v5752
        %v5949 = vpack.c.b16 %v5757, %v5753
        %v5950 = vpack.c.b16 %v5758, %v5754
        %v5951 = vpack.c.b16 %v5763, %v5759
        %v5952 = vpack.c.b16 %v5764, %v5760
        %v5953 = vpack.c.b16 %v5765, %v5761
        %v5954 = vpack.c.b16 %v5766, %v5762
        %v5955 = vpack.c.b16 %v5771, %v5767
        %v5956 = vpack.c.b16 %v5772, %v5768
        %v5957 = vpack.c.b16 %v5773, %v5769
        %v5958 = vpack.c.b16 %v5774, %v5770
        %v5959 = vpack.c.b16 %v5779, %v5775
        %v5960 = vpack.c.b16 %v5780, %v5776
        %v5961 = vpack.c.b16 %v5781, %v5777
        %v5962 = vpack.c.b16 %v5782, %v5778
        %v5963 = vpack.c.b16 %v5787, %v5783
        %v5964 = vpack.c.b16 %v5788, %v5784
        %v5965 = vpack.c.b16 %v5789, %v5785
        %v5966 = vpack.c.b16 %v5790, %v5786
        %v5967 = vpack.c.b16 %v5795, %v5791
        %v5968 = vpack.c.b16 %v5796, %v5792
        %v5969 = vpack.c.b16 %v5797, %v5793
        %v5970 = vpack.c.b16 %v5798, %v5794
        %v5971 = vpack.c.b16 %v5803, %v5799
        %v5972 = vpack.c.b16 %v5804, %v5800
        %v5973 = vpack.c.b16 %v5805, %v5801
        %v5974 = vpack.c.b16 %v5806, %v5802
        %v5975 = vpack.c.b16 %v5811, %v5807
        %v5976 = vpack.c.b16 %v5812, %v5808
        %v5977 = vpack.c.b16 %v5813, %v5809
        %v5978 = vpack.c.b16 %v5814, %v5810
        %v5979 = vpack.c.b16 %v5819, %v5815
        %v5980 = vpack.c.b16 %v5820, %v5816
        %v5981 = vpack.c.b16 %v5821, %v5817
        %v5982 = vpack.c.b16 %v5822, %v5818
        %v5983 = vpack.c.b16 %v5827, %v5823
        %v5984 = vpack.c.b16 %v5828, %v5824
        %v5985 = vpack.c.b16 %v5829, %v5825
        %v5986 = vpack.c.b16 %v5830, %v5826
        %v5987 = vpack.c.b16 %v5835, %v5831
        %v5988 = vpack.c.b16 %v5836, %v5832
        %v5989 = vpack.c.b16 %v5837, %v5833
        %v5990 = vpack.c.b16 %v5838, %v5834
        %v5991 = vpack.c.b16 %v5843, %v5839
        %v5992 = vpack.c.b16 %v5844, %v5840
        %v5993 = vpack.c.b16 %v5845, %v5841
        %v5994 = vpack.c.b16 %v5846, %v5842
        %v5995 = vpack.c.b16 %v5851, %v5847
        %v5996 = vpack.c.b16 %v5852, %v5848
        %v5997 = vpack.c.b16 %v5853, %v5849
        %v5998 = vpack.c.b16 %v5854, %v5850
        %v5999 = vpack.c.b16 %v5859, %v5855
        %v6000 = vpack.c.b16 %v5860, %v5856
        %v6001 = vpack.c.b16 %v5861, %v5857
        %v6002 = vpack.c.b16 %v5862, %v5858
        %v6003 = vpack.c.b16 %v5867, %v5863
        %v6004 = vpack.c.b16 %v5868, %v5864
        %v6005 = vpack.c.b16 %v5869, %v5865
        %v6006 = vpack.c.b16 %v5870, %v5866
        %v6007 = vpack.c.b16 %v5875, %v5871
        %v6008 = vpack.c.b16 %v5876, %v5872
        %v6009 = vpack.c.b16 %v5877, %v5873
        %v6010 = vpack.c.b16 %v5878, %v5874
        %v6011 = vpack.c.b16 %v5883, %v5879
        %v6012 = vpack.c.b16 %v5884, %v5880
        %v6013 = vpack.c.b16 %v5885, %v5881
        %v6014 = vpack.c.b16 %v5886, %v5882
        %6143 = vmatprep.subr.bf16.mxu0 %v5916
        %6144 = vmatpush1.bf16.msra.mxu0 %v5915
        %6145 = vmatprep.subr.bf16.mxu0 %v5912
        %6146 = vmatpush1.bf16.msra.mxu0 %v5911
        %6147 = vmatprep.subr.bf16.mxu0 %v5908
        %6148 = vmatpush1.bf16.msra.mxu0 %v5907
        %6149 = vmatprep.subr.bf16.mxu0 %v5904
        %6150 = vmatpush1.bf16.msra.mxu0 %v5903
        %6151 = vmatprep.subr.bf16.mxu0 %v5900
        %6152 = vmatpush1.bf16.msra.mxu0 %v5899
        %6153 = vmatprep.subr.bf16.mxu0 %v5896
        %6154 = vmatpush1.bf16.msra.mxu0 %v5895
        %6155 = vmatprep.subr.bf16.mxu0 %v5892
        %6156 = vmatpush1.bf16.msra.mxu0 %v5891
        %6157 = vmatprep.subr.bf16.mxu0 %v5888
        %6158 = vmatpush1.bf16.msra.mxu0 %v5887
        %6159 = vmatprep.subr.bf16.mxu0 %v5948
        %6160 = vmatpush2.bf16.msra.mxu0 %v5947
        %6161 = vmatprep.subr.bf16.mxu0 %v5944
        %6162 = vmatpush2.bf16.msra.mxu0 %v5943
        %6163 = vmatprep.subr.bf16.mxu0 %v5940
        %6164 = vmatpush2.bf16.msra.mxu0 %v5939
        %6165 = vmatprep.subr.bf16.mxu0 %v5936
        %6166 = vmatpush2.bf16.msra.mxu0 %v5935
        %6167 = vmatprep.subr.bf16.mxu0 %v5932
        %6168 = vmatpush2.bf16.msra.mxu0 %v5931
        %6169 = vmatprep.subr.bf16.mxu0 %v5928
        %6170 = vmatpush2.bf16.msra.mxu0 %v5927
        %6171 = vmatprep.subr.bf16.mxu0 %v5924
        %6172 = vmatpush2.bf16.msra.mxu0 %v5923
        %6173 = vmatprep.subr.bf16.mxu0 %v5920
        %6174 = vmatpush2.bf16.msra.mxu0 %v5919
        %6175 = vmatprep.mubr.bf16.mxu0 %v1594
        %6176 = vmatmul.mubr.bf16.gmra.mxu0 %v1593
        %v6177 = vpop.f32.mrf.mxu0
        %v6178 = vadd.f32 %v5415, %v6177
        %v6179 = vpop.f32.mrf.mxu0
        %v6180 = vadd.f32 %v5417, %v6179
        %v6181 = vpop.f32.mrf.mxu0
        %v6182 = vpop.f32.mrf.mxu0
        %6183 = vdwg.mxu0
        %6184 = vmatprep.subr.bf16.mxu0 %v5980
        %6185 = vmatpush1.bf16.msra.mxu0 %v5979
        %6186 = vmatprep.subr.bf16.mxu0 %v5976
        %6187 = vmatpush1.bf16.msra.mxu0 %v5975
        %6188 = vmatprep.subr.bf16.mxu0 %v5972
        %6189 = vmatpush1.bf16.msra.mxu0 %v5971
        %6190 = vmatprep.subr.bf16.mxu0 %v5968
        %6191 = vmatpush1.bf16.msra.mxu0 %v5967
        %6192 = vmatprep.subr.bf16.mxu0 %v5964
        %6193 = vmatpush1.bf16.msra.mxu0 %v5963
        %6194 = vmatprep.subr.bf16.mxu0 %v5960
        %6195 = vmatpush1.bf16.msra.mxu0 %v5959
        %6196 = vmatprep.subr.bf16.mxu0 %v5956
        %6197 = vmatpush1.bf16.msra.mxu0 %v5955
        %6198 = vmatprep.subr.bf16.mxu0 %v5952
        %6199 = vmatpush1.bf16.msra.mxu0 %v5951
        %6200 = vmatprep.subr.bf16.mxu0 %v6012
        %6201 = vmatpush2.bf16.msra.mxu0 %v6011
        %6202 = vmatprep.subr.bf16.mxu0 %v6008
        %6203 = vmatpush2.bf16.msra.mxu0 %v6007
        %6204 = vmatprep.subr.bf16.mxu0 %v6004
        %6205 = vmatpush2.bf16.msra.mxu0 %v6003
        %6206 = vmatprep.subr.bf16.mxu0 %v6000
        %6207 = vmatpush2.bf16.msra.mxu0 %v5999
        %6208 = vmatprep.subr.bf16.mxu0 %v5996
        %6209 = vmatpush2.bf16.msra.mxu0 %v5995
        %6210 = vmatprep.subr.bf16.mxu0 %v5992
        %6211 = vmatpush2.bf16.msra.mxu0 %v5991
        %6212 = vmatprep.subr.bf16.mxu0 %v5988
        %6213 = vmatpush2.bf16.msra.mxu0 %v5987
        %6214 = vmatprep.subr.bf16.mxu0 %v5984
        %6215 = vmatpush2.bf16.msra.mxu0 %v5983
        %6216 = vmatprep.mubr.bf16.mxu0 %v1596
        %6217 = vmatmul.mubr.bf16.gmra.mxu0 %v1595
        %v6218 = vpop.f32.mrf.mxu0
        %v6219 = vadd.f32 %v6178, %v6218
        %v6220 = vpop.f32.mrf.mxu0
        %v6221 = vadd.f32 %v6180, %v6220
        %v6222 = vpop.f32.mrf.mxu0
        %v6223 = vpop.f32.mrf.mxu0
        %6224 = vdwg.mxu0
        %6225 = vmatprep.subr.bf16.mxu0 %v5918
        %6226 = vmatpush1.bf16.msra.mxu0 %v5917
        %6227 = vmatprep.subr.bf16.mxu0 %v5914
        %6228 = vmatpush1.bf16.msra.mxu0 %v5913
        %6229 = vmatprep.subr.bf16.mxu0 %v5910
        %6230 = vmatpush1.bf16.msra.mxu0 %v5909
        %6231 = vmatprep.subr.bf16.mxu0 %v5906
        %6232 = vmatpush1.bf16.msra.mxu0 %v5905
        %6233 = vmatprep.subr.bf16.mxu0 %v5902
        %6234 = vmatpush1.bf16.msra.mxu0 %v5901
        %6235 = vmatprep.subr.bf16.mxu0 %v5898
        %6236 = vmatpush1.bf16.msra.mxu0 %v5897
        %6237 = vmatprep.subr.bf16.mxu0 %v5894
        %6238 = vmatpush1.bf16.msra.mxu0 %v5893
        %6239 = vmatprep.subr.bf16.mxu0 %v5890
        %6240 = vmatpush1.bf16.msra.mxu0 %v5889
        %6241 = vmatprep.subr.bf16.mxu0 %v5950
        %6242 = vmatpush2.bf16.msra.mxu0 %v5949
        %6243 = vmatprep.subr.bf16.mxu0 %v5946
        %6244 = vmatpush2.bf16.msra.mxu0 %v5945
        %6245 = vmatprep.subr.bf16.mxu0 %v5942
        %6246 = vmatpush2.bf16.msra.mxu0 %v5941
        %6247 = vmatprep.subr.bf16.mxu0 %v5938
        %6248 = vmatpush2.bf16.msra.mxu0 %v5937
        %6249 = vmatprep.subr.bf16.mxu0 %v5934
        %6250 = vmatpush2.bf16.msra.mxu0 %v5933
        %6251 = vmatprep.subr.bf16.mxu0 %v5930
        %6252 = vmatpush2.bf16.msra.mxu0 %v5929
        %6253 = vmatprep.subr.bf16.mxu0 %v5926
        %6254 = vmatpush2.bf16.msra.mxu0 %v5925
        %6255 = vmatprep.subr.bf16.mxu0 %v5922
        %6256 = vmatpush2.bf16.msra.mxu0 %v5921
        %6257 = vmatprep.mubr.bf16.mxu0 %v1594
        %6258 = vmatmul.mubr.bf16.gmra.mxu0 %v1593
        %v6259 = vpop.f32.mrf.mxu0
        %v6260 = vadd.f32 %v5497, %v6259
        %v6261 = vpop.f32.mrf.mxu0
        %v6262 = vadd.f32 %v5499, %v6261
        %v6263 = vpop.f32.mrf.mxu0
        %v6264 = vpop.f32.mrf.mxu0
        %6265 = vdwg.mxu0
        %6266 = vmatprep.subr.bf16.mxu0 %v5982
        %6267 = vmatpush1.bf16.msra.mxu0 %v5981
        %6268 = vmatprep.subr.bf16.mxu0 %v5978
        %6269 = vmatpush1.bf16.msra.mxu0 %v5977
        %6270 = vmatprep.subr.bf16.mxu0 %v5974
        %6271 = vmatpush1.bf16.msra.mxu0 %v5973
        %6272 = vmatprep.subr.bf16.mxu0 %v5970
        %6273 = vmatpush1.bf16.msra.mxu0 %v5969
        %6274 = vmatprep.subr.bf16.mxu0 %v5966
        %6275 = vmatpush1.bf16.msra.mxu0 %v5965
        %6276 = vmatprep.subr.bf16.mxu0 %v5962
        %6277 = vmatpush1.bf16.msra.mxu0 %v5961
        %6278 = vmatprep.subr.bf16.mxu0 %v5958
        %6279 = vmatpush1.bf16.msra.mxu0 %v5957
        %6280 = vmatprep.subr.bf16.mxu0 %v5954
        %6281 = vmatpush1.bf16.msra.mxu0 %v5953
        %6282 = vmatprep.subr.bf16.mxu0 %v6014
        %6283 = vmatpush2.bf16.msra.mxu0 %v6013
        %6284 = vmatprep.subr.bf16.mxu0 %v6010
        %6285 = vmatpush2.bf16.msra.mxu0 %v6009
        %6286 = vmatprep.subr.bf16.mxu0 %v6006
        %6287 = vmatpush2.bf16.msra.mxu0 %v6005
        %6288 = vmatprep.subr.bf16.mxu0 %v6002
        %6289 = vmatpush2.bf16.msra.mxu0 %v6001
        %6290 = vmatprep.subr.bf16.mxu0 %v5998
        %6291 = vmatpush2.bf16.msra.mxu0 %v5997
        %6292 = vmatprep.subr.bf16.mxu0 %v5994
        %6293 = vmatpush2.bf16.msra.mxu0 %v5993
        %6294 = vmatprep.subr.bf16.mxu0 %v5990
        %6295 = vmatpush2.bf16.msra.mxu0 %v5989
        %6296 = vmatprep.subr.bf16.mxu0 %v5986
        %6297 = vmatpush2.bf16.msra.mxu0 %v5985
        %6298 = vmatprep.mubr.bf16.mxu0 %v1596
        %6299 = vmatmul.mubr.bf16.gmra.mxu0 %v1595
        %v6300 = vpop.f32.mrf.mxu0
        %v6301 = vadd.f32 %v6260, %v6300
        %v6302 = vpop.f32.mrf.mxu0
        %v6303 = vadd.f32 %v6262, %v6302
        %v6304 = vpop.f32.mrf.mxu0
        %v6305 = vpop.f32.mrf.mxu0
        %6306 = vdwg.mxu0
        %s6307 = scalar_lea.vmem [#allocation7], 5120
        %v6308 = vld [vmem:[%s6307] sm:$0xff]
        %v6309 = vld [vmem:[%s6307 + $0x8] sm:$0xff]
        %v6310 = vld [vmem:[%s6307 + $0x10] sm:$0xff]
        %v6311 = vld [vmem:[%s6307 + $0x18] sm:$0xff]
        %v6312 = vld [vmem:[%s6307 + $0x20] sm:$0xff]
        %v6313 = vld [vmem:[%s6307 + $0x28] sm:$0xff]
        %v6314 = vld [vmem:[%s6307 + $0x30] sm:$0xff]
        %v6315 = vld [vmem:[%s6307 + $0x38] sm:$0xff]
        %v6316 = vld [vmem:[%s6307 + $0x40] sm:$0xff]
        %v6317 = vld [vmem:[%s6307 + $0x48] sm:$0xff]
        %v6318 = vld [vmem:[%s6307 + $0x50] sm:$0xff]
        %v6319 = vld [vmem:[%s6307 + $0x58] sm:$0xff]
        %v6320 = vld [vmem:[%s6307 + $0x60] sm:$0xff]
        %v6321 = vld [vmem:[%s6307 + $0x68] sm:$0xff]
        %v6322 = vld [vmem:[%s6307 + $0x70] sm:$0xff]
        %v6323 = vld [vmem:[%s6307 + $0x78] sm:$0xff]
        %v6324 = vld [vmem:[%s6307 + $0x80] sm:$0xff]
        %v6325 = vld [vmem:[%s6307 + $0x88] sm:$0xff]
        %v6326 = vld [vmem:[%s6307 + $0x90] sm:$0xff]
        %v6327 = vld [vmem:[%s6307 + $0x98] sm:$0xff]
        %v6328 = vld [vmem:[%s6307 + $0xa0] sm:$0xff]
        %v6329 = vld [vmem:[%s6307 + $0xa8] sm:$0xff]
        %v6330 = vld [vmem:[%s6307 + $0xb0] sm:$0xff]
        %v6331 = vld [vmem:[%s6307 + $0xb8] sm:$0xff]
        %v6332 = vld [vmem:[%s6307 + $0xc0] sm:$0xff]
        %v6333 = vld [vmem:[%s6307 + $0xc8] sm:$0xff]
        %v6334 = vld [vmem:[%s6307 + $0xd0] sm:$0xff]
        %v6335 = vld [vmem:[%s6307 + $0xd8] sm:$0xff]
        %v6336 = vld [vmem:[%s6307 + $0xe0] sm:$0xff]
        %v6337 = vld [vmem:[%s6307 + $0xe8] sm:$0xff]
        %v6338 = vld [vmem:[%s6307 + $0xf0] sm:$0xff]
        %v6339 = vld [vmem:[%s6307 + $0xf8] sm:$0xff]
        %v6340 = vld [vmem:[%s6307 + $0x100] sm:$0xff]
        %v6341 = vld [vmem:[%s6307 + $0x108] sm:$0xff]
        %v6342 = vld [vmem:[%s6307 + $0x110] sm:$0xff]
        %v6343 = vld [vmem:[%s6307 + $0x118] sm:$0xff]
        %v6344 = vld [vmem:[%s6307 + $0x120] sm:$0xff]
        %v6345 = vld [vmem:[%s6307 + $0x128] sm:$0xff]
        %v6346 = vld [vmem:[%s6307 + $0x130] sm:$0xff]
        %v6347 = vld [vmem:[%s6307 + $0x138] sm:$0xff]
        %v6348 = vld [vmem:[%s6307 + $0x140] sm:$0xff]
        %v6349 = vld [vmem:[%s6307 + $0x148] sm:$0xff]
        %v6350 = vld [vmem:[%s6307 + $0x150] sm:$0xff]
        %v6351 = vld [vmem:[%s6307 + $0x158] sm:$0xff]
        %v6352 = vld [vmem:[%s6307 + $0x160] sm:$0xff]
        %v6353 = vld [vmem:[%s6307 + $0x168] sm:$0xff]
        %v6354 = vld [vmem:[%s6307 + $0x170] sm:$0xff]
        %v6355 = vld [vmem:[%s6307 + $0x178] sm:$0xff]
        %v6356 = vld [vmem:[%s6307 + $0x180] sm:$0xff]
        %v6357 = vld [vmem:[%s6307 + $0x188] sm:$0xff]
        %v6358 = vld [vmem:[%s6307 + $0x190] sm:$0xff]
        %v6359 = vld [vmem:[%s6307 + $0x198] sm:$0xff]
        %v6360 = vld [vmem:[%s6307 + $0x1a0] sm:$0xff]
        %v6361 = vld [vmem:[%s6307 + $0x1a8] sm:$0xff]
        %v6362 = vld [vmem:[%s6307 + $0x1b0] sm:$0xff]
        %v6363 = vld [vmem:[%s6307 + $0x1b8] sm:$0xff]
        %v6364 = vld [vmem:[%s6307 + $0x1c0] sm:$0xff]
        %v6365 = vld [vmem:[%s6307 + $0x1c8] sm:$0xff]
        %v6366 = vld [vmem:[%s6307 + $0x1d0] sm:$0xff]
        %v6367 = vld [vmem:[%s6307 + $0x1d8] sm:$0xff]
        %v6368 = vld [vmem:[%s6307 + $0x1e0] sm:$0xff]
        %v6369 = vld [vmem:[%s6307 + $0x1e8] sm:$0xff]
        %v6370 = vld [vmem:[%s6307 + $0x1f0] sm:$0xff]
        %v6371 = vld [vmem:[%s6307 + $0x1f8] sm:$0xff]
        %v6372 = vld [vmem:[%s6307 + $0x200] sm:$0xff]
        %v6373 = vld [vmem:[%s6307 + $0x208] sm:$0xff]
        %v6374 = vld [vmem:[%s6307 + $0x210] sm:$0xff]
        %v6375 = vld [vmem:[%s6307 + $0x218] sm:$0xff]
        %v6376 = vld [vmem:[%s6307 + $0x220] sm:$0xff]
        %v6377 = vld [vmem:[%s6307 + $0x228] sm:$0xff]
        %v6378 = vld [vmem:[%s6307 + $0x230] sm:$0xff]
        %v6379 = vld [vmem:[%s6307 + $0x238] sm:$0xff]
        %v6380 = vld [vmem:[%s6307 + $0x240] sm:$0xff]
        %v6381 = vld [vmem:[%s6307 + $0x248] sm:$0xff]
        %v6382 = vld [vmem:[%s6307 + $0x250] sm:$0xff]
        %v6383 = vld [vmem:[%s6307 + $0x258] sm:$0xff]
        %v6384 = vld [vmem:[%s6307 + $0x260] sm:$0xff]
        %v6385 = vld [vmem:[%s6307 + $0x268] sm:$0xff]
        %v6386 = vld [vmem:[%s6307 + $0x270] sm:$0xff]
        %v6387 = vld [vmem:[%s6307 + $0x278] sm:$0xff]
        %v6388 = vld [vmem:[%s6307 + $0x280] sm:$0xff]
        %v6389 = vld [vmem:[%s6307 + $0x288] sm:$0xff]
        %v6390 = vld [vmem:[%s6307 + $0x290] sm:$0xff]
        %v6391 = vld [vmem:[%s6307 + $0x298] sm:$0xff]
        %v6392 = vld [vmem:[%s6307 + $0x2a0] sm:$0xff]
        %v6393 = vld [vmem:[%s6307 + $0x2a8] sm:$0xff]
        %v6394 = vld [vmem:[%s6307 + $0x2b0] sm:$0xff]
        %v6395 = vld [vmem:[%s6307 + $0x2b8] sm:$0xff]
        %v6396 = vld [vmem:[%s6307 + $0x2c0] sm:$0xff]
        %v6397 = vld [vmem:[%s6307 + $0x2c8] sm:$0xff]
        %v6398 = vld [vmem:[%s6307 + $0x2d0] sm:$0xff]
        %v6399 = vld [vmem:[%s6307 + $0x2d8] sm:$0xff]
        %v6400 = vld [vmem:[%s6307 + $0x2e0] sm:$0xff]
        %v6401 = vld [vmem:[%s6307 + $0x2e8] sm:$0xff]
        %v6402 = vld [vmem:[%s6307 + $0x2f0] sm:$0xff]
        %v6403 = vld [vmem:[%s6307 + $0x2f8] sm:$0xff]
        %v6404 = vld [vmem:[%s6307 + $0x300] sm:$0xff]
        %v6405 = vld [vmem:[%s6307 + $0x308] sm:$0xff]
        %v6406 = vld [vmem:[%s6307 + $0x310] sm:$0xff]
        %v6407 = vld [vmem:[%s6307 + $0x318] sm:$0xff]
        %v6408 = vld [vmem:[%s6307 + $0x320] sm:$0xff]
        %v6409 = vld [vmem:[%s6307 + $0x328] sm:$0xff]
        %v6410 = vld [vmem:[%s6307 + $0x330] sm:$0xff]
        %v6411 = vld [vmem:[%s6307 + $0x338] sm:$0xff]
        %v6412 = vld [vmem:[%s6307 + $0x340] sm:$0xff]
        %v6413 = vld [vmem:[%s6307 + $0x348] sm:$0xff]
        %v6414 = vld [vmem:[%s6307 + $0x350] sm:$0xff]
        %v6415 = vld [vmem:[%s6307 + $0x358] sm:$0xff]
        %v6416 = vld [vmem:[%s6307 + $0x360] sm:$0xff]
        %v6417 = vld [vmem:[%s6307 + $0x368] sm:$0xff]
        %v6418 = vld [vmem:[%s6307 + $0x370] sm:$0xff]
        %v6419 = vld [vmem:[%s6307 + $0x378] sm:$0xff]
        %v6420 = vld [vmem:[%s6307 + $0x380] sm:$0xff]
        %v6421 = vld [vmem:[%s6307 + $0x388] sm:$0xff]
        %v6422 = vld [vmem:[%s6307 + $0x390] sm:$0xff]
        %v6423 = vld [vmem:[%s6307 + $0x398] sm:$0xff]
        %v6424 = vld [vmem:[%s6307 + $0x3a0] sm:$0xff]
        %v6425 = vld [vmem:[%s6307 + $0x3a8] sm:$0xff]
        %v6426 = vld [vmem:[%s6307 + $0x3b0] sm:$0xff]
        %v6427 = vld [vmem:[%s6307 + $0x3b8] sm:$0xff]
        %v6428 = vld [vmem:[%s6307 + $0x3c0] sm:$0xff]
        %v6429 = vld [vmem:[%s6307 + $0x3c8] sm:$0xff]
        %v6430 = vld [vmem:[%s6307 + $0x3d0] sm:$0xff]
        %v6431 = vld [vmem:[%s6307 + $0x3d8] sm:$0xff]
        %v6432 = vld [vmem:[%s6307 + $0x3e0] sm:$0xff]
        %v6433 = vld [vmem:[%s6307 + $0x3e8] sm:$0xff]
        %v6434 = vld [vmem:[%s6307 + $0x3f0] sm:$0xff]
        %v6435 = vld [vmem:[%s6307 + $0x3f8] sm:$0xff]
        %v6564 = vunpack.c.l.b16 %v6308
        %v6565 = vunpack.c.h.b16 %v6308
        %v6566 = vunpack.c.l.b16 %v6309
        %v6567 = vunpack.c.h.b16 %v6309
        %v6568 = vunpack.c.l.b16 %v6310
        %v6569 = vunpack.c.h.b16 %v6310
        %v6570 = vunpack.c.l.b16 %v6311
        %v6571 = vunpack.c.h.b16 %v6311
        %v6572 = vunpack.c.l.b16 %v6312
        %v6573 = vunpack.c.h.b16 %v6312
        %v6574 = vunpack.c.l.b16 %v6313
        %v6575 = vunpack.c.h.b16 %v6313
        %v6576 = vunpack.c.l.b16 %v6314
        %v6577 = vunpack.c.h.b16 %v6314
        %v6578 = vunpack.c.l.b16 %v6315
        %v6579 = vunpack.c.h.b16 %v6315
        %v6580 = vunpack.c.l.b16 %v6316
        %v6581 = vunpack.c.h.b16 %v6316
        %v6582 = vunpack.c.l.b16 %v6317
        %v6583 = vunpack.c.h.b16 %v6317
        %v6584 = vunpack.c.l.b16 %v6318
        %v6585 = vunpack.c.h.b16 %v6318
        %v6586 = vunpack.c.l.b16 %v6319
        %v6587 = vunpack.c.h.b16 %v6319
        %v6588 = vunpack.c.l.b16 %v6320
        %v6589 = vunpack.c.h.b16 %v6320
        %v6590 = vunpack.c.l.b16 %v6321
        %v6591 = vunpack.c.h.b16 %v6321
        %v6592 = vunpack.c.l.b16 %v6322
        %v6593 = vunpack.c.h.b16 %v6322
        %v6594 = vunpack.c.l.b16 %v6323
        %v6595 = vunpack.c.h.b16 %v6323
        %v6596 = vunpack.c.l.b16 %v6324
        %v6597 = vunpack.c.h.b16 %v6324
        %v6598 = vunpack.c.l.b16 %v6325
        %v6599 = vunpack.c.h.b16 %v6325
        %v6600 = vunpack.c.l.b16 %v6326
        %v6601 = vunpack.c.h.b16 %v6326
        %v6602 = vunpack.c.l.b16 %v6327
        %v6603 = vunpack.c.h.b16 %v6327
        %v6604 = vunpack.c.l.b16 %v6328
        %v6605 = vunpack.c.h.b16 %v6328
        %v6606 = vunpack.c.l.b16 %v6329
        %v6607 = vunpack.c.h.b16 %v6329
        %v6608 = vunpack.c.l.b16 %v6330
        %v6609 = vunpack.c.h.b16 %v6330
        %v6610 = vunpack.c.l.b16 %v6331
        %v6611 = vunpack.c.h.b16 %v6331
        %v6612 = vunpack.c.l.b16 %v6332
        %v6613 = vunpack.c.h.b16 %v6332
        %v6614 = vunpack.c.l.b16 %v6333
        %v6615 = vunpack.c.h.b16 %v6333
        %v6616 = vunpack.c.l.b16 %v6334
        %v6617 = vunpack.c.h.b16 %v6334
        %v6618 = vunpack.c.l.b16 %v6335
        %v6619 = vunpack.c.h.b16 %v6335
        %v6620 = vunpack.c.l.b16 %v6336
        %v6621 = vunpack.c.h.b16 %v6336
        %v6622 = vunpack.c.l.b16 %v6337
        %v6623 = vunpack.c.h.b16 %v6337
        %v6624 = vunpack.c.l.b16 %v6338
        %v6625 = vunpack.c.h.b16 %v6338
        %v6626 = vunpack.c.l.b16 %v6339
        %v6627 = vunpack.c.h.b16 %v6339
        %v6628 = vunpack.c.l.b16 %v6340
        %v6629 = vunpack.c.h.b16 %v6340
        %v6630 = vunpack.c.l.b16 %v6341
        %v6631 = vunpack.c.h.b16 %v6341
        %v6632 = vunpack.c.l.b16 %v6342
        %v6633 = vunpack.c.h.b16 %v6342
        %v6634 = vunpack.c.l.b16 %v6343
        %v6635 = vunpack.c.h.b16 %v6343
        %v6636 = vunpack.c.l.b16 %v6344
        %v6637 = vunpack.c.h.b16 %v6344
        %v6638 = vunpack.c.l.b16 %v6345
        %v6639 = vunpack.c.h.b16 %v6345
        %v6640 = vunpack.c.l.b16 %v6346
        %v6641 = vunpack.c.h.b16 %v6346
        %v6642 = vunpack.c.l.b16 %v6347
        %v6643 = vunpack.c.h.b16 %v6347
        %v6644 = vunpack.c.l.b16 %v6348
        %v6645 = vunpack.c.h.b16 %v6348
        %v6646 = vunpack.c.l.b16 %v6349
        %v6647 = vunpack.c.h.b16 %v6349
        %v6648 = vunpack.c.l.b16 %v6350
        %v6649 = vunpack.c.h.b16 %v6350
        %v6650 = vunpack.c.l.b16 %v6351
        %v6651 = vunpack.c.h.b16 %v6351
        %v6652 = vunpack.c.l.b16 %v6352
        %v6653 = vunpack.c.h.b16 %v6352
        %v6654 = vunpack.c.l.b16 %v6353
        %v6655 = vunpack.c.h.b16 %v6353
        %v6656 = vunpack.c.l.b16 %v6354
        %v6657 = vunpack.c.h.b16 %v6354
        %v6658 = vunpack.c.l.b16 %v6355
        %v6659 = vunpack.c.h.b16 %v6355
        %v6660 = vunpack.c.l.b16 %v6356
        %v6661 = vunpack.c.h.b16 %v6356
        %v6662 = vunpack.c.l.b16 %v6357
        %v6663 = vunpack.c.h.b16 %v6357
        %v6664 = vunpack.c.l.b16 %v6358
        %v6665 = vunpack.c.h.b16 %v6358
        %v6666 = vunpack.c.l.b16 %v6359
        %v6667 = vunpack.c.h.b16 %v6359
        %v6668 = vunpack.c.l.b16 %v6360
        %v6669 = vunpack.c.h.b16 %v6360
        %v6670 = vunpack.c.l.b16 %v6361
        %v6671 = vunpack.c.h.b16 %v6361
        %v6672 = vunpack.c.l.b16 %v6362
        %v6673 = vunpack.c.h.b16 %v6362
        %v6674 = vunpack.c.l.b16 %v6363
        %v6675 = vunpack.c.h.b16 %v6363
        %v6676 = vunpack.c.l.b16 %v6364
        %v6677 = vunpack.c.h.b16 %v6364
        %v6678 = vunpack.c.l.b16 %v6365
        %v6679 = vunpack.c.h.b16 %v6365
        %v6680 = vunpack.c.l.b16 %v6366
        %v6681 = vunpack.c.h.b16 %v6366
        %v6682 = vunpack.c.l.b16 %v6367
        %v6683 = vunpack.c.h.b16 %v6367
        %v6684 = vunpack.c.l.b16 %v6368
        %v6685 = vunpack.c.h.b16 %v6368
        %v6686 = vunpack.c.l.b16 %v6369
        %v6687 = vunpack.c.h.b16 %v6369
        %v6688 = vunpack.c.l.b16 %v6370
        %v6689 = vunpack.c.h.b16 %v6370
        %v6690 = vunpack.c.l.b16 %v6371
        %v6691 = vunpack.c.h.b16 %v6371
        %v6692 = vunpack.c.l.b16 %v6372
        %v6693 = vunpack.c.h.b16 %v6372
        %v6694 = vunpack.c.l.b16 %v6373
        %v6695 = vunpack.c.h.b16 %v6373
        %v6696 = vunpack.c.l.b16 %v6374
        %v6697 = vunpack.c.h.b16 %v6374
        %v6698 = vunpack.c.l.b16 %v6375
        %v6699 = vunpack.c.h.b16 %v6375
        %v6700 = vunpack.c.l.b16 %v6376
        %v6701 = vunpack.c.h.b16 %v6376
        %v6702 = vunpack.c.l.b16 %v6377
        %v6703 = vunpack.c.h.b16 %v6377
        %v6704 = vunpack.c.l.b16 %v6378
        %v6705 = vunpack.c.h.b16 %v6378
        %v6706 = vunpack.c.l.b16 %v6379
        %v6707 = vunpack.c.h.b16 %v6379
        %v6708 = vunpack.c.l.b16 %v6380
        %v6709 = vunpack.c.h.b16 %v6380
        %v6710 = vunpack.c.l.b16 %v6381
        %v6711 = vunpack.c.h.b16 %v6381
        %v6712 = vunpack.c.l.b16 %v6382
        %v6713 = vunpack.c.h.b16 %v6382
        %v6714 = vunpack.c.l.b16 %v6383
        %v6715 = vunpack.c.h.b16 %v6383
        %v6716 = vunpack.c.l.b16 %v6384
        %v6717 = vunpack.c.h.b16 %v6384
        %v6718 = vunpack.c.l.b16 %v6385
        %v6719 = vunpack.c.h.b16 %v6385
        %v6720 = vunpack.c.l.b16 %v6386
        %v6721 = vunpack.c.h.b16 %v6386
        %v6722 = vunpack.c.l.b16 %v6387
        %v6723 = vunpack.c.h.b16 %v6387
        %v6724 = vunpack.c.l.b16 %v6388
        %v6725 = vunpack.c.h.b16 %v6388
        %v6726 = vunpack.c.l.b16 %v6389
        %v6727 = vunpack.c.h.b16 %v6389
        %v6728 = vunpack.c.l.b16 %v6390
        %v6729 = vunpack.c.h.b16 %v6390
        %v6730 = vunpack.c.l.b16 %v6391
        %v6731 = vunpack.c.h.b16 %v6391
        %v6732 = vunpack.c.l.b16 %v6392
        %v6733 = vunpack.c.h.b16 %v6392
        %v6734 = vunpack.c.l.b16 %v6393
        %v6735 = vunpack.c.h.b16 %v6393
        %v6736 = vunpack.c.l.b16 %v6394
        %v6737 = vunpack.c.h.b16 %v6394
        %v6738 = vunpack.c.l.b16 %v6395
        %v6739 = vunpack.c.h.b16 %v6395
        %v6740 = vunpack.c.l.b16 %v6396
        %v6741 = vunpack.c.h.b16 %v6396
        %v6742 = vunpack.c.l.b16 %v6397
        %v6743 = vunpack.c.h.b16 %v6397
        %v6744 = vunpack.c.l.b16 %v6398
        %v6745 = vunpack.c.h.b16 %v6398
        %v6746 = vunpack.c.l.b16 %v6399
        %v6747 = vunpack.c.h.b16 %v6399
        %v6748 = vunpack.c.l.b16 %v6400
        %v6749 = vunpack.c.h.b16 %v6400
        %v6750 = vunpack.c.l.b16 %v6401
        %v6751 = vunpack.c.h.b16 %v6401
        %v6752 = vunpack.c.l.b16 %v6402
        %v6753 = vunpack.c.h.b16 %v6402
        %v6754 = vunpack.c.l.b16 %v6403
        %v6755 = vunpack.c.h.b16 %v6403
        %v6756 = vunpack.c.l.b16 %v6404
        %v6757 = vunpack.c.h.b16 %v6404
        %v6758 = vunpack.c.l.b16 %v6405
        %v6759 = vunpack.c.h.b16 %v6405
        %v6760 = vunpack.c.l.b16 %v6406
        %v6761 = vunpack.c.h.b16 %v6406
        %v6762 = vunpack.c.l.b16 %v6407
        %v6763 = vunpack.c.h.b16 %v6407
        %v6764 = vunpack.c.l.b16 %v6408
        %v6765 = vunpack.c.h.b16 %v6408
        %v6766 = vunpack.c.l.b16 %v6409
        %v6767 = vunpack.c.h.b16 %v6409
        %v6768 = vunpack.c.l.b16 %v6410
        %v6769 = vunpack.c.h.b16 %v6410
        %v6770 = vunpack.c.l.b16 %v6411
        %v6771 = vunpack.c.h.b16 %v6411
        %v6772 = vunpack.c.l.b16 %v6412
        %v6773 = vunpack.c.h.b16 %v6412
        %v6774 = vunpack.c.l.b16 %v6413
        %v6775 = vunpack.c.h.b16 %v6413
        %v6776 = vunpack.c.l.b16 %v6414
        %v6777 = vunpack.c.h.b16 %v6414
        %v6778 = vunpack.c.l.b16 %v6415
        %v6779 = vunpack.c.h.b16 %v6415
        %v6780 = vunpack.c.l.b16 %v6416
        %v6781 = vunpack.c.h.b16 %v6416
        %v6782 = vunpack.c.l.b16 %v6417
        %v6783 = vunpack.c.h.b16 %v6417
        %v6784 = vunpack.c.l.b16 %v6418
        %v6785 = vunpack.c.h.b16 %v6418
        %v6786 = vunpack.c.l.b16 %v6419
        %v6787 = vunpack.c.h.b16 %v6419
        %v6788 = vunpack.c.l.b16 %v6420
        %v6789 = vunpack.c.h.b16 %v6420
        %v6790 = vunpack.c.l.b16 %v6421
        %v6791 = vunpack.c.h.b16 %v6421
        %v6792 = vunpack.c.l.b16 %v6422
        %v6793 = vunpack.c.h.b16 %v6422
        %v6794 = vunpack.c.l.b16 %v6423
        %v6795 = vunpack.c.h.b16 %v6423
        %v6796 = vunpack.c.l.b16 %v6424
        %v6797 = vunpack.c.h.b16 %v6424
        %v6798 = vunpack.c.l.b16 %v6425
        %v6799 = vunpack.c.h.b16 %v6425
        %v6800 = vunpack.c.l.b16 %v6426
        %v6801 = vunpack.c.h.b16 %v6426
        %v6802 = vunpack.c.l.b16 %v6427
        %v6803 = vunpack.c.h.b16 %v6427
        %v6804 = vunpack.c.l.b16 %v6428
        %v6805 = vunpack.c.h.b16 %v6428
        %v6806 = vunpack.c.l.b16 %v6429
        %v6807 = vunpack.c.h.b16 %v6429
        %v6808 = vunpack.c.l.b16 %v6430
        %v6809 = vunpack.c.h.b16 %v6430
        %v6810 = vunpack.c.l.b16 %v6431
        %v6811 = vunpack.c.h.b16 %v6431
        %v6812 = vunpack.c.l.b16 %v6432
        %v6813 = vunpack.c.h.b16 %v6432
        %v6814 = vunpack.c.l.b16 %v6433
        %v6815 = vunpack.c.h.b16 %v6433
        %v6816 = vunpack.c.l.b16 %v6434
        %v6817 = vunpack.c.h.b16 %v6434
        %v6818 = vunpack.c.l.b16 %v6435
        %v6819 = vunpack.c.h.b16 %v6435
        %v6820 = vpack.c.b16 %v6568, %v6564
        %v6821 = vpack.c.b16 %v6569, %v6565
        %v6822 = vpack.c.b16 %v6570, %v6566
        %v6823 = vpack.c.b16 %v6571, %v6567
        %v6824 = vpack.c.b16 %v6576, %v6572
        %v6825 = vpack.c.b16 %v6577, %v6573
        %v6826 = vpack.c.b16 %v6578, %v6574
        %v6827 = vpack.c.b16 %v6579, %v6575
        %v6828 = vpack.c.b16 %v6584, %v6580
        %v6829 = vpack.c.b16 %v6585, %v6581
        %v6830 = vpack.c.b16 %v6586, %v6582
        %v6831 = vpack.c.b16 %v6587, %v6583
        %v6832 = vpack.c.b16 %v6592, %v6588
        %v6833 = vpack.c.b16 %v6593, %v6589
        %v6834 = vpack.c.b16 %v6594, %v6590
        %v6835 = vpack.c.b16 %v6595, %v6591
        %v6836 = vpack.c.b16 %v6600, %v6596
        %v6837 = vpack.c.b16 %v6601, %v6597
        %v6838 = vpack.c.b16 %v6602, %v6598
        %v6839 = vpack.c.b16 %v6603, %v6599
        %v6840 = vpack.c.b16 %v6608, %v6604
        %v6841 = vpack.c.b16 %v6609, %v6605
        %v6842 = vpack.c.b16 %v6610, %v6606
        %v6843 = vpack.c.b16 %v6611, %v6607
        %v6844 = vpack.c.b16 %v6616, %v6612
        %v6845 = vpack.c.b16 %v6617, %v6613
        %v6846 = vpack.c.b16 %v6618, %v6614
        %v6847 = vpack.c.b16 %v6619, %v6615
        %v6848 = vpack.c.b16 %v6624, %v6620
        %v6849 = vpack.c.b16 %v6625, %v6621
        %v6850 = vpack.c.b16 %v6626, %v6622
        %v6851 = vpack.c.b16 %v6627, %v6623
        %v6852 = vpack.c.b16 %v6632, %v6628
        %v6853 = vpack.c.b16 %v6633, %v6629
        %v6854 = vpack.c.b16 %v6634, %v6630
        %v6855 = vpack.c.b16 %v6635, %v6631
        %v6856 = vpack.c.b16 %v6640, %v6636
        %v6857 = vpack.c.b16 %v6641, %v6637
        %v6858 = vpack.c.b16 %v6642, %v6638
        %v6859 = vpack.c.b16 %v6643, %v6639
        %v6860 = vpack.c.b16 %v6648, %v6644
        %v6861 = vpack.c.b16 %v6649, %v6645
        %v6862 = vpack.c.b16 %v6650, %v6646
        %v6863 = vpack.c.b16 %v6651, %v6647
        %v6864 = vpack.c.b16 %v6656, %v6652
        %v6865 = vpack.c.b16 %v6657, %v6653
        %v6866 = vpack.c.b16 %v6658, %v6654
        %v6867 = vpack.c.b16 %v6659, %v6655
        %v6868 = vpack.c.b16 %v6664, %v6660
        %v6869 = vpack.c.b16 %v6665, %v6661
        %v6870 = vpack.c.b16 %v6666, %v6662
        %v6871 = vpack.c.b16 %v6667, %v6663
        %v6872 = vpack.c.b16 %v6672, %v6668
        %v6873 = vpack.c.b16 %v6673, %v6669
        %v6874 = vpack.c.b16 %v6674, %v6670
        %v6875 = vpack.c.b16 %v6675, %v6671
        %v6876 = vpack.c.b16 %v6680, %v6676
        %v6877 = vpack.c.b16 %v6681, %v6677
        %v6878 = vpack.c.b16 %v6682, %v6678
        %v6879 = vpack.c.b16 %v6683, %v6679
        %v6880 = vpack.c.b16 %v6688, %v6684
        %v6881 = vpack.c.b16 %v6689, %v6685
        %v6882 = vpack.c.b16 %v6690, %v6686
        %v6883 = vpack.c.b16 %v6691, %v6687
        %v6884 = vpack.c.b16 %v6696, %v6692
        %v6885 = vpack.c.b16 %v6697, %v6693
        %v6886 = vpack.c.b16 %v6698, %v6694
        %v6887 = vpack.c.b16 %v6699, %v6695
        %v6888 = vpack.c.b16 %v6704, %v6700
        %v6889 = vpack.c.b16 %v6705, %v6701
        %v6890 = vpack.c.b16 %v6706, %v6702
        %v6891 = vpack.c.b16 %v6707, %v6703
        %v6892 = vpack.c.b16 %v6712, %v6708
        %v6893 = vpack.c.b16 %v6713, %v6709
        %v6894 = vpack.c.b16 %v6714, %v6710
        %v6895 = vpack.c.b16 %v6715, %v6711
        %v6896 = vpack.c.b16 %v6720, %v6716
        %v6897 = vpack.c.b16 %v6721, %v6717
        %v6898 = vpack.c.b16 %v6722, %v6718
        %v6899 = vpack.c.b16 %v6723, %v6719
        %v6900 = vpack.c.b16 %v6728, %v6724
        %v6901 = vpack.c.b16 %v6729, %v6725
        %v6902 = vpack.c.b16 %v6730, %v6726
        %v6903 = vpack.c.b16 %v6731, %v6727
        %v6904 = vpack.c.b16 %v6736, %v6732
        %v6905 = vpack.c.b16 %v6737, %v6733
        %v6906 = vpack.c.b16 %v6738, %v6734
        %v6907 = vpack.c.b16 %v6739, %v6735
        %v6908 = vpack.c.b16 %v6744, %v6740
        %v6909 = vpack.c.b16 %v6745, %v6741
        %v6910 = vpack.c.b16 %v6746, %v6742
        %v6911 = vpack.c.b16 %v6747, %v6743
        %v6912 = vpack.c.b16 %v6752, %v6748
        %v6913 = vpack.c.b16 %v6753, %v6749
        %v6914 = vpack.c.b16 %v6754, %v6750
        %v6915 = vpack.c.b16 %v6755, %v6751
        %v6916 = vpack.c.b16 %v6760, %v6756
        %v6917 = vpack.c.b16 %v6761, %v6757
        %v6918 = vpack.c.b16 %v6762, %v6758
        %v6919 = vpack.c.b16 %v6763, %v6759
        %v6920 = vpack.c.b16 %v6768, %v6764
        %v6921 = vpack.c.b16 %v6769, %v6765
        %v6922 = vpack.c.b16 %v6770, %v6766
        %v6923 = vpack.c.b16 %v6771, %v6767
        %v6924 = vpack.c.b16 %v6776, %v6772
        %v6925 = vpack.c.b16 %v6777, %v6773
        %v6926 = vpack.c.b16 %v6778, %v6774
        %v6927 = vpack.c.b16 %v6779, %v6775
        %v6928 = vpack.c.b16 %v6784, %v6780
        %v6929 = vpack.c.b16 %v6785, %v6781
        %v6930 = vpack.c.b16 %v6786, %v6782
        %v6931 = vpack.c.b16 %v6787, %v6783
        %v6932 = vpack.c.b16 %v6792, %v6788
        %v6933 = vpack.c.b16 %v6793, %v6789
        %v6934 = vpack.c.b16 %v6794, %v6790
        %v6935 = vpack.c.b16 %v6795, %v6791
        %v6936 = vpack.c.b16 %v6800, %v6796
        %v6937 = vpack.c.b16 %v6801, %v6797
        %v6938 = vpack.c.b16 %v6802, %v6798
        %v6939 = vpack.c.b16 %v6803, %v6799
        %v6940 = vpack.c.b16 %v6808, %v6804
        %v6941 = vpack.c.b16 %v6809, %v6805
        %v6942 = vpack.c.b16 %v6810, %v6806
        %v6943 = vpack.c.b16 %v6811, %v6807
        %v6944 = vpack.c.b16 %v6816, %v6812
        %v6945 = vpack.c.b16 %v6817, %v6813
        %v6946 = vpack.c.b16 %v6818, %v6814
        %v6947 = vpack.c.b16 %v6819, %v6815
        %7076 = vmatprep.subr.bf16.mxu0 %v6849
        %7077 = vmatpush1.bf16.msra.mxu0 %v6848
        %7078 = vmatprep.subr.bf16.mxu0 %v6845
        %7079 = vmatpush1.bf16.msra.mxu0 %v6844
        %7080 = vmatprep.subr.bf16.mxu0 %v6841
        %7081 = vmatpush1.bf16.msra.mxu0 %v6840
        %7082 = vmatprep.subr.bf16.mxu0 %v6837
        %7083 = vmatpush1.bf16.msra.mxu0 %v6836
        %7084 = vmatprep.subr.bf16.mxu0 %v6833
        %7085 = vmatpush1.bf16.msra.mxu0 %v6832
        %7086 = vmatprep.subr.bf16.mxu0 %v6829
        %7087 = vmatpush1.bf16.msra.mxu0 %v6828
        %7088 = vmatprep.subr.bf16.mxu0 %v6825
        %7089 = vmatpush1.bf16.msra.mxu0 %v6824
        %7090 = vmatprep.subr.bf16.mxu0 %v6821
        %7091 = vmatpush1.bf16.msra.mxu0 %v6820
        %7092 = vmatprep.subr.bf16.mxu0 %v6881
        %7093 = vmatpush2.bf16.msra.mxu0 %v6880
        %7094 = vmatprep.subr.bf16.mxu0 %v6877
        %7095 = vmatpush2.bf16.msra.mxu0 %v6876
        %7096 = vmatprep.subr.bf16.mxu0 %v6873
        %7097 = vmatpush2.bf16.msra.mxu0 %v6872
        %7098 = vmatprep.subr.bf16.mxu0 %v6869
        %7099 = vmatpush2.bf16.msra.mxu0 %v6868
        %7100 = vmatprep.subr.bf16.mxu0 %v6865
        %7101 = vmatpush2.bf16.msra.mxu0 %v6864
        %7102 = vmatprep.subr.bf16.mxu0 %v6861
        %7103 = vmatpush2.bf16.msra.mxu0 %v6860
        %7104 = vmatprep.subr.bf16.mxu0 %v6857
        %7105 = vmatpush2.bf16.msra.mxu0 %v6856
        %7106 = vmatprep.subr.bf16.mxu0 %v6853
        %7107 = vmatpush2.bf16.msra.mxu0 %v6852
        %7108 = vmatprep.mubr.bf16.mxu0 %v1555
        %7109 = vmatmul.mubr.bf16.gmra.mxu0 %v1554
        %v7110 = vpop.f32.mrf.mxu0
        %v7111 = vadd.f32 0.0, %v7110
        %v7112 = vpop.f32.mrf.mxu0
        %v7113 = vadd.f32 0.0, %v7112
        %v7114 = vpop.f32.mrf.mxu0
        %v7115 = vpop.f32.mrf.mxu0
        %7116 = vdwg.mxu0
        %7117 = vmatprep.subr.bf16.mxu0 %v6913
        %7118 = vmatpush1.bf16.msra.mxu0 %v6912
        %7119 = vmatprep.subr.bf16.mxu0 %v6909
        %7120 = vmatpush1.bf16.msra.mxu0 %v6908
        %7121 = vmatprep.subr.bf16.mxu0 %v6905
        %7122 = vmatpush1.bf16.msra.mxu0 %v6904
        %7123 = vmatprep.subr.bf16.mxu0 %v6901
        %7124 = vmatpush1.bf16.msra.mxu0 %v6900
        %7125 = vmatprep.subr.bf16.mxu0 %v6897
        %7126 = vmatpush1.bf16.msra.mxu0 %v6896
        %7127 = vmatprep.subr.bf16.mxu0 %v6893
        %7128 = vmatpush1.bf16.msra.mxu0 %v6892
        %7129 = vmatprep.subr.bf16.mxu0 %v6889
        %7130 = vmatpush1.bf16.msra.mxu0 %v6888
        %7131 = vmatprep.subr.bf16.mxu0 %v6885
        %7132 = vmatpush1.bf16.msra.mxu0 %v6884
        %7133 = vmatprep.subr.bf16.mxu0 %v6945
        %7134 = vmatpush2.bf16.msra.mxu0 %v6944
        %7135 = vmatprep.subr.bf16.mxu0 %v6941
        %7136 = vmatpush2.bf16.msra.mxu0 %v6940
        %7137 = vmatprep.subr.bf16.mxu0 %v6937
        %7138 = vmatpush2.bf16.msra.mxu0 %v6936
        %7139 = vmatprep.subr.bf16.mxu0 %v6933
        %7140 = vmatpush2.bf16.msra.mxu0 %v6932
        %7141 = vmatprep.subr.bf16.mxu0 %v6929
        %7142 = vmatpush2.bf16.msra.mxu0 %v6928
        %7143 = vmatprep.subr.bf16.mxu0 %v6925
        %7144 = vmatpush2.bf16.msra.mxu0 %v6924
        %7145 = vmatprep.subr.bf16.mxu0 %v6921
        %7146 = vmatpush2.bf16.msra.mxu0 %v6920
        %7147 = vmatprep.subr.bf16.mxu0 %v6917
        %7148 = vmatpush2.bf16.msra.mxu0 %v6916
        %7149 = vmatprep.mubr.bf16.mxu0 %v1557
        %7150 = vmatmul.mubr.bf16.gmra.mxu0 %v1556
        %v7151 = vpop.f32.mrf.mxu0
        %v7152 = vadd.f32 %v7111, %v7151
        %v7153 = vpop.f32.mrf.mxu0
        %v7154 = vadd.f32 %v7113, %v7153
        %v7155 = vpop.f32.mrf.mxu0
        %v7156 = vpop.f32.mrf.mxu0
        %7157 = vdwg.mxu0
        %7158 = vmatprep.subr.bf16.mxu0 %v6851
        %7159 = vmatpush1.bf16.msra.mxu0 %v6850
        %7160 = vmatprep.subr.bf16.mxu0 %v6847
        %7161 = vmatpush1.bf16.msra.mxu0 %v6846
        %7162 = vmatprep.subr.bf16.mxu0 %v6843
        %7163 = vmatpush1.bf16.msra.mxu0 %v6842
        %7164 = vmatprep.subr.bf16.mxu0 %v6839
        %7165 = vmatpush1.bf16.msra.mxu0 %v6838
        %7166 = vmatprep.subr.bf16.mxu0 %v6835
        %7167 = vmatpush1.bf16.msra.mxu0 %v6834
        %7168 = vmatprep.subr.bf16.mxu0 %v6831
        %7169 = vmatpush1.bf16.msra.mxu0 %v6830
        %7170 = vmatprep.subr.bf16.mxu0 %v6827
        %7171 = vmatpush1.bf16.msra.mxu0 %v6826
        %7172 = vmatprep.subr.bf16.mxu0 %v6823
        %7173 = vmatpush1.bf16.msra.mxu0 %v6822
        %7174 = vmatprep.subr.bf16.mxu0 %v6883
        %7175 = vmatpush2.bf16.msra.mxu0 %v6882
        %7176 = vmatprep.subr.bf16.mxu0 %v6879
        %7177 = vmatpush2.bf16.msra.mxu0 %v6878
        %7178 = vmatprep.subr.bf16.mxu0 %v6875
        %7179 = vmatpush2.bf16.msra.mxu0 %v6874
        %7180 = vmatprep.subr.bf16.mxu0 %v6871
        %7181 = vmatpush2.bf16.msra.mxu0 %v6870
        %7182 = vmatprep.subr.bf16.mxu0 %v6867
        %7183 = vmatpush2.bf16.msra.mxu0 %v6866
        %7184 = vmatprep.subr.bf16.mxu0 %v6863
        %7185 = vmatpush2.bf16.msra.mxu0 %v6862
        %7186 = vmatprep.subr.bf16.mxu0 %v6859
        %7187 = vmatpush2.bf16.msra.mxu0 %v6858
        %7188 = vmatprep.subr.bf16.mxu0 %v6855
        %7189 = vmatpush2.bf16.msra.mxu0 %v6854
        %7190 = vmatprep.mubr.bf16.mxu0 %v1555
        %7191 = vmatmul.mubr.bf16.gmra.mxu0 %v1554
        %v7192 = vpop.f32.mrf.mxu0
        %v7193 = vadd.f32 0.0, %v7192
        %v7194 = vpop.f32.mrf.mxu0
        %v7195 = vadd.f32 0.0, %v7194
        %v7196 = vpop.f32.mrf.mxu0
        %v7197 = vpop.f32.mrf.mxu0
        %7198 = vdwg.mxu0
        %7199 = vmatprep.subr.bf16.mxu0 %v6915
        %7200 = vmatpush1.bf16.msra.mxu0 %v6914
        %7201 = vmatprep.subr.bf16.mxu0 %v6911
        %7202 = vmatpush1.bf16.msra.mxu0 %v6910
        %7203 = vmatprep.subr.bf16.mxu0 %v6907
        %7204 = vmatpush1.bf16.msra.mxu0 %v6906
        %7205 = vmatprep.subr.bf16.mxu0 %v6903
        %7206 = vmatpush1.bf16.msra.mxu0 %v6902
        %7207 = vmatprep.subr.bf16.mxu0 %v6899
        %7208 = vmatpush1.bf16.msra.mxu0 %v6898
        %7209 = vmatprep.subr.bf16.mxu0 %v6895
        %7210 = vmatpush1.bf16.msra.mxu0 %v6894
        %7211 = vmatprep.subr.bf16.mxu0 %v6891
        %7212 = vmatpush1.bf16.msra.mxu0 %v6890
        %7213 = vmatprep.subr.bf16.mxu0 %v6887
        %7214 = vmatpush1.bf16.msra.mxu0 %v6886
        %7215 = vmatprep.subr.bf16.mxu0 %v6947
        %7216 = vmatpush2.bf16.msra.mxu0 %v6946
        %7217 = vmatprep.subr.bf16.mxu0 %v6943
        %7218 = vmatpush2.bf16.msra.mxu0 %v6942
        %7219 = vmatprep.subr.bf16.mxu0 %v6939
        %7220 = vmatpush2.bf16.msra.mxu0 %v6938
        %7221 = vmatprep.subr.bf16.mxu0 %v6935
        %7222 = vmatpush2.bf16.msra.mxu0 %v6934
        %7223 = vmatprep.subr.bf16.mxu0 %v6931
        %7224 = vmatpush2.bf16.msra.mxu0 %v6930
        %7225 = vmatprep.subr.bf16.mxu0 %v6927
        %7226 = vmatpush2.bf16.msra.mxu0 %v6926
        %7227 = vmatprep.subr.bf16.mxu0 %v6923
        %7228 = vmatpush2.bf16.msra.mxu0 %v6922
        %7229 = vmatprep.subr.bf16.mxu0 %v6919
        %7230 = vmatpush2.bf16.msra.mxu0 %v6918
        %7231 = vmatprep.mubr.bf16.mxu0 %v1557
        %7232 = vmatmul.mubr.bf16.gmra.mxu0 %v1556
        %v7233 = vpop.f32.mrf.mxu0
        %v7234 = vadd.f32 %v7193, %v7233
        %v7235 = vpop.f32.mrf.mxu0
        %v7236 = vadd.f32 %v7195, %v7235
        %v7237 = vpop.f32.mrf.mxu0
        %v7238 = vpop.f32.mrf.mxu0
        %7239 = vdwg.mxu0
        %v7240 = vadd.f32 %v6219, %v7152
        %v7241 = vadd.f32 %v6221, %v7154
        %v7242 = vadd.f32 %v6301, %v7234
        %v7243 = vadd.f32 %v6303, %v7236
        %v7244 = vmax.f32 %v4437, %v7240
        %v7245 = vmax.f32 %v4438, %v7241
        %v7246 = vmax.f32 %v4439, %v7242
        %v7247 = vmax.f32 %v4440, %v7243
        %7248 = vmatprep.subr.bf16.mxu0 %v2309
        %7249 = vmatpush1.bf16.msra.mxu0 %v2308
        %7250 = vmatprep.subr.bf16.mxu0 %v2305
        %7251 = vmatpush1.bf16.msra.mxu0 %v2304
        %7252 = vmatprep.subr.bf16.mxu0 %v2301
        %7253 = vmatpush1.bf16.msra.mxu0 %v2300
        %7254 = vmatprep.subr.bf16.mxu0 %v2297
        %7255 = vmatpush1.bf16.msra.mxu0 %v2296
        %7256 = vmatprep.subr.bf16.mxu0 %v2293
        %7257 = vmatpush1.bf16.msra.mxu0 %v2292
        %7258 = vmatprep.subr.bf16.mxu0 %v2289
        %7259 = vmatpush1.bf16.msra.mxu0 %v2288
        %7260 = vmatprep.subr.bf16.mxu0 %v2285
        %7261 = vmatpush1.bf16.msra.mxu0 %v2284
        %7262 = vmatprep.subr.bf16.mxu0 %v2281
        %7263 = vmatpush1.bf16.msra.mxu0 %v2280
        %7264 = vmatprep.subr.bf16.mxu0 %v2341
        %7265 = vmatpush2.bf16.msra.mxu0 %v2340
        %7266 = vmatprep.subr.bf16.mxu0 %v2337
        %7267 = vmatpush2.bf16.msra.mxu0 %v2336
        %7268 = vmatprep.subr.bf16.mxu0 %v2333
        %7269 = vmatpush2.bf16.msra.mxu0 %v2332
        %7270 = vmatprep.subr.bf16.mxu0 %v2329
        %7271 = vmatpush2.bf16.msra.mxu0 %v2328
        %7272 = vmatprep.subr.bf16.mxu0 %v2325
        %7273 = vmatpush2.bf16.msra.mxu0 %v2324
        %7274 = vmatprep.subr.bf16.mxu0 %v2321
        %7275 = vmatpush2.bf16.msra.mxu0 %v2320
        %7276 = vmatprep.subr.bf16.mxu0 %v2317
        %7277 = vmatpush2.bf16.msra.mxu0 %v2316
        %7278 = vmatprep.subr.bf16.mxu0 %v2313
        %7279 = vmatpush2.bf16.msra.mxu0 %v2312
        %7280 = vmatprep.mubr.bf16.mxu0 %v1555
        %7281 = vmatmul.mubr.bf16.gmra.mxu0 %v1554
        %v7282 = vpop.f32.mrf.mxu0
        %v7283 = vadd.f32 0.0, %v7282
        %v7284 = vpop.f32.mrf.mxu0
        %v7285 = vadd.f32 0.0, %v7284
        %v7286 = vpop.f32.mrf.mxu0
        %v7287 = vpop.f32.mrf.mxu0
        %7288 = vdwg.mxu0
        %7289 = vmatprep.subr.bf16.mxu0 %v2373
        %7290 = vmatpush1.bf16.msra.mxu0 %v2372
        %7291 = vmatprep.subr.bf16.mxu0 %v2369
        %7292 = vmatpush1.bf16.msra.mxu0 %v2368
        %7293 = vmatprep.subr.bf16.mxu0 %v2365
        %7294 = vmatpush1.bf16.msra.mxu0 %v2364
        %7295 = vmatprep.subr.bf16.mxu0 %v2361
        %7296 = vmatpush1.bf16.msra.mxu0 %v2360
        %7297 = vmatprep.subr.bf16.mxu0 %v2357
        %7298 = vmatpush1.bf16.msra.mxu0 %v2356
        %7299 = vmatprep.subr.bf16.mxu0 %v2353
        %7300 = vmatpush1.bf16.msra.mxu0 %v2352
        %7301 = vmatprep.subr.bf16.mxu0 %v2349
        %7302 = vmatpush1.bf16.msra.mxu0 %v2348
        %7303 = vmatprep.subr.bf16.mxu0 %v2345
        %7304 = vmatpush1.bf16.msra.mxu0 %v2344
        %7305 = vmatprep.subr.bf16.mxu0 %v2405
        %7306 = vmatpush2.bf16.msra.mxu0 %v2404
        %7307 = vmatprep.subr.bf16.mxu0 %v2401
        %7308 = vmatpush2.bf16.msra.mxu0 %v2400
        %7309 = vmatprep.subr.bf16.mxu0 %v2397
        %7310 = vmatpush2.bf16.msra.mxu0 %v2396
        %7311 = vmatprep.subr.bf16.mxu0 %v2393
        %7312 = vmatpush2.bf16.msra.mxu0 %v2392
        %7313 = vmatprep.subr.bf16.mxu0 %v2389
        %7314 = vmatpush2.bf16.msra.mxu0 %v2388
        %7315 = vmatprep.subr.bf16.mxu0 %v2385
        %7316 = vmatpush2.bf16.msra.mxu0 %v2384
        %7317 = vmatprep.subr.bf16.mxu0 %v2381
        %7318 = vmatpush2.bf16.msra.mxu0 %v2380
        %7319 = vmatprep.subr.bf16.mxu0 %v2377
        %7320 = vmatpush2.bf16.msra.mxu0 %v2376
        %7321 = vmatprep.mubr.bf16.mxu0 %v1557
        %7322 = vmatmul.mubr.bf16.gmra.mxu0 %v1556
        %v7323 = vpop.f32.mrf.mxu0
        %v7324 = vadd.f32 %v7283, %v7323
        %v7325 = vpop.f32.mrf.mxu0
        %v7326 = vadd.f32 %v7285, %v7325
        %v7327 = vpop.f32.mrf.mxu0
        %v7328 = vpop.f32.mrf.mxu0
        %7329 = vdwg.mxu0
        %7330 = vmatprep.subr.bf16.mxu0 %v2311
        %7331 = vmatpush1.bf16.msra.mxu0 %v2310
        %7332 = vmatprep.subr.bf16.mxu0 %v2307
        %7333 = vmatpush1.bf16.msra.mxu0 %v2306
        %7334 = vmatprep.subr.bf16.mxu0 %v2303
        %7335 = vmatpush1.bf16.msra.mxu0 %v2302
        %7336 = vmatprep.subr.bf16.mxu0 %v2299
        %7337 = vmatpush1.bf16.msra.mxu0 %v2298
        %7338 = vmatprep.subr.bf16.mxu0 %v2295
        %7339 = vmatpush1.bf16.msra.mxu0 %v2294
        %7340 = vmatprep.subr.bf16.mxu0 %v2291
        %7341 = vmatpush1.bf16.msra.mxu0 %v2290
        %7342 = vmatprep.subr.bf16.mxu0 %v2287
        %7343 = vmatpush1.bf16.msra.mxu0 %v2286
        %7344 = vmatprep.subr.bf16.mxu0 %v2283
        %7345 = vmatpush1.bf16.msra.mxu0 %v2282
        %7346 = vmatprep.subr.bf16.mxu0 %v2343
        %7347 = vmatpush2.bf16.msra.mxu0 %v2342
        %7348 = vmatprep.subr.bf16.mxu0 %v2339
        %7349 = vmatpush2.bf16.msra.mxu0 %v2338
        %7350 = vmatprep.subr.bf16.mxu0 %v2335
        %7351 = vmatpush2.bf16.msra.mxu0 %v2334
        %7352 = vmatprep.subr.bf16.mxu0 %v2331
        %7353 = vmatpush2.bf16.msra.mxu0 %v2330
        %7354 = vmatprep.subr.bf16.mxu0 %v2327
        %7355 = vmatpush2.bf16.msra.mxu0 %v2326
        %7356 = vmatprep.subr.bf16.mxu0 %v2323
        %7357 = vmatpush2.bf16.msra.mxu0 %v2322
        %7358 = vmatprep.subr.bf16.mxu0 %v2319
        %7359 = vmatpush2.bf16.msra.mxu0 %v2318
        %7360 = vmatprep.subr.bf16.mxu0 %v2315
        %7361 = vmatpush2.bf16.msra.mxu0 %v2314
        %7362 = vmatprep.mubr.bf16.mxu0 %v1555
        %7363 = vmatmul.mubr.bf16.gmra.mxu0 %v1554
        %v7364 = vpop.f32.mrf.mxu0
        %v7365 = vadd.f32 0.0, %v7364
        %v7366 = vpop.f32.mrf.mxu0
        %v7367 = vadd.f32 0.0, %v7366
        %v7368 = vpop.f32.mrf.mxu0
        %v7369 = vpop.f32.mrf.mxu0
        %7370 = vdwg.mxu0
        %7371 = vmatprep.subr.bf16.mxu0 %v2375
        %7372 = vmatpush1.bf16.msra.mxu0 %v2374
        %7373 = vmatprep.subr.bf16.mxu0 %v2371
        %7374 = vmatpush1.bf16.msra.mxu0 %v2370
        %7375 = vmatprep.subr.bf16.mxu0 %v2367
        %7376 = vmatpush1.bf16.msra.mxu0 %v2366
        %7377 = vmatprep.subr.bf16.mxu0 %v2363
        %7378 = vmatpush1.bf16.msra.mxu0 %v2362
        %7379 = vmatprep.subr.bf16.mxu0 %v2359
        %7380 = vmatpush1.bf16.msra.mxu0 %v2358
        %7381 = vmatprep.subr.bf16.mxu0 %v2355
        %7382 = vmatpush1.bf16.msra.mxu0 %v2354
        %7383 = vmatprep.subr.bf16.mxu0 %v2351
        %7384 = vmatpush1.bf16.msra.mxu0 %v2350
        %7385 = vmatprep.subr.bf16.mxu0 %v2347
        %7386 = vmatpush1.bf16.msra.mxu0 %v2346
        %7387 = vmatprep.subr.bf16.mxu0 %v2407
        %7388 = vmatpush2.bf16.msra.mxu0 %v2406
        %7389 = vmatprep.subr.bf16.mxu0 %v2403
        %7390 = vmatpush2.bf16.msra.mxu0 %v2402
        %7391 = vmatprep.subr.bf16.mxu0 %v2399
        %7392 = vmatpush2.bf16.msra.mxu0 %v2398
        %7393 = vmatprep.subr.bf16.mxu0 %v2395
        %7394 = vmatpush2.bf16.msra.mxu0 %v2394
        %7395 = vmatprep.subr.bf16.mxu0 %v2391
        %7396 = vmatpush2.bf16.msra.mxu0 %v2390
        %7397 = vmatprep.subr.bf16.mxu0 %v2387
        %7398 = vmatpush2.bf16.msra.mxu0 %v2386
        %7399 = vmatprep.subr.bf16.mxu0 %v2383
        %7400 = vmatpush2.bf16.msra.mxu0 %v2382
        %7401 = vmatprep.subr.bf16.mxu0 %v2379
        %7402 = vmatpush2.bf16.msra.mxu0 %v2378
        %7403 = vmatprep.mubr.bf16.mxu0 %v1557
        %7404 = vmatmul.mubr.bf16.gmra.mxu0 %v1556
        %v7405 = vpop.f32.mrf.mxu0
        %v7406 = vadd.f32 %v7365, %v7405
        %v7407 = vpop.f32.mrf.mxu0
        %v7408 = vadd.f32 %v7367, %v7407
        %v7409 = vpop.f32.mrf.mxu0
        %v7410 = vpop.f32.mrf.mxu0
        %7411 = vdwg.mxu0
        %7412 = vmatprep.subr.bf16.mxu0 %v3113
        %7413 = vmatpush1.bf16.msra.mxu0 %v3112
        %7414 = vmatprep.subr.bf16.mxu0 %v3109
        %7415 = vmatpush1.bf16.msra.mxu0 %v3108
        %7416 = vmatprep.subr.bf16.mxu0 %v3105
        %7417 = vmatpush1.bf16.msra.mxu0 %v3104
        %7418 = vmatprep.subr.bf16.mxu0 %v3101
        %7419 = vmatpush1.bf16.msra.mxu0 %v3100
        %7420 = vmatprep.subr.bf16.mxu0 %v3097
        %7421 = vmatpush1.bf16.msra.mxu0 %v3096
        %7422 = vmatprep.subr.bf16.mxu0 %v3093
        %7423 = vmatpush1.bf16.msra.mxu0 %v3092
        %7424 = vmatprep.subr.bf16.mxu0 %v3089
        %7425 = vmatpush1.bf16.msra.mxu0 %v3088
        %7426 = vmatprep.subr.bf16.mxu0 %v3085
        %7427 = vmatpush1.bf16.msra.mxu0 %v3084
        %7428 = vmatprep.subr.bf16.mxu0 %v3145
        %7429 = vmatpush2.bf16.msra.mxu0 %v3144
        %7430 = vmatprep.subr.bf16.mxu0 %v3141
        %7431 = vmatpush2.bf16.msra.mxu0 %v3140
        %7432 = vmatprep.subr.bf16.mxu0 %v3137
        %7433 = vmatpush2.bf16.msra.mxu0 %v3136
        %7434 = vmatprep.subr.bf16.mxu0 %v3133
        %7435 = vmatpush2.bf16.msra.mxu0 %v3132
        %7436 = vmatprep.subr.bf16.mxu0 %v3129
        %7437 = vmatpush2.bf16.msra.mxu0 %v3128
        %7438 = vmatprep.subr.bf16.mxu0 %v3125
        %7439 = vmatpush2.bf16.msra.mxu0 %v3124
        %7440 = vmatprep.subr.bf16.mxu0 %v3121
        %7441 = vmatpush2.bf16.msra.mxu0 %v3120
        %7442 = vmatprep.subr.bf16.mxu0 %v3117
        %7443 = vmatpush2.bf16.msra.mxu0 %v3116
        %7444 = vmatprep.mubr.bf16.mxu0 %v1199
        %7445 = vmatmul.mubr.bf16.gmra.mxu0 %v1198
        %v7446 = vpop.f32.mrf.mxu0
        %v7447 = vadd.f32 %v7324, %v7446
        %v7448 = vpop.f32.mrf.mxu0
        %v7449 = vadd.f32 %v7326, %v7448
        %v7450 = vpop.f32.mrf.mxu0
        %v7451 = vpop.f32.mrf.mxu0
        %7452 = vdwg.mxu0
        %7453 = vmatprep.subr.bf16.mxu0 %v3177
        %7454 = vmatpush1.bf16.msra.mxu0 %v3176
        %7455 = vmatprep.subr.bf16.mxu0 %v3173
        %7456 = vmatpush1.bf16.msra.mxu0 %v3172
        %7457 = vmatprep.subr.bf16.mxu0 %v3169
        %7458 = vmatpush1.bf16.msra.mxu0 %v3168
        %7459 = vmatprep.subr.bf16.mxu0 %v3165
        %7460 = vmatpush1.bf16.msra.mxu0 %v3164
        %7461 = vmatprep.subr.bf16.mxu0 %v3161
        %7462 = vmatpush1.bf16.msra.mxu0 %v3160
        %7463 = vmatprep.subr.bf16.mxu0 %v3157
        %7464 = vmatpush1.bf16.msra.mxu0 %v3156
        %7465 = vmatprep.subr.bf16.mxu0 %v3153
        %7466 = vmatpush1.bf16.msra.mxu0 %v3152
        %7467 = vmatprep.subr.bf16.mxu0 %v3149
        %7468 = vmatpush1.bf16.msra.mxu0 %v3148
        %7469 = vmatprep.subr.bf16.mxu0 %v3209
        %7470 = vmatpush2.bf16.msra.mxu0 %v3208
        %7471 = vmatprep.subr.bf16.mxu0 %v3205
        %7472 = vmatpush2.bf16.msra.mxu0 %v3204
        %7473 = vmatprep.subr.bf16.mxu0 %v3201
        %7474 = vmatpush2.bf16.msra.mxu0 %v3200
        %7475 = vmatprep.subr.bf16.mxu0 %v3197
        %7476 = vmatpush2.bf16.msra.mxu0 %v3196
        %7477 = vmatprep.subr.bf16.mxu0 %v3193
        %7478 = vmatpush2.bf16.msra.mxu0 %v3192
        %7479 = vmatprep.subr.bf16.mxu0 %v3189
        %7480 = vmatpush2.bf16.msra.mxu0 %v3188
        %7481 = vmatprep.subr.bf16.mxu0 %v3185
        %7482 = vmatpush2.bf16.msra.mxu0 %v3184
        %7483 = vmatprep.subr.bf16.mxu0 %v3181
        %7484 = vmatpush2.bf16.msra.mxu0 %v3180
        %7485 = vmatprep.mubr.bf16.mxu0 %v1201
        %7486 = vmatmul.mubr.bf16.gmra.mxu0 %v1200
        %v7487 = vpop.f32.mrf.mxu0
        %v7488 = vadd.f32 %v7447, %v7487
        %v7489 = vpop.f32.mrf.mxu0
        %v7490 = vadd.f32 %v7449, %v7489
        %v7491 = vpop.f32.mrf.mxu0
        %v7492 = vpop.f32.mrf.mxu0
        %7493 = vdwg.mxu0
        %7494 = vmatprep.subr.bf16.mxu0 %v3115
        %7495 = vmatpush1.bf16.msra.mxu0 %v3114
        %7496 = vmatprep.subr.bf16.mxu0 %v3111
        %7497 = vmatpush1.bf16.msra.mxu0 %v3110
        %7498 = vmatprep.subr.bf16.mxu0 %v3107
        %7499 = vmatpush1.bf16.msra.mxu0 %v3106
        %7500 = vmatprep.subr.bf16.mxu0 %v3103
        %7501 = vmatpush1.bf16.msra.mxu0 %v3102
        %7502 = vmatprep.subr.bf16.mxu0 %v3099
        %7503 = vmatpush1.bf16.msra.mxu0 %v3098
        %7504 = vmatprep.subr.bf16.mxu0 %v3095
        %7505 = vmatpush1.bf16.msra.mxu0 %v3094
        %7506 = vmatprep.subr.bf16.mxu0 %v3091
        %7507 = vmatpush1.bf16.msra.mxu0 %v3090
        %7508 = vmatprep.subr.bf16.mxu0 %v3087
        %7509 = vmatpush1.bf16.msra.mxu0 %v3086
        %7510 = vmatprep.subr.bf16.mxu0 %v3147
        %7511 = vmatpush2.bf16.msra.mxu0 %v3146
        %7512 = vmatprep.subr.bf16.mxu0 %v3143
        %7513 = vmatpush2.bf16.msra.mxu0 %v3142
        %7514 = vmatprep.subr.bf16.mxu0 %v3139
        %7515 = vmatpush2.bf16.msra.mxu0 %v3138
        %7516 = vmatprep.subr.bf16.mxu0 %v3135
        %7517 = vmatpush2.bf16.msra.mxu0 %v3134
        %7518 = vmatprep.subr.bf16.mxu0 %v3131
        %7519 = vmatpush2.bf16.msra.mxu0 %v3130
        %7520 = vmatprep.subr.bf16.mxu0 %v3127
        %7521 = vmatpush2.bf16.msra.mxu0 %v3126
        %7522 = vmatprep.subr.bf16.mxu0 %v3123
        %7523 = vmatpush2.bf16.msra.mxu0 %v3122
        %7524 = vmatprep.subr.bf16.mxu0 %v3119
        %7525 = vmatpush2.bf16.msra.mxu0 %v3118
        %7526 = vmatprep.mubr.bf16.mxu0 %v1199
        %7527 = vmatmul.mubr.bf16.gmra.mxu0 %v1198
        %v7528 = vpop.f32.mrf.mxu0
        %v7529 = vadd.f32 %v7406, %v7528
        %v7530 = vpop.f32.mrf.mxu0
        %v7531 = vadd.f32 %v7408, %v7530
        %v7532 = vpop.f32.mrf.mxu0
        %v7533 = vpop.f32.mrf.mxu0
        %7534 = vdwg.mxu0
        %7535 = vmatprep.subr.bf16.mxu0 %v3179
        %7536 = vmatpush1.bf16.msra.mxu0 %v3178
        %7537 = vmatprep.subr.bf16.mxu0 %v3175
        %7538 = vmatpush1.bf16.msra.mxu0 %v3174
        %7539 = vmatprep.subr.bf16.mxu0 %v3171
        %7540 = vmatpush1.bf16.msra.mxu0 %v3170
        %7541 = vmatprep.subr.bf16.mxu0 %v3167
        %7542 = vmatpush1.bf16.msra.mxu0 %v3166
        %7543 = vmatprep.subr.bf16.mxu0 %v3163
        %7544 = vmatpush1.bf16.msra.mxu0 %v3162
        %7545 = vmatprep.subr.bf16.mxu0 %v3159
        %7546 = vmatpush1.bf16.msra.mxu0 %v3158
        %7547 = vmatprep.subr.bf16.mxu0 %v3155
        %7548 = vmatpush1.bf16.msra.mxu0 %v3154
        %7549 = vmatprep.subr.bf16.mxu0 %v3151
        %7550 = vmatpush1.bf16.msra.mxu0 %v3150
        %7551 = vmatprep.subr.bf16.mxu0 %v3211
        %7552 = vmatpush2.bf16.msra.mxu0 %v3210
        %7553 = vmatprep.subr.bf16.mxu0 %v3207
        %7554 = vmatpush2.bf16.msra.mxu0 %v3206
        %7555 = vmatprep.subr.bf16.mxu0 %v3203
        %7556 = vmatpush2.bf16.msra.mxu0 %v3202
        %7557 = vmatprep.subr.bf16.mxu0 %v3199
        %7558 = vmatpush2.bf16.msra.mxu0 %v3198
        %7559 = vmatprep.subr.bf16.mxu0 %v3195
        %7560 = vmatpush2.bf16.msra.mxu0 %v3194
        %7561 = vmatprep.subr.bf16.mxu0 %v3191
        %7562 = vmatpush2.bf16.msra.mxu0 %v3190
        %7563 = vmatprep.subr.bf16.mxu0 %v3187
        %7564 = vmatpush2.bf16.msra.mxu0 %v3186
        %7565 = vmatprep.subr.bf16.mxu0 %v3183
        %7566 = vmatpush2.bf16.msra.mxu0 %v3182
        %7567 = vmatprep.mubr.bf16.mxu0 %v1201
        %7568 = vmatmul.mubr.bf16.gmra.mxu0 %v1200
        %v7569 = vpop.f32.mrf.mxu0
        %v7570 = vadd.f32 %v7529, %v7569
        %v7571 = vpop.f32.mrf.mxu0
        %v7572 = vadd.f32 %v7531, %v7571
        %v7573 = vpop.f32.mrf.mxu0
        %v7574 = vpop.f32.mrf.mxu0
        %7575 = vdwg.mxu0
        %7576 = vmatprep.subr.bf16.mxu0 %v4046
        %7577 = vmatpush1.bf16.msra.mxu0 %v4045
        %7578 = vmatprep.subr.bf16.mxu0 %v4042
        %7579 = vmatpush1.bf16.msra.mxu0 %v4041
        %7580 = vmatprep.subr.bf16.mxu0 %v4038
        %7581 = vmatpush1.bf16.msra.mxu0 %v4037
        %7582 = vmatprep.subr.bf16.mxu0 %v4034
        %7583 = vmatpush1.bf16.msra.mxu0 %v4033
        %7584 = vmatprep.subr.bf16.mxu0 %v4030
        %7585 = vmatpush1.bf16.msra.mxu0 %v4029
        %7586 = vmatprep.subr.bf16.mxu0 %v4026
        %7587 = vmatpush1.bf16.msra.mxu0 %v4025
        %7588 = vmatprep.subr.bf16.mxu0 %v4022
        %7589 = vmatpush1.bf16.msra.mxu0 %v4021
        %7590 = vmatprep.subr.bf16.mxu0 %v4018
        %7591 = vmatpush1.bf16.msra.mxu0 %v4017
        %7592 = vmatprep.subr.bf16.mxu0 %v4078
        %7593 = vmatpush2.bf16.msra.mxu0 %v4077
        %7594 = vmatprep.subr.bf16.mxu0 %v4074
        %7595 = vmatpush2.bf16.msra.mxu0 %v4073
        %7596 = vmatprep.subr.bf16.mxu0 %v4070
        %7597 = vmatpush2.bf16.msra.mxu0 %v4069
        %7598 = vmatprep.subr.bf16.mxu0 %v4066
        %7599 = vmatpush2.bf16.msra.mxu0 %v4065
        %7600 = vmatprep.subr.bf16.mxu0 %v4062
        %7601 = vmatpush2.bf16.msra.mxu0 %v4061
        %7602 = vmatprep.subr.bf16.mxu0 %v4058
        %7603 = vmatpush2.bf16.msra.mxu0 %v4057
        %7604 = vmatprep.subr.bf16.mxu0 %v4054
        %7605 = vmatpush2.bf16.msra.mxu0 %v4053
        %7606 = vmatprep.subr.bf16.mxu0 %v4050
        %7607 = vmatpush2.bf16.msra.mxu0 %v4049
        %7608 = vmatprep.mubr.bf16.mxu0 %v1631
        %7609 = vmatmul.mubr.bf16.gmra.mxu0 %v1628
        %v7610 = vpop.f32.mrf.mxu0
        %v7611 = vadd.f32 0.0, %v7610
        %v7612 = vpop.f32.mrf.mxu0
        %v7613 = vadd.f32 0.0, %v7612
        %v7614 = vpop.f32.mrf.mxu0
        %v7615 = vpop.f32.mrf.mxu0
        %7616 = vdwg.mxu0
        %7617 = vmatprep.subr.bf16.mxu0 %v4110
        %7618 = vmatpush1.bf16.msra.mxu0 %v4109
        %7619 = vmatprep.subr.bf16.mxu0 %v4106
        %7620 = vmatpush1.bf16.msra.mxu0 %v4105
        %7621 = vmatprep.subr.bf16.mxu0 %v4102
        %7622 = vmatpush1.bf16.msra.mxu0 %v4101
        %7623 = vmatprep.subr.bf16.mxu0 %v4098
        %7624 = vmatpush1.bf16.msra.mxu0 %v4097
        %7625 = vmatprep.subr.bf16.mxu0 %v4094
        %7626 = vmatpush1.bf16.msra.mxu0 %v4093
        %7627 = vmatprep.subr.bf16.mxu0 %v4090
        %7628 = vmatpush1.bf16.msra.mxu0 %v4089
        %7629 = vmatprep.subr.bf16.mxu0 %v4086
        %7630 = vmatpush1.bf16.msra.mxu0 %v4085
        %7631 = vmatprep.subr.bf16.mxu0 %v4082
        %7632 = vmatpush1.bf16.msra.mxu0 %v4081
        %7633 = vmatprep.subr.bf16.mxu0 %v4142
        %7634 = vmatpush2.bf16.msra.mxu0 %v4141
        %7635 = vmatprep.subr.bf16.mxu0 %v4138
        %7636 = vmatpush2.bf16.msra.mxu0 %v4137
        %7637 = vmatprep.subr.bf16.mxu0 %v4134
        %7638 = vmatpush2.bf16.msra.mxu0 %v4133
        %7639 = vmatprep.subr.bf16.mxu0 %v4130
        %7640 = vmatpush2.bf16.msra.mxu0 %v4129
        %7641 = vmatprep.subr.bf16.mxu0 %v4126
        %7642 = vmatpush2.bf16.msra.mxu0 %v4125
        %7643 = vmatprep.subr.bf16.mxu0 %v4122
        %7644 = vmatpush2.bf16.msra.mxu0 %v4121
        %7645 = vmatprep.subr.bf16.mxu0 %v4118
        %7646 = vmatpush2.bf16.msra.mxu0 %v4117
        %7647 = vmatprep.subr.bf16.mxu0 %v4114
        %7648 = vmatpush2.bf16.msra.mxu0 %v4113
        %7649 = vmatprep.mubr.bf16.mxu0 %v1637
        %7650 = vmatmul.mubr.bf16.gmra.mxu0 %v1634
        %v7651 = vpop.f32.mrf.mxu0
        %v7652 = vadd.f32 %v7611, %v7651
        %v7653 = vpop.f32.mrf.mxu0
        %v7654 = vadd.f32 %v7613, %v7653
        %v7655 = vpop.f32.mrf.mxu0
        %v7656 = vpop.f32.mrf.mxu0
        %7657 = vdwg.mxu0
        %7658 = vmatprep.subr.bf16.mxu0 %v4048
        %7659 = vmatpush1.bf16.msra.mxu0 %v4047
        %7660 = vmatprep.subr.bf16.mxu0 %v4044
        %7661 = vmatpush1.bf16.msra.mxu0 %v4043
        %7662 = vmatprep.subr.bf16.mxu0 %v4040
        %7663 = vmatpush1.bf16.msra.mxu0 %v4039
        %7664 = vmatprep.subr.bf16.mxu0 %v4036
        %7665 = vmatpush1.bf16.msra.mxu0 %v4035
        %7666 = vmatprep.subr.bf16.mxu0 %v4032
        %7667 = vmatpush1.bf16.msra.mxu0 %v4031
        %7668 = vmatprep.subr.bf16.mxu0 %v4028
        %7669 = vmatpush1.bf16.msra.mxu0 %v4027
        %7670 = vmatprep.subr.bf16.mxu0 %v4024
        %7671 = vmatpush1.bf16.msra.mxu0 %v4023
        %7672 = vmatprep.subr.bf16.mxu0 %v4020
        %7673 = vmatpush1.bf16.msra.mxu0 %v4019
        %7674 = vmatprep.subr.bf16.mxu0 %v4080
        %7675 = vmatpush2.bf16.msra.mxu0 %v4079
        %7676 = vmatprep.subr.bf16.mxu0 %v4076
        %7677 = vmatpush2.bf16.msra.mxu0 %v4075
        %7678 = vmatprep.subr.bf16.mxu0 %v4072
        %7679 = vmatpush2.bf16.msra.mxu0 %v4071
        %7680 = vmatprep.subr.bf16.mxu0 %v4068
        %7681 = vmatpush2.bf16.msra.mxu0 %v4067
        %7682 = vmatprep.subr.bf16.mxu0 %v4064
        %7683 = vmatpush2.bf16.msra.mxu0 %v4063
        %7684 = vmatprep.subr.bf16.mxu0 %v4060
        %7685 = vmatpush2.bf16.msra.mxu0 %v4059
        %7686 = vmatprep.subr.bf16.mxu0 %v4056
        %7687 = vmatpush2.bf16.msra.mxu0 %v4055
        %7688 = vmatprep.subr.bf16.mxu0 %v4052
        %7689 = vmatpush2.bf16.msra.mxu0 %v4051
        %7690 = vmatprep.mubr.bf16.mxu0 %v1631
        %7691 = vmatmul.mubr.bf16.gmra.mxu0 %v1628
        %v7692 = vpop.f32.mrf.mxu0
        %v7693 = vadd.f32 0.0, %v7692
        %v7694 = vpop.f32.mrf.mxu0
        %v7695 = vadd.f32 0.0, %v7694
        %v7696 = vpop.f32.mrf.mxu0
        %v7697 = vpop.f32.mrf.mxu0
        %7698 = vdwg.mxu0
        %7699 = vmatprep.subr.bf16.mxu0 %v4112
        %7700 = vmatpush1.bf16.msra.mxu0 %v4111
        %7701 = vmatprep.subr.bf16.mxu0 %v4108
        %7702 = vmatpush1.bf16.msra.mxu0 %v4107
        %7703 = vmatprep.subr.bf16.mxu0 %v4104
        %7704 = vmatpush1.bf16.msra.mxu0 %v4103
        %7705 = vmatprep.subr.bf16.mxu0 %v4100
        %7706 = vmatpush1.bf16.msra.mxu0 %v4099
        %7707 = vmatprep.subr.bf16.mxu0 %v4096
        %7708 = vmatpush1.bf16.msra.mxu0 %v4095
        %7709 = vmatprep.subr.bf16.mxu0 %v4092
        %7710 = vmatpush1.bf16.msra.mxu0 %v4091
        %7711 = vmatprep.subr.bf16.mxu0 %v4088
        %7712 = vmatpush1.bf16.msra.mxu0 %v4087
        %7713 = vmatprep.subr.bf16.mxu0 %v4084
        %7714 = vmatpush1.bf16.msra.mxu0 %v4083
        %7715 = vmatprep.subr.bf16.mxu0 %v4144
        %7716 = vmatpush2.bf16.msra.mxu0 %v4143
        %7717 = vmatprep.subr.bf16.mxu0 %v4140
        %7718 = vmatpush2.bf16.msra.mxu0 %v4139
        %7719 = vmatprep.subr.bf16.mxu0 %v4136
        %7720 = vmatpush2.bf16.msra.mxu0 %v4135
        %7721 = vmatprep.subr.bf16.mxu0 %v4132
        %7722 = vmatpush2.bf16.msra.mxu0 %v4131
        %7723 = vmatprep.subr.bf16.mxu0 %v4128
        %7724 = vmatpush2.bf16.msra.mxu0 %v4127
        %7725 = vmatprep.subr.bf16.mxu0 %v4124
        %7726 = vmatpush2.bf16.msra.mxu0 %v4123
        %7727 = vmatprep.subr.bf16.mxu0 %v4120
        %7728 = vmatpush2.bf16.msra.mxu0 %v4119
        %7729 = vmatprep.subr.bf16.mxu0 %v4116
        %7730 = vmatpush2.bf16.msra.mxu0 %v4115
        %7731 = vmatprep.mubr.bf16.mxu0 %v1637
        %7732 = vmatmul.mubr.bf16.gmra.mxu0 %v1634
        %v7733 = vpop.f32.mrf.mxu0
        %v7734 = vadd.f32 %v7693, %v7733
        %v7735 = vpop.f32.mrf.mxu0
        %v7736 = vadd.f32 %v7695, %v7735
        %v7737 = vpop.f32.mrf.mxu0
        %v7738 = vpop.f32.mrf.mxu0
        %7739 = vdwg.mxu0
        %v7740 = vadd.f32 %v7488, %v7652
        %v7741 = vadd.f32 %v7490, %v7654
        %v7742 = vadd.f32 %v7570, %v7734
        %v7743 = vadd.f32 %v7572, %v7736
        %v7744 = vmax.f32 %v7244, %v7740
        %v7745 = vmax.f32 %v7245, %v7741
        %v7746 = vmax.f32 %v7246, %v7742
        %v7747 = vmax.f32 %v7247, %v7743
        %7748 = vmatprep.subr.bf16.mxu0 %v5112
        %7749 = vmatpush1.bf16.msra.mxu0 %v5111
        %7750 = vmatprep.subr.bf16.mxu0 %v5108
        %7751 = vmatpush1.bf16.msra.mxu0 %v5107
        %7752 = vmatprep.subr.bf16.mxu0 %v5104
        %7753 = vmatpush1.bf16.msra.mxu0 %v5103
        %7754 = vmatprep.subr.bf16.mxu0 %v5100
        %7755 = vmatpush1.bf16.msra.mxu0 %v5099
        %7756 = vmatprep.subr.bf16.mxu0 %v5096
        %7757 = vmatpush1.bf16.msra.mxu0 %v5095
        %7758 = vmatprep.subr.bf16.mxu0 %v5092
        %7759 = vmatpush1.bf16.msra.mxu0 %v5091
        %7760 = vmatprep.subr.bf16.mxu0 %v5088
        %7761 = vmatpush1.bf16.msra.mxu0 %v5087
        %7762 = vmatprep.subr.bf16.mxu0 %v5084
        %7763 = vmatpush1.bf16.msra.mxu0 %v5083
        %7764 = vmatprep.subr.bf16.mxu0 %v5144
        %7765 = vmatpush2.bf16.msra.mxu0 %v5143
        %7766 = vmatprep.subr.bf16.mxu0 %v5140
        %7767 = vmatpush2.bf16.msra.mxu0 %v5139
        %7768 = vmatprep.subr.bf16.mxu0 %v5136
        %7769 = vmatpush2.bf16.msra.mxu0 %v5135
        %7770 = vmatprep.subr.bf16.mxu0 %v5132
        %7771 = vmatpush2.bf16.msra.mxu0 %v5131
        %7772 = vmatprep.subr.bf16.mxu0 %v5128
        %7773 = vmatpush2.bf16.msra.mxu0 %v5127
        %7774 = vmatprep.subr.bf16.mxu0 %v5124
        %7775 = vmatpush2.bf16.msra.mxu0 %v5123
        %7776 = vmatprep.subr.bf16.mxu0 %v5120
        %7777 = vmatpush2.bf16.msra.mxu0 %v5119
        %7778 = vmatprep.subr.bf16.mxu0 %v5116
        %7779 = vmatpush2.bf16.msra.mxu0 %v5115
        %7780 = vmatprep.mubr.bf16.mxu0 %v1555
        %7781 = vmatmul.mubr.bf16.gmra.mxu0 %v1554
        %v7782 = vpop.f32.mrf.mxu0
        %v7783 = vadd.f32 0.0, %v7782
        %v7784 = vpop.f32.mrf.mxu0
        %v7785 = vadd.f32 0.0, %v7784
        %v7786 = vpop.f32.mrf.mxu0
        %v7787 = vpop.f32.mrf.mxu0
        %7788 = vdwg.mxu0
        %7789 = vmatprep.subr.bf16.mxu0 %v5176
        %7790 = vmatpush1.bf16.msra.mxu0 %v5175
        %7791 = vmatprep.subr.bf16.mxu0 %v5172
        %7792 = vmatpush1.bf16.msra.mxu0 %v5171
        %7793 = vmatprep.subr.bf16.mxu0 %v5168
        %7794 = vmatpush1.bf16.msra.mxu0 %v5167
        %7795 = vmatprep.subr.bf16.mxu0 %v5164
        %7796 = vmatpush1.bf16.msra.mxu0 %v5163
        %7797 = vmatprep.subr.bf16.mxu0 %v5160
        %7798 = vmatpush1.bf16.msra.mxu0 %v5159
        %7799 = vmatprep.subr.bf16.mxu0 %v5156
        %7800 = vmatpush1.bf16.msra.mxu0 %v5155
        %7801 = vmatprep.subr.bf16.mxu0 %v5152
        %7802 = vmatpush1.bf16.msra.mxu0 %v5151
        %7803 = vmatprep.subr.bf16.mxu0 %v5148
        %7804 = vmatpush1.bf16.msra.mxu0 %v5147
        %7805 = vmatprep.subr.bf16.mxu0 %v5208
        %7806 = vmatpush2.bf16.msra.mxu0 %v5207
        %7807 = vmatprep.subr.bf16.mxu0 %v5204
        %7808 = vmatpush2.bf16.msra.mxu0 %v5203
        %7809 = vmatprep.subr.bf16.mxu0 %v5200
        %7810 = vmatpush2.bf16.msra.mxu0 %v5199
        %7811 = vmatprep.subr.bf16.mxu0 %v5196
        %7812 = vmatpush2.bf16.msra.mxu0 %v5195
        %7813 = vmatprep.subr.bf16.mxu0 %v5192
        %7814 = vmatpush2.bf16.msra.mxu0 %v5191
        %7815 = vmatprep.subr.bf16.mxu0 %v5188
        %7816 = vmatpush2.bf16.msra.mxu0 %v5187
        %7817 = vmatprep.subr.bf16.mxu0 %v5184
        %7818 = vmatpush2.bf16.msra.mxu0 %v5183
        %7819 = vmatprep.subr.bf16.mxu0 %v5180
        %7820 = vmatpush2.bf16.msra.mxu0 %v5179
        %7821 = vmatprep.mubr.bf16.mxu0 %v1557
        %7822 = vmatmul.mubr.bf16.gmra.mxu0 %v1556
        %v7823 = vpop.f32.mrf.mxu0
        %v7824 = vadd.f32 %v7783, %v7823
        %v7825 = vpop.f32.mrf.mxu0
        %v7826 = vadd.f32 %v7785, %v7825
        %v7827 = vpop.f32.mrf.mxu0
        %v7828 = vpop.f32.mrf.mxu0
        %7829 = vdwg.mxu0
        %7830 = vmatprep.subr.bf16.mxu0 %v5114
        %7831 = vmatpush1.bf16.msra.mxu0 %v5113
        %7832 = vmatprep.subr.bf16.mxu0 %v5110
        %7833 = vmatpush1.bf16.msra.mxu0 %v5109
        %7834 = vmatprep.subr.bf16.mxu0 %v5106
        %7835 = vmatpush1.bf16.msra.mxu0 %v5105
        %7836 = vmatprep.subr.bf16.mxu0 %v5102
        %7837 = vmatpush1.bf16.msra.mxu0 %v5101
        %7838 = vmatprep.subr.bf16.mxu0 %v5098
        %7839 = vmatpush1.bf16.msra.mxu0 %v5097
        %7840 = vmatprep.subr.bf16.mxu0 %v5094
        %7841 = vmatpush1.bf16.msra.mxu0 %v5093
        %7842 = vmatprep.subr.bf16.mxu0 %v5090
        %7843 = vmatpush1.bf16.msra.mxu0 %v5089
        %7844 = vmatprep.subr.bf16.mxu0 %v5086
        %7845 = vmatpush1.bf16.msra.mxu0 %v5085
        %7846 = vmatprep.subr.bf16.mxu0 %v5146
        %7847 = vmatpush2.bf16.msra.mxu0 %v5145
        %7848 = vmatprep.subr.bf16.mxu0 %v5142
        %7849 = vmatpush2.bf16.msra.mxu0 %v5141
        %7850 = vmatprep.subr.bf16.mxu0 %v5138
        %7851 = vmatpush2.bf16.msra.mxu0 %v5137
        %7852 = vmatprep.subr.bf16.mxu0 %v5134
        %7853 = vmatpush2.bf16.msra.mxu0 %v5133
        %7854 = vmatprep.subr.bf16.mxu0 %v5130
        %7855 = vmatpush2.bf16.msra.mxu0 %v5129
        %7856 = vmatprep.subr.bf16.mxu0 %v5126
        %7857 = vmatpush2.bf16.msra.mxu0 %v5125
        %7858 = vmatprep.subr.bf16.mxu0 %v5122
        %7859 = vmatpush2.bf16.msra.mxu0 %v5121
        %7860 = vmatprep.subr.bf16.mxu0 %v5118
        %7861 = vmatpush2.bf16.msra.mxu0 %v5117
        %7862 = vmatprep.mubr.bf16.mxu0 %v1555
        %7863 = vmatmul.mubr.bf16.gmra.mxu0 %v1554
        %v7864 = vpop.f32.mrf.mxu0
        %v7865 = vadd.f32 0.0, %v7864
        %v7866 = vpop.f32.mrf.mxu0
        %v7867 = vadd.f32 0.0, %v7866
        %v7868 = vpop.f32.mrf.mxu0
        %v7869 = vpop.f32.mrf.mxu0
        %7870 = vdwg.mxu0
        %7871 = vmatprep.subr.bf16.mxu0 %v5178
        %7872 = vmatpush1.bf16.msra.mxu0 %v5177
        %7873 = vmatprep.subr.bf16.mxu0 %v5174
        %7874 = vmatpush1.bf16.msra.mxu0 %v5173
        %7875 = vmatprep.subr.bf16.mxu0 %v5170
        %7876 = vmatpush1.bf16.msra.mxu0 %v5169
        %7877 = vmatprep.subr.bf16.mxu0 %v5166
        %7878 = vmatpush1.bf16.msra.mxu0 %v5165
        %7879 = vmatprep.subr.bf16.mxu0 %v5162
        %7880 = vmatpush1.bf16.msra.mxu0 %v5161
        %7881 = vmatprep.subr.bf16.mxu0 %v5158
        %7882 = vmatpush1.bf16.msra.mxu0 %v5157
        %7883 = vmatprep.subr.bf16.mxu0 %v5154
        %7884 = vmatpush1.bf16.msra.mxu0 %v5153
        %7885 = vmatprep.subr.bf16.mxu0 %v5150
        %7886 = vmatpush1.bf16.msra.mxu0 %v5149
        %7887 = vmatprep.subr.bf16.mxu0 %v5210
        %7888 = vmatpush2.bf16.msra.mxu0 %v5209
        %7889 = vmatprep.subr.bf16.mxu0 %v5206
        %7890 = vmatpush2.bf16.msra.mxu0 %v5205
        %7891 = vmatprep.subr.bf16.mxu0 %v5202
        %7892 = vmatpush2.bf16.msra.mxu0 %v5201
        %7893 = vmatprep.subr.bf16.mxu0 %v5198
        %7894 = vmatpush2.bf16.msra.mxu0 %v5197
        %7895 = vmatprep.subr.bf16.mxu0 %v5194
        %7896 = vmatpush2.bf16.msra.mxu0 %v5193
        %7897 = vmatprep.subr.bf16.mxu0 %v5190
        %7898 = vmatpush2.bf16.msra.mxu0 %v5189
        %7899 = vmatprep.subr.bf16.mxu0 %v5186
        %7900 = vmatpush2.bf16.msra.mxu0 %v5185
        %7901 = vmatprep.subr.bf16.mxu0 %v5182
        %7902 = vmatpush2.bf16.msra.mxu0 %v5181
        %7903 = vmatprep.mubr.bf16.mxu0 %v1557
        %7904 = vmatmul.mubr.bf16.gmra.mxu0 %v1556
        %v7905 = vpop.f32.mrf.mxu0
        %v7906 = vadd.f32 %v7865, %v7905
        %v7907 = vpop.f32.mrf.mxu0
        %v7908 = vadd.f32 %v7867, %v7907
        %v7909 = vpop.f32.mrf.mxu0
        %v7910 = vpop.f32.mrf.mxu0
        %7911 = vdwg.mxu0
        %7912 = vmatprep.subr.bf16.mxu0 %v5916
        %7913 = vmatpush1.bf16.msra.mxu0 %v5915
        %7914 = vmatprep.subr.bf16.mxu0 %v5912
        %7915 = vmatpush1.bf16.msra.mxu0 %v5911
        %7916 = vmatprep.subr.bf16.mxu0 %v5908
        %7917 = vmatpush1.bf16.msra.mxu0 %v5907
        %7918 = vmatprep.subr.bf16.mxu0 %v5904
        %7919 = vmatpush1.bf16.msra.mxu0 %v5903
        %7920 = vmatprep.subr.bf16.mxu0 %v5900
        %7921 = vmatpush1.bf16.msra.mxu0 %v5899
        %7922 = vmatprep.subr.bf16.mxu0 %v5896
        %7923 = vmatpush1.bf16.msra.mxu0 %v5895
        %7924 = vmatprep.subr.bf16.mxu0 %v5892
        %7925 = vmatpush1.bf16.msra.mxu0 %v5891
        %7926 = vmatprep.subr.bf16.mxu0 %v5888
        %7927 = vmatpush1.bf16.msra.mxu0 %v5887
        %7928 = vmatprep.subr.bf16.mxu0 %v5948
        %7929 = vmatpush2.bf16.msra.mxu0 %v5947
        %7930 = vmatprep.subr.bf16.mxu0 %v5944
        %7931 = vmatpush2.bf16.msra.mxu0 %v5943
        %7932 = vmatprep.subr.bf16.mxu0 %v5940
        %7933 = vmatpush2.bf16.msra.mxu0 %v5939
        %7934 = vmatprep.subr.bf16.mxu0 %v5936
        %7935 = vmatpush2.bf16.msra.mxu0 %v5935
        %7936 = vmatprep.subr.bf16.mxu0 %v5932
        %7937 = vmatpush2.bf16.msra.mxu0 %v5931
        %7938 = vmatprep.subr.bf16.mxu0 %v5928
        %7939 = vmatpush2.bf16.msra.mxu0 %v5927
        %7940 = vmatprep.subr.bf16.mxu0 %v5924
        %7941 = vmatpush2.bf16.msra.mxu0 %v5923
        %7942 = vmatprep.subr.bf16.mxu0 %v5920
        %7943 = vmatpush2.bf16.msra.mxu0 %v5919
        %7944 = vmatprep.mubr.bf16.mxu0 %v1199
        %7945 = vmatmul.mubr.bf16.gmra.mxu0 %v1198
        %v7946 = vpop.f32.mrf.mxu0
        %v7947 = vadd.f32 %v7824, %v7946
        %v7948 = vpop.f32.mrf.mxu0
        %v7949 = vadd.f32 %v7826, %v7948
        %v7950 = vpop.f32.mrf.mxu0
        %v7951 = vpop.f32.mrf.mxu0
        %7952 = vdwg.mxu0
        %7953 = vmatprep.subr.bf16.mxu0 %v5980
        %7954 = vmatpush1.bf16.msra.mxu0 %v5979
        %7955 = vmatprep.subr.bf16.mxu0 %v5976
        %7956 = vmatpush1.bf16.msra.mxu0 %v5975
        %7957 = vmatprep.subr.bf16.mxu0 %v5972
        %7958 = vmatpush1.bf16.msra.mxu0 %v5971
        %7959 = vmatprep.subr.bf16.mxu0 %v5968
        %7960 = vmatpush1.bf16.msra.mxu0 %v5967
        %7961 = vmatprep.subr.bf16.mxu0 %v5964
        %7962 = vmatpush1.bf16.msra.mxu0 %v5963
        %7963 = vmatprep.subr.bf16.mxu0 %v5960
        %7964 = vmatpush1.bf16.msra.mxu0 %v5959
        %7965 = vmatprep.subr.bf16.mxu0 %v5956
        %7966 = vmatpush1.bf16.msra.mxu0 %v5955
        %7967 = vmatprep.subr.bf16.mxu0 %v5952
        %7968 = vmatpush1.bf16.msra.mxu0 %v5951
        %7969 = vmatprep.subr.bf16.mxu0 %v6012
        %7970 = vmatpush2.bf16.msra.mxu0 %v6011
        %7971 = vmatprep.subr.bf16.mxu0 %v6008
        %7972 = vmatpush2.bf16.msra.mxu0 %v6007
        %7973 = vmatprep.subr.bf16.mxu0 %v6004
        %7974 = vmatpush2.bf16.msra.mxu0 %v6003
        %7975 = vmatprep.subr.bf16.mxu0 %v6000
        %7976 = vmatpush2.bf16.msra.mxu0 %v5999
        %7977 = vmatprep.subr.bf16.mxu0 %v5996
        %7978 = vmatpush2.bf16.msra.mxu0 %v5995
        %7979 = vmatprep.subr.bf16.mxu0 %v5992
        %7980 = vmatpush2.bf16.msra.mxu0 %v5991
        %7981 = vmatprep.subr.bf16.mxu0 %v5988
        %7982 = vmatpush2.bf16.msra.mxu0 %v5987
        %7983 = vmatprep.subr.bf16.mxu0 %v5984
        %7984 = vmatpush2.bf16.msra.mxu0 %v5983
        %7985 = vmatprep.mubr.bf16.mxu0 %v1201
        %7986 = vmatmul.mubr.bf16.gmra.mxu0 %v1200
        %v7987 = vpop.f32.mrf.mxu0
        %v7988 = vadd.f32 %v7947, %v7987
        %v7989 = vpop.f32.mrf.mxu0
        %v7990 = vadd.f32 %v7949, %v7989
        %v7991 = vpop.f32.mrf.mxu0
        %v7992 = vpop.f32.mrf.mxu0
        %7993 = vdwg.mxu0
        %7994 = vmatprep.subr.bf16.mxu0 %v5918
        %7995 = vmatpush1.bf16.msra.mxu0 %v5917
        %7996 = vmatprep.subr.bf16.mxu0 %v5914
        %7997 = vmatpush1.bf16.msra.mxu0 %v5913
        %7998 = vmatprep.subr.bf16.mxu0 %v5910
        %7999 = vmatpush1.bf16.msra.mxu0 %v5909
        %8000 = vmatprep.subr.bf16.mxu0 %v5906
        %8001 = vmatpush1.bf16.msra.mxu0 %v5905
        %8002 = vmatprep.subr.bf16.mxu0 %v5902
        %8003 = vmatpush1.bf16.msra.mxu0 %v5901
        %8004 = vmatprep.subr.bf16.mxu0 %v5898
        %8005 = vmatpush1.bf16.msra.mxu0 %v5897
        %8006 = vmatprep.subr.bf16.mxu0 %v5894
        %8007 = vmatpush1.bf16.msra.mxu0 %v5893
        %8008 = vmatprep.subr.bf16.mxu0 %v5890
        %8009 = vmatpush1.bf16.msra.mxu0 %v5889
        %8010 = vmatprep.subr.bf16.mxu0 %v5950
        %8011 = vmatpush2.bf16.msra.mxu0 %v5949
        %8012 = vmatprep.subr.bf16.mxu0 %v5946
        %8013 = vmatpush2.bf16.msra.mxu0 %v5945
        %8014 = vmatprep.subr.bf16.mxu0 %v5942
        %8015 = vmatpush2.bf16.msra.mxu0 %v5941
        %8016 = vmatprep.subr.bf16.mxu0 %v5938
        %8017 = vmatpush2.bf16.msra.mxu0 %v5937
        %8018 = vmatprep.subr.bf16.mxu0 %v5934
        %8019 = vmatpush2.bf16.msra.mxu0 %v5933
        %8020 = vmatprep.subr.bf16.mxu0 %v5930
        %8021 = vmatpush2.bf16.msra.mxu0 %v5929
        %8022 = vmatprep.subr.bf16.mxu0 %v5926
        %8023 = vmatpush2.bf16.msra.mxu0 %v5925
        %8024 = vmatprep.subr.bf16.mxu0 %v5922
        %8025 = vmatpush2.bf16.msra.mxu0 %v5921
        %8026 = vmatprep.mubr.bf16.mxu0 %v1199
        %8027 = vmatmul.mubr.bf16.gmra.mxu0 %v1198
        %v8028 = vpop.f32.mrf.mxu0
        %v8029 = vadd.f32 %v7906, %v8028
        %v8030 = vpop.f32.mrf.mxu0
        %v8031 = vadd.f32 %v7908, %v8030
        %v8032 = vpop.f32.mrf.mxu0
        %v8033 = vpop.f32.mrf.mxu0
        %8034 = vdwg.mxu0
        %8035 = vmatprep.subr.bf16.mxu0 %v5982
        %8036 = vmatpush1.bf16.msra.mxu0 %v5981
        %8037 = vmatprep.subr.bf16.mxu0 %v5978
        %8038 = vmatpush1.bf16.msra.mxu0 %v5977
        %8039 = vmatprep.subr.bf16.mxu0 %v5974
        %8040 = vmatpush1.bf16.msra.mxu0 %v5973
        %8041 = vmatprep.subr.bf16.mxu0 %v5970
        %8042 = vmatpush1.bf16.msra.mxu0 %v5969
        %8043 = vmatprep.subr.bf16.mxu0 %v5966
        %8044 = vmatpush1.bf16.msra.mxu0 %v5965
        %8045 = vmatprep.subr.bf16.mxu0 %v5962
        %8046 = vmatpush1.bf16.msra.mxu0 %v5961
        %8047 = vmatprep.subr.bf16.mxu0 %v5958
        %8048 = vmatpush1.bf16.msra.mxu0 %v5957
        %8049 = vmatprep.subr.bf16.mxu0 %v5954
        %8050 = vmatpush1.bf16.msra.mxu0 %v5953
        %8051 = vmatprep.subr.bf16.mxu0 %v6014
        %8052 = vmatpush2.bf16.msra.mxu0 %v6013
        %8053 = vmatprep.subr.bf16.mxu0 %v6010
        %8054 = vmatpush2.bf16.msra.mxu0 %v6009
        %8055 = vmatprep.subr.bf16.mxu0 %v6006
        %8056 = vmatpush2.bf16.msra.mxu0 %v6005
        %8057 = vmatprep.subr.bf16.mxu0 %v6002
        %8058 = vmatpush2.bf16.msra.mxu0 %v6001
        %8059 = vmatprep.subr.bf16.mxu0 %v5998
        %8060 = vmatpush2.bf16.msra.mxu0 %v5997
        %8061 = vmatprep.subr.bf16.mxu0 %v5994
        %8062 = vmatpush2.bf16.msra.mxu0 %v5993
        %8063 = vmatprep.subr.bf16.mxu0 %v5990
        %8064 = vmatpush2.bf16.msra.mxu0 %v5989
        %8065 = vmatprep.subr.bf16.mxu0 %v5986
        %8066 = vmatpush2.bf16.msra.mxu0 %v5985
        %8067 = vmatprep.mubr.bf16.mxu0 %v1201
        %8068 = vmatmul.mubr.bf16.gmra.mxu0 %v1200
        %v8069 = vpop.f32.mrf.mxu0
        %v8070 = vadd.f32 %v8029, %v8069
        %v8071 = vpop.f32.mrf.mxu0
        %v8072 = vadd.f32 %v8031, %v8071
        %v8073 = vpop.f32.mrf.mxu0
        %v8074 = vpop.f32.mrf.mxu0
        %8075 = vdwg.mxu0
        %8076 = vmatprep.subr.bf16.mxu0 %v6849
        %8077 = vmatpush1.bf16.msra.mxu0 %v6848
        %8078 = vmatprep.subr.bf16.mxu0 %v6845
        %8079 = vmatpush1.bf16.msra.mxu0 %v6844
        %8080 = vmatprep.subr.bf16.mxu0 %v6841
        %8081 = vmatpush1.bf16.msra.mxu0 %v6840
        %8082 = vmatprep.subr.bf16.mxu0 %v6837
        %8083 = vmatpush1.bf16.msra.mxu0 %v6836
        %8084 = vmatprep.subr.bf16.mxu0 %v6833
        %8085 = vmatpush1.bf16.msra.mxu0 %v6832
        %8086 = vmatprep.subr.bf16.mxu0 %v6829
        %8087 = vmatpush1.bf16.msra.mxu0 %v6828
        %8088 = vmatprep.subr.bf16.mxu0 %v6825
        %8089 = vmatpush1.bf16.msra.mxu0 %v6824
        %8090 = vmatprep.subr.bf16.mxu0 %v6821
        %8091 = vmatpush1.bf16.msra.mxu0 %v6820
        %8092 = vmatprep.subr.bf16.mxu0 %v6881
        %8093 = vmatpush2.bf16.msra.mxu0 %v6880
        %8094 = vmatprep.subr.bf16.mxu0 %v6877
        %8095 = vmatpush2.bf16.msra.mxu0 %v6876
        %8096 = vmatprep.subr.bf16.mxu0 %v6873
        %8097 = vmatpush2.bf16.msra.mxu0 %v6872
        %8098 = vmatprep.subr.bf16.mxu0 %v6869
        %8099 = vmatpush2.bf16.msra.mxu0 %v6868
        %8100 = vmatprep.subr.bf16.mxu0 %v6865
        %8101 = vmatpush2.bf16.msra.mxu0 %v6864
        %8102 = vmatprep.subr.bf16.mxu0 %v6861
        %8103 = vmatpush2.bf16.msra.mxu0 %v6860
        %8104 = vmatprep.subr.bf16.mxu0 %v6857
        %8105 = vmatpush2.bf16.msra.mxu0 %v6856
        %8106 = vmatprep.subr.bf16.mxu0 %v6853
        %8107 = vmatpush2.bf16.msra.mxu0 %v6852
        %8108 = vmatprep.mubr.bf16.mxu0 %v1631
        %8109 = vmatmul.mubr.bf16.gmra.mxu0 %v1628
        %v8110 = vpop.f32.mrf.mxu0
        %v8111 = vadd.f32 0.0, %v8110
        %v8112 = vpop.f32.mrf.mxu0
        %v8113 = vadd.f32 0.0, %v8112
        %v8114 = vpop.f32.mrf.mxu0
        %v8115 = vpop.f32.mrf.mxu0
        %8116 = vdwg.mxu0
        %8117 = vmatprep.subr.bf16.mxu0 %v6913
        %8118 = vmatpush1.bf16.msra.mxu0 %v6912
        %8119 = vmatprep.subr.bf16.mxu0 %v6909
        %8120 = vmatpush1.bf16.msra.mxu0 %v6908
        %8121 = vmatprep.subr.bf16.mxu0 %v6905
        %8122 = vmatpush1.bf16.msra.mxu0 %v6904
        %8123 = vmatprep.subr.bf16.mxu0 %v6901
        %8124 = vmatpush1.bf16.msra.mxu0 %v6900
        %8125 = vmatprep.subr.bf16.mxu0 %v6897
        %8126 = vmatpush1.bf16.msra.mxu0 %v6896
        %8127 = vmatprep.subr.bf16.mxu0 %v6893
        %8128 = vmatpush1.bf16.msra.mxu0 %v6892
        %8129 = vmatprep.subr.bf16.mxu0 %v6889
        %8130 = vmatpush1.bf16.msra.mxu0 %v6888
        %8131 = vmatprep.subr.bf16.mxu0 %v6885
        %8132 = vmatpush1.bf16.msra.mxu0 %v6884
        %8133 = vmatprep.subr.bf16.mxu0 %v6945
        %8134 = vmatpush2.bf16.msra.mxu0 %v6944
        %8135 = vmatprep.subr.bf16.mxu0 %v6941
        %8136 = vmatpush2.bf16.msra.mxu0 %v6940
        %8137 = vmatprep.subr.bf16.mxu0 %v6937
        %8138 = vmatpush2.bf16.msra.mxu0 %v6936
        %8139 = vmatprep.subr.bf16.mxu0 %v6933
        %8140 = vmatpush2.bf16.msra.mxu0 %v6932
        %8141 = vmatprep.subr.bf16.mxu0 %v6929
        %8142 = vmatpush2.bf16.msra.mxu0 %v6928
        %8143 = vmatprep.subr.bf16.mxu0 %v6925
        %8144 = vmatpush2.bf16.msra.mxu0 %v6924
        %8145 = vmatprep.subr.bf16.mxu0 %v6921
        %8146 = vmatpush2.bf16.msra.mxu0 %v6920
        %8147 = vmatprep.subr.bf16.mxu0 %v6917
        %8148 = vmatpush2.bf16.msra.mxu0 %v6916
        %8149 = vmatprep.mubr.bf16.mxu0 %v1637
        %8150 = vmatmul.mubr.bf16.gmra.mxu0 %v1634
        %v8151 = vpop.f32.mrf.mxu0
        %v8152 = vadd.f32 %v8111, %v8151
        %v8153 = vpop.f32.mrf.mxu0
        %v8154 = vadd.f32 %v8113, %v8153
        %v8155 = vpop.f32.mrf.mxu0
        %v8156 = vpop.f32.mrf.mxu0
        %8157 = vdwg.mxu0
        %8158 = vmatprep.subr.bf16.mxu0 %v6851
        %8159 = vmatpush1.bf16.msra.mxu0 %v6850
        %8160 = vmatprep.subr.bf16.mxu0 %v6847
        %8161 = vmatpush1.bf16.msra.mxu0 %v6846
        %8162 = vmatprep.subr.bf16.mxu0 %v6843
        %8163 = vmatpush1.bf16.msra.mxu0 %v6842
        %8164 = vmatprep.subr.bf16.mxu0 %v6839
        %8165 = vmatpush1.bf16.msra.mxu0 %v6838
        %8166 = vmatprep.subr.bf16.mxu0 %v6835
        %8167 = vmatpush1.bf16.msra.mxu0 %v6834
        %8168 = vmatprep.subr.bf16.mxu0 %v6831
        %8169 = vmatpush1.bf16.msra.mxu0 %v6830
        %8170 = vmatprep.subr.bf16.mxu0 %v6827
        %8171 = vmatpush1.bf16.msra.mxu0 %v6826
        %8172 = vmatprep.subr.bf16.mxu0 %v6823
        %8173 = vmatpush1.bf16.msra.mxu0 %v6822
        %8174 = vmatprep.subr.bf16.mxu0 %v6883
        %8175 = vmatpush2.bf16.msra.mxu0 %v6882
        %8176 = vmatprep.subr.bf16.mxu0 %v6879
        %8177 = vmatpush2.bf16.msra.mxu0 %v6878
        %8178 = vmatprep.subr.bf16.mxu0 %v6875
        %8179 = vmatpush2.bf16.msra.mxu0 %v6874
        %8180 = vmatprep.subr.bf16.mxu0 %v6871
        %8181 = vmatpush2.bf16.msra.mxu0 %v6870
        %8182 = vmatprep.subr.bf16.mxu0 %v6867
        %8183 = vmatpush2.bf16.msra.mxu0 %v6866
        %8184 = vmatprep.subr.bf16.mxu0 %v6863
        %8185 = vmatpush2.bf16.msra.mxu0 %v6862
        %8186 = vmatprep.subr.bf16.mxu0 %v6859
        %8187 = vmatpush2.bf16.msra.mxu0 %v6858
        %8188 = vmatprep.subr.bf16.mxu0 %v6855
        %8189 = vmatpush2.bf16.msra.mxu0 %v6854
        %8190 = vmatprep.mubr.bf16.mxu0 %v1631
        %8191 = vmatmul.mubr.bf16.gmra.mxu0 %v1628
        %v8192 = vpop.f32.mrf.mxu0
        %v8193 = vadd.f32 0.0, %v8192
        %v8194 = vpop.f32.mrf.mxu0
        %v8195 = vadd.f32 0.0, %v8194
        %v8196 = vpop.f32.mrf.mxu0
        %v8197 = vpop.f32.mrf.mxu0
        %8198 = vdwg.mxu0
        %8199 = vmatprep.subr.bf16.mxu0 %v6915
        %8200 = vmatpush1.bf16.msra.mxu0 %v6914
        %8201 = vmatprep.subr.bf16.mxu0 %v6911
        %8202 = vmatpush1.bf16.msra.mxu0 %v6910
        %8203 = vmatprep.subr.bf16.mxu0 %v6907
        %8204 = vmatpush1.bf16.msra.mxu0 %v6906
        %8205 = vmatprep.subr.bf16.mxu0 %v6903
        %8206 = vmatpush1.bf16.msra.mxu0 %v6902
        %8207 = vmatprep.subr.bf16.mxu0 %v6899
        %8208 = vmatpush1.bf16.msra.mxu0 %v6898
        %8209 = vmatprep.subr.bf16.mxu0 %v6895
        %8210 = vmatpush1.bf16.msra.mxu0 %v6894
        %8211 = vmatprep.subr.bf16.mxu0 %v6891
        %8212 = vmatpush1.bf16.msra.mxu0 %v6890
        %8213 = vmatprep.subr.bf16.mxu0 %v6887
        %8214 = vmatpush1.bf16.msra.mxu0 %v6886
        %8215 = vmatprep.subr.bf16.mxu0 %v6947
        %8216 = vmatpush2.bf16.msra.mxu0 %v6946
        %8217 = vmatprep.subr.bf16.mxu0 %v6943
        %8218 = vmatpush2.bf16.msra.mxu0 %v6942
        %8219 = vmatprep.subr.bf16.mxu0 %v6939
        %8220 = vmatpush2.bf16.msra.mxu0 %v6938
        %8221 = vmatprep.subr.bf16.mxu0 %v6935
        %8222 = vmatpush2.bf16.msra.mxu0 %v6934
        %8223 = vmatprep.subr.bf16.mxu0 %v6931
        %8224 = vmatpush2.bf16.msra.mxu0 %v6930
        %8225 = vmatprep.subr.bf16.mxu0 %v6927
        %8226 = vmatpush2.bf16.msra.mxu0 %v6926
        %8227 = vmatprep.subr.bf16.mxu0 %v6923
        %8228 = vmatpush2.bf16.msra.mxu0 %v6922
        %8229 = vmatprep.subr.bf16.mxu0 %v6919
        %8230 = vmatpush2.bf16.msra.mxu0 %v6918
        %8231 = vmatprep.mubr.bf16.mxu0 %v1637
        %8232 = vmatmul.mubr.bf16.gmra.mxu0 %v1634
        %v8233 = vpop.f32.mrf.mxu0
        %v8234 = vadd.f32 %v8193, %v8233
        %v8235 = vpop.f32.mrf.mxu0
        %v8236 = vadd.f32 %v8195, %v8235
        %v8237 = vpop.f32.mrf.mxu0
        %v8238 = vpop.f32.mrf.mxu0
        %8239 = vdwg.mxu0
        %v8240 = vadd.f32 %v7988, %v8152
        %v8241 = vadd.f32 %v7990, %v8154
        %v8242 = vadd.f32 %v8070, %v8234
        %v8243 = vadd.f32 %v8072, %v8236
        %v8244 = vmax.f32 %v7744, %v8240
        %v8245 = vmax.f32 %v7745, %v8241
        %v8246 = vmax.f32 %v7746, %v8242
        %v8247 = vmax.f32 %v7747, %v8243
        %v8248 = vld [vmem:[#allocation8] sm:$0xf]
        %v8250 = vlaneseq
        %v8251 = vshrl.u32 %v8250, 7
        %v8252 = vsub.s32 0, %v8251
        %v8253 = vrot.slane %v8248, %v8252
        %v8254 = vlaneseq
        %v8255 = vshrl.u32 %v8254, 7
        %v8256 = vsub.s32 1, %v8255
        %v8257 = vrot.slane %v8248, %v8256
        %v8258 = vlaneseq
        %v8259 = vshrl.u32 %v8258, 7
        %v8260 = vsub.s32 2, %v8259
        %v8261 = vrot.slane %v8248, %v8260
        %v8262 = vlaneseq
        %v8263 = vshrl.u32 %v8262, 7
        %v8264 = vsub.s32 3, %v8263
        %v8265 = vrot.slane %v8248, %v8264
        %v8270 = vadd.f32 %v8244, %v8253
        %v8271 = vadd.f32 %v8245, %v8257
        %v8272 = vadd.f32 %v8246, %v8261
        %v8273 = vadd.f32 %v8247, %v8265
        %v8274 = vmax.f32 %v8270, 0.0
        %v8275 = vmax.f32 %v8271, 0.0
        %v8276 = vmax.f32 %v8272, 0.0
        %v8277 = vmax.f32 %v8273, 0.0
        %v8278 = vpack.c.bf16 %v8274, %v8274
        %v8279 = vpack.c.bf16 %v8275, %v8275
        %v8280 = vpack.c.bf16 %v8276, %v8276
        %v8281 = vpack.c.bf16 %v8277, %v8277
        %v8282 = vld [vmem:[#allocation10] sm:$0xf]
        %v8283 = vld [vmem:[#allocation10 + $0x4] sm:$0xf]
        %v8284 = vld [vmem:[#allocation10 + $0x8] sm:$0xf]
        %v8285 = vld [vmem:[#allocation10 + $0xc] sm:$0xf]
        %v8286 = vld [vmem:[#allocation10 + $0x10] sm:$0xf]
        %v8287 = vld [vmem:[#allocation10 + $0x14] sm:$0xf]
        %v8288 = vld [vmem:[#allocation10 + $0x18] sm:$0xf]
        %v8289 = vld [vmem:[#allocation10 + $0x1c] sm:$0xf]
        %v8290 = vld [vmem:[#allocation10 + $0x20] sm:$0xf]
        %v8291 = vld [vmem:[#allocation10 + $0x24] sm:$0xf]
        %v8292 = vld [vmem:[#allocation10 + $0x28] sm:$0xf]
        %v8293 = vld [vmem:[#allocation10 + $0x2c] sm:$0xf]
        %v8294 = vld [vmem:[#allocation10 + $0x30] sm:$0xf]
        %v8295 = vld [vmem:[#allocation10 + $0x34] sm:$0xf]
        %v8296 = vld [vmem:[#allocation10 + $0x38] sm:$0xf]
        %v8297 = vld [vmem:[#allocation10 + $0x3c] sm:$0xf]
        %v8298 = vld [vmem:[#allocation10 + $0x40] sm:$0xf]
        %v8299 = vld [vmem:[#allocation10 + $0x44] sm:$0xf]
        %v8300 = vld [vmem:[#allocation10 + $0x48] sm:$0xf]
        %v8301 = vld [vmem:[#allocation10 + $0x4c] sm:$0xf]
        %v8302 = vld [vmem:[#allocation10 + $0x50] sm:$0xf]
        %v8303 = vld [vmem:[#allocation10 + $0x54] sm:$0xf]
        %v8304 = vld [vmem:[#allocation10 + $0x58] sm:$0xf]
        %v8305 = vld [vmem:[#allocation10 + $0x5c] sm:$0xf]
        %v8306 = vld [vmem:[#allocation10 + $0x60] sm:$0xf]
        %v8307 = vld [vmem:[#allocation10 + $0x64] sm:$0xf]
        %v8308 = vld [vmem:[#allocation10 + $0x68] sm:$0xf]
        %v8309 = vld [vmem:[#allocation10 + $0x6c] sm:$0xf]
        %v8310 = vld [vmem:[#allocation10 + $0x70] sm:$0xf]
        %v8311 = vld [vmem:[#allocation10 + $0x74] sm:$0xf]
        %v8312 = vld [vmem:[#allocation10 + $0x78] sm:$0xf]
        %v8313 = vld [vmem:[#allocation10 + $0x7c] sm:$0xf]
        %v8314 = vld [vmem:[#allocation10 + $0x80] sm:$0xf]
        %v8315 = vld [vmem:[#allocation10 + $0x84] sm:$0xf]
        %v8316 = vld [vmem:[#allocation10 + $0x88] sm:$0xf]
        %v8317 = vld [vmem:[#allocation10 + $0x8c] sm:$0xf]
        %v8318 = vld [vmem:[#allocation10 + $0x90] sm:$0xf]
        %v8319 = vld [vmem:[#allocation10 + $0x94] sm:$0xf]
        %v8320 = vld [vmem:[#allocation10 + $0x98] sm:$0xf]
        %v8321 = vld [vmem:[#allocation10 + $0x9c] sm:$0xf]
        %v8322 = vld [vmem:[#allocation10 + $0xa0] sm:$0xf]
        %v8323 = vld [vmem:[#allocation10 + $0xa4] sm:$0xf]
        %v8324 = vld [vmem:[#allocation10 + $0xa8] sm:$0xf]
        %v8325 = vld [vmem:[#allocation10 + $0xac] sm:$0xf]
        %v8326 = vld [vmem:[#allocation10 + $0xb0] sm:$0xf]
        %v8327 = vld [vmem:[#allocation10 + $0xb4] sm:$0xf]
        %v8328 = vld [vmem:[#allocation10 + $0xb8] sm:$0xf]
        %v8329 = vld [vmem:[#allocation10 + $0xbc] sm:$0xf]
        %v8330 = vld [vmem:[#allocation10 + $0xc0] sm:$0xf]
        %v8331 = vld [vmem:[#allocation10 + $0xc4] sm:$0xf]
        %v8332 = vld [vmem:[#allocation10 + $0xc8] sm:$0xf]
        %v8333 = vld [vmem:[#allocation10 + $0xcc] sm:$0xf]
        %v8334 = vld [vmem:[#allocation10 + $0xd0] sm:$0xf]
        %v8335 = vld [vmem:[#allocation10 + $0xd4] sm:$0xf]
        %v8336 = vld [vmem:[#allocation10 + $0xd8] sm:$0xf]
        %v8337 = vld [vmem:[#allocation10 + $0xdc] sm:$0xf]
        %v8338 = vld [vmem:[#allocation10 + $0xe0] sm:$0xf]
        %v8339 = vld [vmem:[#allocation10 + $0xe4] sm:$0xf]
        %v8340 = vld [vmem:[#allocation10 + $0xe8] sm:$0xf]
        %v8341 = vld [vmem:[#allocation10 + $0xec] sm:$0xf]
        %v8342 = vld [vmem:[#allocation10 + $0xf0] sm:$0xf]
        %v8343 = vld [vmem:[#allocation10 + $0xf4] sm:$0xf]
        %v8344 = vld [vmem:[#allocation10 + $0xf8] sm:$0xf]
        %v8345 = vld [vmem:[#allocation10 + $0xfc] sm:$0xf]
        %s8346 = scalar_lea.vmem [#allocation10], 256
        %v8347 = vld [vmem:[%s8346] sm:$0xf]
        %v8348 = vld [vmem:[%s8346 + $0x4] sm:$0xf]
        %v8349 = vld [vmem:[%s8346 + $0x8] sm:$0xf]
        %v8350 = vld [vmem:[%s8346 + $0xc] sm:$0xf]
        %v8351 = vld [vmem:[%s8346 + $0x10] sm:$0xf]
        %v8352 = vld [vmem:[%s8346 + $0x14] sm:$0xf]
        %v8353 = vld [vmem:[%s8346 + $0x18] sm:$0xf]
        %v8354 = vld [vmem:[%s8346 + $0x1c] sm:$0xf]
        %v8355 = vld [vmem:[%s8346 + $0x20] sm:$0xf]
        %v8356 = vld [vmem:[%s8346 + $0x24] sm:$0xf]
        %v8357 = vld [vmem:[%s8346 + $0x28] sm:$0xf]
        %v8358 = vld [vmem:[%s8346 + $0x2c] sm:$0xf]
        %v8359 = vld [vmem:[%s8346 + $0x30] sm:$0xf]
        %v8360 = vld [vmem:[%s8346 + $0x34] sm:$0xf]
        %v8361 = vld [vmem:[%s8346 + $0x38] sm:$0xf]
        %v8362 = vld [vmem:[%s8346 + $0x3c] sm:$0xf]
        %v8363 = vld [vmem:[%s8346 + $0x40] sm:$0xf]
        %v8364 = vld [vmem:[%s8346 + $0x44] sm:$0xf]
        %v8365 = vld [vmem:[%s8346 + $0x48] sm:$0xf]
        %v8366 = vld [vmem:[%s8346 + $0x4c] sm:$0xf]
        %v8367 = vld [vmem:[%s8346 + $0x50] sm:$0xf]
        %v8368 = vld [vmem:[%s8346 + $0x54] sm:$0xf]
        %v8369 = vld [vmem:[%s8346 + $0x58] sm:$0xf]
        %v8370 = vld [vmem:[%s8346 + $0x5c] sm:$0xf]
        %v8371 = vld [vmem:[%s8346 + $0x60] sm:$0xf]
        %v8372 = vld [vmem:[%s8346 + $0x64] sm:$0xf]
        %v8373 = vld [vmem:[%s8346 + $0x68] sm:$0xf]
        %v8374 = vld [vmem:[%s8346 + $0x6c] sm:$0xf]
        %v8375 = vld [vmem:[%s8346 + $0x70] sm:$0xf]
        %v8376 = vld [vmem:[%s8346 + $0x74] sm:$0xf]
        %v8377 = vld [vmem:[%s8346 + $0x78] sm:$0xf]
        %v8378 = vld [vmem:[%s8346 + $0x7c] sm:$0xf]
        %v8379 = vld [vmem:[%s8346 + $0x80] sm:$0xf]
        %v8380 = vld [vmem:[%s8346 + $0x84] sm:$0xf]
        %v8381 = vld [vmem:[%s8346 + $0x88] sm:$0xf]
        %v8382 = vld [vmem:[%s8346 + $0x8c] sm:$0xf]
        %v8383 = vld [vmem:[%s8346 + $0x90] sm:$0xf]
        %v8384 = vld [vmem:[%s8346 + $0x94] sm:$0xf]
        %v8385 = vld [vmem:[%s8346 + $0x98] sm:$0xf]
        %v8386 = vld [vmem:[%s8346 + $0x9c] sm:$0xf]
        %v8387 = vld [vmem:[%s8346 + $0xa0] sm:$0xf]
        %v8388 = vld [vmem:[%s8346 + $0xa4] sm:$0xf]
        %v8389 = vld [vmem:[%s8346 + $0xa8] sm:$0xf]
        %v8390 = vld [vmem:[%s8346 + $0xac] sm:$0xf]
        %v8391 = vld [vmem:[%s8346 + $0xb0] sm:$0xf]
        %v8392 = vld [vmem:[%s8346 + $0xb4] sm:$0xf]
        %v8393 = vld [vmem:[%s8346 + $0xb8] sm:$0xf]
        %v8394 = vld [vmem:[%s8346 + $0xbc] sm:$0xf]
        %v8395 = vld [vmem:[%s8346 + $0xc0] sm:$0xf]
        %v8396 = vld [vmem:[%s8346 + $0xc4] sm:$0xf]
        %v8397 = vld [vmem:[%s8346 + $0xc8] sm:$0xf]
        %v8398 = vld [vmem:[%s8346 + $0xcc] sm:$0xf]
        %v8399 = vld [vmem:[%s8346 + $0xd0] sm:$0xf]
        %v8400 = vld [vmem:[%s8346 + $0xd4] sm:$0xf]
        %v8401 = vld [vmem:[%s8346 + $0xd8] sm:$0xf]
        %v8402 = vld [vmem:[%s8346 + $0xdc] sm:$0xf]
        %v8403 = vld [vmem:[%s8346 + $0xe0] sm:$0xf]
        %v8404 = vld [vmem:[%s8346 + $0xe4] sm:$0xf]
        %v8405 = vld [vmem:[%s8346 + $0xe8] sm:$0xf]
        %v8406 = vld [vmem:[%s8346 + $0xec] sm:$0xf]
        %v8407 = vld [vmem:[%s8346 + $0xf0] sm:$0xf]
        %v8408 = vld [vmem:[%s8346 + $0xf4] sm:$0xf]
        %v8409 = vld [vmem:[%s8346 + $0xf8] sm:$0xf]
        %v8410 = vld [vmem:[%s8346 + $0xfc] sm:$0xf]
        %v8412 = vshrl.u32 %v8278, 16
        %v8415 = vshrl.u32 %v8279, 16
        %v8418 = vshrl.u32 %v8280, 16
        %v8421 = vshrl.u32 %v8281, 16
        %v8491 = vunpack.c.l.b16 %v8347
        %v8492 = vunpack.c.l.b16 %v8348
        %v8493 = vunpack.c.l.b16 %v8349
        %v8494 = vunpack.c.l.b16 %v8350
        %v8495 = vunpack.c.l.b16 %v8351
        %v8496 = vunpack.c.l.b16 %v8352
        %v8497 = vunpack.c.l.b16 %v8353
        %v8498 = vunpack.c.l.b16 %v8354
        %v8499 = vunpack.c.l.b16 %v8355
        %v8500 = vunpack.c.l.b16 %v8356
        %v8501 = vunpack.c.l.b16 %v8357
        %v8502 = vunpack.c.l.b16 %v8358
        %v8503 = vunpack.c.l.b16 %v8359
        %v8504 = vunpack.c.l.b16 %v8360
        %v8505 = vunpack.c.l.b16 %v8361
        %v8506 = vunpack.c.l.b16 %v8362
        %v8507 = vunpack.c.l.b16 %v8363
        %v8508 = vunpack.c.l.b16 %v8364
        %v8509 = vunpack.c.l.b16 %v8365
        %v8510 = vunpack.c.l.b16 %v8366
        %v8511 = vunpack.c.l.b16 %v8367
        %v8512 = vunpack.c.l.b16 %v8368
        %v8513 = vunpack.c.l.b16 %v8369
        %v8514 = vunpack.c.l.b16 %v8370
        %v8515 = vunpack.c.l.b16 %v8371
        %v8516 = vunpack.c.l.b16 %v8372
        %v8517 = vunpack.c.l.b16 %v8373
        %v8518 = vunpack.c.l.b16 %v8374
        %v8519 = vunpack.c.l.b16 %v8375
        %v8520 = vunpack.c.l.b16 %v8376
        %v8521 = vunpack.c.l.b16 %v8377
        %v8522 = vunpack.c.l.b16 %v8378
        %v8523 = vunpack.c.l.b16 %v8379
        %v8524 = vunpack.c.l.b16 %v8380
        %v8525 = vunpack.c.l.b16 %v8381
        %v8526 = vunpack.c.l.b16 %v8382
        %v8527 = vunpack.c.l.b16 %v8383
        %v8528 = vunpack.c.l.b16 %v8384
        %v8529 = vunpack.c.l.b16 %v8385
        %v8530 = vunpack.c.l.b16 %v8386
        %v8531 = vunpack.c.l.b16 %v8387
        %v8532 = vunpack.c.l.b16 %v8388
        %v8533 = vunpack.c.l.b16 %v8389
        %v8534 = vunpack.c.l.b16 %v8390
        %v8535 = vunpack.c.l.b16 %v8391
        %v8536 = vunpack.c.l.b16 %v8392
        %v8537 = vunpack.c.l.b16 %v8393
        %v8538 = vunpack.c.l.b16 %v8394
        %v8539 = vunpack.c.l.b16 %v8395
        %v8540 = vunpack.c.l.b16 %v8396
        %v8541 = vunpack.c.l.b16 %v8397
        %v8542 = vunpack.c.l.b16 %v8398
        %v8543 = vunpack.c.l.b16 %v8399
        %v8544 = vunpack.c.l.b16 %v8400
        %v8545 = vunpack.c.l.b16 %v8401
        %v8546 = vunpack.c.l.b16 %v8402
        %v8547 = vunpack.c.l.b16 %v8403
        %v8548 = vunpack.c.l.b16 %v8404
        %v8549 = vunpack.c.l.b16 %v8405
        %v8550 = vunpack.c.l.b16 %v8406
        %v8551 = vunpack.c.l.b16 %v8407
        %v8552 = vunpack.c.l.b16 %v8408
        %v8553 = vunpack.c.l.b16 %v8409
        %v8554 = vunpack.c.l.b16 %v8410
        %v8555 = vpack.c.b16 %v8492, %v8491
        %v8556 = vpack.c.b16 %v8494, %v8493
        %v8557 = vpack.c.b16 %v8496, %v8495
        %v8558 = vpack.c.b16 %v8498, %v8497
        %v8559 = vpack.c.b16 %v8500, %v8499
        %v8560 = vpack.c.b16 %v8502, %v8501
        %v8561 = vpack.c.b16 %v8504, %v8503
        %v8562 = vpack.c.b16 %v8506, %v8505
        %v8563 = vpack.c.b16 %v8508, %v8507
        %v8564 = vpack.c.b16 %v8510, %v8509
        %v8565 = vpack.c.b16 %v8512, %v8511
        %v8566 = vpack.c.b16 %v8514, %v8513
        %v8567 = vpack.c.b16 %v8516, %v8515
        %v8568 = vpack.c.b16 %v8518, %v8517
        %v8569 = vpack.c.b16 %v8520, %v8519
        %v8570 = vpack.c.b16 %v8522, %v8521
        %v8571 = vpack.c.b16 %v8524, %v8523
        %v8572 = vpack.c.b16 %v8526, %v8525
        %v8573 = vpack.c.b16 %v8528, %v8527
        %v8574 = vpack.c.b16 %v8530, %v8529
        %v8575 = vpack.c.b16 %v8532, %v8531
        %v8576 = vpack.c.b16 %v8534, %v8533
        %v8577 = vpack.c.b16 %v8536, %v8535
        %v8578 = vpack.c.b16 %v8538, %v8537
        %v8579 = vpack.c.b16 %v8540, %v8539
        %v8580 = vpack.c.b16 %v8542, %v8541
        %v8581 = vpack.c.b16 %v8544, %v8543
        %v8582 = vpack.c.b16 %v8546, %v8545
        %v8583 = vpack.c.b16 %v8548, %v8547
        %v8584 = vpack.c.b16 %v8550, %v8549
        %v8585 = vpack.c.b16 %v8552, %v8551
        %v8586 = vpack.c.b16 %v8554, %v8553
        %8619 = vmatprep.subr.bf16.mxu0 0
        %8620 = vmatpush1.bf16.msra.mxu0 %v8562
        %8621 = vmatprep.subr.bf16.mxu0 0
        %8622 = vmatpush1.bf16.msra.mxu0 %v8561
        %8623 = vmatprep.subr.bf16.mxu0 0
        %8624 = vmatpush1.bf16.msra.mxu0 %v8560
        %8625 = vmatprep.subr.bf16.mxu0 0
        %8626 = vmatpush1.bf16.msra.mxu0 %v8559
        %8627 = vmatprep.subr.bf16.mxu0 0
        %8628 = vmatpush1.bf16.msra.mxu0 %v8558
        %8629 = vmatprep.subr.bf16.mxu0 0
        %8630 = vmatpush1.bf16.msra.mxu0 %v8557
        %8631 = vmatprep.subr.bf16.mxu0 0
        %8632 = vmatpush1.bf16.msra.mxu0 %v8556
        %8633 = vmatprep.subr.bf16.mxu0 0
        %8634 = vmatpush1.bf16.msra.mxu0 %v8555
        %8635 = vmatprep.subr.bf16.mxu0 0
        %8636 = vmatpush2.bf16.msra.mxu0 %v8570
        %8637 = vmatprep.subr.bf16.mxu0 0
        %8638 = vmatpush2.bf16.msra.mxu0 %v8569
        %8639 = vmatprep.subr.bf16.mxu0 0
        %8640 = vmatpush2.bf16.msra.mxu0 %v8568
        %8641 = vmatprep.subr.bf16.mxu0 0
        %8642 = vmatpush2.bf16.msra.mxu0 %v8567
        %8643 = vmatprep.subr.bf16.mxu0 0
        %8644 = vmatpush2.bf16.msra.mxu0 %v8566
        %8645 = vmatprep.subr.bf16.mxu0 0
        %8646 = vmatpush2.bf16.msra.mxu0 %v8565
        %8647 = vmatprep.subr.bf16.mxu0 0
        %8648 = vmatpush2.bf16.msra.mxu0 %v8564
        %8649 = vmatprep.subr.bf16.mxu0 0
        %8650 = vmatpush2.bf16.msra.mxu0 %v8563
        %8651 = vmatprep.mubr.bf16.mxu0 %v8415
        %8652 = vmatmul.mubr.bf16.gmra.mxu0 %v8412
        %v8653 = vpop.f32.mrf.mxu0
        %v8654 = vadd.f32 0.0, %v8653
        %v8655 = vpop.f32.mrf.mxu0
        %v8656 = vpop.f32.mrf.mxu0
        %v8657 = vpop.f32.mrf.mxu0
        %8658 = vdwg.mxu0
        %8659 = vmatprep.subr.bf16.mxu0 0
        %8660 = vmatpush1.bf16.msra.mxu0 %v8578
        %8661 = vmatprep.subr.bf16.mxu0 0
        %8662 = vmatpush1.bf16.msra.mxu0 %v8577
        %8663 = vmatprep.subr.bf16.mxu0 0
        %8664 = vmatpush1.bf16.msra.mxu0 %v8576
        %8665 = vmatprep.subr.bf16.mxu0 0
        %8666 = vmatpush1.bf16.msra.mxu0 %v8575
        %8667 = vmatprep.subr.bf16.mxu0 0
        %8668 = vmatpush1.bf16.msra.mxu0 %v8574
        %8669 = vmatprep.subr.bf16.mxu0 0
        %8670 = vmatpush1.bf16.msra.mxu0 %v8573
        %8671 = vmatprep.subr.bf16.mxu0 0
        %8672 = vmatpush1.bf16.msra.mxu0 %v8572
        %8673 = vmatprep.subr.bf16.mxu0 0
        %8674 = vmatpush1.bf16.msra.mxu0 %v8571
        %8675 = vmatprep.subr.bf16.mxu0 0
        %8676 = vmatpush2.bf16.msra.mxu0 %v8586
        %8677 = vmatprep.subr.bf16.mxu0 0
        %8678 = vmatpush2.bf16.msra.mxu0 %v8585
        %8679 = vmatprep.subr.bf16.mxu0 0
        %8680 = vmatpush2.bf16.msra.mxu0 %v8584
        %8681 = vmatprep.subr.bf16.mxu0 0
        %8682 = vmatpush2.bf16.msra.mxu0 %v8583
        %8683 = vmatprep.subr.bf16.mxu0 0
        %8684 = vmatpush2.bf16.msra.mxu0 %v8582
        %8685 = vmatprep.subr.bf16.mxu0 0
        %8686 = vmatpush2.bf16.msra.mxu0 %v8581
        %8687 = vmatprep.subr.bf16.mxu0 0
        %8688 = vmatpush2.bf16.msra.mxu0 %v8580
        %8689 = vmatprep.subr.bf16.mxu0 0
        %8690 = vmatpush2.bf16.msra.mxu0 %v8579
        %8691 = vmatprep.mubr.bf16.mxu0 %v8421
        %8692 = vmatmul.mubr.bf16.gmra.mxu0 %v8418
        %v8693 = vpop.f32.mrf.mxu0
        %v8694 = vadd.f32 %v8654, %v8693
        %v8695 = vpop.f32.mrf.mxu0
        %v8696 = vpop.f32.mrf.mxu0
        %v8697 = vpop.f32.mrf.mxu0
        %8698 = vdwg.mxu0
        %v8763 = vunpack.c.l.b16 %v8282
        %v8764 = vunpack.c.l.b16 %v8283
        %v8765 = vunpack.c.l.b16 %v8284
        %v8766 = vunpack.c.l.b16 %v8285
        %v8767 = vunpack.c.l.b16 %v8286
        %v8768 = vunpack.c.l.b16 %v8287
        %v8769 = vunpack.c.l.b16 %v8288
        %v8770 = vunpack.c.l.b16 %v8289
        %v8771 = vunpack.c.l.b16 %v8290
        %v8772 = vunpack.c.l.b16 %v8291
        %v8773 = vunpack.c.l.b16 %v8292
        %v8774 = vunpack.c.l.b16 %v8293
        %v8775 = vunpack.c.l.b16 %v8294
        %v8776 = vunpack.c.l.b16 %v8295
        %v8777 = vunpack.c.l.b16 %v8296
        %v8778 = vunpack.c.l.b16 %v8297
        %v8779 = vunpack.c.l.b16 %v8298
        %v8780 = vunpack.c.l.b16 %v8299
        %v8781 = vunpack.c.l.b16 %v8300
        %v8782 = vunpack.c.l.b16 %v8301
        %v8783 = vunpack.c.l.b16 %v8302
        %v8784 = vunpack.c.l.b16 %v8303
        %v8785 = vunpack.c.l.b16 %v8304
        %v8786 = vunpack.c.l.b16 %v8305
        %v8787 = vunpack.c.l.b16 %v8306
        %v8788 = vunpack.c.l.b16 %v8307
        %v8789 = vunpack.c.l.b16 %v8308
        %v8790 = vunpack.c.l.b16 %v8309
        %v8791 = vunpack.c.l.b16 %v8310
        %v8792 = vunpack.c.l.b16 %v8311
        %v8793 = vunpack.c.l.b16 %v8312
        %v8794 = vunpack.c.l.b16 %v8313
        %v8795 = vunpack.c.l.b16 %v8314
        %v8796 = vunpack.c.l.b16 %v8315
        %v8797 = vunpack.c.l.b16 %v8316
        %v8798 = vunpack.c.l.b16 %v8317
        %v8799 = vunpack.c.l.b16 %v8318
        %v8800 = vunpack.c.l.b16 %v8319
        %v8801 = vunpack.c.l.b16 %v8320
        %v8802 = vunpack.c.l.b16 %v8321
        %v8803 = vunpack.c.l.b16 %v8322
        %v8804 = vunpack.c.l.b16 %v8323
        %v8805 = vunpack.c.l.b16 %v8324
        %v8806 = vunpack.c.l.b16 %v8325
        %v8807 = vunpack.c.l.b16 %v8326
        %v8808 = vunpack.c.l.b16 %v8327
        %v8809 = vunpack.c.l.b16 %v8328
        %v8810 = vunpack.c.l.b16 %v8329
        %v8811 = vunpack.c.l.b16 %v8330
        %v8812 = vunpack.c.l.b16 %v8331
        %v8813 = vunpack.c.l.b16 %v8332
        %v8814 = vunpack.c.l.b16 %v8333
        %v8815 = vunpack.c.l.b16 %v8334
        %v8816 = vunpack.c.l.b16 %v8335
        %v8817 = vunpack.c.l.b16 %v8336
        %v8818 = vunpack.c.l.b16 %v8337
        %v8819 = vunpack.c.l.b16 %v8338
        %v8820 = vunpack.c.l.b16 %v8339
        %v8821 = vunpack.c.l.b16 %v8340
        %v8822 = vunpack.c.l.b16 %v8341
        %v8823 = vunpack.c.l.b16 %v8342
        %v8824 = vunpack.c.l.b16 %v8343
        %v8825 = vunpack.c.l.b16 %v8344
        %v8826 = vunpack.c.l.b16 %v8345
        %v8827 = vpack.c.b16 %v8764, %v8763
        %v8828 = vpack.c.b16 %v8766, %v8765
        %v8829 = vpack.c.b16 %v8768, %v8767
        %v8830 = vpack.c.b16 %v8770, %v8769
        %v8831 = vpack.c.b16 %v8772, %v8771
        %v8832 = vpack.c.b16 %v8774, %v8773
        %v8833 = vpack.c.b16 %v8776, %v8775
        %v8834 = vpack.c.b16 %v8778, %v8777
        %v8835 = vpack.c.b16 %v8780, %v8779
        %v8836 = vpack.c.b16 %v8782, %v8781
        %v8837 = vpack.c.b16 %v8784, %v8783
        %v8838 = vpack.c.b16 %v8786, %v8785
        %v8839 = vpack.c.b16 %v8788, %v8787
        %v8840 = vpack.c.b16 %v8790, %v8789
        %v8841 = vpack.c.b16 %v8792, %v8791
        %v8842 = vpack.c.b16 %v8794, %v8793
        %v8843 = vpack.c.b16 %v8796, %v8795
        %v8844 = vpack.c.b16 %v8798, %v8797
        %v8845 = vpack.c.b16 %v8800, %v8799
        %v8846 = vpack.c.b16 %v8802, %v8801
        %v8847 = vpack.c.b16 %v8804, %v8803
        %v8848 = vpack.c.b16 %v8806, %v8805
        %v8849 = vpack.c.b16 %v8808, %v8807
        %v8850 = vpack.c.b16 %v8810, %v8809
        %v8851 = vpack.c.b16 %v8812, %v8811
        %v8852 = vpack.c.b16 %v8814, %v8813
        %v8853 = vpack.c.b16 %v8816, %v8815
        %v8854 = vpack.c.b16 %v8818, %v8817
        %v8855 = vpack.c.b16 %v8820, %v8819
        %v8856 = vpack.c.b16 %v8822, %v8821
        %v8857 = vpack.c.b16 %v8824, %v8823
        %v8858 = vpack.c.b16 %v8826, %v8825
        %8891 = vmatprep.subr.bf16.mxu0 0
        %8892 = vmatpush1.bf16.msra.mxu0 %v8834
        %8893 = vmatprep.subr.bf16.mxu0 0
        %8894 = vmatpush1.bf16.msra.mxu0 %v8833
        %8895 = vmatprep.subr.bf16.mxu0 0
        %8896 = vmatpush1.bf16.msra.mxu0 %v8832
        %8897 = vmatprep.subr.bf16.mxu0 0
        %8898 = vmatpush1.bf16.msra.mxu0 %v8831
        %8899 = vmatprep.subr.bf16.mxu0 0
        %8900 = vmatpush1.bf16.msra.mxu0 %v8830
        %8901 = vmatprep.subr.bf16.mxu0 0
        %8902 = vmatpush1.bf16.msra.mxu0 %v8829
        %8903 = vmatprep.subr.bf16.mxu0 0
        %8904 = vmatpush1.bf16.msra.mxu0 %v8828
        %8905 = vmatprep.subr.bf16.mxu0 0
        %8906 = vmatpush1.bf16.msra.mxu0 %v8827
        %8907 = vmatprep.subr.bf16.mxu0 0
        %8908 = vmatpush2.bf16.msra.mxu0 %v8842
        %8909 = vmatprep.subr.bf16.mxu0 0
        %8910 = vmatpush2.bf16.msra.mxu0 %v8841
        %8911 = vmatprep.subr.bf16.mxu0 0
        %8912 = vmatpush2.bf16.msra.mxu0 %v8840
        %8913 = vmatprep.subr.bf16.mxu0 0
        %8914 = vmatpush2.bf16.msra.mxu0 %v8839
        %8915 = vmatprep.subr.bf16.mxu0 0
        %8916 = vmatpush2.bf16.msra.mxu0 %v8838
        %8917 = vmatprep.subr.bf16.mxu0 0
        %8918 = vmatpush2.bf16.msra.mxu0 %v8837
        %8919 = vmatprep.subr.bf16.mxu0 0
        %8920 = vmatpush2.bf16.msra.mxu0 %v8836
        %8921 = vmatprep.subr.bf16.mxu0 0
        %8922 = vmatpush2.bf16.msra.mxu0 %v8835
        %8923 = vmatprep.mubr.bf16.mxu0 %v8279
        %8924 = vmatmul.mubr.bf16.gmra.mxu0 %v8278
        %v8925 = vpop.f32.mrf.mxu0
        %v8926 = vadd.f32 %v8694, %v8925
        %v8927 = vpop.f32.mrf.mxu0
        %v8928 = vpop.f32.mrf.mxu0
        %v8929 = vpop.f32.mrf.mxu0
        %8930 = vdwg.mxu0
        %8931 = vmatprep.subr.bf16.mxu0 0
        %8932 = vmatpush1.bf16.msra.mxu0 %v8850
        %8933 = vmatprep.subr.bf16.mxu0 0
        %8934 = vmatpush1.bf16.msra.mxu0 %v8849
        %8935 = vmatprep.subr.bf16.mxu0 0
        %8936 = vmatpush1.bf16.msra.mxu0 %v8848
        %8937 = vmatprep.subr.bf16.mxu0 0
        %8938 = vmatpush1.bf16.msra.mxu0 %v8847
        %8939 = vmatprep.subr.bf16.mxu0 0
        %8940 = vmatpush1.bf16.msra.mxu0 %v8846
        %8941 = vmatprep.subr.bf16.mxu0 0
        %8942 = vmatpush1.bf16.msra.mxu0 %v8845
        %8943 = vmatprep.subr.bf16.mxu0 0
        %8944 = vmatpush1.bf16.msra.mxu0 %v8844
        %8945 = vmatprep.subr.bf16.mxu0 0
        %8946 = vmatpush1.bf16.msra.mxu0 %v8843
        %8947 = vmatprep.subr.bf16.mxu0 0
        %8948 = vmatpush2.bf16.msra.mxu0 %v8858
        %8949 = vmatprep.subr.bf16.mxu0 0
        %8950 = vmatpush2.bf16.msra.mxu0 %v8857
        %8951 = vmatprep.subr.bf16.mxu0 0
        %8952 = vmatpush2.bf16.msra.mxu0 %v8856
        %8953 = vmatprep.subr.bf16.mxu0 0
        %8954 = vmatpush2.bf16.msra.mxu0 %v8855
        %8955 = vmatprep.subr.bf16.mxu0 0
        %8956 = vmatpush2.bf16.msra.mxu0 %v8854
        %8957 = vmatprep.subr.bf16.mxu0 0
        %8958 = vmatpush2.bf16.msra.mxu0 %v8853
        %8959 = vmatprep.subr.bf16.mxu0 0
        %8960 = vmatpush2.bf16.msra.mxu0 %v8852
        %8961 = vmatprep.subr.bf16.mxu0 0
        %8962 = vmatpush2.bf16.msra.mxu0 %v8851
        %8963 = vmatprep.mubr.bf16.mxu0 %v8281
        %8964 = vmatmul.mubr.bf16.gmra.mxu0 %v8280
        %v8965 = vpop.f32.mrf.mxu0
        %v8966 = vadd.f32 %v8926, %v8965
        %v8967 = vpop.f32.mrf.mxu0
        %v8968 = vpop.f32.mrf.mxu0
        %v8969 = vpop.f32.mrf.mxu0
        %8970 = vdwg.mxu0
        %s8971 = scalar_lea.vmem [#allocation10], 512
        %v8972 = vld [vmem:[%s8971] sm:$0xf]
        %v8973 = vld [vmem:[%s8971 + $0x4] sm:$0xf]
        %v8974 = vld [vmem:[%s8971 + $0x8] sm:$0xf]
        %v8975 = vld [vmem:[%s8971 + $0xc] sm:$0xf]
        %v8976 = vld [vmem:[%s8971 + $0x10] sm:$0xf]
        %v8977 = vld [vmem:[%s8971 + $0x14] sm:$0xf]
        %v8978 = vld [vmem:[%s8971 + $0x18] sm:$0xf]
        %v8979 = vld [vmem:[%s8971 + $0x1c] sm:$0xf]
        %v8980 = vld [vmem:[%s8971 + $0x20] sm:$0xf]
        %v8981 = vld [vmem:[%s8971 + $0x24] sm:$0xf]
        %v8982 = vld [vmem:[%s8971 + $0x28] sm:$0xf]
        %v8983 = vld [vmem:[%s8971 + $0x2c] sm:$0xf]
        %v8984 = vld [vmem:[%s8971 + $0x30] sm:$0xf]
        %v8985 = vld [vmem:[%s8971 + $0x34] sm:$0xf]
        %v8986 = vld [vmem:[%s8971 + $0x38] sm:$0xf]
        %v8987 = vld [vmem:[%s8971 + $0x3c] sm:$0xf]
        %v8988 = vld [vmem:[%s8971 + $0x40] sm:$0xf]
        %v8989 = vld [vmem:[%s8971 + $0x44] sm:$0xf]
        %v8990 = vld [vmem:[%s8971 + $0x48] sm:$0xf]
        %v8991 = vld [vmem:[%s8971 + $0x4c] sm:$0xf]
        %v8992 = vld [vmem:[%s8971 + $0x50] sm:$0xf]
        %v8993 = vld [vmem:[%s8971 + $0x54] sm:$0xf]
        %v8994 = vld [vmem:[%s8971 + $0x58] sm:$0xf]
        %v8995 = vld [vmem:[%s8971 + $0x5c] sm:$0xf]
        %v8996 = vld [vmem:[%s8971 + $0x60] sm:$0xf]
        %v8997 = vld [vmem:[%s8971 + $0x64] sm:$0xf]
        %v8998 = vld [vmem:[%s8971 + $0x68] sm:$0xf]
        %v8999 = vld [vmem:[%s8971 + $0x6c] sm:$0xf]
        %v9000 = vld [vmem:[%s8971 + $0x70] sm:$0xf]
        %v9001 = vld [vmem:[%s8971 + $0x74] sm:$0xf]
        %v9002 = vld [vmem:[%s8971 + $0x78] sm:$0xf]
        %v9003 = vld [vmem:[%s8971 + $0x7c] sm:$0xf]
        %v9004 = vld [vmem:[%s8971 + $0x80] sm:$0xf]
        %v9005 = vld [vmem:[%s8971 + $0x84] sm:$0xf]
        %v9006 = vld [vmem:[%s8971 + $0x88] sm:$0xf]
        %v9007 = vld [vmem:[%s8971 + $0x8c] sm:$0xf]
        %v9008 = vld [vmem:[%s8971 + $0x90] sm:$0xf]
        %v9009 = vld [vmem:[%s8971 + $0x94] sm:$0xf]
        %v9010 = vld [vmem:[%s8971 + $0x98] sm:$0xf]
        %v9011 = vld [vmem:[%s8971 + $0x9c] sm:$0xf]
        %v9012 = vld [vmem:[%s8971 + $0xa0] sm:$0xf]
        %v9013 = vld [vmem:[%s8971 + $0xa4] sm:$0xf]
        %v9014 = vld [vmem:[%s8971 + $0xa8] sm:$0xf]
        %v9015 = vld [vmem:[%s8971 + $0xac] sm:$0xf]
        %v9016 = vld [vmem:[%s8971 + $0xb0] sm:$0xf]
        %v9017 = vld [vmem:[%s8971 + $0xb4] sm:$0xf]
        %v9018 = vld [vmem:[%s8971 + $0xb8] sm:$0xf]
        %v9019 = vld [vmem:[%s8971 + $0xbc] sm:$0xf]
        %v9020 = vld [vmem:[%s8971 + $0xc0] sm:$0xf]
        %v9021 = vld [vmem:[%s8971 + $0xc4] sm:$0xf]
        %v9022 = vld [vmem:[%s8971 + $0xc8] sm:$0xf]
        %v9023 = vld [vmem:[%s8971 + $0xcc] sm:$0xf]
        %v9024 = vld [vmem:[%s8971 + $0xd0] sm:$0xf]
        %v9025 = vld [vmem:[%s8971 + $0xd4] sm:$0xf]
        %v9026 = vld [vmem:[%s8971 + $0xd8] sm:$0xf]
        %v9027 = vld [vmem:[%s8971 + $0xdc] sm:$0xf]
        %v9028 = vld [vmem:[%s8971 + $0xe0] sm:$0xf]
        %v9029 = vld [vmem:[%s8971 + $0xe4] sm:$0xf]
        %v9030 = vld [vmem:[%s8971 + $0xe8] sm:$0xf]
        %v9031 = vld [vmem:[%s8971 + $0xec] sm:$0xf]
        %v9032 = vld [vmem:[%s8971 + $0xf0] sm:$0xf]
        %v9033 = vld [vmem:[%s8971 + $0xf4] sm:$0xf]
        %v9034 = vld [vmem:[%s8971 + $0xf8] sm:$0xf]
        %v9035 = vld [vmem:[%s8971 + $0xfc] sm:$0xf]
        %v9040 = vrot.slane %v8278, 1
        %v9041 = vrot.slane %v8279, 1
        %v9042 = vrot.slane %v8280, 1
        %v9043 = vrot.slane %v8281, 1
        %v9112 = vunpack.c.l.b16 %v8972
        %v9113 = vunpack.c.l.b16 %v8973
        %v9114 = vunpack.c.l.b16 %v8974
        %v9115 = vunpack.c.l.b16 %v8975
        %v9116 = vunpack.c.l.b16 %v8976
        %v9117 = vunpack.c.l.b16 %v8977
        %v9118 = vunpack.c.l.b16 %v8978
        %v9119 = vunpack.c.l.b16 %v8979
        %v9120 = vunpack.c.l.b16 %v8980
        %v9121 = vunpack.c.l.b16 %v8981
        %v9122 = vunpack.c.l.b16 %v8982
        %v9123 = vunpack.c.l.b16 %v8983
        %v9124 = vunpack.c.l.b16 %v8984
        %v9125 = vunpack.c.l.b16 %v8985
        %v9126 = vunpack.c.l.b16 %v8986
        %v9127 = vunpack.c.l.b16 %v8987
        %v9128 = vunpack.c.l.b16 %v8988
        %v9129 = vunpack.c.l.b16 %v8989
        %v9130 = vunpack.c.l.b16 %v8990
        %v9131 = vunpack.c.l.b16 %v8991
        %v9132 = vunpack.c.l.b16 %v8992
        %v9133 = vunpack.c.l.b16 %v8993
        %v9134 = vunpack.c.l.b16 %v8994
        %v9135 = vunpack.c.l.b16 %v8995
        %v9136 = vunpack.c.l.b16 %v8996
        %v9137 = vunpack.c.l.b16 %v8997
        %v9138 = vunpack.c.l.b16 %v8998
        %v9139 = vunpack.c.l.b16 %v8999
        %v9140 = vunpack.c.l.b16 %v9000
        %v9141 = vunpack.c.l.b16 %v9001
        %v9142 = vunpack.c.l.b16 %v9002
        %v9143 = vunpack.c.l.b16 %v9003
        %v9144 = vunpack.c.l.b16 %v9004
        %v9145 = vunpack.c.l.b16 %v9005
        %v9146 = vunpack.c.l.b16 %v9006
        %v9147 = vunpack.c.l.b16 %v9007
        %v9148 = vunpack.c.l.b16 %v9008
        %v9149 = vunpack.c.l.b16 %v9009
        %v9150 = vunpack.c.l.b16 %v9010
        %v9151 = vunpack.c.l.b16 %v9011
        %v9152 = vunpack.c.l.b16 %v9012
        %v9153 = vunpack.c.l.b16 %v9013
        %v9154 = vunpack.c.l.b16 %v9014
        %v9155 = vunpack.c.l.b16 %v9015
        %v9156 = vunpack.c.l.b16 %v9016
        %v9157 = vunpack.c.l.b16 %v9017
        %v9158 = vunpack.c.l.b16 %v9018
        %v9159 = vunpack.c.l.b16 %v9019
        %v9160 = vunpack.c.l.b16 %v9020
        %v9161 = vunpack.c.l.b16 %v9021
        %v9162 = vunpack.c.l.b16 %v9022
        %v9163 = vunpack.c.l.b16 %v9023
        %v9164 = vunpack.c.l.b16 %v9024
        %v9165 = vunpack.c.l.b16 %v9025
        %v9166 = vunpack.c.l.b16 %v9026
        %v9167 = vunpack.c.l.b16 %v9027
        %v9168 = vunpack.c.l.b16 %v9028
        %v9169 = vunpack.c.l.b16 %v9029
        %v9170 = vunpack.c.l.b16 %v9030
        %v9171 = vunpack.c.l.b16 %v9031
        %v9172 = vunpack.c.l.b16 %v9032
        %v9173 = vunpack.c.l.b16 %v9033
        %v9174 = vunpack.c.l.b16 %v9034
        %v9175 = vunpack.c.l.b16 %v9035
        %v9176 = vpack.c.b16 %v9113, %v9112
        %v9177 = vpack.c.b16 %v9115, %v9114
        %v9178 = vpack.c.b16 %v9117, %v9116
        %v9179 = vpack.c.b16 %v9119, %v9118
        %v9180 = vpack.c.b16 %v9121, %v9120
        %v9181 = vpack.c.b16 %v9123, %v9122
        %v9182 = vpack.c.b16 %v9125, %v9124
        %v9183 = vpack.c.b16 %v9127, %v9126
        %v9184 = vpack.c.b16 %v9129, %v9128
        %v9185 = vpack.c.b16 %v9131, %v9130
        %v9186 = vpack.c.b16 %v9133, %v9132
        %v9187 = vpack.c.b16 %v9135, %v9134
        %v9188 = vpack.c.b16 %v9137, %v9136
        %v9189 = vpack.c.b16 %v9139, %v9138
        %v9190 = vpack.c.b16 %v9141, %v9140
        %v9191 = vpack.c.b16 %v9143, %v9142
        %v9192 = vpack.c.b16 %v9145, %v9144
        %v9193 = vpack.c.b16 %v9147, %v9146
        %v9194 = vpack.c.b16 %v9149, %v9148
        %v9195 = vpack.c.b16 %v9151, %v9150
        %v9196 = vpack.c.b16 %v9153, %v9152
        %v9197 = vpack.c.b16 %v9155, %v9154
        %v9198 = vpack.c.b16 %v9157, %v9156
        %v9199 = vpack.c.b16 %v9159, %v9158
        %v9200 = vpack.c.b16 %v9161, %v9160
        %v9201 = vpack.c.b16 %v9163, %v9162
        %v9202 = vpack.c.b16 %v9165, %v9164
        %v9203 = vpack.c.b16 %v9167, %v9166
        %v9204 = vpack.c.b16 %v9169, %v9168
        %v9205 = vpack.c.b16 %v9171, %v9170
        %v9206 = vpack.c.b16 %v9173, %v9172
        %v9207 = vpack.c.b16 %v9175, %v9174
        %9240 = vmatprep.subr.bf16.mxu0 0
        %9241 = vmatpush1.bf16.msra.mxu0 %v9183
        %9242 = vmatprep.subr.bf16.mxu0 0
        %9243 = vmatpush1.bf16.msra.mxu0 %v9182
        %9244 = vmatprep.subr.bf16.mxu0 0
        %9245 = vmatpush1.bf16.msra.mxu0 %v9181
        %9246 = vmatprep.subr.bf16.mxu0 0
        %9247 = vmatpush1.bf16.msra.mxu0 %v9180
        %9248 = vmatprep.subr.bf16.mxu0 0
        %9249 = vmatpush1.bf16.msra.mxu0 %v9179
        %9250 = vmatprep.subr.bf16.mxu0 0
        %9251 = vmatpush1.bf16.msra.mxu0 %v9178
        %9252 = vmatprep.subr.bf16.mxu0 0
        %9253 = vmatpush1.bf16.msra.mxu0 %v9177
        %9254 = vmatprep.subr.bf16.mxu0 0
        %9255 = vmatpush1.bf16.msra.mxu0 %v9176
        %9256 = vmatprep.subr.bf16.mxu0 0
        %9257 = vmatpush2.bf16.msra.mxu0 %v9191
        %9258 = vmatprep.subr.bf16.mxu0 0
        %9259 = vmatpush2.bf16.msra.mxu0 %v9190
        %9260 = vmatprep.subr.bf16.mxu0 0
        %9261 = vmatpush2.bf16.msra.mxu0 %v9189
        %9262 = vmatprep.subr.bf16.mxu0 0
        %9263 = vmatpush2.bf16.msra.mxu0 %v9188
        %9264 = vmatprep.subr.bf16.mxu0 0
        %9265 = vmatpush2.bf16.msra.mxu0 %v9187
        %9266 = vmatprep.subr.bf16.mxu0 0
        %9267 = vmatpush2.bf16.msra.mxu0 %v9186
        %9268 = vmatprep.subr.bf16.mxu0 0
        %9269 = vmatpush2.bf16.msra.mxu0 %v9185
        %9270 = vmatprep.subr.bf16.mxu0 0
        %9271 = vmatpush2.bf16.msra.mxu0 %v9184
        %9272 = vmatprep.mubr.bf16.mxu0 %v9041
        %9273 = vmatmul.mubr.bf16.gmra.mxu0 %v9040
        %v9274 = vpop.f32.mrf.mxu0
        %v9275 = vadd.f32 0.0, %v9274
        %v9276 = vpop.f32.mrf.mxu0
        %v9277 = vpop.f32.mrf.mxu0
        %v9278 = vpop.f32.mrf.mxu0
        %9279 = vdwg.mxu0
        %9280 = vmatprep.subr.bf16.mxu0 0
        %9281 = vmatpush1.bf16.msra.mxu0 %v9199
        %9282 = vmatprep.subr.bf16.mxu0 0
        %9283 = vmatpush1.bf16.msra.mxu0 %v9198
        %9284 = vmatprep.subr.bf16.mxu0 0
        %9285 = vmatpush1.bf16.msra.mxu0 %v9197
        %9286 = vmatprep.subr.bf16.mxu0 0
        %9287 = vmatpush1.bf16.msra.mxu0 %v9196
        %9288 = vmatprep.subr.bf16.mxu0 0
        %9289 = vmatpush1.bf16.msra.mxu0 %v9195
        %9290 = vmatprep.subr.bf16.mxu0 0
        %9291 = vmatpush1.bf16.msra.mxu0 %v9194
        %9292 = vmatprep.subr.bf16.mxu0 0
        %9293 = vmatpush1.bf16.msra.mxu0 %v9193
        %9294 = vmatprep.subr.bf16.mxu0 0
        %9295 = vmatpush1.bf16.msra.mxu0 %v9192
        %9296 = vmatprep.subr.bf16.mxu0 0
        %9297 = vmatpush2.bf16.msra.mxu0 %v9207
        %9298 = vmatprep.subr.bf16.mxu0 0
        %9299 = vmatpush2.bf16.msra.mxu0 %v9206
        %9300 = vmatprep.subr.bf16.mxu0 0
        %9301 = vmatpush2.bf16.msra.mxu0 %v9205
        %9302 = vmatprep.subr.bf16.mxu0 0
        %9303 = vmatpush2.bf16.msra.mxu0 %v9204
        %9304 = vmatprep.subr.bf16.mxu0 0
        %9305 = vmatpush2.bf16.msra.mxu0 %v9203
        %9306 = vmatprep.subr.bf16.mxu0 0
        %9307 = vmatpush2.bf16.msra.mxu0 %v9202
        %9308 = vmatprep.subr.bf16.mxu0 0
        %9309 = vmatpush2.bf16.msra.mxu0 %v9201
        %9310 = vmatprep.subr.bf16.mxu0 0
        %9311 = vmatpush2.bf16.msra.mxu0 %v9200
        %9312 = vmatprep.mubr.bf16.mxu0 %v9043
        %9313 = vmatmul.mubr.bf16.gmra.mxu0 %v9042
        %v9314 = vpop.f32.mrf.mxu0
        %v9315 = vadd.f32 %v9275, %v9314
        %v9316 = vpop.f32.mrf.mxu0
        %v9317 = vpop.f32.mrf.mxu0
        %v9318 = vpop.f32.mrf.mxu0
        %9319 = vdwg.mxu0
        %v9320 = vadd.f32 %v8966, %v9315
        %s9321 = scalar_lea.vmem [#allocation10], 768
        %v9322 = vld [vmem:[%s9321] sm:$0xf]
        %v9323 = vld [vmem:[%s9321 + $0x4] sm:$0xf]
        %v9324 = vld [vmem:[%s9321 + $0x8] sm:$0xf]
        %v9325 = vld [vmem:[%s9321 + $0xc] sm:$0xf]
        %v9326 = vld [vmem:[%s9321 + $0x10] sm:$0xf]
        %v9327 = vld [vmem:[%s9321 + $0x14] sm:$0xf]
        %v9328 = vld [vmem:[%s9321 + $0x18] sm:$0xf]
        %v9329 = vld [vmem:[%s9321 + $0x1c] sm:$0xf]
        %v9330 = vld [vmem:[%s9321 + $0x20] sm:$0xf]
        %v9331 = vld [vmem:[%s9321 + $0x24] sm:$0xf]
        %v9332 = vld [vmem:[%s9321 + $0x28] sm:$0xf]
        %v9333 = vld [vmem:[%s9321 + $0x2c] sm:$0xf]
        %v9334 = vld [vmem:[%s9321 + $0x30] sm:$0xf]
        %v9335 = vld [vmem:[%s9321 + $0x34] sm:$0xf]
        %v9336 = vld [vmem:[%s9321 + $0x38] sm:$0xf]
        %v9337 = vld [vmem:[%s9321 + $0x3c] sm:$0xf]
        %v9338 = vld [vmem:[%s9321 + $0x40] sm:$0xf]
        %v9339 = vld [vmem:[%s9321 + $0x44] sm:$0xf]
        %v9340 = vld [vmem:[%s9321 + $0x48] sm:$0xf]
        %v9341 = vld [vmem:[%s9321 + $0x4c] sm:$0xf]
        %v9342 = vld [vmem:[%s9321 + $0x50] sm:$0xf]
        %v9343 = vld [vmem:[%s9321 + $0x54] sm:$0xf]
        %v9344 = vld [vmem:[%s9321 + $0x58] sm:$0xf]
        %v9345 = vld [vmem:[%s9321 + $0x5c] sm:$0xf]
        %v9346 = vld [vmem:[%s9321 + $0x60] sm:$0xf]
        %v9347 = vld [vmem:[%s9321 + $0x64] sm:$0xf]
        %v9348 = vld [vmem:[%s9321 + $0x68] sm:$0xf]
        %v9349 = vld [vmem:[%s9321 + $0x6c] sm:$0xf]
        %v9350 = vld [vmem:[%s9321 + $0x70] sm:$0xf]
        %v9351 = vld [vmem:[%s9321 + $0x74] sm:$0xf]
        %v9352 = vld [vmem:[%s9321 + $0x78] sm:$0xf]
        %v9353 = vld [vmem:[%s9321 + $0x7c] sm:$0xf]
        %v9354 = vld [vmem:[%s9321 + $0x80] sm:$0xf]
        %v9355 = vld [vmem:[%s9321 + $0x84] sm:$0xf]
        %v9356 = vld [vmem:[%s9321 + $0x88] sm:$0xf]
        %v9357 = vld [vmem:[%s9321 + $0x8c] sm:$0xf]
        %v9358 = vld [vmem:[%s9321 + $0x90] sm:$0xf]
        %v9359 = vld [vmem:[%s9321 + $0x94] sm:$0xf]
        %v9360 = vld [vmem:[%s9321 + $0x98] sm:$0xf]
        %v9361 = vld [vmem:[%s9321 + $0x9c] sm:$0xf]
        %v9362 = vld [vmem:[%s9321 + $0xa0] sm:$0xf]
        %v9363 = vld [vmem:[%s9321 + $0xa4] sm:$0xf]
        %v9364 = vld [vmem:[%s9321 + $0xa8] sm:$0xf]
        %v9365 = vld [vmem:[%s9321 + $0xac] sm:$0xf]
        %v9366 = vld [vmem:[%s9321 + $0xb0] sm:$0xf]
        %v9367 = vld [vmem:[%s9321 + $0xb4] sm:$0xf]
        %v9368 = vld [vmem:[%s9321 + $0xb8] sm:$0xf]
        %v9369 = vld [vmem:[%s9321 + $0xbc] sm:$0xf]
        %v9370 = vld [vmem:[%s9321 + $0xc0] sm:$0xf]
        %v9371 = vld [vmem:[%s9321 + $0xc4] sm:$0xf]
        %v9372 = vld [vmem:[%s9321 + $0xc8] sm:$0xf]
        %v9373 = vld [vmem:[%s9321 + $0xcc] sm:$0xf]
        %v9374 = vld [vmem:[%s9321 + $0xd0] sm:$0xf]
        %v9375 = vld [vmem:[%s9321 + $0xd4] sm:$0xf]
        %v9376 = vld [vmem:[%s9321 + $0xd8] sm:$0xf]
        %v9377 = vld [vmem:[%s9321 + $0xdc] sm:$0xf]
        %v9378 = vld [vmem:[%s9321 + $0xe0] sm:$0xf]
        %v9379 = vld [vmem:[%s9321 + $0xe4] sm:$0xf]
        %v9380 = vld [vmem:[%s9321 + $0xe8] sm:$0xf]
        %v9381 = vld [vmem:[%s9321 + $0xec] sm:$0xf]
        %v9382 = vld [vmem:[%s9321 + $0xf0] sm:$0xf]
        %v9383 = vld [vmem:[%s9321 + $0xf4] sm:$0xf]
        %v9384 = vld [vmem:[%s9321 + $0xf8] sm:$0xf]
        %v9385 = vld [vmem:[%s9321 + $0xfc] sm:$0xf]
        %v9386 = vrot.slane %v8412, 1
        %v9387 = vrot.slane %v8415, 1
        %v9388 = vrot.slane %v8418, 1
        %v9389 = vrot.slane %v8421, 1
        %v9458 = vunpack.c.l.b16 %v9322
        %v9459 = vunpack.c.l.b16 %v9323
        %v9460 = vunpack.c.l.b16 %v9324
        %v9461 = vunpack.c.l.b16 %v9325
        %v9462 = vunpack.c.l.b16 %v9326
        %v9463 = vunpack.c.l.b16 %v9327
        %v9464 = vunpack.c.l.b16 %v9328
        %v9465 = vunpack.c.l.b16 %v9329
        %v9466 = vunpack.c.l.b16 %v9330
        %v9467 = vunpack.c.l.b16 %v9331
        %v9468 = vunpack.c.l.b16 %v9332
        %v9469 = vunpack.c.l.b16 %v9333
        %v9470 = vunpack.c.l.b16 %v9334
        %v9471 = vunpack.c.l.b16 %v9335
        %v9472 = vunpack.c.l.b16 %v9336
        %v9473 = vunpack.c.l.b16 %v9337
        %v9474 = vunpack.c.l.b16 %v9338
        %v9475 = vunpack.c.l.b16 %v9339
        %v9476 = vunpack.c.l.b16 %v9340
        %v9477 = vunpack.c.l.b16 %v9341
        %v9478 = vunpack.c.l.b16 %v9342
        %v9479 = vunpack.c.l.b16 %v9343
        %v9480 = vunpack.c.l.b16 %v9344
        %v9481 = vunpack.c.l.b16 %v9345
        %v9482 = vunpack.c.l.b16 %v9346
        %v9483 = vunpack.c.l.b16 %v9347
        %v9484 = vunpack.c.l.b16 %v9348
        %v9485 = vunpack.c.l.b16 %v9349
        %v9486 = vunpack.c.l.b16 %v9350
        %v9487 = vunpack.c.l.b16 %v9351
        %v9488 = vunpack.c.l.b16 %v9352
        %v9489 = vunpack.c.l.b16 %v9353
        %v9490 = vunpack.c.l.b16 %v9354
        %v9491 = vunpack.c.l.b16 %v9355
        %v9492 = vunpack.c.l.b16 %v9356
        %v9493 = vunpack.c.l.b16 %v9357
        %v9494 = vunpack.c.l.b16 %v9358
        %v9495 = vunpack.c.l.b16 %v9359
        %v9496 = vunpack.c.l.b16 %v9360
        %v9497 = vunpack.c.l.b16 %v9361
        %v9498 = vunpack.c.l.b16 %v9362
        %v9499 = vunpack.c.l.b16 %v9363
        %v9500 = vunpack.c.l.b16 %v9364
        %v9501 = vunpack.c.l.b16 %v9365
        %v9502 = vunpack.c.l.b16 %v9366
        %v9503 = vunpack.c.l.b16 %v9367
        %v9504 = vunpack.c.l.b16 %v9368
        %v9505 = vunpack.c.l.b16 %v9369
        %v9506 = vunpack.c.l.b16 %v9370
        %v9507 = vunpack.c.l.b16 %v9371
        %v9508 = vunpack.c.l.b16 %v9372
        %v9509 = vunpack.c.l.b16 %v9373
        %v9510 = vunpack.c.l.b16 %v9374
        %v9511 = vunpack.c.l.b16 %v9375
        %v9512 = vunpack.c.l.b16 %v9376
        %v9513 = vunpack.c.l.b16 %v9377
        %v9514 = vunpack.c.l.b16 %v9378
        %v9515 = vunpack.c.l.b16 %v9379
        %v9516 = vunpack.c.l.b16 %v9380
        %v9517 = vunpack.c.l.b16 %v9381
        %v9518 = vunpack.c.l.b16 %v9382
        %v9519 = vunpack.c.l.b16 %v9383
        %v9520 = vunpack.c.l.b16 %v9384
        %v9521 = vunpack.c.l.b16 %v9385
        %v9522 = vpack.c.b16 %v9459, %v9458
        %v9523 = vpack.c.b16 %v9461, %v9460
        %v9524 = vpack.c.b16 %v9463, %v9462
        %v9525 = vpack.c.b16 %v9465, %v9464
        %v9526 = vpack.c.b16 %v9467, %v9466
        %v9527 = vpack.c.b16 %v9469, %v9468
        %v9528 = vpack.c.b16 %v9471, %v9470
        %v9529 = vpack.c.b16 %v9473, %v9472
        %v9530 = vpack.c.b16 %v9475, %v9474
        %v9531 = vpack.c.b16 %v9477, %v9476
        %v9532 = vpack.c.b16 %v9479, %v9478
        %v9533 = vpack.c.b16 %v9481, %v9480
        %v9534 = vpack.c.b16 %v9483, %v9482
        %v9535 = vpack.c.b16 %v9485, %v9484
        %v9536 = vpack.c.b16 %v9487, %v9486
        %v9537 = vpack.c.b16 %v9489, %v9488
        %v9538 = vpack.c.b16 %v9491, %v9490
        %v9539 = vpack.c.b16 %v9493, %v9492
        %v9540 = vpack.c.b16 %v9495, %v9494
        %v9541 = vpack.c.b16 %v9497, %v9496
        %v9542 = vpack.c.b16 %v9499, %v9498
        %v9543 = vpack.c.b16 %v9501, %v9500
        %v9544 = vpack.c.b16 %v9503, %v9502
        %v9545 = vpack.c.b16 %v9505, %v9504
        %v9546 = vpack.c.b16 %v9507, %v9506
        %v9547 = vpack.c.b16 %v9509, %v9508
        %v9548 = vpack.c.b16 %v9511, %v9510
        %v9549 = vpack.c.b16 %v9513, %v9512
        %v9550 = vpack.c.b16 %v9515, %v9514
        %v9551 = vpack.c.b16 %v9517, %v9516
        %v9552 = vpack.c.b16 %v9519, %v9518
        %v9553 = vpack.c.b16 %v9521, %v9520
        %9586 = vmatprep.subr.bf16.mxu0 0
        %9587 = vmatpush1.bf16.msra.mxu0 %v9529
        %9588 = vmatprep.subr.bf16.mxu0 0
        %9589 = vmatpush1.bf16.msra.mxu0 %v9528
        %9590 = vmatprep.subr.bf16.mxu0 0
        %9591 = vmatpush1.bf16.msra.mxu0 %v9527
        %9592 = vmatprep.subr.bf16.mxu0 0
        %9593 = vmatpush1.bf16.msra.mxu0 %v9526
        %9594 = vmatprep.subr.bf16.mxu0 0
        %9595 = vmatpush1.bf16.msra.mxu0 %v9525
        %9596 = vmatprep.subr.bf16.mxu0 0
        %9597 = vmatpush1.bf16.msra.mxu0 %v9524
        %9598 = vmatprep.subr.bf16.mxu0 0
        %9599 = vmatpush1.bf16.msra.mxu0 %v9523
        %9600 = vmatprep.subr.bf16.mxu0 0
        %9601 = vmatpush1.bf16.msra.mxu0 %v9522
        %9602 = vmatprep.subr.bf16.mxu0 0
        %9603 = vmatpush2.bf16.msra.mxu0 %v9537
        %9604 = vmatprep.subr.bf16.mxu0 0
        %9605 = vmatpush2.bf16.msra.mxu0 %v9536
        %9606 = vmatprep.subr.bf16.mxu0 0
        %9607 = vmatpush2.bf16.msra.mxu0 %v9535
        %9608 = vmatprep.subr.bf16.mxu0 0
        %9609 = vmatpush2.bf16.msra.mxu0 %v9534
        %9610 = vmatprep.subr.bf16.mxu0 0
        %9611 = vmatpush2.bf16.msra.mxu0 %v9533
        %9612 = vmatprep.subr.bf16.mxu0 0
        %9613 = vmatpush2.bf16.msra.mxu0 %v9532
        %9614 = vmatprep.subr.bf16.mxu0 0
        %9615 = vmatpush2.bf16.msra.mxu0 %v9531
        %9616 = vmatprep.subr.bf16.mxu0 0
        %9617 = vmatpush2.bf16.msra.mxu0 %v9530
        %9618 = vmatprep.mubr.bf16.mxu0 %v9387
        %9619 = vmatmul.mubr.bf16.gmra.mxu0 %v9386
        %v9620 = vpop.f32.mrf.mxu0
        %v9621 = vadd.f32 0.0, %v9620
        %v9622 = vpop.f32.mrf.mxu0
        %v9623 = vpop.f32.mrf.mxu0
        %v9624 = vpop.f32.mrf.mxu0
        %9625 = vdwg.mxu0
        %9626 = vmatprep.subr.bf16.mxu0 0
        %9627 = vmatpush1.bf16.msra.mxu0 %v9545
        %9628 = vmatprep.subr.bf16.mxu0 0
        %9629 = vmatpush1.bf16.msra.mxu0 %v9544
        %9630 = vmatprep.subr.bf16.mxu0 0
        %9631 = vmatpush1.bf16.msra.mxu0 %v9543
        %9632 = vmatprep.subr.bf16.mxu0 0
        %9633 = vmatpush1.bf16.msra.mxu0 %v9542
        %9634 = vmatprep.subr.bf16.mxu0 0
        %9635 = vmatpush1.bf16.msra.mxu0 %v9541
        %9636 = vmatprep.subr.bf16.mxu0 0
        %9637 = vmatpush1.bf16.msra.mxu0 %v9540
        %9638 = vmatprep.subr.bf16.mxu0 0
        %9639 = vmatpush1.bf16.msra.mxu0 %v9539
        %9640 = vmatprep.subr.bf16.mxu0 0
        %9641 = vmatpush1.bf16.msra.mxu0 %v9538
        %9642 = vmatprep.subr.bf16.mxu0 0
        %9643 = vmatpush2.bf16.msra.mxu0 %v9553
        %9644 = vmatprep.subr.bf16.mxu0 0
        %9645 = vmatpush2.bf16.msra.mxu0 %v9552
        %9646 = vmatprep.subr.bf16.mxu0 0
        %9647 = vmatpush2.bf16.msra.mxu0 %v9551
        %9648 = vmatprep.subr.bf16.mxu0 0
        %9649 = vmatpush2.bf16.msra.mxu0 %v9550
        %9650 = vmatprep.subr.bf16.mxu0 0
        %9651 = vmatpush2.bf16.msra.mxu0 %v9549
        %9652 = vmatprep.subr.bf16.mxu0 0
        %9653 = vmatpush2.bf16.msra.mxu0 %v9548
        %9654 = vmatprep.subr.bf16.mxu0 0
        %9655 = vmatpush2.bf16.msra.mxu0 %v9547
        %9656 = vmatprep.subr.bf16.mxu0 0
        %9657 = vmatpush2.bf16.msra.mxu0 %v9546
        %9658 = vmatprep.mubr.bf16.mxu0 %v9389
        %9659 = vmatmul.mubr.bf16.gmra.mxu0 %v9388
        %v9660 = vpop.f32.mrf.mxu0
        %v9661 = vadd.f32 %v9621, %v9660
        %v9662 = vpop.f32.mrf.mxu0
        %v9663 = vpop.f32.mrf.mxu0
        %v9664 = vpop.f32.mrf.mxu0
        %9665 = vdwg.mxu0
        %v9666 = vadd.f32 %v9320, %v9661
        %s9667 = scalar_lea.vmem [#allocation10], 1024
        %v9668 = vld [vmem:[%s9667] sm:$0xf]
        %v9669 = vld [vmem:[%s9667 + $0x4] sm:$0xf]
        %v9670 = vld [vmem:[%s9667 + $0x8] sm:$0xf]
        %v9671 = vld [vmem:[%s9667 + $0xc] sm:$0xf]
        %v9672 = vld [vmem:[%s9667 + $0x10] sm:$0xf]
        %v9673 = vld [vmem:[%s9667 + $0x14] sm:$0xf]
        %v9674 = vld [vmem:[%s9667 + $0x18] sm:$0xf]
        %v9675 = vld [vmem:[%s9667 + $0x1c] sm:$0xf]
        %v9676 = vld [vmem:[%s9667 + $0x20] sm:$0xf]
        %v9677 = vld [vmem:[%s9667 + $0x24] sm:$0xf]
        %v9678 = vld [vmem:[%s9667 + $0x28] sm:$0xf]
        %v9679 = vld [vmem:[%s9667 + $0x2c] sm:$0xf]
        %v9680 = vld [vmem:[%s9667 + $0x30] sm:$0xf]
        %v9681 = vld [vmem:[%s9667 + $0x34] sm:$0xf]
        %v9682 = vld [vmem:[%s9667 + $0x38] sm:$0xf]
        %v9683 = vld [vmem:[%s9667 + $0x3c] sm:$0xf]
        %v9684 = vld [vmem:[%s9667 + $0x40] sm:$0xf]
        %v9685 = vld [vmem:[%s9667 + $0x44] sm:$0xf]
        %v9686 = vld [vmem:[%s9667 + $0x48] sm:$0xf]
        %v9687 = vld [vmem:[%s9667 + $0x4c] sm:$0xf]
        %v9688 = vld [vmem:[%s9667 + $0x50] sm:$0xf]
        %v9689 = vld [vmem:[%s9667 + $0x54] sm:$0xf]
        %v9690 = vld [vmem:[%s9667 + $0x58] sm:$0xf]
        %v9691 = vld [vmem:[%s9667 + $0x5c] sm:$0xf]
        %v9692 = vld [vmem:[%s9667 + $0x60] sm:$0xf]
        %v9693 = vld [vmem:[%s9667 + $0x64] sm:$0xf]
        %v9694 = vld [vmem:[%s9667 + $0x68] sm:$0xf]
        %v9695 = vld [vmem:[%s9667 + $0x6c] sm:$0xf]
        %v9696 = vld [vmem:[%s9667 + $0x70] sm:$0xf]
        %v9697 = vld [vmem:[%s9667 + $0x74] sm:$0xf]
        %v9698 = vld [vmem:[%s9667 + $0x78] sm:$0xf]
        %v9699 = vld [vmem:[%s9667 + $0x7c] sm:$0xf]
        %v9700 = vld [vmem:[%s9667 + $0x80] sm:$0xf]
        %v9701 = vld [vmem:[%s9667 + $0x84] sm:$0xf]
        %v9702 = vld [vmem:[%s9667 + $0x88] sm:$0xf]
        %v9703 = vld [vmem:[%s9667 + $0x8c] sm:$0xf]
        %v9704 = vld [vmem:[%s9667 + $0x90] sm:$0xf]
        %v9705 = vld [vmem:[%s9667 + $0x94] sm:$0xf]
        %v9706 = vld [vmem:[%s9667 + $0x98] sm:$0xf]
        %v9707 = vld [vmem:[%s9667 + $0x9c] sm:$0xf]
        %v9708 = vld [vmem:[%s9667 + $0xa0] sm:$0xf]
        %v9709 = vld [vmem:[%s9667 + $0xa4] sm:$0xf]
        %v9710 = vld [vmem:[%s9667 + $0xa8] sm:$0xf]
        %v9711 = vld [vmem:[%s9667 + $0xac] sm:$0xf]
        %v9712 = vld [vmem:[%s9667 + $0xb0] sm:$0xf]
        %v9713 = vld [vmem:[%s9667 + $0xb4] sm:$0xf]
        %v9714 = vld [vmem:[%s9667 + $0xb8] sm:$0xf]
        %v9715 = vld [vmem:[%s9667 + $0xbc] sm:$0xf]
        %v9716 = vld [vmem:[%s9667 + $0xc0] sm:$0xf]
        %v9717 = vld [vmem:[%s9667 + $0xc4] sm:$0xf]
        %v9718 = vld [vmem:[%s9667 + $0xc8] sm:$0xf]
        %v9719 = vld [vmem:[%s9667 + $0xcc] sm:$0xf]
        %v9720 = vld [vmem:[%s9667 + $0xd0] sm:$0xf]
        %v9721 = vld [vmem:[%s9667 + $0xd4] sm:$0xf]
        %v9722 = vld [vmem:[%s9667 + $0xd8] sm:$0xf]
        %v9723 = vld [vmem:[%s9667 + $0xdc] sm:$0xf]
        %v9724 = vld [vmem:[%s9667 + $0xe0] sm:$0xf]
        %v9725 = vld [vmem:[%s9667 + $0xe4] sm:$0xf]
        %v9726 = vld [vmem:[%s9667 + $0xe8] sm:$0xf]
        %v9727 = vld [vmem:[%s9667 + $0xec] sm:$0xf]
        %v9728 = vld [vmem:[%s9667 + $0xf0] sm:$0xf]
        %v9729 = vld [vmem:[%s9667 + $0xf4] sm:$0xf]
        %v9730 = vld [vmem:[%s9667 + $0xf8] sm:$0xf]
        %v9731 = vld [vmem:[%s9667 + $0xfc] sm:$0xf]
        %v9732 = vrot.slane %v8278, 2
        %v9733 = vrot.slane %v8279, 2
        %v9734 = vrot.slane %v8280, 2
        %v9735 = vrot.slane %v8281, 2
        %v9804 = vunpack.c.l.b16 %v9668
        %v9805 = vunpack.c.l.b16 %v9669
        %v9806 = vunpack.c.l.b16 %v9670
        %v9807 = vunpack.c.l.b16 %v9671
        %v9808 = vunpack.c.l.b16 %v9672
        %v9809 = vunpack.c.l.b16 %v9673
        %v9810 = vunpack.c.l.b16 %v9674
        %v9811 = vunpack.c.l.b16 %v9675
        %v9812 = vunpack.c.l.b16 %v9676
        %v9813 = vunpack.c.l.b16 %v9677
        %v9814 = vunpack.c.l.b16 %v9678
        %v9815 = vunpack.c.l.b16 %v9679
        %v9816 = vunpack.c.l.b16 %v9680
        %v9817 = vunpack.c.l.b16 %v9681
        %v9818 = vunpack.c.l.b16 %v9682
        %v9819 = vunpack.c.l.b16 %v9683
        %v9820 = vunpack.c.l.b16 %v9684
        %v9821 = vunpack.c.l.b16 %v9685
        %v9822 = vunpack.c.l.b16 %v9686
        %v9823 = vunpack.c.l.b16 %v9687
        %v9824 = vunpack.c.l.b16 %v9688
        %v9825 = vunpack.c.l.b16 %v9689
        %v9826 = vunpack.c.l.b16 %v9690
        %v9827 = vunpack.c.l.b16 %v9691
        %v9828 = vunpack.c.l.b16 %v9692
        %v9829 = vunpack.c.l.b16 %v9693
        %v9830 = vunpack.c.l.b16 %v9694
        %v9831 = vunpack.c.l.b16 %v9695
        %v9832 = vunpack.c.l.b16 %v9696
        %v9833 = vunpack.c.l.b16 %v9697
        %v9834 = vunpack.c.l.b16 %v9698
        %v9835 = vunpack.c.l.b16 %v9699
        %v9836 = vunpack.c.l.b16 %v9700
        %v9837 = vunpack.c.l.b16 %v9701
        %v9838 = vunpack.c.l.b16 %v9702
        %v9839 = vunpack.c.l.b16 %v9703
        %v9840 = vunpack.c.l.b16 %v9704
        %v9841 = vunpack.c.l.b16 %v9705
        %v9842 = vunpack.c.l.b16 %v9706
        %v9843 = vunpack.c.l.b16 %v9707
        %v9844 = vunpack.c.l.b16 %v9708
        %v9845 = vunpack.c.l.b16 %v9709
        %v9846 = vunpack.c.l.b16 %v9710
        %v9847 = vunpack.c.l.b16 %v9711
        %v9848 = vunpack.c.l.b16 %v9712
        %v9849 = vunpack.c.l.b16 %v9713
        %v9850 = vunpack.c.l.b16 %v9714
        %v9851 = vunpack.c.l.b16 %v9715
        %v9852 = vunpack.c.l.b16 %v9716
        %v9853 = vunpack.c.l.b16 %v9717
        %v9854 = vunpack.c.l.b16 %v9718
        %v9855 = vunpack.c.l.b16 %v9719
        %v9856 = vunpack.c.l.b16 %v9720
        %v9857 = vunpack.c.l.b16 %v9721
        %v9858 = vunpack.c.l.b16 %v9722
        %v9859 = vunpack.c.l.b16 %v9723
        %v9860 = vunpack.c.l.b16 %v9724
        %v9861 = vunpack.c.l.b16 %v9725
        %v9862 = vunpack.c.l.b16 %v9726
        %v9863 = vunpack.c.l.b16 %v9727
        %v9864 = vunpack.c.l.b16 %v9728
        %v9865 = vunpack.c.l.b16 %v9729
        %v9866 = vunpack.c.l.b16 %v9730
        %v9867 = vunpack.c.l.b16 %v9731
        %v9868 = vpack.c.b16 %v9805, %v9804
        %v9869 = vpack.c.b16 %v9807, %v9806
        %v9870 = vpack.c.b16 %v9809, %v9808
        %v9871 = vpack.c.b16 %v9811, %v9810
        %v9872 = vpack.c.b16 %v9813, %v9812
        %v9873 = vpack.c.b16 %v9815, %v9814
        %v9874 = vpack.c.b16 %v9817, %v9816
        %v9875 = vpack.c.b16 %v9819, %v9818
        %v9876 = vpack.c.b16 %v9821, %v9820
        %v9877 = vpack.c.b16 %v9823, %v9822
        %v9878 = vpack.c.b16 %v9825, %v9824
        %v9879 = vpack.c.b16 %v9827, %v9826
        %v9880 = vpack.c.b16 %v9829, %v9828
        %v9881 = vpack.c.b16 %v9831, %v9830
        %v9882 = vpack.c.b16 %v9833, %v9832
        %v9883 = vpack.c.b16 %v9835, %v9834
        %v9884 = vpack.c.b16 %v9837, %v9836
        %v9885 = vpack.c.b16 %v9839, %v9838
        %v9886 = vpack.c.b16 %v9841, %v9840
        %v9887 = vpack.c.b16 %v9843, %v9842
        %v9888 = vpack.c.b16 %v9845, %v9844
        %v9889 = vpack.c.b16 %v9847, %v9846
        %v9890 = vpack.c.b16 %v9849, %v9848
        %v9891 = vpack.c.b16 %v9851, %v9850
        %v9892 = vpack.c.b16 %v9853, %v9852
        %v9893 = vpack.c.b16 %v9855, %v9854
        %v9894 = vpack.c.b16 %v9857, %v9856
        %v9895 = vpack.c.b16 %v9859, %v9858
        %v9896 = vpack.c.b16 %v9861, %v9860
        %v9897 = vpack.c.b16 %v9863, %v9862
        %v9898 = vpack.c.b16 %v9865, %v9864
        %v9899 = vpack.c.b16 %v9867, %v9866
        %9932 = vmatprep.subr.bf16.mxu0 0
        %9933 = vmatpush1.bf16.msra.mxu0 %v9875
        %9934 = vmatprep.subr.bf16.mxu0 0
        %9935 = vmatpush1.bf16.msra.mxu0 %v9874
        %9936 = vmatprep.subr.bf16.mxu0 0
        %9937 = vmatpush1.bf16.msra.mxu0 %v9873
        %9938 = vmatprep.subr.bf16.mxu0 0
        %9939 = vmatpush1.bf16.msra.mxu0 %v9872
        %9940 = vmatprep.subr.bf16.mxu0 0
        %9941 = vmatpush1.bf16.msra.mxu0 %v9871
        %9942 = vmatprep.subr.bf16.mxu0 0
        %9943 = vmatpush1.bf16.msra.mxu0 %v9870
        %9944 = vmatprep.subr.bf16.mxu0 0
        %9945 = vmatpush1.bf16.msra.mxu0 %v9869
        %9946 = vmatprep.subr.bf16.mxu0 0
        %9947 = vmatpush1.bf16.msra.mxu0 %v9868
        %9948 = vmatprep.subr.bf16.mxu0 0
        %9949 = vmatpush2.bf16.msra.mxu0 %v9883
        %9950 = vmatprep.subr.bf16.mxu0 0
        %9951 = vmatpush2.bf16.msra.mxu0 %v9882
        %9952 = vmatprep.subr.bf16.mxu0 0
        %9953 = vmatpush2.bf16.msra.mxu0 %v9881
        %9954 = vmatprep.subr.bf16.mxu0 0
        %9955 = vmatpush2.bf16.msra.mxu0 %v9880
        %9956 = vmatprep.subr.bf16.mxu0 0
        %9957 = vmatpush2.bf16.msra.mxu0 %v9879
        %9958 = vmatprep.subr.bf16.mxu0 0
        %9959 = vmatpush2.bf16.msra.mxu0 %v9878
        %9960 = vmatprep.subr.bf16.mxu0 0
        %9961 = vmatpush2.bf16.msra.mxu0 %v9877
        %9962 = vmatprep.subr.bf16.mxu0 0
        %9963 = vmatpush2.bf16.msra.mxu0 %v9876
        %9964 = vmatprep.mubr.bf16.mxu0 %v9733
        %9965 = vmatmul.mubr.bf16.gmra.mxu0 %v9732
        %v9966 = vpop.f32.mrf.mxu0
        %v9967 = vadd.f32 0.0, %v9966
        %v9968 = vpop.f32.mrf.mxu0
        %v9969 = vpop.f32.mrf.mxu0
        %v9970 = vpop.f32.mrf.mxu0
        %9971 = vdwg.mxu0
        %9972 = vmatprep.subr.bf16.mxu0 0
        %9973 = vmatpush1.bf16.msra.mxu0 %v9891
        %9974 = vmatprep.subr.bf16.mxu0 0
        %9975 = vmatpush1.bf16.msra.mxu0 %v9890
        %9976 = vmatprep.subr.bf16.mxu0 0
        %9977 = vmatpush1.bf16.msra.mxu0 %v9889
        %9978 = vmatprep.subr.bf16.mxu0 0
        %9979 = vmatpush1.bf16.msra.mxu0 %v9888
        %9980 = vmatprep.subr.bf16.mxu0 0
        %9981 = vmatpush1.bf16.msra.mxu0 %v9887
        %9982 = vmatprep.subr.bf16.mxu0 0
        %9983 = vmatpush1.bf16.msra.mxu0 %v9886
        %9984 = vmatprep.subr.bf16.mxu0 0
        %9985 = vmatpush1.bf16.msra.mxu0 %v9885
        %9986 = vmatprep.subr.bf16.mxu0 0
        %9987 = vmatpush1.bf16.msra.mxu0 %v9884
        %9988 = vmatprep.subr.bf16.mxu0 0
        %9989 = vmatpush2.bf16.msra.mxu0 %v9899
        %9990 = vmatprep.subr.bf16.mxu0 0
        %9991 = vmatpush2.bf16.msra.mxu0 %v9898
        %9992 = vmatprep.subr.bf16.mxu0 0
        %9993 = vmatpush2.bf16.msra.mxu0 %v9897
        %9994 = vmatprep.subr.bf16.mxu0 0
        %9995 = vmatpush2.bf16.msra.mxu0 %v9896
        %9996 = vmatprep.subr.bf16.mxu0 0
        %9997 = vmatpush2.bf16.msra.mxu0 %v9895
        %9998 = vmatprep.subr.bf16.mxu0 0
        %9999 = vmatpush2.bf16.msra.mxu0 %v9894
        %10000 = vmatprep.subr.bf16.mxu0 0
        %10001 = vmatpush2.bf16.msra.mxu0 %v9893
        %10002 = vmatprep.subr.bf16.mxu0 0
        %10003 = vmatpush2.bf16.msra.mxu0 %v9892
        %10004 = vmatprep.mubr.bf16.mxu0 %v9735
        %10005 = vmatmul.mubr.bf16.gmra.mxu0 %v9734
        %v10006 = vpop.f32.mrf.mxu0
        %v10007 = vadd.f32 %v9967, %v10006
        %v10008 = vpop.f32.mrf.mxu0
        %v10009 = vpop.f32.mrf.mxu0
        %v10010 = vpop.f32.mrf.mxu0
        %10011 = vdwg.mxu0
        %v10012 = vadd.f32 %v9666, %v10007
        %s10013 = scalar_lea.vmem [#allocation10], 1280
        %v10014 = vld [vmem:[%s10013] sm:$0xf]
        %v10015 = vld [vmem:[%s10013 + $0x4] sm:$0xf]
        %v10016 = vld [vmem:[%s10013 + $0x8] sm:$0xf]
        %v10017 = vld [vmem:[%s10013 + $0xc] sm:$0xf]
        %v10018 = vld [vmem:[%s10013 + $0x10] sm:$0xf]
        %v10019 = vld [vmem:[%s10013 + $0x14] sm:$0xf]
        %v10020 = vld [vmem:[%s10013 + $0x18] sm:$0xf]
        %v10021 = vld [vmem:[%s10013 + $0x1c] sm:$0xf]
        %v10022 = vld [vmem:[%s10013 + $0x20] sm:$0xf]
        %v10023 = vld [vmem:[%s10013 + $0x24] sm:$0xf]
        %v10024 = vld [vmem:[%s10013 + $0x28] sm:$0xf]
        %v10025 = vld [vmem:[%s10013 + $0x2c] sm:$0xf]
        %v10026 = vld [vmem:[%s10013 + $0x30] sm:$0xf]
        %v10027 = vld [vmem:[%s10013 + $0x34] sm:$0xf]
        %v10028 = vld [vmem:[%s10013 + $0x38] sm:$0xf]
        %v10029 = vld [vmem:[%s10013 + $0x3c] sm:$0xf]
        %v10030 = vld [vmem:[%s10013 + $0x40] sm:$0xf]
        %v10031 = vld [vmem:[%s10013 + $0x44] sm:$0xf]
        %v10032 = vld [vmem:[%s10013 + $0x48] sm:$0xf]
        %v10033 = vld [vmem:[%s10013 + $0x4c] sm:$0xf]
        %v10034 = vld [vmem:[%s10013 + $0x50] sm:$0xf]
        %v10035 = vld [vmem:[%s10013 + $0x54] sm:$0xf]
        %v10036 = vld [vmem:[%s10013 + $0x58] sm:$0xf]
        %v10037 = vld [vmem:[%s10013 + $0x5c] sm:$0xf]
        %v10038 = vld [vmem:[%s10013 + $0x60] sm:$0xf]
        %v10039 = vld [vmem:[%s10013 + $0x64] sm:$0xf]
        %v10040 = vld [vmem:[%s10013 + $0x68] sm:$0xf]
        %v10041 = vld [vmem:[%s10013 + $0x6c] sm:$0xf]
        %v10042 = vld [vmem:[%s10013 + $0x70] sm:$0xf]
        %v10043 = vld [vmem:[%s10013 + $0x74] sm:$0xf]
        %v10044 = vld [vmem:[%s10013 + $0x78] sm:$0xf]
        %v10045 = vld [vmem:[%s10013 + $0x7c] sm:$0xf]
        %v10046 = vld [vmem:[%s10013 + $0x80] sm:$0xf]
        %v10047 = vld [vmem:[%s10013 + $0x84] sm:$0xf]
        %v10048 = vld [vmem:[%s10013 + $0x88] sm:$0xf]
        %v10049 = vld [vmem:[%s10013 + $0x8c] sm:$0xf]
        %v10050 = vld [vmem:[%s10013 + $0x90] sm:$0xf]
        %v10051 = vld [vmem:[%s10013 + $0x94] sm:$0xf]
        %v10052 = vld [vmem:[%s10013 + $0x98] sm:$0xf]
        %v10053 = vld [vmem:[%s10013 + $0x9c] sm:$0xf]
        %v10054 = vld [vmem:[%s10013 + $0xa0] sm:$0xf]
        %v10055 = vld [vmem:[%s10013 + $0xa4] sm:$0xf]
        %v10056 = vld [vmem:[%s10013 + $0xa8] sm:$0xf]
        %v10057 = vld [vmem:[%s10013 + $0xac] sm:$0xf]
        %v10058 = vld [vmem:[%s10013 + $0xb0] sm:$0xf]
        %v10059 = vld [vmem:[%s10013 + $0xb4] sm:$0xf]
        %v10060 = vld [vmem:[%s10013 + $0xb8] sm:$0xf]
        %v10061 = vld [vmem:[%s10013 + $0xbc] sm:$0xf]
        %v10062 = vld [vmem:[%s10013 + $0xc0] sm:$0xf]
        %v10063 = vld [vmem:[%s10013 + $0xc4] sm:$0xf]
        %v10064 = vld [vmem:[%s10013 + $0xc8] sm:$0xf]
        %v10065 = vld [vmem:[%s10013 + $0xcc] sm:$0xf]
        %v10066 = vld [vmem:[%s10013 + $0xd0] sm:$0xf]
        %v10067 = vld [vmem:[%s10013 + $0xd4] sm:$0xf]
        %v10068 = vld [vmem:[%s10013 + $0xd8] sm:$0xf]
        %v10069 = vld [vmem:[%s10013 + $0xdc] sm:$0xf]
        %v10070 = vld [vmem:[%s10013 + $0xe0] sm:$0xf]
        %v10071 = vld [vmem:[%s10013 + $0xe4] sm:$0xf]
        %v10072 = vld [vmem:[%s10013 + $0xe8] sm:$0xf]
        %v10073 = vld [vmem:[%s10013 + $0xec] sm:$0xf]
        %v10074 = vld [vmem:[%s10013 + $0xf0] sm:$0xf]
        %v10075 = vld [vmem:[%s10013 + $0xf4] sm:$0xf]
        %v10076 = vld [vmem:[%s10013 + $0xf8] sm:$0xf]
        %v10077 = vld [vmem:[%s10013 + $0xfc] sm:$0xf]
        %v10078 = vrot.slane %v8412, 2
        %v10079 = vrot.slane %v8415, 2
        %v10080 = vrot.slane %v8418, 2
        %v10081 = vrot.slane %v8421, 2
        %v10150 = vunpack.c.l.b16 %v10014
        %v10151 = vunpack.c.l.b16 %v10015
        %v10152 = vunpack.c.l.b16 %v10016
        %v10153 = vunpack.c.l.b16 %v10017
        %v10154 = vunpack.c.l.b16 %v10018
        %v10155 = vunpack.c.l.b16 %v10019
        %v10156 = vunpack.c.l.b16 %v10020
        %v10157 = vunpack.c.l.b16 %v10021
        %v10158 = vunpack.c.l.b16 %v10022
        %v10159 = vunpack.c.l.b16 %v10023
        %v10160 = vunpack.c.l.b16 %v10024
        %v10161 = vunpack.c.l.b16 %v10025
        %v10162 = vunpack.c.l.b16 %v10026
        %v10163 = vunpack.c.l.b16 %v10027
        %v10164 = vunpack.c.l.b16 %v10028
        %v10165 = vunpack.c.l.b16 %v10029
        %v10166 = vunpack.c.l.b16 %v10030
        %v10167 = vunpack.c.l.b16 %v10031
        %v10168 = vunpack.c.l.b16 %v10032
        %v10169 = vunpack.c.l.b16 %v10033
        %v10170 = vunpack.c.l.b16 %v10034
        %v10171 = vunpack.c.l.b16 %v10035
        %v10172 = vunpack.c.l.b16 %v10036
        %v10173 = vunpack.c.l.b16 %v10037
        %v10174 = vunpack.c.l.b16 %v10038
        %v10175 = vunpack.c.l.b16 %v10039
        %v10176 = vunpack.c.l.b16 %v10040
        %v10177 = vunpack.c.l.b16 %v10041
        %v10178 = vunpack.c.l.b16 %v10042
        %v10179 = vunpack.c.l.b16 %v10043
        %v10180 = vunpack.c.l.b16 %v10044
        %v10181 = vunpack.c.l.b16 %v10045
        %v10182 = vunpack.c.l.b16 %v10046
        %v10183 = vunpack.c.l.b16 %v10047
        %v10184 = vunpack.c.l.b16 %v10048
        %v10185 = vunpack.c.l.b16 %v10049
        %v10186 = vunpack.c.l.b16 %v10050
        %v10187 = vunpack.c.l.b16 %v10051
        %v10188 = vunpack.c.l.b16 %v10052
        %v10189 = vunpack.c.l.b16 %v10053
        %v10190 = vunpack.c.l.b16 %v10054
        %v10191 = vunpack.c.l.b16 %v10055
        %v10192 = vunpack.c.l.b16 %v10056
        %v10193 = vunpack.c.l.b16 %v10057
        %v10194 = vunpack.c.l.b16 %v10058
        %v10195 = vunpack.c.l.b16 %v10059
        %v10196 = vunpack.c.l.b16 %v10060
        %v10197 = vunpack.c.l.b16 %v10061
        %v10198 = vunpack.c.l.b16 %v10062
        %v10199 = vunpack.c.l.b16 %v10063
        %v10200 = vunpack.c.l.b16 %v10064
        %v10201 = vunpack.c.l.b16 %v10065
        %v10202 = vunpack.c.l.b16 %v10066
        %v10203 = vunpack.c.l.b16 %v10067
        %v10204 = vunpack.c.l.b16 %v10068
        %v10205 = vunpack.c.l.b16 %v10069
        %v10206 = vunpack.c.l.b16 %v10070
        %v10207 = vunpack.c.l.b16 %v10071
        %v10208 = vunpack.c.l.b16 %v10072
        %v10209 = vunpack.c.l.b16 %v10073
        %v10210 = vunpack.c.l.b16 %v10074
        %v10211 = vunpack.c.l.b16 %v10075
        %v10212 = vunpack.c.l.b16 %v10076
        %v10213 = vunpack.c.l.b16 %v10077
        %v10214 = vpack.c.b16 %v10151, %v10150
        %v10215 = vpack.c.b16 %v10153, %v10152
        %v10216 = vpack.c.b16 %v10155, %v10154
        %v10217 = vpack.c.b16 %v10157, %v10156
        %v10218 = vpack.c.b16 %v10159, %v10158
        %v10219 = vpack.c.b16 %v10161, %v10160
        %v10220 = vpack.c.b16 %v10163, %v10162
        %v10221 = vpack.c.b16 %v10165, %v10164
        %v10222 = vpack.c.b16 %v10167, %v10166
        %v10223 = vpack.c.b16 %v10169, %v10168
        %v10224 = vpack.c.b16 %v10171, %v10170
        %v10225 = vpack.c.b16 %v10173, %v10172
        %v10226 = vpack.c.b16 %v10175, %v10174
        %v10227 = vpack.c.b16 %v10177, %v10176
        %v10228 = vpack.c.b16 %v10179, %v10178
        %v10229 = vpack.c.b16 %v10181, %v10180
        %v10230 = vpack.c.b16 %v10183, %v10182
        %v10231 = vpack.c.b16 %v10185, %v10184
        %v10232 = vpack.c.b16 %v10187, %v10186
        %v10233 = vpack.c.b16 %v10189, %v10188
        %v10234 = vpack.c.b16 %v10191, %v10190
        %v10235 = vpack.c.b16 %v10193, %v10192
        %v10236 = vpack.c.b16 %v10195, %v10194
        %v10237 = vpack.c.b16 %v10197, %v10196
        %v10238 = vpack.c.b16 %v10199, %v10198
        %v10239 = vpack.c.b16 %v10201, %v10200
        %v10240 = vpack.c.b16 %v10203, %v10202
        %v10241 = vpack.c.b16 %v10205, %v10204
        %v10242 = vpack.c.b16 %v10207, %v10206
        %v10243 = vpack.c.b16 %v10209, %v10208
        %v10244 = vpack.c.b16 %v10211, %v10210
        %v10245 = vpack.c.b16 %v10213, %v10212
        %10278 = vmatprep.subr.bf16.mxu0 0
        %10279 = vmatpush1.bf16.msra.mxu0 %v10221
        %10280 = vmatprep.subr.bf16.mxu0 0
        %10281 = vmatpush1.bf16.msra.mxu0 %v10220
        %10282 = vmatprep.subr.bf16.mxu0 0
        %10283 = vmatpush1.bf16.msra.mxu0 %v10219
        %10284 = vmatprep.subr.bf16.mxu0 0
        %10285 = vmatpush1.bf16.msra.mxu0 %v10218
        %10286 = vmatprep.subr.bf16.mxu0 0
        %10287 = vmatpush1.bf16.msra.mxu0 %v10217
        %10288 = vmatprep.subr.bf16.mxu0 0
        %10289 = vmatpush1.bf16.msra.mxu0 %v10216
        %10290 = vmatprep.subr.bf16.mxu0 0
        %10291 = vmatpush1.bf16.msra.mxu0 %v10215
        %10292 = vmatprep.subr.bf16.mxu0 0
        %10293 = vmatpush1.bf16.msra.mxu0 %v10214
        %10294 = vmatprep.subr.bf16.mxu0 0
        %10295 = vmatpush2.bf16.msra.mxu0 %v10229
        %10296 = vmatprep.subr.bf16.mxu0 0
        %10297 = vmatpush2.bf16.msra.mxu0 %v10228
        %10298 = vmatprep.subr.bf16.mxu0 0
        %10299 = vmatpush2.bf16.msra.mxu0 %v10227
        %10300 = vmatprep.subr.bf16.mxu0 0
        %10301 = vmatpush2.bf16.msra.mxu0 %v10226
        %10302 = vmatprep.subr.bf16.mxu0 0
        %10303 = vmatpush2.bf16.msra.mxu0 %v10225
        %10304 = vmatprep.subr.bf16.mxu0 0
        %10305 = vmatpush2.bf16.msra.mxu0 %v10224
        %10306 = vmatprep.subr.bf16.mxu0 0
        %10307 = vmatpush2.bf16.msra.mxu0 %v10223
        %10308 = vmatprep.subr.bf16.mxu0 0
        %10309 = vmatpush2.bf16.msra.mxu0 %v10222
        %10310 = vmatprep.mubr.bf16.mxu0 %v10079
        %10311 = vmatmul.mubr.bf16.gmra.mxu0 %v10078
        %v10312 = vpop.f32.mrf.mxu0
        %v10313 = vadd.f32 0.0, %v10312
        %v10314 = vpop.f32.mrf.mxu0
        %v10315 = vpop.f32.mrf.mxu0
        %v10316 = vpop.f32.mrf.mxu0
        %10317 = vdwg.mxu0
        %10318 = vmatprep.subr.bf16.mxu0 0
        %10319 = vmatpush1.bf16.msra.mxu0 %v10237
        %10320 = vmatprep.subr.bf16.mxu0 0
        %10321 = vmatpush1.bf16.msra.mxu0 %v10236
        %10322 = vmatprep.subr.bf16.mxu0 0
        %10323 = vmatpush1.bf16.msra.mxu0 %v10235
        %10324 = vmatprep.subr.bf16.mxu0 0
        %10325 = vmatpush1.bf16.msra.mxu0 %v10234
        %10326 = vmatprep.subr.bf16.mxu0 0
        %10327 = vmatpush1.bf16.msra.mxu0 %v10233
        %10328 = vmatprep.subr.bf16.mxu0 0
        %10329 = vmatpush1.bf16.msra.mxu0 %v10232
        %10330 = vmatprep.subr.bf16.mxu0 0
        %10331 = vmatpush1.bf16.msra.mxu0 %v10231
        %10332 = vmatprep.subr.bf16.mxu0 0
        %10333 = vmatpush1.bf16.msra.mxu0 %v10230
        %10334 = vmatprep.subr.bf16.mxu0 0
        %10335 = vmatpush2.bf16.msra.mxu0 %v10245
        %10336 = vmatprep.subr.bf16.mxu0 0
        %10337 = vmatpush2.bf16.msra.mxu0 %v10244
        %10338 = vmatprep.subr.bf16.mxu0 0
        %10339 = vmatpush2.bf16.msra.mxu0 %v10243
        %10340 = vmatprep.subr.bf16.mxu0 0
        %10341 = vmatpush2.bf16.msra.mxu0 %v10242
        %10342 = vmatprep.subr.bf16.mxu0 0
        %10343 = vmatpush2.bf16.msra.mxu0 %v10241
        %10344 = vmatprep.subr.bf16.mxu0 0
        %10345 = vmatpush2.bf16.msra.mxu0 %v10240
        %10346 = vmatprep.subr.bf16.mxu0 0
        %10347 = vmatpush2.bf16.msra.mxu0 %v10239
        %10348 = vmatprep.subr.bf16.mxu0 0
        %10349 = vmatpush2.bf16.msra.mxu0 %v10238
        %10350 = vmatprep.mubr.bf16.mxu0 %v10081
        %10351 = vmatmul.mubr.bf16.gmra.mxu0 %v10080
        %v10352 = vpop.f32.mrf.mxu0
        %v10353 = vadd.f32 %v10313, %v10352
        %v10354 = vpop.f32.mrf.mxu0
        %v10355 = vpop.f32.mrf.mxu0
        %v10356 = vpop.f32.mrf.mxu0
        %10357 = vdwg.mxu0
        %v10358 = vadd.f32 %v10012, %v10353
        %s10359 = scalar_lea.vmem [#allocation10], 1536
        %v10360 = vld [vmem:[%s10359] sm:$0xf]
        %v10361 = vld [vmem:[%s10359 + $0x4] sm:$0xf]
        %v10362 = vld [vmem:[%s10359 + $0x8] sm:$0xf]
        %v10363 = vld [vmem:[%s10359 + $0xc] sm:$0xf]
        %v10364 = vld [vmem:[%s10359 + $0x10] sm:$0xf]
        %v10365 = vld [vmem:[%s10359 + $0x14] sm:$0xf]
        %v10366 = vld [vmem:[%s10359 + $0x18] sm:$0xf]
        %v10367 = vld [vmem:[%s10359 + $0x1c] sm:$0xf]
        %v10368 = vld [vmem:[%s10359 + $0x20] sm:$0xf]
        %v10369 = vld [vmem:[%s10359 + $0x24] sm:$0xf]
        %v10370 = vld [vmem:[%s10359 + $0x28] sm:$0xf]
        %v10371 = vld [vmem:[%s10359 + $0x2c] sm:$0xf]
        %v10372 = vld [vmem:[%s10359 + $0x30] sm:$0xf]
        %v10373 = vld [vmem:[%s10359 + $0x34] sm:$0xf]
        %v10374 = vld [vmem:[%s10359 + $0x38] sm:$0xf]
        %v10375 = vld [vmem:[%s10359 + $0x3c] sm:$0xf]
        %v10376 = vld [vmem:[%s10359 + $0x40] sm:$0xf]
        %v10377 = vld [vmem:[%s10359 + $0x44] sm:$0xf]
        %v10378 = vld [vmem:[%s10359 + $0x48] sm:$0xf]
        %v10379 = vld [vmem:[%s10359 + $0x4c] sm:$0xf]
        %v10380 = vld [vmem:[%s10359 + $0x50] sm:$0xf]
        %v10381 = vld [vmem:[%s10359 + $0x54] sm:$0xf]
        %v10382 = vld [vmem:[%s10359 + $0x58] sm:$0xf]
        %v10383 = vld [vmem:[%s10359 + $0x5c] sm:$0xf]
        %v10384 = vld [vmem:[%s10359 + $0x60] sm:$0xf]
        %v10385 = vld [vmem:[%s10359 + $0x64] sm:$0xf]
        %v10386 = vld [vmem:[%s10359 + $0x68] sm:$0xf]
        %v10387 = vld [vmem:[%s10359 + $0x6c] sm:$0xf]
        %v10388 = vld [vmem:[%s10359 + $0x70] sm:$0xf]
        %v10389 = vld [vmem:[%s10359 + $0x74] sm:$0xf]
        %v10390 = vld [vmem:[%s10359 + $0x78] sm:$0xf]
        %v10391 = vld [vmem:[%s10359 + $0x7c] sm:$0xf]
        %v10392 = vld [vmem:[%s10359 + $0x80] sm:$0xf]
        %v10393 = vld [vmem:[%s10359 + $0x84] sm:$0xf]
        %v10394 = vld [vmem:[%s10359 + $0x88] sm:$0xf]
        %v10395 = vld [vmem:[%s10359 + $0x8c] sm:$0xf]
        %v10396 = vld [vmem:[%s10359 + $0x90] sm:$0xf]
        %v10397 = vld [vmem:[%s10359 + $0x94] sm:$0xf]
        %v10398 = vld [vmem:[%s10359 + $0x98] sm:$0xf]
        %v10399 = vld [vmem:[%s10359 + $0x9c] sm:$0xf]
        %v10400 = vld [vmem:[%s10359 + $0xa0] sm:$0xf]
        %v10401 = vld [vmem:[%s10359 + $0xa4] sm:$0xf]
        %v10402 = vld [vmem:[%s10359 + $0xa8] sm:$0xf]
        %v10403 = vld [vmem:[%s10359 + $0xac] sm:$0xf]
        %v10404 = vld [vmem:[%s10359 + $0xb0] sm:$0xf]
        %v10405 = vld [vmem:[%s10359 + $0xb4] sm:$0xf]
        %v10406 = vld [vmem:[%s10359 + $0xb8] sm:$0xf]
        %v10407 = vld [vmem:[%s10359 + $0xbc] sm:$0xf]
        %v10408 = vld [vmem:[%s10359 + $0xc0] sm:$0xf]
        %v10409 = vld [vmem:[%s10359 + $0xc4] sm:$0xf]
        %v10410 = vld [vmem:[%s10359 + $0xc8] sm:$0xf]
        %v10411 = vld [vmem:[%s10359 + $0xcc] sm:$0xf]
        %v10412 = vld [vmem:[%s10359 + $0xd0] sm:$0xf]
        %v10413 = vld [vmem:[%s10359 + $0xd4] sm:$0xf]
        %v10414 = vld [vmem:[%s10359 + $0xd8] sm:$0xf]
        %v10415 = vld [vmem:[%s10359 + $0xdc] sm:$0xf]
        %v10416 = vld [vmem:[%s10359 + $0xe0] sm:$0xf]
        %v10417 = vld [vmem:[%s10359 + $0xe4] sm:$0xf]
        %v10418 = vld [vmem:[%s10359 + $0xe8] sm:$0xf]
        %v10419 = vld [vmem:[%s10359 + $0xec] sm:$0xf]
        %v10420 = vld [vmem:[%s10359 + $0xf0] sm:$0xf]
        %v10421 = vld [vmem:[%s10359 + $0xf4] sm:$0xf]
        %v10422 = vld [vmem:[%s10359 + $0xf8] sm:$0xf]
        %v10423 = vld [vmem:[%s10359 + $0xfc] sm:$0xf]
        %v10424 = vrot.slane %v8278, 3
        %v10425 = vrot.slane %v8279, 3
        %v10426 = vrot.slane %v8280, 3
        %v10427 = vrot.slane %v8281, 3
        %v10496 = vunpack.c.l.b16 %v10360
        %v10497 = vunpack.c.l.b16 %v10361
        %v10498 = vunpack.c.l.b16 %v10362
        %v10499 = vunpack.c.l.b16 %v10363
        %v10500 = vunpack.c.l.b16 %v10364
        %v10501 = vunpack.c.l.b16 %v10365
        %v10502 = vunpack.c.l.b16 %v10366
        %v10503 = vunpack.c.l.b16 %v10367
        %v10504 = vunpack.c.l.b16 %v10368
        %v10505 = vunpack.c.l.b16 %v10369
        %v10506 = vunpack.c.l.b16 %v10370
        %v10507 = vunpack.c.l.b16 %v10371
        %v10508 = vunpack.c.l.b16 %v10372
        %v10509 = vunpack.c.l.b16 %v10373
        %v10510 = vunpack.c.l.b16 %v10374
        %v10511 = vunpack.c.l.b16 %v10375
        %v10512 = vunpack.c.l.b16 %v10376
        %v10513 = vunpack.c.l.b16 %v10377
        %v10514 = vunpack.c.l.b16 %v10378
        %v10515 = vunpack.c.l.b16 %v10379
        %v10516 = vunpack.c.l.b16 %v10380
        %v10517 = vunpack.c.l.b16 %v10381
        %v10518 = vunpack.c.l.b16 %v10382
        %v10519 = vunpack.c.l.b16 %v10383
        %v10520 = vunpack.c.l.b16 %v10384
        %v10521 = vunpack.c.l.b16 %v10385
        %v10522 = vunpack.c.l.b16 %v10386
        %v10523 = vunpack.c.l.b16 %v10387
        %v10524 = vunpack.c.l.b16 %v10388
        %v10525 = vunpack.c.l.b16 %v10389
        %v10526 = vunpack.c.l.b16 %v10390
        %v10527 = vunpack.c.l.b16 %v10391
        %v10528 = vunpack.c.l.b16 %v10392
        %v10529 = vunpack.c.l.b16 %v10393
        %v10530 = vunpack.c.l.b16 %v10394
        %v10531 = vunpack.c.l.b16 %v10395
        %v10532 = vunpack.c.l.b16 %v10396
        %v10533 = vunpack.c.l.b16 %v10397
        %v10534 = vunpack.c.l.b16 %v10398
        %v10535 = vunpack.c.l.b16 %v10399
        %v10536 = vunpack.c.l.b16 %v10400
        %v10537 = vunpack.c.l.b16 %v10401
        %v10538 = vunpack.c.l.b16 %v10402
        %v10539 = vunpack.c.l.b16 %v10403
        %v10540 = vunpack.c.l.b16 %v10404
        %v10541 = vunpack.c.l.b16 %v10405
        %v10542 = vunpack.c.l.b16 %v10406
        %v10543 = vunpack.c.l.b16 %v10407
        %v10544 = vunpack.c.l.b16 %v10408
        %v10545 = vunpack.c.l.b16 %v10409
        %v10546 = vunpack.c.l.b16 %v10410
        %v10547 = vunpack.c.l.b16 %v10411
        %v10548 = vunpack.c.l.b16 %v10412
        %v10549 = vunpack.c.l.b16 %v10413
        %v10550 = vunpack.c.l.b16 %v10414
        %v10551 = vunpack.c.l.b16 %v10415
        %v10552 = vunpack.c.l.b16 %v10416
        %v10553 = vunpack.c.l.b16 %v10417
        %v10554 = vunpack.c.l.b16 %v10418
        %v10555 = vunpack.c.l.b16 %v10419
        %v10556 = vunpack.c.l.b16 %v10420
        %v10557 = vunpack.c.l.b16 %v10421
        %v10558 = vunpack.c.l.b16 %v10422
        %v10559 = vunpack.c.l.b16 %v10423
        %v10560 = vpack.c.b16 %v10497, %v10496
        %v10561 = vpack.c.b16 %v10499, %v10498
        %v10562 = vpack.c.b16 %v10501, %v10500
        %v10563 = vpack.c.b16 %v10503, %v10502
        %v10564 = vpack.c.b16 %v10505, %v10504
        %v10565 = vpack.c.b16 %v10507, %v10506
        %v10566 = vpack.c.b16 %v10509, %v10508
        %v10567 = vpack.c.b16 %v10511, %v10510
        %v10568 = vpack.c.b16 %v10513, %v10512
        %v10569 = vpack.c.b16 %v10515, %v10514
        %v10570 = vpack.c.b16 %v10517, %v10516
        %v10571 = vpack.c.b16 %v10519, %v10518
        %v10572 = vpack.c.b16 %v10521, %v10520
        %v10573 = vpack.c.b16 %v10523, %v10522
        %v10574 = vpack.c.b16 %v10525, %v10524
        %v10575 = vpack.c.b16 %v10527, %v10526
        %v10576 = vpack.c.b16 %v10529, %v10528
        %v10577 = vpack.c.b16 %v10531, %v10530
        %v10578 = vpack.c.b16 %v10533, %v10532
        %v10579 = vpack.c.b16 %v10535, %v10534
        %v10580 = vpack.c.b16 %v10537, %v10536
        %v10581 = vpack.c.b16 %v10539, %v10538
        %v10582 = vpack.c.b16 %v10541, %v10540
        %v10583 = vpack.c.b16 %v10543, %v10542
        %v10584 = vpack.c.b16 %v10545, %v10544
        %v10585 = vpack.c.b16 %v10547, %v10546
        %v10586 = vpack.c.b16 %v10549, %v10548
        %v10587 = vpack.c.b16 %v10551, %v10550
        %v10588 = vpack.c.b16 %v10553, %v10552
        %v10589 = vpack.c.b16 %v10555, %v10554
        %v10590 = vpack.c.b16 %v10557, %v10556
        %v10591 = vpack.c.b16 %v10559, %v10558
        %10624 = vmatprep.subr.bf16.mxu0 0
        %10625 = vmatpush1.bf16.msra.mxu0 %v10567
        %10626 = vmatprep.subr.bf16.mxu0 0
        %10627 = vmatpush1.bf16.msra.mxu0 %v10566
        %10628 = vmatprep.subr.bf16.mxu0 0
        %10629 = vmatpush1.bf16.msra.mxu0 %v10565
        %10630 = vmatprep.subr.bf16.mxu0 0
        %10631 = vmatpush1.bf16.msra.mxu0 %v10564
        %10632 = vmatprep.subr.bf16.mxu0 0
        %10633 = vmatpush1.bf16.msra.mxu0 %v10563
        %10634 = vmatprep.subr.bf16.mxu0 0
        %10635 = vmatpush1.bf16.msra.mxu0 %v10562
        %10636 = vmatprep.subr.bf16.mxu0 0
        %10637 = vmatpush1.bf16.msra.mxu0 %v10561
        %10638 = vmatprep.subr.bf16.mxu0 0
        %10639 = vmatpush1.bf16.msra.mxu0 %v10560
        %10640 = vmatprep.subr.bf16.mxu0 0
        %10641 = vmatpush2.bf16.msra.mxu0 %v10575
        %10642 = vmatprep.subr.bf16.mxu0 0
        %10643 = vmatpush2.bf16.msra.mxu0 %v10574
        %10644 = vmatprep.subr.bf16.mxu0 0
        %10645 = vmatpush2.bf16.msra.mxu0 %v10573
        %10646 = vmatprep.subr.bf16.mxu0 0
        %10647 = vmatpush2.bf16.msra.mxu0 %v10572
        %10648 = vmatprep.subr.bf16.mxu0 0
        %10649 = vmatpush2.bf16.msra.mxu0 %v10571
        %10650 = vmatprep.subr.bf16.mxu0 0
        %10651 = vmatpush2.bf16.msra.mxu0 %v10570
        %10652 = vmatprep.subr.bf16.mxu0 0
        %10653 = vmatpush2.bf16.msra.mxu0 %v10569
        %10654 = vmatprep.subr.bf16.mxu0 0
        %10655 = vmatpush2.bf16.msra.mxu0 %v10568
        %10656 = vmatprep.mubr.bf16.mxu0 %v10425
        %10657 = vmatmul.mubr.bf16.gmra.mxu0 %v10424
        %v10658 = vpop.f32.mrf.mxu0
        %v10659 = vadd.f32 0.0, %v10658
        %v10660 = vpop.f32.mrf.mxu0
        %v10661 = vpop.f32.mrf.mxu0
        %v10662 = vpop.f32.mrf.mxu0
        %10663 = vdwg.mxu0
        %10664 = vmatprep.subr.bf16.mxu0 0
        %10665 = vmatpush1.bf16.msra.mxu0 %v10583
        %10666 = vmatprep.subr.bf16.mxu0 0
        %10667 = vmatpush1.bf16.msra.mxu0 %v10582
        %10668 = vmatprep.subr.bf16.mxu0 0
        %10669 = vmatpush1.bf16.msra.mxu0 %v10581
        %10670 = vmatprep.subr.bf16.mxu0 0
        %10671 = vmatpush1.bf16.msra.mxu0 %v10580
        %10672 = vmatprep.subr.bf16.mxu0 0
        %10673 = vmatpush1.bf16.msra.mxu0 %v10579
        %10674 = vmatprep.subr.bf16.mxu0 0
        %10675 = vmatpush1.bf16.msra.mxu0 %v10578
        %10676 = vmatprep.subr.bf16.mxu0 0
        %10677 = vmatpush1.bf16.msra.mxu0 %v10577
        %10678 = vmatprep.subr.bf16.mxu0 0
        %10679 = vmatpush1.bf16.msra.mxu0 %v10576
        %10680 = vmatprep.subr.bf16.mxu0 0
        %10681 = vmatpush2.bf16.msra.mxu0 %v10591
        %10682 = vmatprep.subr.bf16.mxu0 0
        %10683 = vmatpush2.bf16.msra.mxu0 %v10590
        %10684 = vmatprep.subr.bf16.mxu0 0
        %10685 = vmatpush2.bf16.msra.mxu0 %v10589
        %10686 = vmatprep.subr.bf16.mxu0 0
        %10687 = vmatpush2.bf16.msra.mxu0 %v10588
        %10688 = vmatprep.subr.bf16.mxu0 0
        %10689 = vmatpush2.bf16.msra.mxu0 %v10587
        %10690 = vmatprep.subr.bf16.mxu0 0
        %10691 = vmatpush2.bf16.msra.mxu0 %v10586
        %10692 = vmatprep.subr.bf16.mxu0 0
        %10693 = vmatpush2.bf16.msra.mxu0 %v10585
        %10694 = vmatprep.subr.bf16.mxu0 0
        %10695 = vmatpush2.bf16.msra.mxu0 %v10584
        %10696 = vmatprep.mubr.bf16.mxu0 %v10427
        %10697 = vmatmul.mubr.bf16.gmra.mxu0 %v10426
        %v10698 = vpop.f32.mrf.mxu0
        %v10699 = vadd.f32 %v10659, %v10698
        %v10700 = vpop.f32.mrf.mxu0
        %v10701 = vpop.f32.mrf.mxu0
        %v10702 = vpop.f32.mrf.mxu0
        %10703 = vdwg.mxu0
        %v10704 = vadd.f32 %v10358, %v10699
        %v10705 = vld [vmem:[#allocation11] sm:$0x1]
        %v10706 = vadd.f32 %v10704, %v10705
        %v10707 = vmax.f32 %v10706, 0.0
        %v10708 = vpack.c.bf16 %v10707, %v10707
        %v10709 = vld [vmem:[#allocation13] sm:$0xf]
        %v10710 = vld [vmem:[#allocation13 + $0x4] sm:$0xf]
        %v10711 = vld [vmem:[#allocation13 + $0x8] sm:$0xf]
        %v10712 = vld [vmem:[#allocation13 + $0xc] sm:$0xf]
        %v10713 = vld [vmem:[#allocation13 + $0x10] sm:$0xf]
        %v10714 = vld [vmem:[#allocation13 + $0x14] sm:$0xf]
        %v10715 = vld [vmem:[#allocation13 + $0x18] sm:$0xf]
        %v10716 = vld [vmem:[#allocation13 + $0x1c] sm:$0xf]
        %v10717 = vld [vmem:[#allocation13 + $0x20] sm:$0xf]
        %v10718 = vld [vmem:[#allocation13 + $0x24] sm:$0xf]
        %v10719 = vld [vmem:[#allocation13 + $0x28] sm:$0xf]
        %v10720 = vld [vmem:[#allocation13 + $0x2c] sm:$0xf]
        %v10721 = vld [vmem:[#allocation13 + $0x30] sm:$0xf]
        %v10722 = vld [vmem:[#allocation13 + $0x34] sm:$0xf]
        %v10723 = vld [vmem:[#allocation13 + $0x38] sm:$0xf]
        %v10724 = vld [vmem:[#allocation13 + $0x3c] sm:$0xf]
        %v10725 = vld [vmem:[#allocation14] sm:$0x1]
        %v10742 = vunpack.c.l.b16 %v10709
        %v10743 = vunpack.c.l.b16 %v10710
        %v10744 = vunpack.c.l.b16 %v10711
        %v10745 = vunpack.c.l.b16 %v10712
        %v10746 = vunpack.c.l.b16 %v10713
        %v10747 = vunpack.c.l.b16 %v10714
        %v10748 = vunpack.c.l.b16 %v10715
        %v10749 = vunpack.c.l.b16 %v10716
        %v10750 = vunpack.c.l.b16 %v10717
        %v10751 = vunpack.c.l.b16 %v10718
        %v10752 = vunpack.c.l.b16 %v10719
        %v10753 = vunpack.c.l.b16 %v10720
        %v10754 = vunpack.c.l.b16 %v10721
        %v10755 = vunpack.c.l.b16 %v10722
        %v10756 = vunpack.c.l.b16 %v10723
        %v10757 = vunpack.c.l.b16 %v10724
        %v10758 = vpack.c.b16 %v10743, %v10742
        %v10759 = vpack.c.b16 %v10745, %v10744
        %v10760 = vpack.c.b16 %v10747, %v10746
        %v10761 = vpack.c.b16 %v10749, %v10748
        %v10762 = vpack.c.b16 %v10751, %v10750
        %v10763 = vpack.c.b16 %v10753, %v10752
        %v10764 = vpack.c.b16 %v10755, %v10754
        %v10765 = vpack.c.b16 %v10757, %v10756
        %10774 = vmatprep.subr.bf16.mxu0 0
        %10775 = vmatpush1.bf16.msra.mxu0 %v10765
        %10776 = vmatprep.subr.bf16.mxu0 0
        %10777 = vmatpush1.bf16.msra.mxu0 %v10764
        %10778 = vmatprep.subr.bf16.mxu0 0
        %10779 = vmatpush1.bf16.msra.mxu0 %v10763
        %10780 = vmatprep.subr.bf16.mxu0 0
        %10781 = vmatpush1.bf16.msra.mxu0 %v10762
        %10782 = vmatprep.subr.bf16.mxu0 0
        %10783 = vmatpush1.bf16.msra.mxu0 %v10761
        %10784 = vmatprep.subr.bf16.mxu0 0
        %10785 = vmatpush1.bf16.msra.mxu0 %v10760
        %10786 = vmatprep.subr.bf16.mxu0 0
        %10787 = vmatpush1.bf16.msra.mxu0 %v10759
        %10788 = vmatprep.subr.bf16.mxu0 0
        %10789 = vmatpush1.bf16.msra.mxu0 %v10758
        %10790 = vmatprep.subr.bf16.mxu0 0
        %10791 = vmatpush2.bf16.msra.mxu0 0
        %10792 = vmatprep.subr.bf16.mxu0 0
        %10793 = vmatpush2.bf16.msra.mxu0 0
        %10794 = vmatprep.subr.bf16.mxu0 0
        %10795 = vmatpush2.bf16.msra.mxu0 0
        %10796 = vmatprep.subr.bf16.mxu0 0
        %10797 = vmatpush2.bf16.msra.mxu0 0
        %10798 = vmatprep.subr.bf16.mxu0 0
        %10799 = vmatpush2.bf16.msra.mxu0 0
        %10800 = vmatprep.subr.bf16.mxu0 0
        %10801 = vmatpush2.bf16.msra.mxu0 0
        %10802 = vmatprep.subr.bf16.mxu0 0
        %10803 = vmatpush2.bf16.msra.mxu0 0
        %10804 = vmatprep.subr.bf16.mxu0 0
        %10805 = vmatpush2.bf16.msra.mxu0 0
        %10806 = vmatprep.mubr.bf16.mxu0 0
        %10807 = vmatmul.mubr.bf16.gmra.mxu0 %v10708
        %v10808 = vpop.f32.mrf.mxu0
        %v10809 = vadd.f32 %v10725, %v10808
        %v10810 = vpop.f32.mrf.mxu0
        %v10811 = vpop.f32.mrf.mxu0
        %v10812 = vpop.f32.mrf.mxu0
        %10813 = vdwg.mxu0
        %10814 = vst [vmem:[%s433] sm:$0x1] %v10809
        %s10815 = sand.u32 %s230, 1
        %s10816 = scalar_lea.sflag [#allocation4], %s10815
        %s10817 = sand.u32 %s230, 1
        %s10818 = scalar_lea.vmem [#allocation16], %s10817
        // Predicated region
        $region89: #{simple_cnn_forward.1} parent=55 // pred_check
          %p10819 = pneg %p240
        $region90: #{simple_cnn_forward.1} parent=55 // pred_check_branch
          %10821 = sbr.rel (%p10819) target = $region92
        $region91: #{simple_cnn_forward.1} parent=55 // pred_region
          %s10823 = ssub.s32 16, 16
          %10824 = vsyncadd %s10816, %s10823
          %s10825 = smul.addr %s28, 16
          %s10826 = scalar_lea.hbm %s9, %s10825
          %s10828 = sshll.u32 %s10818, 4
          %s10829 = int_to_ptr.vmem [resolvable:$true] %s10828
          %10831 = dma.vmem_to_hbm [thread:$0]  %s10829, 16, %s10826, %s10816
        $region92: #{simple_cnn_forward.1} parent=55 // pred_fallthru
          _
      $region56: #{simple_cnn_forward.1} parent=5 // pred_fallthru
        _
      %p10832 = scmp.le.s32.totalorder 2, %s23
      // Predicated region
      $region93: #{simple_cnn_forward.1} parent=5 // pred_check
        %p10833 = pneg %p10832
      $region94: #{simple_cnn_forward.1} parent=5 // pred_check_branch
        %10835 = sbr.rel (%p10833) target = $region96
      $region95: #{simple_cnn_forward.1} parent=5 // pred_region
        %s10836 = ssub.s32 %s23, 2
        // Predicated region
        $region97: #{simple_cnn_forward.1} parent=95 // pred_check
          %p10837 = pneg %p246
        $region98: #{simple_cnn_forward.1} parent=95 // pred_check_branch
          %10839 = sbr.rel (%p10837) target = $region100
        $region99: #{simple_cnn_forward.1} parent=95 // pred_region
          %s10840 = sand.u32 %s231, 1
          %s10841 = scalar_lea.sflag [#allocation4], %s10840
          %s10842 = sand.u32 %s231, 1
          %s10843 = scalar_lea.vmem [#allocation16], %s10842
          %10844 = dma.done %s10841, 16
        $region100: #{simple_cnn_forward.1} parent=95 // pred_fallthru
          _
      $region96: #{simple_cnn_forward.1} parent=5 // pred_fallthru
        _
    $region6: #{simple_cnn_forward.1} parent=1 // loop_footer
      %s27 = sadd.s32 1, %s23
    $region7: #{simple_cnn_forward.1} parent=1 // loop_footer_branch
      %22 = sbr.rel target = $region3
    $region8: #{simple_cnn_forward.1} parent=1 // loop_exit
      _
    %10845 = vsyncpa [#allocation3], 1
    %s10846 = scalar_lea.sflag [#allocation3], 1
    %10847 = vsyncpa %s10846, 1
    %10848 = vsyncpa [#allocation6], 1
    %10849 = vsyncpa [#allocation9], 1
    %10850 = vsyncpa [#allocation12], 1
    %10851 = vsyncpa [#allocation15], 1
    %10852 = vsyncpa [#allocation4], 1
    %s10853 = scalar_lea.sflag [#allocation4], 1
    %10854 = vsyncpa %s10853, 1

</llo_original>
